<compile_context>
chip_gen: v7x
topology: tpu7x:2x2x1
jax: 0.10.0
libtpu: 0.0.40
codegen_flags: <defaults>
</compile_context>

<pallas_src>
import math
import functools

import jax
import jax.numpy as jnp
from jax.experimental import pallas as pl
from jax.experimental.pallas import tpu as pltpu

PAD = 0          # onmt.constants.PAD
LANE = 128       # lane-dense padding multiple for T and S
NEG_INF = -1e9   # additive mask bias


def _round_up(x, m):
    return ((x + m - 1) // m) * m


@functools.lru_cache(maxsize=None)
def _vmem_limit_bytes():
    """Per-generation scoped-VMEM limit: ~112 MiB v5e/v6e, ~56 MiB v7x."""
    try:
        cap = pltpu.get_tpu_info().vmem_capacity_bytes
        return int(min(cap * 7 // 8, 112 * 1024 * 1024))
    except Exception:
        return 64 * 1024 * 1024


# ----------------------------- in-kernel helpers -----------------------------

def _layernorm(x, g, b, eps=1e-5):
    """f32 layer norm over the last axis."""
    mu = jnp.mean(x, axis=-1, keepdims=True)
    var = jnp.mean(jnp.square(x - mu), axis=-1, keepdims=True)
    return (x - mu) * jax.lax.rsqrt(var + eps) * g + b


def _multihead_attention(q_all, k_all, v_all, bias, n_heads, want_cov):
    """Multi-head attention on already-projected full-width Q/K/V.

    q_all : (T, D) f32, pre-scaled by 1/sqrt(dh) (folded into W_q host-side)
    k_all : (S, D) f32, v_all : (S, D) f32
    bias  : additive f32 mask, broadcastable to (T, S); NEG_INF = masked.
    Returns (slab (T, D) f32 of concatenated per-head contexts,
             sum-over-heads attention probs (T, S) f32 or None).
    """
    T, D = q_all.shape
    dh = D // n_heads
    outs = []
    cov = None
    for h in range(n_heads):                      # static python loop
        sl = slice(h * dh, (h + 1) * dh)
        qh = q_all[:, sl]                         # (T, dh)
        kh = k_all[:, sl]                         # (S, dh)
        vh = v_all[:, sl]                         # (S, dh)
        # q . k^T without materializing a transpose (contract last dims)
        s = jax.lax.dot_general(qh, kh, (((1,), (1,)), ((), ())),
                                preferred_element_type=jnp.float32) + bias
        s = s - jnp.max(s, axis=-1, keepdims=True)
        p = jnp.exp(s)
        # exact division (approx reciprocal was flagged as a correctness concern)
        p = p / jnp.sum(p, axis=-1, keepdims=True)
        if want_cov:
            cov = p if cov is None else cov + p
        outs.append(jnp.dot(p, vh, preferred_element_type=jnp.float32))
    return jnp.concatenate(outs, axis=-1), cov    # (T, D)


# --------------------------------- kernel ------------------------------------

def fused_decoder_kernel(n_heads,
                         emb_ref, ctx_ref, pos_ref, time_ref, tb_ref, sb_ref,
                         wqkv_ref, wo_s_ref, wq_x_ref, wkv_x_ref, wo_x_ref,
                         ln_ref, w1_ref, b1_ref, w2_ref, b2_ref,
                         out_ref, cov_ref,
                         x_acc, k_ctx, v_ctx, bias_self):
    """All `layers` Universal-Transformer decoder steps for one batch element.

    grid = (batch, layers); the layer axis is "arbitrary" and x is carried in
    the VMEM scratch x_acc.  Encoder K/V and the causal+pad bias are computed
    once at t==0 and cached in VMEM scratch across all UT steps.
    """
    t = pl.program_id(1)
    n_steps = pl.num_programs(1)
    T, D = x_acc.shape

    # ---- step 0: init carry, project encoder K/V once, build self-attn bias --
    @pl.when(t == 0)
    def _init():
        x_acc[...] = emb_ref[0]
        # fused context K/V projection: (S, D) @ (D, 2D)
        kv = jnp.dot(ctx_ref[0], wkv_x_ref[...],
                     preferred_element_type=jnp.float32)
        k_ctx[...] = kv[:, :D]
        v_ctx[...] = kv[:, D:]
        # causal + target-pad additive bias, reused across all UT steps
        row = jax.lax.broadcasted_iota(jnp.int32, (T, T), 0)
        col = jax.lax.broadcasted_iota(jnp.int32, (T, T), 1)
        causal = jnp.where(col > row, NEG_INF, 0.0).astype(jnp.float32)
        bias_self[...] = causal + tb_ref[0]                  # (T,T) + (1,T)

    ln = ln_ref[...]                                         # (8, D) f32

    # Universal Transformer: positional + per-step time signal every step.
    x = x_acc[...] + pos_ref[...] + time_ref[0]              # (T,D)+(T,D)+(1,D)

    # --- masked self-attention (pre-LN, residual add) ---
    a_in = _layernorm(x, ln[0:1, :], ln[1:2, :])
    qkv = jnp.dot(a_in, wqkv_ref[...],                       # (T, 3D) fused QKV
                  preferred_element_type=jnp.float32)
    sa_slab, _ = _multihead_attention(qkv[:, :D], qkv[:, D:2 * D], qkv[:, 2 * D:],
                                      bias_self[...], n_heads, want_cov=False)
    x = x + jnp.dot(sa_slab, wo_s_ref[...],                  # single (T,D)@(D,D)
                    preferred_element_type=jnp.float32)

    # --- cross attention over cached encoder K/V ---
    c_in = _layernorm(x, ln[2:3, :], ln[3:4, :])
    q_x = jnp.dot(c_in, wq_x_ref[...],                       # (T, D)
                  preferred_element_type=jnp.float32)
    ca_slab, cov = _multihead_attention(q_x, k_ctx[...], v_ctx[...],
                                        sb_ref[0], n_heads, want_cov=True)
    x = x + jnp.dot(ca_slab, wo_x_ref[...],
                    preferred_element_type=jnp.float32)

    # --- position-wise feed-forward ---
    f_in = _layernorm(x, ln[4:5, :], ln[5:6, :])
    h1 = jnp.maximum(
        jnp.dot(f_in, w1_ref[...], preferred_element_type=jnp.float32)
        + b1_ref[...], 0.0)
    x = x + jnp.dot(h1, w2_ref[...],
                    preferred_element_type=jnp.float32) + b2_ref[...]

    x_acc[...] = x

    # --- last UT step: postprocess layernorm + coverage writeback ---
    @pl.when(t == n_steps - 1)
    def _finalize():
        out_ref[0] = _layernorm(x, ln[6:7, :], ln[7:8, :])
        # coverage = cross-attention probabilities averaged over heads.
        # TODO(synk): verify against the exact ONMT MultiHeadAttention coverage
        # definition (some versions return unaveraged / single-head attention).
        cov_ref[0] = cov * (1.0 / n_heads)


# --------------------------------- wrappers ----------------------------------

def prepare_decoder_weights(params, n_heads):
    """One-time (load-time) weight fusion: fused QKV / KV projections, 1/sqrt(dh)
    folded into W_q, LayerNorm params stacked.  All f32."""
    aw = params["layer"]["attn_w"]              # (8, D, D) f32
    D = aw.shape[-1]
    dh = D // n_heads
    scale = 1.0 / math.sqrt(dh)
    return {
        "embedding": params["embedding"].astype(jnp.float32),
        "pos_table": params["pos_table"].astype(jnp.float32),
        "time_table": params["time_table"].astype(jnp.float32),
        # [Wq*scale | Wk | Wv] for self-attention -> (D, 3D)
        "w_qkv_self": jnp.concatenate([aw[0] * scale, aw[1], aw[2]], axis=1),
        "w_o_self": aw[3],
        "w_q_x": aw[4] * scale,
        # [Wk | Wv] for cross-attention -> (D, 2D)
        "w_kv_x": jnp.concatenate([aw[5], aw[6]], axis=1),
        "w_o_x": aw[7],
        # [g_self, b_self, g_src, b_src, g_ffn, b_ffn, g_post, b_post] -> (8, D)
        "ln": jnp.concatenate(
            [params["layer"]["ln"], params["post_g"], params["post_b"]], axis=0),
        "w1": params["layer"]["w1"], "b1": params["layer"]["b1"],
        "w2": params["layer"]["w2"], "b2": params["layer"]["b2"],
    }


@functools.partial(jax.jit, static_argnames=("n_heads", "layers", "lane_multiple"))
def universal_transformer_decoder_forward(input_ids, context, src, weights, *,
                                          n_heads, layers, lane_multiple=LANE):
    """input_ids: (B, T0) int32; context: (B, S0, D) f32; src: (B, S0) int32.
    Returns (out (B, T0, D) f32, coverage (B, T0, S0) f32)."""
    D = weights["embedding"].shape[1]
    F = weights["w1"].shape[1]
    B, T0 = input_ids.shape
    S0 = src.shape[1]
    assert D % n_heads == 0
    assert layers <= weights["time_table"].shape[0], "time table too short"
    assert T0 <= weights["pos_table"].shape[0], "positional table too short"

    # lane-dense padding of the sequence axes (masked via additive pad biases)
    T = _round_up(T0, lane_multiple)
    S = _round_up(S0, lane_multiple)
    ids_p = jnp.full((B, T), PAD, jnp.int32).at[:, :T0].set(input_ids)
    src_p = jnp.full((B, S), PAD, jnp.int32).at[:, :S0].set(src)
    ctx_p = jnp.zeros((B, S, D), jnp.float32).at[:, :S0, :].set(
        context.astype(jnp.float32))

    # word embedding (padding_idx rows are zero) * sqrt(d_model); dropout = id
    emb = jnp.take(weights["embedding"], ids_p, axis=0) * math.sqrt(D)

    # additive pad biases (NEG_INF = masked); causal part built in-kernel once
    # NOTE: fully-masked rows give a uniform softmax here whereas torch
    # masked_fill(-inf)+softmax yields NaN; those rows are PAD outputs anyway.
    tgt_bias = jnp.where(ids_p == PAD, NEG_INF, 0.0).astype(jnp.float32)[:, None, :]
    src_bias = jnp.where(src_p == PAD, NEG_INF, 0.0).astype(jnp.float32)[:, None, :]

    # positional table shipped once (grid-invariant); per-step time is (1, D)
    pos = jnp.zeros((T, D), jnp.float32).at[:T0, :].set(weights["pos_table"][:T0])
    time = weights["time_table"][:layers][:, None, :]          # (layers, 1, D)

    kernel = functools.partial(fused_decoder_kernel, n_heads)
    inv = lambda b, t: (0, 0)                                  # grid-invariant
    out, cov = pl.pallas_call(
        kernel,
        out_shape=(jax.ShapeDtypeStruct((B, T, D), jnp.float32),
                   jax.ShapeDtypeStruct((B, T, S), jnp.float32)),
        grid=(B, layers),
        in_specs=[
            pl.BlockSpec((1, T, D), lambda b, t: (b, 0, 0)),   # emb
            pl.BlockSpec((1, S, D), lambda b, t: (b, 0, 0)),   # context
            pl.BlockSpec((T, D), inv),                         # positional table
            pl.BlockSpec((1, 1, D), lambda b, t: (t, 0, 0)),   # time row (per step)
            pl.BlockSpec((1, 1, T), lambda b, t: (b, 0, 0)),   # tgt pad bias
            pl.BlockSpec((1, 1, S), lambda b, t: (b, 0, 0)),   # src pad bias
            pl.BlockSpec((D, 3 * D), inv),                     # fused self QKV
            pl.BlockSpec((D, D), inv),                         # self out-proj
            pl.BlockSpec((D, D), inv),                         # cross Q (scaled)
            pl.BlockSpec((D, 2 * D), inv),                     # fused cross KV
            pl.BlockSpec((D, D), inv),                         # cross out-proj
            pl.BlockSpec((8, D), inv),                         # layernorm params
            pl.BlockSpec((D, F), inv),                         # ffn w1
            pl.BlockSpec((1, F), inv),                         # ffn b1
            pl.BlockSpec((F, D), inv),                         # ffn w2
            pl.BlockSpec((1, D), inv),                         # ffn b2
        ],
        out_specs=(pl.BlockSpec((1, T, D), lambda b, t: (b, 0, 0)),
                   pl.BlockSpec((1, T, S), lambda b, t: (b, 0, 0))),
        scratch_shapes=[
            pltpu.VMEM((T, D), jnp.float32),   # carried activation x
            pltpu.VMEM((S, D), jnp.float32),   # cached K_ctx (no transpose)
            pltpu.VMEM((S, D), jnp.float32),   # cached V_ctx
            pltpu.VMEM((T, T), jnp.float32),   # causal+pad self-attn bias
        ],
        compiler_params=pltpu.CompilerParams(
            dimension_semantics=("parallel", "arbitrary"),
            vmem_limit_bytes=_vmem_limit_bytes()),
    )(emb, ctx_p, pos, time, tgt_bias, src_bias,
      weights["w_qkv_self"], weights["w_o_self"], weights["w_q_x"],
      weights["w_kv_x"], weights["w_o_x"], weights["ln"],
      weights["w1"], weights["b1"], weights["w2"], weights["b2"])

    return out[:, :T0, :], cov[:, :T0, :S0]


# ------------------------------- param setup ----------------------------------

def sinusoidal_table(length, dim):
    pos = jnp.arange(length, dtype=jnp.float32)[:, None]
    i = jnp.arange(dim // 2, dtype=jnp.float32)[None, :]
    inv = jnp.exp(-(math.log(10000.0)) * (2.0 * i) / dim)
    ang = pos * inv
    return jnp.concatenate([jnp.sin(ang), jnp.cos(ang)], axis=-1)


def init_params(key, vocab, d_model, inner, n_layers_max=16):
    ks = jax.random.split(key, 8)
    emb = 0.02 * jax.random.normal(ks[0], (vocab, d_model), jnp.float32)
    emb = emb.at[PAD].set(0.0)  # padding_idx
    layer = {
        # [Wq_self, Wk_self, Wv_self, Wo_self, Wq_src, Wk_src, Wv_src, Wo_src]
        # TODO(synk): legacy ONMT MultiHeadAttention projections are bias-free Linear layers.
        "attn_w": 0.02 * jax.random.normal(ks[1], (8, d_model, d_model), jnp.float32),
        # [g_selfattn, b_selfattn, g_srcattn, b_srcattn, g_ffn, b_ffn]
        "ln": jnp.concatenate(
            [jnp.ones((1, d_model), jnp.float32),
             jnp.zeros((1, d_model), jnp.float32)] * 3, axis=0),
        "w1": 0.02 * jax.random.normal(ks[2], (d_model, inner), jnp.float32),
        "b1": jnp.zeros((1, inner), jnp.float32),
        "w2": 0.02 * jax.random.normal(ks[3], (inner, d_model), jnp.float32),
        "b2": jnp.zeros((1, d_model), jnp.float32),
    }
    return {
        "embedding": emb,
        "layer": layer,                                         # shared across UT steps
        "pos_table": sinusoidal_table(64, d_model),             # positional encoder
        "time_table": sinusoidal_table(n_layers_max, d_model),  # time encoder
        "post_g": jnp.ones((1, d_model), jnp.float32),
        "post_b": jnp.zeros((1, d_model), jnp.float32),
    }


# ----------------------------------- main -------------------------------------

if __name__ == "__main__":
    B, T, S = 2, 8, 8
    D, H, F = 128, 4, 256        # D multiple of 128 keeps lane-dense stores
    VOCAB, LAYERS = 64, 3

    key = jax.random.PRNGKey(0)
    k_in, k_src, k_ctx, k_par = jax.random.split(key, 4)

    # target tokens: non-PAD with trailing PAD in sequence 1
    input_ids = jax.random.randint(k_in, (B, T), 1, VOCAB).astype(jnp.int32)
    input_ids = input_ids.at[1, T - 2:].set(PAD)
    # source tokens: non-PAD with trailing PAD in sequence 0
    src = jax.random.randint(k_src, (B, S), 1, VOCAB).astype(jnp.int32)
    src = src.at[0, S - 3:].set(PAD)
    # encoder context
    context = jax.random.normal(k_ctx, (B, S, D), jnp.float32)

    params = init_params(k_par, VOCAB, D, F, n_layers_max=8)
    weights = prepare_decoder_weights(params, n_heads=H)   # one-time, at load

    out, coverage = universal_transformer_decoder_forward(
        input_ids, context, src, weights, n_heads=H, layers=LAYERS)
    jax.block_until_ready((out, coverage))

    assert out.shape == (B, T, D)
    assert coverage.shape == (B, T, S)
    assert bool(jnp.all(jnp.isfinite(out)))
    assert bool(jnp.all(jnp.isfinite(coverage)))
    print("KERNEL_OK")
</pallas_src>

<mosaic_0001>
module attributes {stable_mosaic.version = 11 : i64} {
  func.func @fused_decoder_kernel(%arg0: i32, %arg1: i32, %arg2: memref<1x128x128xf32, #tpu.memory_space<vmem>>, %arg3: memref<1x128x128xf32, #tpu.memory_space<vmem>>, %arg4: memref<128x128xf32, #tpu.memory_space<vmem>>, %arg5: memref<1x1x128xf32, #tpu.memory_space<vmem>>, %arg6: memref<1x1x128xf32, #tpu.memory_space<vmem>>, %arg7: memref<1x1x128xf32, #tpu.memory_space<vmem>>, %arg8: memref<128x384xf32, #tpu.memory_space<vmem>>, %arg9: memref<128x128xf32, #tpu.memory_space<vmem>>, %arg10: memref<128x128xf32, #tpu.memory_space<vmem>>, %arg11: memref<128x256xf32, #tpu.memory_space<vmem>>, %arg12: memref<128x128xf32, #tpu.memory_space<vmem>>, %arg13: memref<8x128xf32, #tpu.memory_space<vmem>>, %arg14: memref<128x256xf32, #tpu.memory_space<vmem>>, %arg15: memref<1x256xf32, #tpu.memory_space<vmem>>, %arg16: memref<256x128xf32, #tpu.memory_space<vmem>>, %arg17: memref<1x128xf32, #tpu.memory_space<vmem>>, %arg18: memref<1x128x128xf32, #tpu.memory_space<vmem>>, %arg19: memref<1x128x128xf32, #tpu.memory_space<vmem>>, %arg20: memref<128x128xf32, #tpu.memory_space<vmem>>, %arg21: memref<128x128xf32, #tpu.memory_space<vmem>>, %arg22: memref<128x128xf32, #tpu.memory_space<vmem>>, %arg23: memref<128x128xf32, #tpu.memory_space<vmem>>) attributes {dimension_semantics = [#tpu.dimension_semantics<parallel>, #tpu.dimension_semantics<arbitrary>], iteration_bounds = array<i64: 2, 3>, scalar_prefetch = 0 : i64, scratch_operands = 4 : i64, tpu.core_type = #tpu.core_type<tc>, window_params = [{transform_indices = @transform_0, window_bounds = array<i64: 1, 128, 128>}, {transform_indices = @transform_1, window_bounds = array<i64: 1, 128, 128>}, {pipeline_mode = #tpu.pipeline_mode<synchronous>, transform_indices = @transform_2, window_bounds = array<i64: 128, 128>}, {transform_indices = @transform_3, window_bounds = array<i64: 1, 1, 128>}, {transform_indices = @transform_4, window_bounds = array<i64: 1, 1, 128>}, {transform_indices = @transform_5, window_bounds = array<i64: 1, 1, 128>}, {pipeline_mode = #tpu.pipeline_mode<synchronous>, transform_indices = @transform_6, window_bounds = array<i64: 128, 384>}, {pipeline_mode = #tpu.pipeline_mode<synchronous>, transform_indices = @transform_7, window_bounds = array<i64: 128, 128>}, {pipeline_mode = #tpu.pipeline_mode<synchronous>, transform_indices = @transform_8, window_bounds = array<i64: 128, 128>}, {pipeline_mode = #tpu.pipeline_mode<synchronous>, transform_indices = @transform_9, window_bounds = array<i64: 128, 256>}, {pipeline_mode = #tpu.pipeline_mode<synchronous>, transform_indices = @transform_10, window_bounds = array<i64: 128, 128>}, {pipeline_mode = #tpu.pipeline_mode<synchronous>, transform_indices = @transform_11, window_bounds = array<i64: 8, 128>}, {pipeline_mode = #tpu.pipeline_mode<synchronous>, transform_indices = @transform_12, window_bounds = array<i64: 128, 256>}, {pipeline_mode = #tpu.pipeline_mode<synchronous>, transform_indices = @transform_13, window_bounds = array<i64: 1, 256>}, {pipeline_mode = #tpu.pipeline_mode<synchronous>, transform_indices = @transform_14, window_bounds = array<i64: 256, 128>}, {pipeline_mode = #tpu.pipeline_mode<synchronous>, transform_indices = @transform_15, window_bounds = array<i64: 1, 128>}, {transform_indices = @transform_16, window_bounds = array<i64: 1, 128, 128>}, {transform_indices = @transform_17, window_bounds = array<i64: 1, 128, 128>}]} {
    %c0_i32 = arith.constant 0 : i32
    %0 = arith.cmpi eq, %arg1, %c0_i32 : i32
    %1 = arith.extui %0 : i1 to i32
    %c0_i32_0 = arith.constant 0 : i32
    %2 = arith.cmpi ne, %1, %c0_i32_0 : i32
    scf.if %2 {
      %c0_90 = arith.constant 0 : index
      %c0_91 = arith.constant 0 : index
      %c0_92 = arith.constant 0 : index
      %247 = vector.load %arg2[%c0_90, %c0_91, %c0_92] : memref<1x128x128xf32, #tpu.memory_space<vmem>>, vector<1x128x128xf32>
      %248 = vector.shape_cast %247 : vector<1x128x128xf32> to vector<128x128xf32>
      %c0_93 = arith.constant 0 : index
      %c0_94 = arith.constant 0 : index
      %249 = vector.load %arg20[%c0_93, %c0_94] : memref<128x128xf32, #tpu.memory_space<vmem>>, vector<128x128xf32>
      tpu.vector_store %arg20[%c0_93, %c0_94], %248 {strides = array<i32>} : memref<128x128xf32, #tpu.memory_space<vmem>>, vector<128x128xf32>,
      %c0_95 = arith.constant 0 : index
      %c0_96 = arith.constant 0 : index
      %c0_97 = arith.constant 0 : index
      %250 = vector.load %arg3[%c0_95, %c0_96, %c0_97] : memref<1x128x128xf32, #tpu.memory_space<vmem>>, vector<1x128x128xf32>
      %251 = vector.shape_cast %250 : vector<1x128x128xf32> to vector<128x128xf32>
      %c0_98 = arith.constant 0 : index
      %c0_99 = arith.constant 0 : index
      %252 = vector.load %arg11[%c0_98, %c0_99] : memref<128x256xf32, #tpu.memory_space<vmem>>, vector<128x256xf32>
      %cst_100 = arith.constant dense<0.000000e+00> : vector<128x256xf32>
      %253 = tpu.matmul %251, %252, %cst_100 {dimension_numbers = #tpu.dot_dimension_numbers<[1], [0], [0], [1], [0, 0, 1, 1], [], []>} : vector<128x128xf32>, vector<128x256xf32>, vector<128x256xf32> -> vector<128x256xf32>
      %254 = vector.extract_strided_slice %253 {offsets = [0, 0], sizes = [128, 128], strides = [1, 1]} : vector<128x256xf32> to vector<128x128xf32>
      %c0_101 = arith.constant 0 : index
      %c0_102 = arith.constant 0 : index
      %255 = vector.load %arg21[%c0_101, %c0_102] : memref<128x128xf32, #tpu.memory_space<vmem>>, vector<128x128xf32>
      tpu.vector_store %arg21[%c0_101, %c0_102], %254 {strides = array<i32>} : memref<128x128xf32, #tpu.memory_space<vmem>>, vector<128x128xf32>,
      %256 = vector.extract_strided_slice %253 {offsets = [0, 128], sizes = [128, 128], strides = [1, 1]} : vector<128x256xf32> to vector<128x128xf32>
      %c0_103 = arith.constant 0 : index
      %c0_104 = arith.constant 0 : index
      %257 = vector.load %arg22[%c0_103, %c0_104] : memref<128x128xf32, #tpu.memory_space<vmem>>, vector<128x128xf32>
      tpu.vector_store %arg22[%c0_103, %c0_104], %256 {strides = array<i32>} : memref<128x128xf32, #tpu.memory_space<vmem>>, vector<128x128xf32>,
      %258 = tpu.iota {dimensions = array<i32: 0>} : vector<128x128xi32>
      %259 = tpu.iota {dimensions = array<i32: 1>} : vector<128x128xi32>
      %260 = arith.cmpi sgt, %259, %258 : vector<128x128xi32>
      %cst_105 = arith.constant -1.000000e+09 : f32
      %cst_106 = arith.constant 0.000000e+00 : f32
      %261 = vector.broadcast %cst_105 : f32 to vector<128x128xf32>
      %262 = vector.broadcast %cst_106 : f32 to vector<128x128xf32>
      %263 = arith.select %260, %261, %262 : vector<128x128xi1>, vector<128x128xf32>
      %c0_107 = arith.constant 0 : index
      %c0_108 = arith.constant 0 : index
      %c0_109 = arith.constant 0 : index
      %264 = vector.load %arg6[%c0_107, %c0_108, %c0_109] : memref<1x1x128xf32, #tpu.memory_space<vmem>>, vector<1x1x128xf32>
      %265 = vector.shape_cast %264 : vector<1x1x128xf32> to vector<1x128xf32>
      %266 = vector.broadcast %265 : vector<1x128xf32> to vector<128x128xf32>
      %267 = arith.addf %263, %266 : vector<128x128xf32>
      %c0_110 = arith.constant 0 : index
      %c0_111 = arith.constant 0 : index
      %268 = vector.load %arg23[%c0_110, %c0_111] : memref<128x128xf32, #tpu.memory_space<vmem>>, vector<128x128xf32>
      tpu.vector_store %arg23[%c0_110, %c0_111], %267 {strides = array<i32>} : memref<128x128xf32, #tpu.memory_space<vmem>>, vector<128x128xf32>,
    } else {
    }
    %c0 = arith.constant 0 : index
    %c0_1 = arith.constant 0 : index
    %3 = vector.load %arg13[%c0, %c0_1] : memref<8x128xf32, #tpu.memory_space<vmem>>, vector<8x128xf32>
    %c0_2 = arith.constant 0 : index
    %c0_3 = arith.constant 0 : index
    %4 = vector.load %arg20[%c0_2, %c0_3] : memref<128x128xf32, #tpu.memory_space<vmem>>, vector<128x128xf32>
    %c0_4 = arith.constant 0 : index
    %c0_5 = arith.constant 0 : index
    %5 = vector.load %arg4[%c0_4, %c0_5] : memref<128x128xf32, #tpu.memory_space<vmem>>, vector<128x128xf32>
    %6 = arith.addf %4, %5 : vector<128x128xf32>
    %c0_6 = arith.constant 0 : index
    %c0_7 = arith.constant 0 : index
    %c0_8 = arith.constant 0 : index
    %7 = vector.load %arg5[%c0_6, %c0_7, %c0_8] : memref<1x1x128xf32, #tpu.memory_space<vmem>>, vector<1x1x128xf32>
    %8 = vector.shape_cast %7 : vector<1x1x128xf32> to vector<1x128xf32>
    %9 = vector.broadcast %8 : vector<1x128xf32> to vector<128x128xf32>
    %10 = arith.addf %6, %9 : vector<128x128xf32>
    %11 = vector.extract_strided_slice %3 {offsets = [0, 0], sizes = [1, 128], strides = [1, 1]} : vector<8x128xf32> to vector<1x128xf32>
    %12 = vector.extract_strided_slice %3 {offsets = [1, 0], sizes = [1, 128], strides = [1, 1]} : vector<8x128xf32> to vector<1x128xf32>
    %cst = arith.constant dense<0.000000e+00> : vector<128xf32>
    %13 = vector.multi_reduction <add>, %10, %cst [1] : vector<128x128xf32> to vector<128xf32>
    %14 = vector.shape_cast %13 : vector<128xf32> to vector<128x1xf32>
    %cst_9 = arith.constant 1.280000e+02 : f32
    %15 = vector.broadcast %cst_9 : f32 to vector<128x1xf32>
    %16 = arith.divf %14, %15 : vector<128x1xf32>
    %17 = vector.broadcast %16 : vector<128x1xf32> to vector<128x128xf32>
    %18 = arith.subf %10, %17 : vector<128x128xf32>
    %19 = arith.mulf %18, %18 : vector<128x128xf32>
    %cst_10 = arith.constant dense<0.000000e+00> : vector<128xf32>
    %20 = vector.multi_reduction <add>, %19, %cst_10 [1] : vector<128x128xf32> to vector<128xf32>
    %21 = vector.shape_cast %20 : vector<128xf32> to vector<128x1xf32>
    %cst_11 = arith.constant 1.280000e+02 : f32
    %22 = vector.broadcast %cst_11 : f32 to vector<128x1xf32>
    %23 = arith.divf %21, %22 : vector<128x1xf32>
    %24 = vector.broadcast %16 : vector<128x1xf32> to vector<128x128xf32>
    %25 = arith.subf %10, %24 : vector<128x128xf32>
    %cst_12 = arith.constant 9.99999974E-6 : f32
    %26 = vector.broadcast %cst_12 : f32 to vector<128x1xf32>
    %27 = arith.addf %23, %26 : vector<128x1xf32>
    %28 = math.rsqrt %27 : vector<128x1xf32>
    %29 = vector.broadcast %28 : vector<128x1xf32> to vector<128x128xf32>
    %30 = arith.mulf %25, %29 : vector<128x128xf32>
    %31 = vector.broadcast %11 : vector<1x128xf32> to vector<128x128xf32>
    %32 = arith.mulf %30, %31 : vector<128x128xf32>
    %33 = vector.broadcast %12 : vector<1x128xf32> to vector<128x128xf32>
    %34 = arith.addf %32, %33 : vector<128x128xf32>
    %c0_13 = arith.constant 0 : index
    %c0_14 = arith.constant 0 : index
    %35 = vector.load %arg8[%c0_13, %c0_14] : memref<128x384xf32, #tpu.memory_space<vmem>>, vector<128x384xf32>
    %cst_15 = arith.constant dense<0.000000e+00> : vector<128x384xf32>
    %36 = tpu.matmul %34, %35, %cst_15 {dimension_numbers = #tpu.dot_dimension_numbers<[1], [0], [0], [1], [0, 0, 1, 1], [], []>} : vector<128x128xf32>, vector<128x384xf32>, vector<128x384xf32> -> vector<128x384xf32>
    %37 = vector.extract_strided_slice %36 {offsets = [0, 0], sizes = [128, 128], strides = [1, 1]} : vector<128x384xf32> to vector<128x128xf32>
    %38 = vector.extract_strided_slice %36 {offsets = [0, 128], sizes = [128, 128], strides = [1, 1]} : vector<128x384xf32> to vector<128x128xf32>
    %39 = vector.extract_strided_slice %36 {offsets = [0, 256], sizes = [128, 128], strides = [1, 1]} : vector<128x384xf32> to vector<128x128xf32>
    %c0_16 = arith.constant 0 : index
    %c0_17 = arith.constant 0 : index
    %40 = vector.load %arg23[%c0_16, %c0_17] : memref<128x128xf32, #tpu.memory_space<vmem>>, vector<128x128xf32>
    %41 = vector.extract_strided_slice %37 {offsets = [0, 0], sizes = [128, 32], strides = [1, 1]} : vector<128x128xf32> to vector<128x32xf32>
    %42 = vector.extract_strided_slice %38 {offsets = [0, 0], sizes = [128, 32], strides = [1, 1]} : vector<128x128xf32> to vector<128x32xf32>
    %43 = vector.extract_strided_slice %39 {offsets = [0, 0], sizes = [128, 32], strides = [1, 1]} : vector<128x128xf32> to vector<128x32xf32>
    %cst_18 = arith.constant dense<0.000000e+00> : vector<128x128xf32>
    %44 = tpu.matmul %41, %42, %cst_18 {dimension_numbers = #tpu.dot_dimension_numbers<[1], [1], [0], [0], [0, 0, 1, 0], [], []>} : vector<128x32xf32>, vector<128x32xf32>, vector<128x128xf32> -> vector<128x128xf32>
    %45 = arith.addf %44, %40 : vector<128x128xf32>
    %cst_19 = arith.constant dense<0xFF800000> : vector<128xf32>
    %46 = vector.multi_reduction <maximumf>, %45, %cst_19 [1] : vector<128x128xf32> to vector<128xf32>
    %47 = vector.shape_cast %46 : vector<128xf32> to vector<128x1xf32>
    %48 = vector.broadcast %47 : vector<128x1xf32> to vector<128x128xf32>
    %49 = arith.subf %45, %48 : vector<128x128xf32>
    %50 = math.exp %49 : vector<128x128xf32>
    %cst_20 = arith.constant dense<0.000000e+00> : vector<128xf32>
    %51 = vector.multi_reduction <add>, %50, %cst_20 [1] : vector<128x128xf32> to vector<128xf32>
    %52 = vector.shape_cast %51 : vector<128xf32> to vector<128x1xf32>
    %53 = vector.broadcast %52 : vector<128x1xf32> to vector<128x128xf32>
    %54 = arith.divf %50, %53 : vector<128x128xf32>
    %cst_21 = arith.constant dense<0.000000e+00> : vector<128x32xf32>
    %55 = tpu.matmul %54, %43, %cst_21 {dimension_numbers = #tpu.dot_dimension_numbers<[1], [0], [0], [1], [0, 0, 1, 1], [], []>} : vector<128x128xf32>, vector<128x32xf32>, vector<128x32xf32> -> vector<128x32xf32>
    %56 = vector.extract_strided_slice %37 {offsets = [0, 32], sizes = [128, 32], strides = [1, 1]} : vector<128x128xf32> to vector<128x32xf32>
    %57 = vector.extract_strided_slice %38 {offsets = [0, 32], sizes = [128, 32], strides = [1, 1]} : vector<128x128xf32> to vector<128x32xf32>
    %58 = vector.extract_strided_slice %39 {offsets = [0, 32], sizes = [128, 32], strides = [1, 1]} : vector<128x128xf32> to vector<128x32xf32>
    %cst_22 = arith.constant dense<0.000000e+00> : vector<128x128xf32>
    %59 = tpu.matmul %56, %57, %cst_22 {dimension_numbers = #tpu.dot_dimension_numbers<[1], [1], [0], [0], [0, 0, 1, 0], [], []>} : vector<128x32xf32>, vector<128x32xf32>, vector<128x128xf32> -> vector<128x128xf32>
    %60 = arith.addf %59, %40 : vector<128x128xf32>
    %cst_23 = arith.constant dense<0xFF800000> : vector<128xf32>
    %61 = vector.multi_reduction <maximumf>, %60, %cst_23 [1] : vector<128x128xf32> to vector<128xf32>
    %62 = vector.shape_cast %61 : vector<128xf32> to vector<128x1xf32>
    %63 = vector.broadcast %62 : vector<128x1xf32> to vector<128x128xf32>
    %64 = arith.subf %60, %63 : vector<128x128xf32>
    %65 = math.exp %64 : vector<128x128xf32>
    %cst_24 = arith.constant dense<0.000000e+00> : vector<128xf32>
    %66 = vector.multi_reduction <add>, %65, %cst_24 [1] : vector<128x128xf32> to vector<128xf32>
    %67 = vector.shape_cast %66 : vector<128xf32> to vector<128x1xf32>
    %68 = vector.broadcast %67 : vector<128x1xf32> to vector<128x128xf32>
    %69 = arith.divf %65, %68 : vector<128x128xf32>
    %cst_25 = arith.constant dense<0.000000e+00> : vector<128x32xf32>
    %70 = tpu.matmul %69, %58, %cst_25 {dimension_numbers = #tpu.dot_dimension_numbers<[1], [0], [0], [1], [0, 0, 1, 1], [], []>} : vector<128x128xf32>, vector<128x32xf32>, vector<128x32xf32> -> vector<128x32xf32>
    %71 = vector.extract_strided_slice %37 {offsets = [0, 64], sizes = [128, 32], strides = [1, 1]} : vector<128x128xf32> to vector<128x32xf32>
    %72 = vector.extract_strided_slice %38 {offsets = [0, 64], sizes = [128, 32], strides = [1, 1]} : vector<128x128xf32> to vector<128x32xf32>
    %73 = vector.extract_strided_slice %39 {offsets = [0, 64], sizes = [128, 32], strides = [1, 1]} : vector<128x128xf32> to vector<128x32xf32>
    %cst_26 = arith.constant dense<0.000000e+00> : vector<128x128xf32>
    %74 = tpu.matmul %71, %72, %cst_26 {dimension_numbers = #tpu.dot_dimension_numbers<[1], [1], [0], [0], [0, 0, 1, 0], [], []>} : vector<128x32xf32>, vector<128x32xf32>, vector<128x128xf32> -> vector<128x128xf32>
    %75 = arith.addf %74, %40 : vector<128x128xf32>
    %cst_27 = arith.constant dense<0xFF800000> : vector<128xf32>
    %76 = vector.multi_reduction <maximumf>, %75, %cst_27 [1] : vector<128x128xf32> to vector<128xf32>
    %77 = vector.shape_cast %76 : vector<128xf32> to vector<128x1xf32>
    %78 = vector.broadcast %77 : vector<128x1xf32> to vector<128x128xf32>
    %79 = arith.subf %75, %78 : vector<128x128xf32>
    %80 = math.exp %79 : vector<128x128xf32>
    %cst_28 = arith.constant dense<0.000000e+00> : vector<128xf32>
    %81 = vector.multi_reduction <add>, %80, %cst_28 [1] : vector<128x128xf32> to vector<128xf32>
    %82 = vector.shape_cast %81 : vector<128xf32> to vector<128x1xf32>
    %83 = vector.broadcast %82 : vector<128x1xf32> to vector<128x128xf32>
    %84 = arith.divf %80, %83 : vector<128x128xf32>
    %cst_29 = arith.constant dense<0.000000e+00> : vector<128x32xf32>
    %85 = tpu.matmul %84, %73, %cst_29 {dimension_numbers = #tpu.dot_dimension_numbers<[1], [0], [0], [1], [0, 0, 1, 1], [], []>} : vector<128x128xf32>, vector<128x32xf32>, vector<128x32xf32> -> vector<128x32xf32>
    %86 = vector.extract_strided_slice %37 {offsets = [0, 96], sizes = [128, 32], strides = [1, 1]} : vector<128x128xf32> to vector<128x32xf32>
    %87 = vector.extract_strided_slice %38 {offsets = [0, 96], sizes = [128, 32], strides = [1, 1]} : vector<128x128xf32> to vector<128x32xf32>
    %88 = vector.extract_strided_slice %39 {offsets = [0, 96], sizes = [128, 32], strides = [1, 1]} : vector<128x128xf32> to vector<128x32xf32>
    %cst_30 = arith.constant dense<0.000000e+00> : vector<128x128xf32>
    %89 = tpu.matmul %86, %87, %cst_30 {dimension_numbers = #tpu.dot_dimension_numbers<[1], [1], [0], [0], [0, 0, 1, 0], [], []>} : vector<128x32xf32>, vector<128x32xf32>, vector<128x128xf32> -> vector<128x128xf32>
    %90 = arith.addf %89, %40 : vector<128x128xf32>
    %cst_31 = arith.constant dense<0xFF800000> : vector<128xf32>
    %91 = vector.multi_reduction <maximumf>, %90, %cst_31 [1] : vector<128x128xf32> to vector<128xf32>
    %92 = vector.shape_cast %91 : vector<128xf32> to vector<128x1xf32>
    %93 = vector.broadcast %92 : vector<128x1xf32> to vector<128x128xf32>
    %94 = arith.subf %90, %93 : vector<128x128xf32>
    %95 = math.exp %94 : vector<128x128xf32>
    %cst_32 = arith.constant dense<0.000000e+00> : vector<128xf32>
    %96 = vector.multi_reduction <add>, %95, %cst_32 [1] : vector<128x128xf32> to vector<128xf32>
    %97 = vector.shape_cast %96 : vector<128xf32> to vector<128x1xf32>
    %98 = vector.broadcast %97 : vector<128x1xf32> to vector<128x128xf32>
    %99 = arith.divf %95, %98 : vector<128x128xf32>
    %cst_33 = arith.constant dense<0.000000e+00> : vector<128x32xf32>
    %100 = tpu.matmul %99, %88, %cst_33 {dimension_numbers = #tpu.dot_dimension_numbers<[1], [0], [0], [1], [0, 0, 1, 1], [], []>} : vector<128x128xf32>, vector<128x32xf32>, vector<128x32xf32> -> vector<128x32xf32>
    %101 = tpu.concatenate %55, %70, %85, %100 in 1 : vector<128x32xf32>, vector<128x32xf32>, vector<128x32xf32>, vector<128x32xf32> -> vector<128x128xf32>
    %c0_34 = arith.constant 0 : index
    %c0_35 = arith.constant 0 : index
    %102 = vector.load %arg9[%c0_34, %c0_35] : memref<128x128xf32, #tpu.memory_space<vmem>>, vector<128x128xf32>
    %cst_36 = arith.constant dense<0.000000e+00> : vector<128x128xf32>
    %103 = tpu.matmul %101, %102, %cst_36 {dimension_numbers = #tpu.dot_dimension_numbers<[1], [0], [0], [1], [0, 0, 1, 1], [], []>} : vector<128x128xf32>, vector<128x128xf32>, vector<128x128xf32> -> vector<128x128xf32>
    %104 = arith.addf %10, %103 : vector<128x128xf32>
    %105 = vector.extract_strided_slice %3 {offsets = [2, 0], sizes = [1, 128], strides = [1, 1]} : vector<8x128xf32> to vector<1x128xf32>
    %106 = vector.extract_strided_slice %3 {offsets = [3, 0], sizes = [1, 128], strides = [1, 1]} : vector<8x128xf32> to vector<1x128xf32>
    %cst_37 = arith.constant dense<0.000000e+00> : vector<128xf32>
    %107 = vector.multi_reduction <add>, %104, %cst_37 [1] : vector<128x128xf32> to vector<128xf32>
    %108 = vector.shape_cast %107 : vector<128xf32> to vector<128x1xf32>
    %cst_38 = arith.constant 1.280000e+02 : f32
    %109 = vector.broadcast %cst_38 : f32 to vector<128x1xf32>
    %110 = arith.divf %108, %109 : vector<128x1xf32>
    %111 = vector.broadcast %110 : vector<128x1xf32> to vector<128x128xf32>
    %112 = arith.subf %104, %111 : vector<128x128xf32>
    %113 = arith.mulf %112, %112 : vector<128x128xf32>
    %cst_39 = arith.constant dense<0.000000e+00> : vector<128xf32>
    %114 = vector.multi_reduction <add>, %113, %cst_39 [1] : vector<128x128xf32> to vector<128xf32>
    %115 = vector.shape_cast %114 : vector<128xf32> to vector<128x1xf32>
    %cst_40 = arith.constant 1.280000e+02 : f32
    %116 = vector.broadcast %cst_40 : f32 to vector<128x1xf32>
    %117 = arith.divf %115, %116 : vector<128x1xf32>
    %118 = vector.broadcast %110 : vector<128x1xf32> to vector<128x128xf32>
    %119 = arith.subf %104, %118 : vector<128x128xf32>
    %cst_41 = arith.constant 9.99999974E-6 : f32
    %120 = vector.broadcast %cst_41 : f32 to vector<128x1xf32>
    %121 = arith.addf %117, %120 : vector<128x1xf32>
    %122 = math.rsqrt %121 : vector<128x1xf32>
    %123 = vector.broadcast %122 : vector<128x1xf32> to vector<128x128xf32>
    %124 = arith.mulf %119, %123 : vector<128x128xf32>
    %125 = vector.broadcast %105 : vector<1x128xf32> to vector<128x128xf32>
    %126 = arith.mulf %124, %125 : vector<128x128xf32>
    %127 = vector.broadcast %106 : vector<1x128xf32> to vector<128x128xf32>
    %128 = arith.addf %126, %127 : vector<128x128xf32>
    %c0_42 = arith.constant 0 : index
    %c0_43 = arith.constant 0 : index
    %129 = vector.load %arg10[%c0_42, %c0_43] : memref<128x128xf32, #tpu.memory_space<vmem>>, vector<128x128xf32>
    %cst_44 = arith.constant dense<0.000000e+00> : vector<128x128xf32>
    %130 = tpu.matmul %128, %129, %cst_44 {dimension_numbers = #tpu.dot_dimension_numbers<[1], [0], [0], [1], [0, 0, 1, 1], [], []>} : vector<128x128xf32>, vector<128x128xf32>, vector<128x128xf32> -> vector<128x128xf32>
    %c0_45 = arith.constant 0 : index
    %c0_46 = arith.constant 0 : index
    %131 = vector.load %arg21[%c0_45, %c0_46] : memref<128x128xf32, #tpu.memory_space<vmem>>, vector<128x128xf32>
    %c0_47 = arith.constant 0 : index
    %c0_48 = arith.constant 0 : index
    %132 = vector.load %arg22[%c0_47, %c0_48] : memref<128x128xf32, #tpu.memory_space<vmem>>, vector<128x128xf32>
    %c0_49 = arith.constant 0 : index
    %c0_50 = arith.constant 0 : index
    %c0_51 = arith.constant 0 : index
    %133 = vector.load %arg7[%c0_49, %c0_50, %c0_51] : memref<1x1x128xf32, #tpu.memory_space<vmem>>, vector<1x1x128xf32>
    %134 = vector.shape_cast %133 : vector<1x1x128xf32> to vector<1x128xf32>
    %135 = vector.extract_strided_slice %130 {offsets = [0, 0], sizes = [128, 32], strides = [1, 1]} : vector<128x128xf32> to vector<128x32xf32>
    %136 = vector.extract_strided_slice %131 {offsets = [0, 0], sizes = [128, 32], strides = [1, 1]} : vector<128x128xf32> to vector<128x32xf32>
    %137 = vector.extract_strided_slice %132 {offsets = [0, 0], sizes = [128, 32], strides = [1, 1]} : vector<128x128xf32> to vector<128x32xf32>
    %cst_52 = arith.constant dense<0.000000e+00> : vector<128x128xf32>
    %138 = tpu.matmul %135, %136, %cst_52 {dimension_numbers = #tpu.dot_dimension_numbers<[1], [1], [0], [0], [0, 0, 1, 0], [], []>} : vector<128x32xf32>, vector<128x32xf32>, vector<128x128xf32> -> vector<128x128xf32>
    %139 = vector.broadcast %134 : vector<1x128xf32> to vector<128x128xf32>
    %140 = arith.addf %138, %139 : vector<128x128xf32>
    %cst_53 = arith.constant dense<0xFF800000> : vector<128xf32>
    %141 = vector.multi_reduction <maximumf>, %140, %cst_53 [1] : vector<128x128xf32> to vector<128xf32>
    %142 = vector.shape_cast %141 : vector<128xf32> to vector<128x1xf32>
    %143 = vector.broadcast %142 : vector<128x1xf32> to vector<128x128xf32>
    %144 = arith.subf %140, %143 : vector<128x128xf32>
    %145 = math.exp %144 : vector<128x128xf32>
    %cst_54 = arith.constant dense<0.000000e+00> : vector<128xf32>
    %146 = vector.multi_reduction <add>, %145, %cst_54 [1] : vector<128x128xf32> to vector<128xf32>
    %147 = vector.shape_cast %146 : vector<128xf32> to vector<128x1xf32>
    %148 = vector.broadcast %147 : vector<128x1xf32> to vector<128x128xf32>
    %149 = arith.divf %145, %148 : vector<128x128xf32>
    %cst_55 = arith.constant dense<0.000000e+00> : vector<128x32xf32>
    %150 = tpu.matmul %149, %137, %cst_55 {dimension_numbers = #tpu.dot_dimension_numbers<[1], [0], [0], [1], [0, 0, 1, 1], [], []>} : vector<128x128xf32>, vector<128x32xf32>, vector<128x32xf32> -> vector<128x32xf32>
    %151 = vector.extract_strided_slice %130 {offsets = [0, 32], sizes = [128, 32], strides = [1, 1]} : vector<128x128xf32> to vector<128x32xf32>
    %152 = vector.extract_strided_slice %131 {offsets = [0, 32], sizes = [128, 32], strides = [1, 1]} : vector<128x128xf32> to vector<128x32xf32>
    %153 = vector.extract_strided_slice %132 {offsets = [0, 32], sizes = [128, 32], strides = [1, 1]} : vector<128x128xf32> to vector<128x32xf32>
    %cst_56 = arith.constant dense<0.000000e+00> : vector<128x128xf32>
    %154 = tpu.matmul %151, %152, %cst_56 {dimension_numbers = #tpu.dot_dimension_numbers<[1], [1], [0], [0], [0, 0, 1, 0], [], []>} : vector<128x32xf32>, vector<128x32xf32>, vector<128x128xf32> -> vector<128x128xf32>
    %155 = vector.broadcast %134 : vector<1x128xf32> to vector<128x128xf32>
    %156 = arith.addf %154, %155 : vector<128x128xf32>
    %cst_57 = arith.constant dense<0xFF800000> : vector<128xf32>
    %157 = vector.multi_reduction <maximumf>, %156, %cst_57 [1] : vector<128x128xf32> to vector<128xf32>
    %158 = vector.shape_cast %157 : vector<128xf32> to vector<128x1xf32>
    %159 = vector.broadcast %158 : vector<128x1xf32> to vector<128x128xf32>
    %160 = arith.subf %156, %159 : vector<128x128xf32>
    %161 = math.exp %160 : vector<128x128xf32>
    %cst_58 = arith.constant dense<0.000000e+00> : vector<128xf32>
    %162 = vector.multi_reduction <add>, %161, %cst_58 [1] : vector<128x128xf32> to vector<128xf32>
    %163 = vector.shape_cast %162 : vector<128xf32> to vector<128x1xf32>
    %164 = vector.broadcast %163 : vector<128x1xf32> to vector<128x128xf32>
    %165 = arith.divf %161, %164 : vector<128x128xf32>
    %166 = arith.addf %149, %165 : vector<128x128xf32>
    %cst_59 = arith.constant dense<0.000000e+00> : vector<128x32xf32>
    %167 = tpu.matmul %165, %153, %cst_59 {dimension_numbers = #tpu.dot_dimension_numbers<[1], [0], [0], [1], [0, 0, 1, 1], [], []>} : vector<128x128xf32>, vector<128x32xf32>, vector<128x32xf32> -> vector<128x32xf32>
    %168 = vector.extract_strided_slice %130 {offsets = [0, 64], sizes = [128, 32], strides = [1, 1]} : vector<128x128xf32> to vector<128x32xf32>
    %169 = vector.extract_strided_slice %131 {offsets = [0, 64], sizes = [128, 32], strides = [1, 1]} : vector<128x128xf32> to vector<128x32xf32>
    %170 = vector.extract_strided_slice %132 {offsets = [0, 64], sizes = [128, 32], strides = [1, 1]} : vector<128x128xf32> to vector<128x32xf32>
    %cst_60 = arith.constant dense<0.000000e+00> : vector<128x128xf32>
    %171 = tpu.matmul %168, %169, %cst_60 {dimension_numbers = #tpu.dot_dimension_numbers<[1], [1], [0], [0], [0, 0, 1, 0], [], []>} : vector<128x32xf32>, vector<128x32xf32>, vector<128x128xf32> -> vector<128x128xf32>
    %172 = vector.broadcast %134 : vector<1x128xf32> to vector<128x128xf32>
    %173 = arith.addf %171, %172 : vector<128x128xf32>
    %cst_61 = arith.constant dense<0xFF800000> : vector<128xf32>
    %174 = vector.multi_reduction <maximumf>, %173, %cst_61 [1] : vector<128x128xf32> to vector<128xf32>
    %175 = vector.shape_cast %174 : vector<128xf32> to vector<128x1xf32>
    %176 = vector.broadcast %175 : vector<128x1xf32> to vector<128x128xf32>
    %177 = arith.subf %173, %176 : vector<128x128xf32>
    %178 = math.exp %177 : vector<128x128xf32>
    %cst_62 = arith.constant dense<0.000000e+00> : vector<128xf32>
    %179 = vector.multi_reduction <add>, %178, %cst_62 [1] : vector<128x128xf32> to vector<128xf32>
    %180 = vector.shape_cast %179 : vector<128xf32> to vector<128x1xf32>
    %181 = vector.broadcast %180 : vector<128x1xf32> to vector<128x128xf32>
    %182 = arith.divf %178, %181 : vector<128x128xf32>
    %183 = arith.addf %166, %182 : vector<128x128xf32>
    %cst_63 = arith.constant dense<0.000000e+00> : vector<128x32xf32>
    %184 = tpu.matmul %182, %170, %cst_63 {dimension_numbers = #tpu.dot_dimension_numbers<[1], [0], [0], [1], [0, 0, 1, 1], [], []>} : vector<128x128xf32>, vector<128x32xf32>, vector<128x32xf32> -> vector<128x32xf32>
    %185 = vector.extract_strided_slice %130 {offsets = [0, 96], sizes = [128, 32], strides = [1, 1]} : vector<128x128xf32> to vector<128x32xf32>
    %186 = vector.extract_strided_slice %131 {offsets = [0, 96], sizes = [128, 32], strides = [1, 1]} : vector<128x128xf32> to vector<128x32xf32>
    %187 = vector.extract_strided_slice %132 {offsets = [0, 96], sizes = [128, 32], strides = [1, 1]} : vector<128x128xf32> to vector<128x32xf32>
    %cst_64 = arith.constant dense<0.000000e+00> : vector<128x128xf32>
    %188 = tpu.matmul %185, %186, %cst_64 {dimension_numbers = #tpu.dot_dimension_numbers<[1], [1], [0], [0], [0, 0, 1, 0], [], []>} : vector<128x32xf32>, vector<128x32xf32>, vector<128x128xf32> -> vector<128x128xf32>
    %189 = vector.broadcast %134 : vector<1x128xf32> to vector<128x128xf32>
    %190 = arith.addf %188, %189 : vector<128x128xf32>
    %cst_65 = arith.constant dense<0xFF800000> : vector<128xf32>
    %191 = vector.multi_reduction <maximumf>, %190, %cst_65 [1] : vector<128x128xf32> to vector<128xf32>
    %192 = vector.shape_cast %191 : vector<128xf32> to vector<128x1xf32>
    %193 = vector.broadcast %192 : vector<128x1xf32> to vector<128x128xf32>
    %194 = arith.subf %190, %193 : vector<128x128xf32>
    %195 = math.exp %194 : vector<128x128xf32>
    %cst_66 = arith.constant dense<0.000000e+00> : vector<128xf32>
    %196 = vector.multi_reduction <add>, %195, %cst_66 [1] : vector<128x128xf32> to vector<128xf32>
    %197 = vector.shape_cast %196 : vector<128xf32> to vector<128x1xf32>
    %198 = vector.broadcast %197 : vector<128x1xf32> to vector<128x128xf32>
    %199 = arith.divf %195, %198 : vector<128x128xf32>
    %200 = arith.addf %183, %199 : vector<128x128xf32>
    %cst_67 = arith.constant dense<0.000000e+00> : vector<128x32xf32>
    %201 = tpu.matmul %199, %187, %cst_67 {dimension_numbers = #tpu.dot_dimension_numbers<[1], [0], [0], [1], [0, 0, 1, 1], [], []>} : vector<128x128xf32>, vector<128x32xf32>, vector<128x32xf32> -> vector<128x32xf32>
    %202 = tpu.concatenate %150, %167, %184, %201 in 1 : vector<128x32xf32>, vector<128x32xf32>, vector<128x32xf32>, vector<128x32xf32> -> vector<128x128xf32>
    %c0_68 = arith.constant 0 : index
    %c0_69 = arith.constant 0 : index
    %203 = vector.load %arg12[%c0_68, %c0_69] : memref<128x128xf32, #tpu.memory_space<vmem>>, vector<128x128xf32>
    %cst_70 = arith.constant dense<0.000000e+00> : vector<128x128xf32>
    %204 = tpu.matmul %202, %203, %cst_70 {dimension_numbers = #tpu.dot_dimension_numbers<[1], [0], [0], [1], [0, 0, 1, 1], [], []>} : vector<128x128xf32>, vector<128x128xf32>, vector<128x128xf32> -> vector<128x128xf32>
    %205 = arith.addf %104, %204 : vector<128x128xf32>
    %206 = vector.extract_strided_slice %3 {offsets = [4, 0], sizes = [1, 128], strides = [1, 1]} : vector<8x128xf32> to vector<1x128xf32>
    %207 = vector.extract_strided_slice %3 {offsets = [5, 0], sizes = [1, 128], strides = [1, 1]} : vector<8x128xf32> to vector<1x128xf32>
    %cst_71 = arith.constant dense<0.000000e+00> : vector<128xf32>
    %208 = vector.multi_reduction <add>, %205, %cst_71 [1] : vector<128x128xf32> to vector<128xf32>
    %209 = vector.shape_cast %208 : vector<128xf32> to vector<128x1xf32>
    %cst_72 = arith.constant 1.280000e+02 : f32
    %210 = vector.broadcast %cst_72 : f32 to vector<128x1xf32>
    %211 = arith.divf %209, %210 : vector<128x1xf32>
    %212 = vector.broadcast %211 : vector<128x1xf32> to vector<128x128xf32>
    %213 = arith.subf %205, %212 : vector<128x128xf32>
    %214 = arith.mulf %213, %213 : vector<128x128xf32>
    %cst_73 = arith.constant dense<0.000000e+00> : vector<128xf32>
    %215 = vector.multi_reduction <add>, %214, %cst_73 [1] : vector<128x128xf32> to vector<128xf32>
    %216 = vector.shape_cast %215 : vector<128xf32> to vector<128x1xf32>
    %cst_74 = arith.constant 1.280000e+02 : f32
    %217 = vector.broadcast %cst_74 : f32 to vector<128x1xf32>
    %218 = arith.divf %216, %217 : vector<128x1xf32>
    %219 = vector.broadcast %211 : vector<128x1xf32> to vector<128x128xf32>
    %220 = arith.subf %205, %219 : vector<128x128xf32>
    %cst_75 = arith.constant 9.99999974E-6 : f32
    %221 = vector.broadcast %cst_75 : f32 to vector<128x1xf32>
    %222 = arith.addf %218, %221 : vector<128x1xf32>
    %223 = math.rsqrt %222 : vector<128x1xf32>
    %224 = vector.broadcast %223 : vector<128x1xf32> to vector<128x128xf32>
    %225 = arith.mulf %220, %224 : vector<128x128xf32>
    %226 = vector.broadcast %206 : vector<1x128xf32> to vector<128x128xf32>
    %227 = arith.mulf %225, %226 : vector<128x128xf32>
    %228 = vector.broadcast %207 : vector<1x128xf32> to vector<128x128xf32>
    %229 = arith.addf %227, %228 : vector<128x128xf32>
    %c0_76 = arith.constant 0 : index
    %c0_77 = arith.constant 0 : index
    %230 = vector.load %arg14[%c0_76, %c0_77] : memref<128x256xf32, #tpu.memory_space<vmem>>, vector<128x256xf32>
    %cst_78 = arith.constant dense<0.000000e+00> : vector<128x256xf32>
    %231 = tpu.matmul %229, %230, %cst_78 {dimension_numbers = #tpu.dot_dimension_numbers<[1], [0], [0], [1], [0, 0, 1, 1], [], []>} : vector<128x128xf32>, vector<128x256xf32>, vector<128x256xf32> -> vector<128x256xf32>
    %c0_79 = arith.constant 0 : index
    %c0_80 = arith.constant 0 : index
    %232 = vector.load %arg15[%c0_79, %c0_80] : memref<1x256xf32, #tpu.memory_space<vmem>>, vector<1x256xf32>
    %233 = vector.broadcast %232 : vector<1x256xf32> to vector<128x256xf32>
    %234 = arith.addf %231, %233 : vector<128x256xf32>
    %cst_81 = arith.constant 0.000000e+00 : f32
    %235 = vector.broadcast %cst_81 : f32 to vector<128x256xf32>
    %236 = arith.maximumf %234, %235 : vector<128x256xf32>
    %c0_82 = arith.constant 0 : index
    %c0_83 = arith.constant 0 : index
    %237 = vector.load %arg16[%c0_82, %c0_83] : memref<256x128xf32, #tpu.memory_space<vmem>>, vector<256x128xf32>
    %cst_84 = arith.constant dense<0.000000e+00> : vector<128x128xf32>
    %238 = tpu.matmul %236, %237, %cst_84 {dimension_numbers = #tpu.dot_dimension_numbers<[1], [0], [0], [1], [0, 0, 1, 1], [], []>} : vector<128x256xf32>, vector<256x128xf32>, vector<128x128xf32> -> vector<128x128xf32>
    %239 = arith.addf %205, %238 : vector<128x128xf32>
    %c0_85 = arith.constant 0 : index
    %c0_86 = arith.constant 0 : index
    %240 = vector.load %arg17[%c0_85, %c0_86] : memref<1x128xf32, #tpu.memory_space<vmem>>, vector<1x128xf32>
    %241 = vector.broadcast %240 : vector<1x128xf32> to vector<128x128xf32>
    %242 = arith.addf %239, %241 : vector<128x128xf32>
    %c0_87 = arith.constant 0 : index
    %c0_88 = arith.constant 0 : index
    %243 = vector.load %arg20[%c0_87, %c0_88] : memref<128x128xf32, #tpu.memory_space<vmem>>, vector<128x128xf32>
    tpu.vector_store %arg20[%c0_87, %c0_88], %242 {strides = array<i32>} : memref<128x128xf32, #tpu.memory_space<vmem>>, vector<128x128xf32>,
    %c2_i32 = arith.constant 2 : i32
    %244 = arith.cmpi eq, %arg1, %c2_i32 : i32
    %245 = arith.extui %244 : i1 to i32
    %c0_i32_89 = arith.constant 0 : i32
    %246 = arith.cmpi ne, %245, %c0_i32_89 : i32
    scf.if %246 {
      %247 = vector.extract_strided_slice %3 {offsets = [6, 0], sizes = [1, 128], strides = [1, 1]} : vector<8x128xf32> to vector<1x128xf32>
      %248 = vector.extract_strided_slice %3 {offsets = [7, 0], sizes = [1, 128], strides = [1, 1]} : vector<8x128xf32> to vector<1x128xf32>
      %cst_90 = arith.constant dense<0.000000e+00> : vector<128xf32>
      %249 = vector.multi_reduction <add>, %242, %cst_90 [1] : vector<128x128xf32> to vector<128xf32>
      %250 = vector.shape_cast %249 : vector<128xf32> to vector<128x1xf32>
      %cst_91 = arith.constant 1.280000e+02 : f32
      %251 = vector.broadcast %cst_91 : f32 to vector<128x1xf32>
      %252 = arith.divf %250, %251 : vector<128x1xf32>
      %253 = vector.broadcast %252 : vector<128x1xf32> to vector<128x128xf32>
      %254 = arith.subf %242, %253 : vector<128x128xf32>
      %255 = arith.mulf %254, %254 : vector<128x128xf32>
      %cst_92 = arith.constant dense<0.000000e+00> : vector<128xf32>
      %256 = vector.multi_reduction <add>, %255, %cst_92 [1] : vector<128x128xf32> to vector<128xf32>
      %257 = vector.shape_cast %256 : vector<128xf32> to vector<128x1xf32>
      %cst_93 = arith.constant 1.280000e+02 : f32
      %258 = vector.broadcast %cst_93 : f32 to vector<128x1xf32>
      %259 = arith.divf %257, %258 : vector<128x1xf32>
      %260 = vector.broadcast %252 : vector<128x1xf32> to vector<128x128xf32>
      %261 = arith.subf %242, %260 : vector<128x128xf32>
      %cst_94 = arith.constant 9.99999974E-6 : f32
      %262 = vector.broadcast %cst_94 : f32 to vector<128x1xf32>
      %263 = arith.addf %259, %262 : vector<128x1xf32>
      %264 = math.rsqrt %263 : vector<128x1xf32>
      %265 = vector.broadcast %264 : vector<128x1xf32> to vector<128x128xf32>
      %266 = arith.mulf %261, %265 : vector<128x128xf32>
      %267 = vector.broadcast %247 : vector<1x128xf32> to vector<128x128xf32>
      %268 = arith.mulf %266, %267 : vector<128x128xf32>
      %269 = vector.broadcast %248 : vector<1x128xf32> to vector<128x128xf32>
      %270 = arith.addf %268, %269 : vector<128x128xf32>
      %c0_95 = arith.constant 0 : index
      %c0_96 = arith.constant 0 : index
      %c0_97 = arith.constant 0 : index
      %271 = vector.load %arg18[%c0_95, %c0_96, %c0_97] : memref<1x128x128xf32, #tpu.memory_space<vmem>>, vector<1x128x128xf32>
      %272 = vector.shape_cast %271 : vector<1x128x128xf32> to vector<128x128xf32>
      %273 = vector.shape_cast %270 : vector<128x128xf32> to vector<1x128x128xf32>
      tpu.vector_store %arg18[%c0_95, %c0_96, %c0_97], %273 {strides = array<i32>} : memref<1x128x128xf32, #tpu.memory_space<vmem>>, vector<1x128x128xf32>,
      %cst_98 = arith.constant 2.500000e-01 : f32
      %274 = vector.broadcast %cst_98 : f32 to vector<128x128xf32>
      %275 = arith.mulf %200, %274 : vector<128x128xf32>
      %c0_99 = arith.constant 0 : index
      %c0_100 = arith.constant 0 : index
      %c0_101 = arith.constant 0 : index
      %276 = vector.load %arg19[%c0_99, %c0_100, %c0_101] : memref<1x128x128xf32, #tpu.memory_space<vmem>>, vector<1x128x128xf32>
      %277 = vector.shape_cast %276 : vector<1x128x128xf32> to vector<128x128xf32>
      %278 = vector.shape_cast %275 : vector<128x128xf32> to vector<1x128x128xf32>
      tpu.vector_store %arg19[%c0_99, %c0_100, %c0_101], %278 {strides = array<i32>} : memref<1x128x128xf32, #tpu.memory_space<vmem>>, vector<1x128x128xf32>,
    } else {
    }
    return
  }
  func.func @transform_0(%arg0: i32, %arg1: i32) -> (i32, i32, i32) {
    %c0_i32 = arith.constant 0 : i32
    %c0_i32_0 = arith.constant 0 : i32
    %c0_i32_1 = arith.constant 0 : i32
    return %arg0, %c0_i32, %c0_i32_0 : i32, i32, i32
  }
  func.func @transform_1(%arg0: i32, %arg1: i32) -> (i32, i32, i32) {
    %c0_i32 = arith.constant 0 : i32
    %c0_i32_0 = arith.constant 0 : i32
    %c0_i32_1 = arith.constant 0 : i32
    return %arg0, %c0_i32, %c0_i32_0 : i32, i32, i32
  }
  func.func @transform_2(%arg0: i32, %arg1: i32) -> (i32, i32) {
    %c0_i32 = arith.constant 0 : i32
    %c0_i32_0 = arith.constant 0 : i32
    %c0_i32_1 = arith.constant 0 : i32
    return %c0_i32, %c0_i32_0 : i32, i32
  }
  func.func @transform_3(%arg0: i32, %arg1: i32) -> (i32, i32, i32) {
    %c0_i32 = arith.constant 0 : i32
    %c0_i32_0 = arith.constant 0 : i32
    %c0_i32_1 = arith.constant 0 : i32
    return %arg1, %c0_i32, %c0_i32_0 : i32, i32, i32
  }
  func.func @transform_4(%arg0: i32, %arg1: i32) -> (i32, i32, i32) {
    %c0_i32 = arith.constant 0 : i32
    %c0_i32_0 = arith.constant 0 : i32
    %c0_i32_1 = arith.constant 0 : i32
    return %arg0, %c0_i32, %c0_i32_0 : i32, i32, i32
  }
  func.func @transform_5(%arg0: i32, %arg1: i32) -> (i32, i32, i32) {
    %c0_i32 = arith.constant 0 : i32
    %c0_i32_0 = arith.constant 0 : i32
    %c0_i32_1 = arith.constant 0 : i32
    return %arg0, %c0_i32, %c0_i32_0 : i32, i32, i32
  }
  func.func @transform_6(%arg0: i32, %arg1: i32) -> (i32, i32) {
    %c0_i32 = arith.constant 0 : i32
    %c0_i32_0 = arith.constant 0 : i32
    %c0_i32_1 = arith.constant 0 : i32
    return %c0_i32, %c0_i32_0 : i32, i32
  }
  func.func @transform_7(%arg0: i32, %arg1: i32) -> (i32, i32) {
    %c0_i32 = arith.constant 0 : i32
    %c0_i32_0 = arith.constant 0 : i32
    %c0_i32_1 = arith.constant 0 : i32
    return %c0_i32, %c0_i32_0 : i32, i32
  }
  func.func @transform_8(%arg0: i32, %arg1: i32) -> (i32, i32) {
    %c0_i32 = arith.constant 0 : i32
    %c0_i32_0 = arith.constant 0 : i32
    %c0_i32_1 = arith.constant 0 : i32
    return %c0_i32, %c0_i32_0 : i32, i32
  }
  func.func @transform_9(%arg0: i32, %arg1: i32) -> (i32, i32) {
    %c0_i32 = arith.constant 0 : i32
    %c0_i32_0 = arith.constant 0 : i32
    %c0_i32_1 = arith.constant 0 : i32
    return %c0_i32, %c0_i32_0 : i32, i32
  }
  func.func @transform_10(%arg0: i32, %arg1: i32) -> (i32, i32) {
    %c0_i32 = arith.constant 0 : i32
    %c0_i32_0 = arith.constant 0 : i32
    %c0_i32_1 = arith.constant 0 : i32
    return %c0_i32, %c0_i32_0 : i32, i32
  }
  func.func @transform_11(%arg0: i32, %arg1: i32) -> (i32, i32) {
    %c0_i32 = arith.constant 0 : i32
    %c0_i32_0 = arith.constant 0 : i32
    %c0_i32_1 = arith.constant 0 : i32
    return %c0_i32, %c0_i32_0 : i32, i32
  }
  func.func @transform_12(%arg0: i32, %arg1: i32) -> (i32, i32) {
    %c0_i32 = arith.constant 0 : i32
    %c0_i32_0 = arith.constant 0 : i32
    %c0_i32_1 = arith.constant 0 : i32
    return %c0_i32, %c0_i32_0 : i32, i32
  }
  func.func @transform_13(%arg0: i32, %arg1: i32) -> (i32, i32) {
    %c0_i32 = arith.constant 0 : i32
    %c0_i32_0 = arith.constant 0 : i32
    %c0_i32_1 = arith.constant 0 : i32
    return %c0_i32, %c0_i32_0 : i32, i32
  }
  func.func @transform_14(%arg0: i32, %arg1: i32) -> (i32, i32) {
    %c0_i32 = arith.constant 0 : i32
    %c0_i32_0 = arith.constant 0 : i32
    %c0_i32_1 = arith.constant 0 : i32
    return %c0_i32, %c0_i32_0 : i32, i32
  }
  func.func @transform_15(%arg0: i32, %arg1: i32) -> (i32, i32) {
    %c0_i32 = arith.constant 0 : i32
    %c0_i32_0 = arith.constant 0 : i32
    %c0_i32_1 = arith.constant 0 : i32
    return %c0_i32, %c0_i32_0 : i32, i32
  }
  func.func @transform_16(%arg0: i32, %arg1: i32) -> (i32, i32, i32) {
    %c0_i32 = arith.constant 0 : i32
    %c0_i32_0 = arith.constant 0 : i32
    %c0_i32_1 = arith.constant 0 : i32
    return %arg0, %c0_i32, %c0_i32_0 : i32, i32, i32
  }
  func.func @transform_17(%arg0: i32, %arg1: i32) -> (i32, i32, i32) {
    %c0_i32 = arith.constant 0 : i32
    %c0_i32_0 = arith.constant 0 : i32
    %c0_i32_1 = arith.constant 0 : i32
    return %arg0, %c0_i32, %c0_i32_0 : i32, i32, i32
  }
}

</mosaic_0001>

<llo_original>
// kernel: universal_transformer_decoder_forward.1
$region0: #{universal_transformer_decoder_forward.1}
  #allocation0 [shape = 'u32[]', space=smem, size = 0x4, offset = 0x4, fixed_abs, tag = 'smem constant byte address 0x4 - core index']
  #allocation1 [shape = 'u32[144,128]{1,0:T(1,128)}', space=vmem, size = 0x12000, scoped, tag = 'internal scratch']
  #allocation2 [shape = 'f32[128,128]{1,0:T(8,128)}', space=vmem, size = 0x10000, scoped, tag = 'scratch operand']
  #allocation3 [shape = 'f32[128,128]{1,0:T(8,128)}', space=vmem, size = 0x10000, scoped, tag = 'scratch operand']
  #allocation4 [shape = 'f32[128,128]{1,0:T(8,128)}', space=vmem, size = 0x10000, scoped, tag = 'scratch operand']
  #allocation5 [shape = 'f32[128,128]{1,0:T(8,128)}', space=vmem, size = 0x10000, scoped, tag = 'scratch operand']
  %s0 = inlined_call_operand.hbm [shape: f32[2,128,128], index: 0, kind: input, shape index: {}]
  %s1 = inlined_call_operand.hbm [shape: f32[2,128,128], index: 1, kind: input, shape index: {}]
  %s2 = inlined_call_operand.hbm [shape: f32[128,128], index: 2, kind: input, shape index: {}]
  %s3 = inlined_call_operand.hbm [shape: f32[3,1,128], index: 3, kind: input, shape index: {}]
  %s4 = inlined_call_operand.hbm [shape: f32[2,1,128], index: 4, kind: input, shape index: {}]
  %s5 = inlined_call_operand.hbm [shape: f32[2,1,128], index: 5, kind: input, shape index: {}]
  %s6 = inlined_call_operand.hbm [shape: f32[128,384], index: 6, kind: input, shape index: {}]
  %s7 = inlined_call_operand.hbm [shape: f32[128,128], index: 7, kind: input, shape index: {}]
  %s8 = inlined_call_operand.hbm [shape: f32[128,128], index: 8, kind: input, shape index: {}]
  %s9 = inlined_call_operand.hbm [shape: f32[128,256], index: 9, kind: input, shape index: {}]
  %s10 = inlined_call_operand.hbm [shape: f32[128,128], index: 10, kind: input, shape index: {}]
  %s11 = inlined_call_operand.hbm [shape: f32[8,128], index: 11, kind: input, shape index: {}]
  %s12 = inlined_call_operand.hbm [shape: f32[128,256], index: 12, kind: input, shape index: {}]
  %s13 = inlined_call_operand.hbm [shape: f32[1,256], index: 13, kind: input, shape index: {}]
  %s14 = inlined_call_operand.hbm [shape: f32[256,128], index: 14, kind: input, shape index: {}]
  %s15 = inlined_call_operand.hbm [shape: f32[1,128], index: 15, kind: input, shape index: {}]
  %s16 = inlined_call_operand.hbm [shape: f32[2,128,128], index: 16, kind: output, shape index: {0}]
  %s17 = inlined_call_operand.hbm [shape: f32[2,128,128], index: 17, kind: output, shape index: {1}]
  %18 = xla_tuple %s16, %s17
  %s19 = sld [smem:[#allocation0]]
  $region177: #{universal_transformer_decoder_forward.1} parent=0
    _
  %s21 = ssub.s32 1, %s19
  %s22 = scalar_select 0, %s21, %s19
  $region1: #{universal_transformer_decoder_forward.1} parent=0
    #allocation6 [shape = 'u8[131072]{0}', space=vmem, size = 0x20000, scoped, tag = 'input window, operand 0']
    #allocation7 [shape = 's32[2]{0}', space=sflag, size = 0x8, scoped, tag = 'scoped memory for universal_transformer_decoder_forward.1']
    #allocation8 [shape = 's32[2]{0}', space=sflag, size = 0x8, scoped, tag = 'scoped memory for universal_transformer_decoder_forward.1']
    #allocation9 [shape = 'u8[131072]{0}', space=vmem, size = 0x20000, scoped, tag = 'input window, operand 1']
    #allocation10 [shape = 's32[2]{0}', space=sflag, size = 0x8, scoped, tag = 'scoped memory for universal_transformer_decoder_forward.1']
    #allocation11 [shape = 'u8[65536]{0}', space=vmem, size = 0x10000, scoped, tag = 'input window, operand 2, single buffered']
    #allocation12 [shape = 'u8[1024]{0}', space=vmem, size = 0x400, scoped, tag = 'input window, operand 3']
    #allocation13 [shape = 's32[2]{0}', space=sflag, size = 0x8, scoped, tag = 'scoped memory for universal_transformer_decoder_forward.1']
    #allocation14 [shape = 'u8[1024]{0}', space=vmem, size = 0x400, scoped, tag = 'input window, operand 4']
    #allocation15 [shape = 'u8[1024]{0}', space=vmem, size = 0x400, scoped, tag = 'input window, operand 5']
    #allocation16 [shape = 's32[2]{0}', space=sflag, size = 0x8, scoped, tag = 'scoped memory for universal_transformer_decoder_forward.1']
    #allocation17 [shape = 'u8[196608]{0}', space=vmem, size = 0x30000, scoped, tag = 'input window, operand 6, single buffered']
    #allocation18 [shape = 'u8[65536]{0}', space=vmem, size = 0x10000, scoped, tag = 'input window, operand 7, single buffered']
    #allocation19 [shape = 's32[1]{0}', space=sflag, size = 0x4, scoped, tag = 'scoped memory for universal_transformer_decoder_forward.1']
    #allocation20 [shape = 'u8[65536]{0}', space=vmem, size = 0x10000, scoped, tag = 'input window, operand 8, single buffered']
    #allocation21 [shape = 'u8[131072]{0}', space=vmem, size = 0x20000, scoped, tag = 'input window, operand 9, single buffered']
    #allocation22 [shape = 's32[1]{0}', space=sflag, size = 0x4, scoped, tag = 'scoped memory for universal_transformer_decoder_forward.1']
    #allocation23 [shape = 'u8[65536]{0}', space=vmem, size = 0x10000, scoped, tag = 'input window, operand 10, single buffered']
    #allocation24 [shape = 'u8[4096]{0}', space=vmem, size = 0x1000, scoped, tag = 'input window, operand 11, single buffered']
    #allocation25 [shape = 's32[1]{0}', space=sflag, size = 0x4, scoped, tag = 'scoped memory for universal_transformer_decoder_forward.1']
    #allocation26 [shape = 'u8[131072]{0}', space=vmem, size = 0x20000, scoped, tag = 'input window, operand 12, single buffered']
    #allocation27 [shape = 'u8[1024]{0}', space=vmem, size = 0x400, scoped, tag = 'input window, operand 13, single buffered']
    #allocation28 [shape = 's32[1]{0}', space=sflag, size = 0x4, scoped, tag = 'scoped memory for universal_transformer_decoder_forward.1']
    #allocation29 [shape = 'u8[131072]{0}', space=vmem, size = 0x20000, scoped, tag = 'input window, operand 14, single buffered']
    #allocation30 [shape = 'u8[512]{0}', space=vmem, size = 0x400, scoped, tag = 'input window, operand 15, single buffered']
    #allocation31 [shape = 's32[1]{0}', space=sflag, size = 0x4, scoped, tag = 'scoped memory for universal_transformer_decoder_forward.1']
    #allocation32 [shape = 'u8[131072]{0}', space=vmem, size = 0x20000, scoped, tag = 'output window, operand 0']
    #allocation33 [shape = 'u8[131072]{0}', space=vmem, size = 0x20000, scoped, tag = 'output window, operand 1']
    #allocation34 [shape = 's32[2]{0}', space=sflag, size = 0x8, scoped, tag = 'scoped memory for universal_transformer_decoder_forward.1']
    %23 = vsyncpa [#allocation7], 0
    %s24 = scalar_lea.sflag [#allocation7], 1
    %25 = vsyncpa %s24, 0
    %26 = vsyncpa [#allocation10], 0
    %s27 = scalar_lea.sflag [#allocation10], 1
    %28 = vsyncpa %s27, 0
    %29 = vsyncpa [#allocation13], 0
    %s30 = scalar_lea.sflag [#allocation13], 1
    %31 = vsyncpa %s30, 0
    %32 = vsyncpa [#allocation16], 0
    %s33 = scalar_lea.sflag [#allocation16], 1
    %34 = vsyncpa %s33, 0
    %35 = vsyncpa [#allocation19], 0
    %36 = vsyncpa [#allocation22], 0
    %37 = vsyncpa [#allocation25], 0
    %38 = vsyncpa [#allocation28], 0
    %39 = vsyncpa [#allocation31], 0
    %40 = vsyncpa [#allocation8], 0
    %s41 = scalar_lea.sflag [#allocation8], 1
    %42 = vsyncpa %s41, 0
    %43 = vsyncpa [#allocation34], 0
    %s44 = scalar_lea.sflag [#allocation34], 1
    %45 = vsyncpa %s44, 0
    loop: start=0, step=1, limit=8
    $region2: #{universal_transformer_decoder_forward.1} parent=1 // loop_pre_header
      _
    $region3: #{universal_transformer_decoder_forward.1} parent=1 // loop_header
      %s47 = sphi 0, %s51
      %p48 = scmp.ge.s32.totalorder %s47, 8
      %s54 = sphi 0, %s66
      %s55 = sphi 0, %s62
      %s56 = sphi 0, %s54
      %s57 = sphi 0, %s55
      %s58 = sphi 0, %s56
      %s59 = sphi 0, %s57
      %s69 = sphi 0, %s71
      %s72 = sphi 0, %s69
      %s73 = sphi 0, %s72
      %s89 = sphi 0, %s73
      %s95 = sphi 0, %s97
      %s98 = sphi 0, %s95
      %s99 = sphi 0, %s98
      %s115 = sphi 0, %s99
      %s119 = sphi 0, %s119
      %s121 = sphi 0, %s119
      %s122 = sphi 0, %s121
      %s136 = sphi 0, %s122
      %s142 = sphi 0, %s144
      %s145 = sphi 0, %s142
      %s146 = sphi 0, %s145
      %s162 = sphi 0, %s146
      %s168 = sphi 0, %s170
      %s171 = sphi 0, %s168
      %s172 = sphi 0, %s171
      %s188 = sphi 0, %s172
      %s194 = sphi 0, %s196
      %s197 = sphi 0, %s194
      %s198 = sphi 0, %s197
      %s214 = sphi 0, %s198
      %s218 = sphi 0, %s218
      %s220 = sphi 0, %s218
      %s221 = sphi 0, %s220
      %s235 = sphi 0, %s221
      %s239 = sphi 0, %s239
      %s241 = sphi 0, %s239
      %s242 = sphi 0, %s241
      %s256 = sphi 0, %s242
      %s260 = sphi 0, %s260
      %s262 = sphi 0, %s260
      %s263 = sphi 0, %s262
      %s277 = sphi 0, %s263
      %s281 = sphi 0, %s281
      %s283 = sphi 0, %s281
      %s284 = sphi 0, %s283
      %s298 = sphi 0, %s284
      %s302 = sphi 0, %s302
      %s304 = sphi 0, %s302
      %s305 = sphi 0, %s304
      %s319 = sphi 0, %s305
      %s323 = sphi 0, %s323
      %s325 = sphi 0, %s323
      %s326 = sphi 0, %s325
      %s340 = sphi 0, %s326
      %s344 = sphi 0, %s344
      %s346 = sphi 0, %s344
      %s347 = sphi 0, %s346
      %s361 = sphi 0, %s347
      %s365 = sphi 0, %s365
      %s367 = sphi 0, %s365
      %s368 = sphi 0, %s367
      %s382 = sphi 0, %s368
      %s386 = sphi 0, %s386
      %s388 = sphi 0, %s386
      %s389 = sphi 0, %s388
      %s403 = sphi 0, %s389
      %s407 = sphi 0, %s407
      %s409 = sphi 0, %s407
      %s410 = sphi 0, %s409
      %s424 = sphi 0, %s410
      %s430 = sphi 0, %s432
      %s433 = sphi 0, %s430
      %s434 = sphi 0, %s433
      %s450 = sphi 0, %s434
      %s456 = sphi 0, %s458
      %s459 = sphi 0, %s456
      %s460 = sphi 0, %s459
      %s476 = sphi 0, %s460
    $region4: #{universal_transformer_decoder_forward.1} parent=1 // loop_header_branch
      %50 = sbr.rel (%p48) target = $region8
    $region5: #{universal_transformer_decoder_forward.1} parent=1 // loop_body
      %s52 = ssub.s32 %s47, 1
      %s53 = ssub.s32 %s47, 2
      %s60 = sadd.s32 1, %s55
      %p61 = scmp.ge.s32.totalorder %s60, 3
      %s62 = scalar_select %p61, 0, %s60
      %s63 = sadd.s32 1, %s54
      %s64 = scalar_select %p61, %s63, %s54
      %p65 = scmp.ge.s32.totalorder %s64, 2
      %s66 = scalar_select %p65, 0, %s64
      %s67 = ssub.s32 %s54, %s66
      %p68 = scmp.eq.s32.totalorder %s67, 0
      %s70 = sadd.s32 %s69, 1
      %s71 = scalar_select %p68, %s69, %s70
      %p74 = pneg %p68
      %p75 = scmp.eq.s32.totalorder %s47, 5
      %p76 = por %p74, %p75
      %p77 = scmp.ne.s32.totalorder %s69, %s72
      %p78 = scmp.eq.s32.totalorder %s47, 0
      %p79 = por %p77, %p78
      %p80 = scmp.ne.s32.totalorder %s69, %s72
      %p81 = scmp.eq.s32.totalorder %s52, 5
      %p82 = por %p80, %p81
      %p83 = scmp.ne.s32.totalorder %s72, %s73
      %p84 = scmp.eq.s32.totalorder %s52, 0
      %p85 = por %p83, %p84
      %p86 = scmp.ne.s32.totalorder %s72, %s73
      %p87 = scmp.eq.s32.totalorder %s53, 5
      %p88 = por %p86, %p87
      %p90 = scmp.ne.s32.totalorder %s73, %s89
      %p91 = scmp.eq.s32.totalorder %s53, 0
      %p92 = por %p90, %p91
      %s93 = ssub.s32 %s54, %s66
      %p94 = scmp.eq.s32.totalorder %s93, 0
      %s96 = sadd.s32 %s95, 1
      %s97 = scalar_select %p94, %s95, %s96
      %p100 = pneg %p94
      %p101 = scmp.eq.s32.totalorder %s47, 5
      %p102 = por %p100, %p101
      %p103 = scmp.ne.s32.totalorder %s95, %s98
      %p104 = scmp.eq.s32.totalorder %s47, 0
      %p105 = por %p103, %p104
      %p106 = scmp.ne.s32.totalorder %s95, %s98
      %p107 = scmp.eq.s32.totalorder %s52, 5
      %p108 = por %p106, %p107
      %p109 = scmp.ne.s32.totalorder %s98, %s99
      %p110 = scmp.eq.s32.totalorder %s52, 0
      %p111 = por %p109, %p110
      %p112 = scmp.ne.s32.totalorder %s98, %s99
      %p113 = scmp.eq.s32.totalorder %s53, 5
      %p114 = por %p112, %p113
      %p116 = scmp.ne.s32.totalorder %s99, %s115
      %p117 = scmp.eq.s32.totalorder %s53, 0
      %p118 = por %p116, %p117
      %s120 = sadd.s32 %s119, 1
      %p123 = scmp.eq.s32.totalorder %s47, 5
      %p124 = scmp.ne.s32.totalorder %s119, %s121
      %p125 = scmp.eq.s32.totalorder %s47, 0
      %p126 = por %p124, %p125
      %p127 = scmp.ne.s32.totalorder %s119, %s121
      %p128 = scmp.eq.s32.totalorder %s52, 5
      %p129 = por %p127, %p128
      %p130 = scmp.ne.s32.totalorder %s121, %s122
      %p131 = scmp.eq.s32.totalorder %s52, 0
      %p132 = por %p130, %p131
      %p133 = scmp.ne.s32.totalorder %s121, %s122
      %p134 = scmp.eq.s32.totalorder %s53, 5
      %p135 = por %p133, %p134
      %p137 = scmp.ne.s32.totalorder %s122, %s136
      %p138 = scmp.eq.s32.totalorder %s53, 0
      %p139 = por %p137, %p138
      %s140 = ssub.s32 %s55, %s62
      %p141 = scmp.eq.s32.totalorder %s140, 0
      %s143 = sadd.s32 %s142, 1
      %s144 = scalar_select %p141, %s142, %s143
      %p147 = pneg %p141
      %p148 = scmp.eq.s32.totalorder %s47, 5
      %p149 = por %p147, %p148
      %p150 = scmp.ne.s32.totalorder %s142, %s145
      %p151 = scmp.eq.s32.totalorder %s47, 0
      %p152 = por %p150, %p151
      %p153 = scmp.ne.s32.totalorder %s142, %s145
      %p154 = scmp.eq.s32.totalorder %s52, 5
      %p155 = por %p153, %p154
      %p156 = scmp.ne.s32.totalorder %s145, %s146
      %p157 = scmp.eq.s32.totalorder %s52, 0
      %p158 = por %p156, %p157
      %p159 = scmp.ne.s32.totalorder %s145, %s146
      %p160 = scmp.eq.s32.totalorder %s53, 5
      %p161 = por %p159, %p160
      %p163 = scmp.ne.s32.totalorder %s146, %s162
      %p164 = scmp.eq.s32.totalorder %s53, 0
      %p165 = por %p163, %p164
      %s166 = ssub.s32 %s54, %s66
      %p167 = scmp.eq.s32.totalorder %s166, 0
      %s169 = sadd.s32 %s168, 1
      %s170 = scalar_select %p167, %s168, %s169
      %p173 = pneg %p167
      %p174 = scmp.eq.s32.totalorder %s47, 5
      %p175 = por %p173, %p174
      %p176 = scmp.ne.s32.totalorder %s168, %s171
      %p177 = scmp.eq.s32.totalorder %s47, 0
      %p178 = por %p176, %p177
      %p179 = scmp.ne.s32.totalorder %s168, %s171
      %p180 = scmp.eq.s32.totalorder %s52, 5
      %p181 = por %p179, %p180
      %p182 = scmp.ne.s32.totalorder %s171, %s172
      %p183 = scmp.eq.s32.totalorder %s52, 0
      %p184 = por %p182, %p183
      %p185 = scmp.ne.s32.totalorder %s171, %s172
      %p186 = scmp.eq.s32.totalorder %s53, 5
      %p187 = por %p185, %p186
      %p189 = scmp.ne.s32.totalorder %s172, %s188
      %p190 = scmp.eq.s32.totalorder %s53, 0
      %p191 = por %p189, %p190
      %s192 = ssub.s32 %s54, %s66
      %p193 = scmp.eq.s32.totalorder %s192, 0
      %s195 = sadd.s32 %s194, 1
      %s196 = scalar_select %p193, %s194, %s195
      %p199 = pneg %p193
      %p200 = scmp.eq.s32.totalorder %s47, 5
      %p201 = por %p199, %p200
      %p202 = scmp.ne.s32.totalorder %s194, %s197
      %p203 = scmp.eq.s32.totalorder %s47, 0
      %p204 = por %p202, %p203
      %p205 = scmp.ne.s32.totalorder %s194, %s197
      %p206 = scmp.eq.s32.totalorder %s52, 5
      %p207 = por %p205, %p206
      %p208 = scmp.ne.s32.totalorder %s197, %s198
      %p209 = scmp.eq.s32.totalorder %s52, 0
      %p210 = por %p208, %p209
      %p211 = scmp.ne.s32.totalorder %s197, %s198
      %p212 = scmp.eq.s32.totalorder %s53, 5
      %p213 = por %p211, %p212
      %p215 = scmp.ne.s32.totalorder %s198, %s214
      %p216 = scmp.eq.s32.totalorder %s53, 0
      %p217 = por %p215, %p216
      %s219 = sadd.s32 %s218, 1
      %p222 = scmp.eq.s32.totalorder %s47, 5
      %p223 = scmp.ne.s32.totalorder %s218, %s220
      %p224 = scmp.eq.s32.totalorder %s47, 0
      %p225 = por %p223, %p224
      %p226 = scmp.ne.s32.totalorder %s218, %s220
      %p227 = scmp.eq.s32.totalorder %s52, 5
      %p228 = por %p226, %p227
      %p229 = scmp.ne.s32.totalorder %s220, %s221
      %p230 = scmp.eq.s32.totalorder %s52, 0
      %p231 = por %p229, %p230
      %p232 = scmp.ne.s32.totalorder %s220, %s221
      %p233 = scmp.eq.s32.totalorder %s53, 5
      %p234 = por %p232, %p233
      %p236 = scmp.ne.s32.totalorder %s221, %s235
      %p237 = scmp.eq.s32.totalorder %s53, 0
      %p238 = por %p236, %p237
      %s240 = sadd.s32 %s239, 1
      %p243 = scmp.eq.s32.totalorder %s47, 5
      %p244 = scmp.ne.s32.totalorder %s239, %s241
      %p245 = scmp.eq.s32.totalorder %s47, 0
      %p246 = por %p244, %p245
      %p247 = scmp.ne.s32.totalorder %s239, %s241
      %p248 = scmp.eq.s32.totalorder %s52, 5
      %p249 = por %p247, %p248
      %p250 = scmp.ne.s32.totalorder %s241, %s242
      %p251 = scmp.eq.s32.totalorder %s52, 0
      %p252 = por %p250, %p251
      %p253 = scmp.ne.s32.totalorder %s241, %s242
      %p254 = scmp.eq.s32.totalorder %s53, 5
      %p255 = por %p253, %p254
      %p257 = scmp.ne.s32.totalorder %s242, %s256
      %p258 = scmp.eq.s32.totalorder %s53, 0
      %p259 = por %p257, %p258
      %s261 = sadd.s32 %s260, 1
      %p264 = scmp.eq.s32.totalorder %s47, 5
      %p265 = scmp.ne.s32.totalorder %s260, %s262
      %p266 = scmp.eq.s32.totalorder %s47, 0
      %p267 = por %p265, %p266
      %p268 = scmp.ne.s32.totalorder %s260, %s262
      %p269 = scmp.eq.s32.totalorder %s52, 5
      %p270 = por %p268, %p269
      %p271 = scmp.ne.s32.totalorder %s262, %s263
      %p272 = scmp.eq.s32.totalorder %s52, 0
      %p273 = por %p271, %p272
      %p274 = scmp.ne.s32.totalorder %s262, %s263
      %p275 = scmp.eq.s32.totalorder %s53, 5
      %p276 = por %p274, %p275
      %p278 = scmp.ne.s32.totalorder %s263, %s277
      %p279 = scmp.eq.s32.totalorder %s53, 0
      %p280 = por %p278, %p279
      %s282 = sadd.s32 %s281, 1
      %p285 = scmp.eq.s32.totalorder %s47, 5
      %p286 = scmp.ne.s32.totalorder %s281, %s283
      %p287 = scmp.eq.s32.totalorder %s47, 0
      %p288 = por %p286, %p287
      %p289 = scmp.ne.s32.totalorder %s281, %s283
      %p290 = scmp.eq.s32.totalorder %s52, 5
      %p291 = por %p289, %p290
      %p292 = scmp.ne.s32.totalorder %s283, %s284
      %p293 = scmp.eq.s32.totalorder %s52, 0
      %p294 = por %p292, %p293
      %p295 = scmp.ne.s32.totalorder %s283, %s284
      %p296 = scmp.eq.s32.totalorder %s53, 5
      %p297 = por %p295, %p296
      %p299 = scmp.ne.s32.totalorder %s284, %s298
      %p300 = scmp.eq.s32.totalorder %s53, 0
      %p301 = por %p299, %p300
      %s303 = sadd.s32 %s302, 1
      %p306 = scmp.eq.s32.totalorder %s47, 5
      %p307 = scmp.ne.s32.totalorder %s302, %s304
      %p308 = scmp.eq.s32.totalorder %s47, 0
      %p309 = por %p307, %p308
      %p310 = scmp.ne.s32.totalorder %s302, %s304
      %p311 = scmp.eq.s32.totalorder %s52, 5
      %p312 = por %p310, %p311
      %p313 = scmp.ne.s32.totalorder %s304, %s305
      %p314 = scmp.eq.s32.totalorder %s52, 0
      %p315 = por %p313, %p314
      %p316 = scmp.ne.s32.totalorder %s304, %s305
      %p317 = scmp.eq.s32.totalorder %s53, 5
      %p318 = por %p316, %p317
      %p320 = scmp.ne.s32.totalorder %s305, %s319
      %p321 = scmp.eq.s32.totalorder %s53, 0
      %p322 = por %p320, %p321
      %s324 = sadd.s32 %s323, 1
      %p327 = scmp.eq.s32.totalorder %s47, 5
      %p328 = scmp.ne.s32.totalorder %s323, %s325
      %p329 = scmp.eq.s32.totalorder %s47, 0
      %p330 = por %p328, %p329
      %p331 = scmp.ne.s32.totalorder %s323, %s325
      %p332 = scmp.eq.s32.totalorder %s52, 5
      %p333 = por %p331, %p332
      %p334 = scmp.ne.s32.totalorder %s325, %s326
      %p335 = scmp.eq.s32.totalorder %s52, 0
      %p336 = por %p334, %p335
      %p337 = scmp.ne.s32.totalorder %s325, %s326
      %p338 = scmp.eq.s32.totalorder %s53, 5
      %p339 = por %p337, %p338
      %p341 = scmp.ne.s32.totalorder %s326, %s340
      %p342 = scmp.eq.s32.totalorder %s53, 0
      %p343 = por %p341, %p342
      %s345 = sadd.s32 %s344, 1
      %p348 = scmp.eq.s32.totalorder %s47, 5
      %p349 = scmp.ne.s32.totalorder %s344, %s346
      %p350 = scmp.eq.s32.totalorder %s47, 0
      %p351 = por %p349, %p350
      %p352 = scmp.ne.s32.totalorder %s344, %s346
      %p353 = scmp.eq.s32.totalorder %s52, 5
      %p354 = por %p352, %p353
      %p355 = scmp.ne.s32.totalorder %s346, %s347
      %p356 = scmp.eq.s32.totalorder %s52, 0
      %p357 = por %p355, %p356
      %p358 = scmp.ne.s32.totalorder %s346, %s347
      %p359 = scmp.eq.s32.totalorder %s53, 5
      %p360 = por %p358, %p359
      %p362 = scmp.ne.s32.totalorder %s347, %s361
      %p363 = scmp.eq.s32.totalorder %s53, 0
      %p364 = por %p362, %p363
      %s366 = sadd.s32 %s365, 1
      %p369 = scmp.eq.s32.totalorder %s47, 5
      %p370 = scmp.ne.s32.totalorder %s365, %s367
      %p371 = scmp.eq.s32.totalorder %s47, 0
      %p372 = por %p370, %p371
      %p373 = scmp.ne.s32.totalorder %s365, %s367
      %p374 = scmp.eq.s32.totalorder %s52, 5
      %p375 = por %p373, %p374
      %p376 = scmp.ne.s32.totalorder %s367, %s368
      %p377 = scmp.eq.s32.totalorder %s52, 0
      %p378 = por %p376, %p377
      %p379 = scmp.ne.s32.totalorder %s367, %s368
      %p380 = scmp.eq.s32.totalorder %s53, 5
      %p381 = por %p379, %p380
      %p383 = scmp.ne.s32.totalorder %s368, %s382
      %p384 = scmp.eq.s32.totalorder %s53, 0
      %p385 = por %p383, %p384
      %s387 = sadd.s32 %s386, 1
      %p390 = scmp.eq.s32.totalorder %s47, 5
      %p391 = scmp.ne.s32.totalorder %s386, %s388
      %p392 = scmp.eq.s32.totalorder %s47, 0
      %p393 = por %p391, %p392
      %p394 = scmp.ne.s32.totalorder %s386, %s388
      %p395 = scmp.eq.s32.totalorder %s52, 5
      %p396 = por %p394, %p395
      %p397 = scmp.ne.s32.totalorder %s388, %s389
      %p398 = scmp.eq.s32.totalorder %s52, 0
      %p399 = por %p397, %p398
      %p400 = scmp.ne.s32.totalorder %s388, %s389
      %p401 = scmp.eq.s32.totalorder %s53, 5
      %p402 = por %p400, %p401
      %p404 = scmp.ne.s32.totalorder %s389, %s403
      %p405 = scmp.eq.s32.totalorder %s53, 0
      %p406 = por %p404, %p405
      %s408 = sadd.s32 %s407, 1
      %p411 = scmp.eq.s32.totalorder %s47, 5
      %p412 = scmp.ne.s32.totalorder %s407, %s409
      %p413 = scmp.eq.s32.totalorder %s47, 0
      %p414 = por %p412, %p413
      %p415 = scmp.ne.s32.totalorder %s407, %s409
      %p416 = scmp.eq.s32.totalorder %s52, 5
      %p417 = por %p415, %p416
      %p418 = scmp.ne.s32.totalorder %s409, %s410
      %p419 = scmp.eq.s32.totalorder %s52, 0
      %p420 = por %p418, %p419
      %p421 = scmp.ne.s32.totalorder %s409, %s410
      %p422 = scmp.eq.s32.totalorder %s53, 5
      %p423 = por %p421, %p422
      %p425 = scmp.ne.s32.totalorder %s410, %s424
      %p426 = scmp.eq.s32.totalorder %s53, 0
      %p427 = por %p425, %p426
      %s428 = ssub.s32 %s54, %s66
      %p429 = scmp.eq.s32.totalorder %s428, 0
      %s431 = sadd.s32 %s430, 1
      %s432 = scalar_select %p429, %s430, %s431
      %p435 = pneg %p429
      %p436 = scmp.eq.s32.totalorder %s47, 5
      %p437 = por %p435, %p436
      %p438 = scmp.ne.s32.totalorder %s430, %s433
      %p439 = scmp.eq.s32.totalorder %s47, 0
      %p440 = por %p438, %p439
      %p441 = scmp.ne.s32.totalorder %s430, %s433
      %p442 = scmp.eq.s32.totalorder %s52, 5
      %p443 = por %p441, %p442
      %p444 = scmp.ne.s32.totalorder %s433, %s434
      %p445 = scmp.eq.s32.totalorder %s52, 0
      %p446 = por %p444, %p445
      %p447 = scmp.ne.s32.totalorder %s433, %s434
      %p448 = scmp.eq.s32.totalorder %s53, 5
      %p449 = por %p447, %p448
      %p451 = scmp.ne.s32.totalorder %s434, %s450
      %p452 = scmp.eq.s32.totalorder %s53, 0
      %p453 = por %p451, %p452
      %s454 = ssub.s32 %s54, %s66
      %p455 = scmp.eq.s32.totalorder %s454, 0
      %s457 = sadd.s32 %s456, 1
      %s458 = scalar_select %p455, %s456, %s457
      %p461 = pneg %p455
      %p462 = scmp.eq.s32.totalorder %s47, 5
      %p463 = por %p461, %p462
      %p464 = scmp.ne.s32.totalorder %s456, %s459
      %p465 = scmp.eq.s32.totalorder %s47, 0
      %p466 = por %p464, %p465
      %p467 = scmp.ne.s32.totalorder %s456, %s459
      %p468 = scmp.eq.s32.totalorder %s52, 5
      %p469 = por %p467, %p468
      %p470 = scmp.ne.s32.totalorder %s459, %s460
      %p471 = scmp.eq.s32.totalorder %s52, 0
      %p472 = por %p470, %p471
      %p473 = scmp.ne.s32.totalorder %s459, %s460
      %p474 = scmp.eq.s32.totalorder %s53, 5
      %p475 = por %p473, %p474
      %p477 = scmp.ne.s32.totalorder %s460, %s476
      %p478 = scmp.eq.s32.totalorder %s53, 0
      %p479 = por %p477, %p478
      %p480 = scmp.le.s32.totalorder 1, %s47
      %p481 = scmp.lt.s32.totalorder %s47, 7
      %p482 = pnand %p480, %p481
      %p483 = pneg %p482
      // Predicated region
      $region9: #{universal_transformer_decoder_forward.1} parent=5 // pred_check
        _
      $region10: #{universal_transformer_decoder_forward.1} parent=5 // pred_check_branch
        %485 = sbr.rel (%p482) target = $region12
      $region11: #{universal_transformer_decoder_forward.1} parent=5 // pred_region
        %s486 = ssub.s32 %s47, 1
        // Predicated region
        $region13: #{universal_transformer_decoder_forward.1} parent=11 // pred_check
          %p487 = pneg %p132
        $region14: #{universal_transformer_decoder_forward.1} parent=11 // pred_check_branch
          %489 = sbr.rel (%p487) target = $region16
        $region15: #{universal_transformer_decoder_forward.1} parent=11 // pred_region
          %s491 = ssub.s32 2048, 2048
          %492 = vsyncadd [#allocation10], %s491
          %s493 = sshll.u32 [#allocation11], 4
          %s494 = int_to_ptr.vmem [resolvable:$true] %s493
          %499 = dma.hbm_to_vmem [thread:$0]  %s2, 2048, %s494, [#allocation10], 128, 128, 8
        $region16: #{universal_transformer_decoder_forward.1} parent=11 // pred_fallthru
          _
        // Predicated region
        $region17: #{universal_transformer_decoder_forward.1} parent=11 // pred_check
          %p500 = pneg %p231
        $region18: #{universal_transformer_decoder_forward.1} parent=11 // pred_check_branch
          %502 = sbr.rel (%p500) target = $region20
        $region19: #{universal_transformer_decoder_forward.1} parent=11 // pred_region
          %s504 = ssub.s32 6144, 6144
          %505 = vsyncadd [#allocation16], %s504
          %s506 = sshll.u32 [#allocation17], 4
          %s507 = int_to_ptr.vmem [resolvable:$true] %s506
          %512 = dma.hbm_to_vmem [thread:$0]  %s6, 6144, %s507, [#allocation16], 384, 384, 24
        $region20: #{universal_transformer_decoder_forward.1} parent=11 // pred_fallthru
          _
        // Predicated region
        $region21: #{universal_transformer_decoder_forward.1} parent=11 // pred_check
          %p513 = pneg %p252
        $region22: #{universal_transformer_decoder_forward.1} parent=11 // pred_check_branch
          %515 = sbr.rel (%p513) target = $region24
        $region23: #{universal_transformer_decoder_forward.1} parent=11 // pred_region
          %s517 = ssub.s32 2048, 2048
          %518 = vsyncadd [#allocation19], %s517
          %s519 = sshll.u32 [#allocation18], 4
          %s520 = int_to_ptr.vmem [resolvable:$true] %s519
          %525 = dma.hbm_to_vmem [thread:$0]  %s7, 2048, %s520, [#allocation19], 128, 128, 8
        $region24: #{universal_transformer_decoder_forward.1} parent=11 // pred_fallthru
          _
        // Predicated region
        $region25: #{universal_transformer_decoder_forward.1} parent=11 // pred_check
          %p526 = pneg %p273
        $region26: #{universal_transformer_decoder_forward.1} parent=11 // pred_check_branch
          %528 = sbr.rel (%p526) target = $region28
        $region27: #{universal_transformer_decoder_forward.1} parent=11 // pred_region
          %s530 = ssub.s32 2048, 2048
          %531 = vsyncadd [#allocation19], %s530
          %s532 = sshll.u32 [#allocation20], 4
          %s533 = int_to_ptr.vmem [resolvable:$true] %s532
          %538 = dma.hbm_to_vmem [thread:$0]  %s8, 2048, %s533, [#allocation19], 128, 128, 8
        $region28: #{universal_transformer_decoder_forward.1} parent=11 // pred_fallthru
          _
        // Predicated region
        $region29: #{universal_transformer_decoder_forward.1} parent=11 // pred_check
          %p539 = pneg %p294
        $region30: #{universal_transformer_decoder_forward.1} parent=11 // pred_check_branch
          %541 = sbr.rel (%p539) target = $region32
        $region31: #{universal_transformer_decoder_forward.1} parent=11 // pred_region
          %s543 = ssub.s32 4096, 4096
          %544 = vsyncadd [#allocation22], %s543
          %s545 = sshll.u32 [#allocation21], 4
          %s546 = int_to_ptr.vmem [resolvable:$true] %s545
          %551 = dma.hbm_to_vmem [thread:$0]  %s9, 4096, %s546, [#allocation22], 256, 256, 16
        $region32: #{universal_transformer_decoder_forward.1} parent=11 // pred_fallthru
          _
        // Predicated region
        $region33: #{universal_transformer_decoder_forward.1} parent=11 // pred_check
          %p552 = pneg %p315
        $region34: #{universal_transformer_decoder_forward.1} parent=11 // pred_check_branch
          %554 = sbr.rel (%p552) target = $region36
        $region35: #{universal_transformer_decoder_forward.1} parent=11 // pred_region
          %s556 = ssub.s32 2048, 2048
          %557 = vsyncadd [#allocation22], %s556
          %s558 = sshll.u32 [#allocation23], 4
          %s559 = int_to_ptr.vmem [resolvable:$true] %s558
          %564 = dma.hbm_to_vmem [thread:$0]  %s10, 2048, %s559, [#allocation22], 128, 128, 8
        $region36: #{universal_transformer_decoder_forward.1} parent=11 // pred_fallthru
          _
        // Predicated region
        $region37: #{universal_transformer_decoder_forward.1} parent=11 // pred_check
          %p565 = pneg %p336
        $region38: #{universal_transformer_decoder_forward.1} parent=11 // pred_check_branch
          %567 = sbr.rel (%p565) target = $region40
        $region39: #{universal_transformer_decoder_forward.1} parent=11 // pred_region
          %s569 = ssub.s32 128, 128
          %570 = vsyncadd [#allocation25], %s569
          %s572 = sshll.u32 [#allocation24], 4
          %s573 = int_to_ptr.vmem [resolvable:$true] %s572
          %575 = dma.hbm_to_vmem [thread:$0]  %s11, 128, %s573, [#allocation25]
        $region40: #{universal_transformer_decoder_forward.1} parent=11 // pred_fallthru
          _
        // Predicated region
        $region41: #{universal_transformer_decoder_forward.1} parent=11 // pred_check
          %p576 = pneg %p357
        $region42: #{universal_transformer_decoder_forward.1} parent=11 // pred_check_branch
          %578 = sbr.rel (%p576) target = $region44
        $region43: #{universal_transformer_decoder_forward.1} parent=11 // pred_region
          %s580 = ssub.s32 4096, 4096
          %581 = vsyncadd [#allocation25], %s580
          %s582 = sshll.u32 [#allocation26], 4
          %s583 = int_to_ptr.vmem [resolvable:$true] %s582
          %588 = dma.hbm_to_vmem [thread:$0]  %s12, 4096, %s583, [#allocation25], 256, 256, 16
        $region44: #{universal_transformer_decoder_forward.1} parent=11 // pred_fallthru
          _
        // Predicated region
        $region45: #{universal_transformer_decoder_forward.1} parent=11 // pred_check
          %p589 = pneg %p378
        $region46: #{universal_transformer_decoder_forward.1} parent=11 // pred_check_branch
          %591 = sbr.rel (%p589) target = $region48
        $region47: #{universal_transformer_decoder_forward.1} parent=11 // pred_region
          %s593 = ssub.s32 32, 32
          %594 = vsyncadd [#allocation28], %s593
          %s596 = sshll.u32 [#allocation27], 4
          %s597 = int_to_ptr.vmem [resolvable:$true] %s596
          %599 = dma.hbm_to_vmem [thread:$0]  %s13, 32, %s597, [#allocation28]
        $region48: #{universal_transformer_decoder_forward.1} parent=11 // pred_fallthru
          _
        // Predicated region
        $region49: #{universal_transformer_decoder_forward.1} parent=11 // pred_check
          %p600 = pneg %p399
        $region50: #{universal_transformer_decoder_forward.1} parent=11 // pred_check_branch
          %602 = sbr.rel (%p600) target = $region52
        $region51: #{universal_transformer_decoder_forward.1} parent=11 // pred_region
          %s604 = ssub.s32 4096, 4096
          %605 = vsyncadd [#allocation28], %s604
          %s606 = sshll.u32 [#allocation29], 4
          %s607 = int_to_ptr.vmem [resolvable:$true] %s606
          %612 = dma.hbm_to_vmem [thread:$0]  %s14, 4096, %s607, [#allocation28], 128, 128, 8
        $region52: #{universal_transformer_decoder_forward.1} parent=11 // pred_fallthru
          _
        // Predicated region
        $region53: #{universal_transformer_decoder_forward.1} parent=11 // pred_check
          %p613 = pneg %p420
        $region54: #{universal_transformer_decoder_forward.1} parent=11 // pred_check_branch
          %615 = sbr.rel (%p613) target = $region56
        $region55: #{universal_transformer_decoder_forward.1} parent=11 // pred_region
          %s617 = ssub.s32 16, 16
          %618 = vsyncadd [#allocation31], %s617
          %s620 = sshll.u32 [#allocation30], 4
          %s621 = int_to_ptr.vmem [resolvable:$true] %s620
          %623 = dma.hbm_to_vmem [thread:$0]  %s15, 16, %s621, [#allocation31]
        $region56: #{universal_transformer_decoder_forward.1} parent=11 // pred_fallthru
          _
      $region12: #{universal_transformer_decoder_forward.1} parent=5 // pred_fallthru
        _
      %p624 = scmp.lt.s32.totalorder %s47, 6
      // Predicated region
      $region57: #{universal_transformer_decoder_forward.1} parent=5 // pred_check
        %p625 = pneg %p624
      $region58: #{universal_transformer_decoder_forward.1} parent=5 // pred_check_branch
        %627 = sbr.rel (%p625) target = $region60
      $region59: #{universal_transformer_decoder_forward.1} parent=5 // pred_region
        // Predicated region
        $region61: #{universal_transformer_decoder_forward.1} parent=59 // pred_check
          %p628 = pneg %p79
        $region62: #{universal_transformer_decoder_forward.1} parent=59 // pred_check_branch
          %630 = sbr.rel (%p628) target = $region64
        $region63: #{universal_transformer_decoder_forward.1} parent=59 // pred_region
          %s631 = sand.u32 %s69, 1
          %s632 = scalar_lea.sflag [#allocation7], %s631
          %s633 = sand.u32 %s69, 1
          %s634 = smul.addr %s633, 128
          %s635 = scalar_lea.vmem [#allocation6], %s634
          %s637 = ssub.s32 2048, 2048
          %638 = vsyncadd %s632, %s637
          %s639 = smul.addr %s54, 16
          %s640 = smul.addr %s639, 128
          %s641 = scalar_lea.hbm %s0, %s640
          %s642 = sshll.u32 %s635, 4
          %s643 = int_to_ptr.vmem [resolvable:$true] %s642
          %648 = dma.hbm_to_vmem [thread:$0]  %s641, 2048, %s643, %s632, 128, 128, 8
        $region64: #{universal_transformer_decoder_forward.1} parent=59 // pred_fallthru
          _
        // Predicated region
        $region65: #{universal_transformer_decoder_forward.1} parent=59 // pred_check
          %p649 = pneg %p105
        $region66: #{universal_transformer_decoder_forward.1} parent=59 // pred_check_branch
          %651 = sbr.rel (%p649) target = $region68
        $region67: #{universal_transformer_decoder_forward.1} parent=59 // pred_region
          %s652 = sand.u32 %s47, 1
          %s653 = scalar_lea.sflag [#allocation10], %s652
          %s654 = sand.u32 %s95, 1
          %s655 = smul.addr %s654, 128
          %s656 = scalar_lea.vmem [#allocation9], %s655
          %s658 = ssub.s32 2048, 2048
          %659 = vsyncadd %s653, %s658
          %s660 = smul.addr %s54, 16
          %s661 = smul.addr %s660, 128
          %s662 = scalar_lea.hbm %s1, %s661
          %s663 = sshll.u32 %s656, 4
          %s664 = int_to_ptr.vmem [resolvable:$true] %s663
          %669 = dma.hbm_to_vmem [thread:$0]  %s662, 2048, %s664, %s653, 128, 128, 8
        $region68: #{universal_transformer_decoder_forward.1} parent=59 // pred_fallthru
          _
        // Predicated region
        $region69: #{universal_transformer_decoder_forward.1} parent=59 // pred_check
          %p670 = pneg %p152
        $region70: #{universal_transformer_decoder_forward.1} parent=59 // pred_check_branch
          %672 = sbr.rel (%p670) target = $region72
        $region71: #{universal_transformer_decoder_forward.1} parent=59 // pred_region
          %s673 = sand.u32 %s47, 1
          %s674 = scalar_lea.sflag [#allocation13], %s673
          %s675 = sand.u32 %s142, 1
          %s676 = scalar_lea.vmem [#allocation12], %s675
          %s678 = ssub.s32 16, 16
          %679 = vsyncadd %s674, %s678
          %s680 = smul.addr %s55, 16
          %s681 = scalar_lea.hbm %s3, %s680
          %s683 = sshll.u32 %s676, 4
          %s684 = int_to_ptr.vmem [resolvable:$true] %s683
          %686 = dma.hbm_to_vmem [thread:$0]  %s681, 16, %s684, %s674
        $region72: #{universal_transformer_decoder_forward.1} parent=59 // pred_fallthru
          _
        // Predicated region
        $region73: #{universal_transformer_decoder_forward.1} parent=59 // pred_check
          %p687 = pneg %p178
        $region74: #{universal_transformer_decoder_forward.1} parent=59 // pred_check_branch
          %689 = sbr.rel (%p687) target = $region76
        $region75: #{universal_transformer_decoder_forward.1} parent=59 // pred_region
          %s690 = sand.u32 %s47, 1
          %s691 = scalar_lea.sflag [#allocation13], %s690
          %s692 = sand.u32 %s168, 1
          %s693 = scalar_lea.vmem [#allocation14], %s692
          %s695 = ssub.s32 16, 16
          %696 = vsyncadd %s691, %s695
          %s697 = smul.addr %s54, 16
          %s698 = scalar_lea.hbm %s4, %s697
          %s700 = sshll.u32 %s693, 4
          %s701 = int_to_ptr.vmem [resolvable:$true] %s700
          %703 = dma.hbm_to_vmem [thread:$0]  %s698, 16, %s701, %s691
        $region76: #{universal_transformer_decoder_forward.1} parent=59 // pred_fallthru
          _
        // Predicated region
        $region77: #{universal_transformer_decoder_forward.1} parent=59 // pred_check
          %p704 = pneg %p204
        $region78: #{universal_transformer_decoder_forward.1} parent=59 // pred_check_branch
          %706 = sbr.rel (%p704) target = $region80
        $region79: #{universal_transformer_decoder_forward.1} parent=59 // pred_region
          %s707 = sand.u32 %s47, 1
          %s708 = scalar_lea.sflag [#allocation16], %s707
          %s709 = sand.u32 %s194, 1
          %s710 = scalar_lea.vmem [#allocation15], %s709
          %s712 = ssub.s32 16, 16
          %713 = vsyncadd %s708, %s712
          %s714 = smul.addr %s54, 16
          %s715 = scalar_lea.hbm %s5, %s714
          %s717 = sshll.u32 %s710, 4
          %s718 = int_to_ptr.vmem [resolvable:$true] %s717
          %720 = dma.hbm_to_vmem [thread:$0]  %s715, 16, %s718, %s708
        $region80: #{universal_transformer_decoder_forward.1} parent=59 // pred_fallthru
          _
      $region60: #{universal_transformer_decoder_forward.1} parent=5 // pred_fallthru
        _
      %p721 = scmp.le.s32.totalorder 1, %s47
      %p722 = scmp.lt.s32.totalorder %s47, 7
      %p723 = pnand %p721, %p722
      %p724 = pneg %p723
      // Predicated region
      $region81: #{universal_transformer_decoder_forward.1} parent=5 // pred_check
        _
      $region82: #{universal_transformer_decoder_forward.1} parent=5 // pred_check_branch
        %726 = sbr.rel (%p723) target = $region84
      $region83: #{universal_transformer_decoder_forward.1} parent=5 // pred_region
        %s727 = ssub.s32 %s47, 1
        %s728 = sand.u32 %s72, 1
        %s729 = scalar_lea.sflag [#allocation7], %s728
        %s730 = sand.u32 %s72, 1
        %s731 = smul.addr %s730, 128
        %s732 = scalar_lea.vmem [#allocation6], %s731
        // Predicated region
        $region85: #{universal_transformer_decoder_forward.1} parent=83 // pred_check
          %p733 = pneg %p85
        $region86: #{universal_transformer_decoder_forward.1} parent=83 // pred_check_branch
          %735 = sbr.rel (%p733) target = $region88
        $region87: #{universal_transformer_decoder_forward.1} parent=83 // pred_region
          %736 = dma.done %s729, 2048
        $region88: #{universal_transformer_decoder_forward.1} parent=83 // pred_fallthru
          _
        %s737 = sand.u32 %s52, 1
        %s738 = scalar_lea.sflag [#allocation10], %s737
        %s739 = sand.u32 %s98, 1
        %s740 = smul.addr %s739, 128
        %s741 = scalar_lea.vmem [#allocation9], %s740
        // Predicated region
        $region89: #{universal_transformer_decoder_forward.1} parent=83 // pred_check
          %p742 = pneg %p111
        $region90: #{universal_transformer_decoder_forward.1} parent=83 // pred_check_branch
          %744 = sbr.rel (%p742) target = $region92
        $region91: #{universal_transformer_decoder_forward.1} parent=83 // pred_region
          %745 = dma.done %s738, 2048
        $region92: #{universal_transformer_decoder_forward.1} parent=83 // pred_fallthru
          _
        // Predicated region
        $region93: #{universal_transformer_decoder_forward.1} parent=83 // pred_check
          %p746 = pneg %p132
        $region94: #{universal_transformer_decoder_forward.1} parent=83 // pred_check_branch
          %748 = sbr.rel (%p746) target = $region96
        $region95: #{universal_transformer_decoder_forward.1} parent=83 // pred_region
          %749 = dma.done [#allocation10], 2048
        $region96: #{universal_transformer_decoder_forward.1} parent=83 // pred_fallthru
          _
        %s750 = sand.u32 %s52, 1
        %s751 = scalar_lea.sflag [#allocation13], %s750
        %s752 = sand.u32 %s145, 1
        %s753 = scalar_lea.vmem [#allocation12], %s752
        // Predicated region
        $region97: #{universal_transformer_decoder_forward.1} parent=83 // pred_check
          %p754 = pneg %p158
        $region98: #{universal_transformer_decoder_forward.1} parent=83 // pred_check_branch
          %756 = sbr.rel (%p754) target = $region100
        $region99: #{universal_transformer_decoder_forward.1} parent=83 // pred_region
          %757 = dma.done %s751, 16
        $region100: #{universal_transformer_decoder_forward.1} parent=83 // pred_fallthru
          _
        %s758 = sand.u32 %s52, 1
        %s759 = scalar_lea.sflag [#allocation13], %s758
        %s760 = sand.u32 %s171, 1
        %s761 = scalar_lea.vmem [#allocation14], %s760
        // Predicated region
        $region101: #{universal_transformer_decoder_forward.1} parent=83 // pred_check
          %p762 = pneg %p184
        $region102: #{universal_transformer_decoder_forward.1} parent=83 // pred_check_branch
          %764 = sbr.rel (%p762) target = $region104
        $region103: #{universal_transformer_decoder_forward.1} parent=83 // pred_region
          %765 = dma.done %s759, 16
        $region104: #{universal_transformer_decoder_forward.1} parent=83 // pred_fallthru
          _
        %s766 = sand.u32 %s52, 1
        %s767 = scalar_lea.sflag [#allocation16], %s766
        %s768 = sand.u32 %s197, 1
        %s769 = scalar_lea.vmem [#allocation15], %s768
        // Predicated region
        $region105: #{universal_transformer_decoder_forward.1} parent=83 // pred_check
          %p770 = pneg %p210
        $region106: #{universal_transformer_decoder_forward.1} parent=83 // pred_check_branch
          %772 = sbr.rel (%p770) target = $region108
        $region107: #{universal_transformer_decoder_forward.1} parent=83 // pred_region
          %773 = dma.done %s767, 16
        $region108: #{universal_transformer_decoder_forward.1} parent=83 // pred_fallthru
          _
        // Predicated region
        $region109: #{universal_transformer_decoder_forward.1} parent=83 // pred_check
          %p774 = pneg %p231
        $region110: #{universal_transformer_decoder_forward.1} parent=83 // pred_check_branch
          %776 = sbr.rel (%p774) target = $region112
        $region111: #{universal_transformer_decoder_forward.1} parent=83 // pred_region
          %777 = dma.done [#allocation16], 6144
        $region112: #{universal_transformer_decoder_forward.1} parent=83 // pred_fallthru
          _
        // Predicated region
        $region113: #{universal_transformer_decoder_forward.1} parent=83 // pred_check
          %p778 = pneg %p252
        $region114: #{universal_transformer_decoder_forward.1} parent=83 // pred_check_branch
          %780 = sbr.rel (%p778) target = $region116
        $region115: #{universal_transformer_decoder_forward.1} parent=83 // pred_region
          %781 = dma.done [#allocation19], 2048
        $region116: #{universal_transformer_decoder_forward.1} parent=83 // pred_fallthru
          _
        // Predicated region
        $region117: #{universal_transformer_decoder_forward.1} parent=83 // pred_check
          %p782 = pneg %p273
        $region118: #{universal_transformer_decoder_forward.1} parent=83 // pred_check_branch
          %784 = sbr.rel (%p782) target = $region120
        $region119: #{universal_transformer_decoder_forward.1} parent=83 // pred_region
          %785 = dma.done [#allocation19], 2048
        $region120: #{universal_transformer_decoder_forward.1} parent=83 // pred_fallthru
          _
        // Predicated region
        $region121: #{universal_transformer_decoder_forward.1} parent=83 // pred_check
          %p786 = pneg %p294
        $region122: #{universal_transformer_decoder_forward.1} parent=83 // pred_check_branch
          %788 = sbr.rel (%p786) target = $region124
        $region123: #{universal_transformer_decoder_forward.1} parent=83 // pred_region
          %789 = dma.done [#allocation22], 4096
        $region124: #{universal_transformer_decoder_forward.1} parent=83 // pred_fallthru
          _
        // Predicated region
        $region125: #{universal_transformer_decoder_forward.1} parent=83 // pred_check
          %p790 = pneg %p315
        $region126: #{universal_transformer_decoder_forward.1} parent=83 // pred_check_branch
          %792 = sbr.rel (%p790) target = $region128
        $region127: #{universal_transformer_decoder_forward.1} parent=83 // pred_region
          %793 = dma.done [#allocation22], 2048
        $region128: #{universal_transformer_decoder_forward.1} parent=83 // pred_fallthru
          _
        // Predicated region
        $region129: #{universal_transformer_decoder_forward.1} parent=83 // pred_check
          %p794 = pneg %p336
        $region130: #{universal_transformer_decoder_forward.1} parent=83 // pred_check_branch
          %796 = sbr.rel (%p794) target = $region132
        $region131: #{universal_transformer_decoder_forward.1} parent=83 // pred_region
          %797 = dma.done [#allocation25], 128
        $region132: #{universal_transformer_decoder_forward.1} parent=83 // pred_fallthru
          _
        // Predicated region
        $region133: #{universal_transformer_decoder_forward.1} parent=83 // pred_check
          %p798 = pneg %p357
        $region134: #{universal_transformer_decoder_forward.1} parent=83 // pred_check_branch
          %800 = sbr.rel (%p798) target = $region136
        $region135: #{universal_transformer_decoder_forward.1} parent=83 // pred_region
          %801 = dma.done [#allocation25], 4096
        $region136: #{universal_transformer_decoder_forward.1} parent=83 // pred_fallthru
          _
        // Predicated region
        $region137: #{universal_transformer_decoder_forward.1} parent=83 // pred_check
          %p802 = pneg %p378
        $region138: #{universal_transformer_decoder_forward.1} parent=83 // pred_check_branch
          %804 = sbr.rel (%p802) target = $region140
        $region139: #{universal_transformer_decoder_forward.1} parent=83 // pred_region
          %805 = dma.done [#allocation28], 32
        $region140: #{universal_transformer_decoder_forward.1} parent=83 // pred_fallthru
          _
        // Predicated region
        $region141: #{universal_transformer_decoder_forward.1} parent=83 // pred_check
          %p806 = pneg %p399
        $region142: #{universal_transformer_decoder_forward.1} parent=83 // pred_check_branch
          %808 = sbr.rel (%p806) target = $region144
        $region143: #{universal_transformer_decoder_forward.1} parent=83 // pred_region
          %809 = dma.done [#allocation28], 4096
        $region144: #{universal_transformer_decoder_forward.1} parent=83 // pred_fallthru
          _
        // Predicated region
        $region145: #{universal_transformer_decoder_forward.1} parent=83 // pred_check
          %p810 = pneg %p420
        $region146: #{universal_transformer_decoder_forward.1} parent=83 // pred_check_branch
          %812 = sbr.rel (%p810) target = $region148
        $region147: #{universal_transformer_decoder_forward.1} parent=83 // pred_region
          %813 = dma.done [#allocation31], 16
        $region148: #{universal_transformer_decoder_forward.1} parent=83 // pred_fallthru
          _
        %s814 = sand.u32 %s72, 1
        %s815 = scalar_lea.sflag [#allocation7], %s814
        %s816 = sand.u32 %s72, 1
        %s817 = smul.addr %s816, 128
        %s818 = scalar_lea.vmem [#allocation6], %s817
        %p819 = pneg %p85
        %p820 = pneg %p82
        %s821 = sand.u32 %s52, 1
        %s822 = scalar_lea.sflag [#allocation10], %s821
        %s823 = sand.u32 %s98, 1
        %s824 = smul.addr %s823, 128
        %s825 = scalar_lea.vmem [#allocation9], %s824
        %p826 = pneg %p111
        %p827 = pneg %p108
        %p828 = pneg %p132
        %p829 = pneg %p129
        %s830 = sand.u32 %s52, 1
        %s831 = scalar_lea.sflag [#allocation13], %s830
        %s832 = sand.u32 %s145, 1
        %s833 = scalar_lea.vmem [#allocation12], %s832
        %p834 = pneg %p158
        %p835 = pneg %p155
        %s836 = sand.u32 %s52, 1
        %s837 = scalar_lea.sflag [#allocation13], %s836
        %s838 = sand.u32 %s171, 1
        %s839 = scalar_lea.vmem [#allocation14], %s838
        %p840 = pneg %p184
        %p841 = pneg %p181
        %s842 = sand.u32 %s52, 1
        %s843 = scalar_lea.sflag [#allocation16], %s842
        %s844 = sand.u32 %s197, 1
        %s845 = scalar_lea.vmem [#allocation15], %s844
        %p846 = pneg %p210
        %p847 = pneg %p207
        %p848 = pneg %p231
        %p849 = pneg %p228
        %p850 = pneg %p252
        %p851 = pneg %p249
        %p852 = pneg %p273
        %p853 = pneg %p270
        %p854 = pneg %p294
        %p855 = pneg %p291
        %p856 = pneg %p315
        %p857 = pneg %p312
        %p858 = pneg %p336
        %p859 = pneg %p333
        %p860 = pneg %p357
        %p861 = pneg %p354
        %p862 = pneg %p378
        %p863 = pneg %p375
        %p864 = pneg %p399
        %p865 = pneg %p396
        %p866 = pneg %p420
        %p867 = pneg %p417
        %p868 = pneg %p446
        %p869 = pneg %p443
        %s870 = sand.u32 %s433, 1
        %s871 = scalar_lea.sflag [#allocation8], %s870
        %s872 = sand.u32 %s433, 1
        %s873 = smul.addr %s872, 128
        %s874 = scalar_lea.vmem [#allocation32], %s873
        %p875 = pneg %p472
        %p876 = pneg %p469
        %s877 = sand.u32 %s459, 1
        %s878 = scalar_lea.sflag [#allocation34], %s877
        %s879 = sand.u32 %s459, 1
        %s880 = smul.addr %s879, 128
        %s881 = scalar_lea.vmem [#allocation33], %s880
        %p882 = scmp.eq.s32.totalorder %s57, 0
        // Predicated region
        $region149: #{universal_transformer_decoder_forward.1} parent=83 // pred_check
          %p883 = pneg %p882
        $region150: #{universal_transformer_decoder_forward.1} parent=83 // pred_check_branch
          %885 = sbr.rel (%p883) target = $region152
        $region151: #{universal_transformer_decoder_forward.1} parent=83 // pred_region
          %v886 = vld [vmem:[%s732] sm:$0xff]
          %v887 = vld [vmem:[%s732 + $0x8] sm:$0xff]
          %v888 = vld [vmem:[%s732 + $0x10] sm:$0xff]
          %v889 = vld [vmem:[%s732 + $0x18] sm:$0xff]
          %v890 = vld [vmem:[%s732 + $0x20] sm:$0xff]
          %v891 = vld [vmem:[%s732 + $0x28] sm:$0xff]
          %v892 = vld [vmem:[%s732 + $0x30] sm:$0xff]
          %v893 = vld [vmem:[%s732 + $0x38] sm:$0xff]
          %v894 = vld [vmem:[%s732 + $0x40] sm:$0xff]
          %v895 = vld [vmem:[%s732 + $0x48] sm:$0xff]
          %v896 = vld [vmem:[%s732 + $0x50] sm:$0xff]
          %v897 = vld [vmem:[%s732 + $0x58] sm:$0xff]
          %v898 = vld [vmem:[%s732 + $0x60] sm:$0xff]
          %v899 = vld [vmem:[%s732 + $0x68] sm:$0xff]
          %v900 = vld [vmem:[%s732 + $0x70] sm:$0xff]
          %v901 = vld [vmem:[%s732 + $0x78] sm:$0xff]
          %902 = vst [vmem:[#allocation2] sm:$0xff] %v886
          %903 = vst [vmem:[#allocation2 + $0x8] sm:$0xff] %v887
          %904 = vst [vmem:[#allocation2 + $0x10] sm:$0xff] %v888
          %905 = vst [vmem:[#allocation2 + $0x18] sm:$0xff] %v889
          %906 = vst [vmem:[#allocation2 + $0x20] sm:$0xff] %v890
          %907 = vst [vmem:[#allocation2 + $0x28] sm:$0xff] %v891
          %908 = vst [vmem:[#allocation2 + $0x30] sm:$0xff] %v892
          %909 = vst [vmem:[#allocation2 + $0x38] sm:$0xff] %v893
          %910 = vst [vmem:[#allocation2 + $0x40] sm:$0xff] %v894
          %911 = vst [vmem:[#allocation2 + $0x48] sm:$0xff] %v895
          %912 = vst [vmem:[#allocation2 + $0x50] sm:$0xff] %v896
          %913 = vst [vmem:[#allocation2 + $0x58] sm:$0xff] %v897
          %914 = vst [vmem:[#allocation2 + $0x60] sm:$0xff] %v898
          %915 = vst [vmem:[#allocation2 + $0x68] sm:$0xff] %v899
          %916 = vst [vmem:[#allocation2 + $0x70] sm:$0xff] %v900
          %917 = vst [vmem:[#allocation2 + $0x78] sm:$0xff] %v901
          %v918 = vld [vmem:[%s741] sm:$0xff]
          %v919 = vld [vmem:[%s741 + $0x8] sm:$0xff]
          %v920 = vld [vmem:[%s741 + $0x10] sm:$0xff]
          %v921 = vld [vmem:[%s741 + $0x18] sm:$0xff]
          %v922 = vld [vmem:[%s741 + $0x20] sm:$0xff]
          %v923 = vld [vmem:[%s741 + $0x28] sm:$0xff]
          %v924 = vld [vmem:[%s741 + $0x30] sm:$0xff]
          %v925 = vld [vmem:[%s741 + $0x38] sm:$0xff]
          %v926 = vld [vmem:[%s741 + $0x40] sm:$0xff]
          %v927 = vld [vmem:[%s741 + $0x48] sm:$0xff]
          %v928 = vld [vmem:[%s741 + $0x50] sm:$0xff]
          %v929 = vld [vmem:[%s741 + $0x58] sm:$0xff]
          %v930 = vld [vmem:[%s741 + $0x60] sm:$0xff]
          %v931 = vld [vmem:[%s741 + $0x68] sm:$0xff]
          %v932 = vld [vmem:[%s741 + $0x70] sm:$0xff]
          %v933 = vld [vmem:[%s741 + $0x78] sm:$0xff]
          %v934 = vld [vmem:[#allocation21] sm:$0xff]
          %v935 = vld [vmem:[#allocation21 + $0x8] sm:$0xff]
          %v936 = vld [vmem:[#allocation21 + $0x10] sm:$0xff]
          %v937 = vld [vmem:[#allocation21 + $0x18] sm:$0xff]
          %v938 = vld [vmem:[#allocation21 + $0x20] sm:$0xff]
          %v939 = vld [vmem:[#allocation21 + $0x28] sm:$0xff]
          %v940 = vld [vmem:[#allocation21 + $0x30] sm:$0xff]
          %v941 = vld [vmem:[#allocation21 + $0x38] sm:$0xff]
          %v942 = vld [vmem:[#allocation21 + $0x40] sm:$0xff]
          %v943 = vld [vmem:[#allocation21 + $0x48] sm:$0xff]
          %v944 = vld [vmem:[#allocation21 + $0x50] sm:$0xff]
          %v945 = vld [vmem:[#allocation21 + $0x58] sm:$0xff]
          %v946 = vld [vmem:[#allocation21 + $0x60] sm:$0xff]
          %v947 = vld [vmem:[#allocation21 + $0x68] sm:$0xff]
          %v948 = vld [vmem:[#allocation21 + $0x70] sm:$0xff]
          %v949 = vld [vmem:[#allocation21 + $0x78] sm:$0xff]
          %v950 = vld [vmem:[#allocation21 + $0x80] sm:$0xff]
          %v951 = vld [vmem:[#allocation21 + $0x88] sm:$0xff]
          %v952 = vld [vmem:[#allocation21 + $0x90] sm:$0xff]
          %v953 = vld [vmem:[#allocation21 + $0x98] sm:$0xff]
          %v954 = vld [vmem:[#allocation21 + $0xa0] sm:$0xff]
          %v955 = vld [vmem:[#allocation21 + $0xa8] sm:$0xff]
          %v956 = vld [vmem:[#allocation21 + $0xb0] sm:$0xff]
          %v957 = vld [vmem:[#allocation21 + $0xb8] sm:$0xff]
          %v958 = vld [vmem:[#allocation21 + $0xc0] sm:$0xff]
          %v959 = vld [vmem:[#allocation21 + $0xc8] sm:$0xff]
          %v960 = vld [vmem:[#allocation21 + $0xd0] sm:$0xff]
          %v961 = vld [vmem:[#allocation21 + $0xd8] sm:$0xff]
          %v962 = vld [vmem:[#allocation21 + $0xe0] sm:$0xff]
          %v963 = vld [vmem:[#allocation21 + $0xe8] sm:$0xff]
          %v964 = vld [vmem:[#allocation21 + $0xf0] sm:$0xff]
          %v965 = vld [vmem:[#allocation21 + $0xf8] sm:$0xff]
          %966 = vmatprep.subr.mxu0 %v935
          %967 = vmatpush1.msra.mxu0 %v934
          %968 = vmatprep.subr.mxu0 %v937
          %969 = vmatpush1.msra.mxu0 %v936
          %970 = vmatprep.subr.mxu0 %v939
          %971 = vmatpush1.msra.mxu0 %v938
          %972 = vmatprep.subr.mxu0 %v941
          %973 = vmatpush1.msra.mxu0 %v940
          %974 = vmatprep.subr.mxu0 %v943
          %975 = vmatpush1.msra.mxu0 %v942
          %976 = vmatprep.subr.mxu0 %v945
          %977 = vmatpush1.msra.mxu0 %v944
          %978 = vmatprep.subr.mxu0 %v947
          %979 = vmatpush1.msra.mxu0 %v946
          %980 = vmatprep.subr.mxu0 %v949
          %981 = vmatpush1.msra.mxu0 %v948
          %982 = vmatprep.subr.mxu0 %v951
          %983 = vmatpush1.msra.mxu0 %v950
          %984 = vmatprep.subr.mxu0 %v953
          %985 = vmatpush1.msra.mxu0 %v952
          %986 = vmatprep.subr.mxu0 %v955
          %987 = vmatpush1.msra.mxu0 %v954
          %988 = vmatprep.subr.mxu0 %v957
          %989 = vmatpush1.msra.mxu0 %v956
          %990 = vmatprep.subr.mxu0 %v959
          %991 = vmatpush1.msra.mxu0 %v958
          %992 = vmatprep.subr.mxu0 %v961
          %993 = vmatpush1.msra.mxu0 %v960
          %994 = vmatprep.subr.mxu0 %v963
          %995 = vmatpush1.msra.mxu0 %v962
          %996 = vmatprep.subr.mxu0 %v965
          %997 = vmatpush1.msra.mxu0 %v964
          %998 = vmatprep.subr.mxu0 0.0
          %999 = vmatpush1.msra.mxu0 0.0
          %1000 = vmatprep.subr.mxu0 0.0
          %1001 = vmatpush1.msra.mxu0 0.0
          %1002 = vmatprep.subr.mxu0 0.0
          %1003 = vmatpush1.msra.mxu0 0.0
          %1004 = vmatprep.subr.mxu0 0.0
          %1005 = vmatpush1.msra.mxu0 0.0
          %1006 = vmatprep.subr.mxu0 0.0
          %1007 = vmatpush1.msra.mxu0 0.0
          %1008 = vmatprep.subr.mxu0 0.0
          %1009 = vmatpush1.msra.mxu0 0.0
          %1010 = vmatprep.subr.mxu0 0.0
          %1011 = vmatpush1.msra.mxu0 0.0
          %1012 = vmatprep.subr.mxu0 0.0
          %1013 = vmatpush1.msra.mxu0 0.0
          %1014 = vmatprep.subr.mxu0 0.0
          %1015 = vmatpush1.msra.mxu0 0.0
          %1016 = vmatprep.subr.mxu0 0.0
          %1017 = vmatpush1.msra.mxu0 0.0
          %1018 = vmatprep.subr.mxu0 0.0
          %1019 = vmatpush1.msra.mxu0 0.0
          %1020 = vmatprep.subr.mxu0 0.0
          %1021 = vmatpush1.msra.mxu0 0.0
          %1022 = vmatprep.subr.mxu0 0.0
          %1023 = vmatpush1.msra.mxu0 0.0
          %1024 = vmatprep.subr.mxu0 0.0
          %1025 = vmatpush1.msra.mxu0 0.0
          %1026 = vmatprep.subr.mxu0 0.0
          %1027 = vmatpush1.msra.mxu0 0.0
          %1028 = vmatprep.subr.mxu0 0.0
          %1029 = vmatpush1.msra.mxu0 0.0
          %1030 = vmatprep.mubr.f32.mxu0 0.0
          %1031 = vmatmul.mubr.f32.gmra.mrb[0].mxu0 %v918
          %v1032 = vpop.f32.mrb[0].mxu0
          %v1033 = vadd.f32 0.0, %v1032
          %v1034 = vpop.f32.mrb[0].mxu0
          %v1035 = vadd.f32 0.0, %v1034
          %1036 = vmatprep.mubr.f32.mxu0 0.0
          %1037 = vmatmul.mubr.f32.gmra.mrb[0].mxu0 %v919
          %v1038 = vpop.f32.mrb[0].mxu0
          %v1039 = vadd.f32 0.0, %v1038
          %v1040 = vpop.f32.mrb[0].mxu0
          %v1041 = vadd.f32 0.0, %v1040
          %1042 = vmatprep.mubr.f32.mxu0 0.0
          %1043 = vmatmul.mubr.f32.gmra.mrb[0].mxu0 %v920
          %v1044 = vpop.f32.mrb[0].mxu0
          %v1045 = vadd.f32 0.0, %v1044
          %v1046 = vpop.f32.mrb[0].mxu0
          %v1047 = vadd.f32 0.0, %v1046
          %1048 = vmatprep.mubr.f32.mxu0 0.0
          %1049 = vmatmul.mubr.f32.gmra.mrb[0].mxu0 %v921
          %v1050 = vpop.f32.mrb[0].mxu0
          %v1051 = vadd.f32 0.0, %v1050
          %v1052 = vpop.f32.mrb[0].mxu0
          %v1053 = vadd.f32 0.0, %v1052
          %1054 = vmatprep.mubr.f32.mxu0 0.0
          %1055 = vmatmul.mubr.f32.gmra.mrb[0].mxu0 %v922
          %v1056 = vpop.f32.mrb[0].mxu0
          %v1057 = vadd.f32 0.0, %v1056
          %v1058 = vpop.f32.mrb[0].mxu0
          %v1059 = vadd.f32 0.0, %v1058
          %1060 = vmatprep.mubr.f32.mxu0 0.0
          %1061 = vmatmul.mubr.f32.gmra.mrb[0].mxu0 %v923
          %v1062 = vpop.f32.mrb[0].mxu0
          %v1063 = vadd.f32 0.0, %v1062
          %v1064 = vpop.f32.mrb[0].mxu0
          %v1065 = vadd.f32 0.0, %v1064
          %1066 = vmatprep.mubr.f32.mxu0 0.0
          %1067 = vmatmul.mubr.f32.gmra.mrb[0].mxu0 %v924
          %v1068 = vpop.f32.mrb[0].mxu0
          %v1069 = vadd.f32 0.0, %v1068
          %v1070 = vpop.f32.mrb[0].mxu0
          %v1071 = vadd.f32 0.0, %v1070
          %1072 = vmatprep.mubr.f32.mxu0 0.0
          %1073 = vmatmul.mubr.f32.gmra.mrb[0].mxu0 %v925
          %v1074 = vpop.f32.mrb[0].mxu0
          %v1075 = vadd.f32 0.0, %v1074
          %v1076 = vpop.f32.mrb[0].mxu0
          %v1077 = vadd.f32 0.0, %v1076
          %1078 = vmatprep.mubr.f32.mxu0 0.0
          %1079 = vmatmul.mubr.f32.gmra.mrb[0].mxu0 %v926
          %v1080 = vpop.f32.mrb[0].mxu0
          %v1081 = vadd.f32 0.0, %v1080
          %v1082 = vpop.f32.mrb[0].mxu0
          %v1083 = vadd.f32 0.0, %v1082
          %1084 = vmatprep.mubr.f32.mxu0 0.0
          %1085 = vmatmul.mubr.f32.gmra.mrb[0].mxu0 %v927
          %v1086 = vpop.f32.mrb[0].mxu0
          %v1087 = vadd.f32 0.0, %v1086
          %v1088 = vpop.f32.mrb[0].mxu0
          %v1089 = vadd.f32 0.0, %v1088
          %1090 = vmatprep.mubr.f32.mxu0 0.0
          %1091 = vmatmul.mubr.f32.gmra.mrb[0].mxu0 %v928
          %v1092 = vpop.f32.mrb[0].mxu0
          %v1093 = vadd.f32 0.0, %v1092
          %v1094 = vpop.f32.mrb[0].mxu0
          %v1095 = vadd.f32 0.0, %v1094
          %1096 = vmatprep.mubr.f32.mxu0 0.0
          %1097 = vmatmul.mubr.f32.gmra.mrb[0].mxu0 %v929
          %v1098 = vpop.f32.mrb[0].mxu0
          %v1099 = vadd.f32 0.0, %v1098
          %v1100 = vpop.f32.mrb[0].mxu0
          %v1101 = vadd.f32 0.0, %v1100
          %1102 = vmatprep.mubr.f32.mxu0 0.0
          %1103 = vmatmul.mubr.f32.gmra.mrb[0].mxu0 %v930
          %v1104 = vpop.f32.mrb[0].mxu0
          %v1105 = vadd.f32 0.0, %v1104
          %v1106 = vpop.f32.mrb[0].mxu0
          %v1107 = vadd.f32 0.0, %v1106
          %1108 = vmatprep.mubr.f32.mxu0 0.0
          %1109 = vmatmul.mubr.f32.gmra.mrb[0].mxu0 %v931
          %v1110 = vpop.f32.mrb[0].mxu0
          %v1111 = vadd.f32 0.0, %v1110
          %v1112 = vpop.f32.mrb[0].mxu0
          %v1113 = vadd.f32 0.0, %v1112
          %1114 = vmatprep.mubr.f32.mxu0 0.0
          %1115 = vmatmul.mubr.f32.gmra.mrb[0].mxu0 %v932
          %v1116 = vpop.f32.mrb[0].mxu0
          %v1117 = vadd.f32 0.0, %v1116
          %v1118 = vpop.f32.mrb[0].mxu0
          %v1119 = vadd.f32 0.0, %v1118
          %1120 = vmatprep.mubr.f32.mxu0 0.0
          %1121 = vmatmul.mubr.f32.gmra.mrb[0].mxu0 %v933
          %v1122 = vpop.f32.mrb[0].mxu0
          %v1123 = vadd.f32 0.0, %v1122
          %v1124 = vpop.f32.mrb[0].mxu0
          %v1125 = vadd.f32 0.0, %v1124
          %1126 = vdwg.mxu0
          %1127 = vst [vmem:[#allocation3] sm:$0xff] %v1033
          %1128 = vst [vmem:[#allocation3 + $0x8] sm:$0xff] %v1039
          %1129 = vst [vmem:[#allocation3 + $0x10] sm:$0xff] %v1045
          %1130 = vst [vmem:[#allocation3 + $0x18] sm:$0xff] %v1051
          %1131 = vst [vmem:[#allocation3 + $0x20] sm:$0xff] %v1057
          %1132 = vst [vmem:[#allocation3 + $0x28] sm:$0xff] %v1063
          %1133 = vst [vmem:[#allocation3 + $0x30] sm:$0xff] %v1069
          %1134 = vst [vmem:[#allocation3 + $0x38] sm:$0xff] %v1075
          %1135 = vst [vmem:[#allocation3 + $0x40] sm:$0xff] %v1081
          %1136 = vst [vmem:[#allocation3 + $0x48] sm:$0xff] %v1087
          %1137 = vst [vmem:[#allocation3 + $0x50] sm:$0xff] %v1093
          %1138 = vst [vmem:[#allocation3 + $0x58] sm:$0xff] %v1099
          %1139 = vst [vmem:[#allocation3 + $0x60] sm:$0xff] %v1105
          %1140 = vst [vmem:[#allocation3 + $0x68] sm:$0xff] %v1111
          %1141 = vst [vmem:[#allocation3 + $0x70] sm:$0xff] %v1117
          %1142 = vst [vmem:[#allocation3 + $0x78] sm:$0xff] %v1123
          %1143 = vst [vmem:[#allocation4] sm:$0xff] %v1035
          %1144 = vst [vmem:[#allocation4 + $0x8] sm:$0xff] %v1041
          %1145 = vst [vmem:[#allocation4 + $0x10] sm:$0xff] %v1047
          %1146 = vst [vmem:[#allocation4 + $0x18] sm:$0xff] %v1053
          %1147 = vst [vmem:[#allocation4 + $0x20] sm:$0xff] %v1059
          %1148 = vst [vmem:[#allocation4 + $0x28] sm:$0xff] %v1065
          %1149 = vst [vmem:[#allocation4 + $0x30] sm:$0xff] %v1071
          %1150 = vst [vmem:[#allocation4 + $0x38] sm:$0xff] %v1077
          %1151 = vst [vmem:[#allocation4 + $0x40] sm:$0xff] %v1083
          %1152 = vst [vmem:[#allocation4 + $0x48] sm:$0xff] %v1089
          %1153 = vst [vmem:[#allocation4 + $0x50] sm:$0xff] %v1095
          %1154 = vst [vmem:[#allocation4 + $0x58] sm:$0xff] %v1101
          %1155 = vst [vmem:[#allocation4 + $0x60] sm:$0xff] %v1107
          %1156 = vst [vmem:[#allocation4 + $0x68] sm:$0xff] %v1113
          %1157 = vst [vmem:[#allocation4 + $0x70] sm:$0xff] %v1119
          %1158 = vst [vmem:[#allocation4 + $0x78] sm:$0xff] %v1125
          %v1159 = vlaneseq
          %v1160 = vshrl.u32 %v1159, 7
          %v1161 = vadd.s32 %v1160, 8
          %v1162 = vadd.s32 %v1160, 16
          %v1163 = vadd.s32 %v1160, 24
          %v1164 = vadd.s32 %v1160, 32
          %v1165 = vadd.s32 %v1160, 40
          %v1166 = vadd.s32 %v1160, 48
          %v1167 = vadd.s32 %v1160, 56
          %v1168 = vadd.s32 %v1160, 64
          %v1169 = vadd.s32 %v1160, 72
          %v1170 = vadd.s32 %v1160, 80
          %v1171 = vadd.s32 %v1160, 88
          %v1172 = vadd.s32 %v1160, 96
          %v1173 = vadd.s32 %v1160, 104
          %v1174 = vadd.s32 %v1160, 112
          %v1175 = vadd.s32 %v1160, 120
          %v1176 = vlaneseq
          %v1177 = vand.u32 %v1176, 127
          %vm1178 = vcmp.gt.s32.totalorder %v1177, %v1160
          %vm1179 = vcmp.gt.s32.totalorder %v1177, %v1161
          %vm1180 = vcmp.gt.s32.totalorder %v1177, %v1162
          %vm1181 = vcmp.gt.s32.totalorder %v1177, %v1163
          %vm1182 = vcmp.gt.s32.totalorder %v1177, %v1164
          %vm1183 = vcmp.gt.s32.totalorder %v1177, %v1165
          %vm1184 = vcmp.gt.s32.totalorder %v1177, %v1166
          %vm1185 = vcmp.gt.s32.totalorder %v1177, %v1167
          %vm1186 = vcmp.gt.s32.totalorder %v1177, %v1168
          %vm1187 = vcmp.gt.s32.totalorder %v1177, %v1169
          %vm1188 = vcmp.gt.s32.totalorder %v1177, %v1170
          %vm1189 = vcmp.gt.s32.totalorder %v1177, %v1171
          %vm1190 = vcmp.gt.s32.totalorder %v1177, %v1172
          %vm1191 = vcmp.gt.s32.totalorder %v1177, %v1173
          %vm1192 = vcmp.gt.s32.totalorder %v1177, %v1174
          %vm1193 = vcmp.gt.s32.totalorder %v1177, %v1175
          %v1194 = vsel %vm1178, -1e+09, 0.0
          %v1195 = vsel %vm1179, -1e+09, 0.0
          %v1196 = vsel %vm1180, -1e+09, 0.0
          %v1197 = vsel %vm1181, -1e+09, 0.0
          %v1198 = vsel %vm1182, -1e+09, 0.0
          %v1199 = vsel %vm1183, -1e+09, 0.0
          %v1200 = vsel %vm1184, -1e+09, 0.0
          %v1201 = vsel %vm1185, -1e+09, 0.0
          %v1202 = vsel %vm1186, -1e+09, 0.0
          %v1203 = vsel %vm1187, -1e+09, 0.0
          %v1204 = vsel %vm1188, -1e+09, 0.0
          %v1205 = vsel %vm1189, -1e+09, 0.0
          %v1206 = vsel %vm1190, -1e+09, 0.0
          %v1207 = vsel %vm1191, -1e+09, 0.0
          %v1208 = vsel %vm1192, -1e+09, 0.0
          %v1209 = vsel %vm1193, -1e+09, 0.0
          %v1210 = vld [vmem:[%s761] sm:$0x1]
          %v1212 = vlaneseq
          %v1213 = vshrl.u32 %v1212, 7
          %v1214 = vsub.s32 0, %v1213
          %v1215 = vrot.slane %v1210, %v1214
          %v1217 = vadd.f32 %v1194, %v1215
          %v1218 = vadd.f32 %v1195, %v1215
          %v1219 = vadd.f32 %v1196, %v1215
          %v1220 = vadd.f32 %v1197, %v1215
          %v1221 = vadd.f32 %v1198, %v1215
          %v1222 = vadd.f32 %v1199, %v1215
          %v1223 = vadd.f32 %v1200, %v1215
          %v1224 = vadd.f32 %v1201, %v1215
          %v1225 = vadd.f32 %v1202, %v1215
          %v1226 = vadd.f32 %v1203, %v1215
          %v1227 = vadd.f32 %v1204, %v1215
          %v1228 = vadd.f32 %v1205, %v1215
          %v1229 = vadd.f32 %v1206, %v1215
          %v1230 = vadd.f32 %v1207, %v1215
          %v1231 = vadd.f32 %v1208, %v1215
          %v1232 = vadd.f32 %v1209, %v1215
          %1233 = vst [vmem:[#allocation5] sm:$0xff] %v1217
          %1234 = vst [vmem:[#allocation5 + $0x8] sm:$0xff] %v1218
          %1235 = vst [vmem:[#allocation5 + $0x10] sm:$0xff] %v1219
          %1236 = vst [vmem:[#allocation5 + $0x18] sm:$0xff] %v1220
          %1237 = vst [vmem:[#allocation5 + $0x20] sm:$0xff] %v1221
          %1238 = vst [vmem:[#allocation5 + $0x28] sm:$0xff] %v1222
          %1239 = vst [vmem:[#allocation5 + $0x30] sm:$0xff] %v1223
          %1240 = vst [vmem:[#allocation5 + $0x38] sm:$0xff] %v1224
          %1241 = vst [vmem:[#allocation5 + $0x40] sm:$0xff] %v1225
          %1242 = vst [vmem:[#allocation5 + $0x48] sm:$0xff] %v1226
          %1243 = vst [vmem:[#allocation5 + $0x50] sm:$0xff] %v1227
          %1244 = vst [vmem:[#allocation5 + $0x58] sm:$0xff] %v1228
          %1245 = vst [vmem:[#allocation5 + $0x60] sm:$0xff] %v1229
          %1246 = vst [vmem:[#allocation5 + $0x68] sm:$0xff] %v1230
          %1247 = vst [vmem:[#allocation5 + $0x70] sm:$0xff] %v1231
          %1248 = vst [vmem:[#allocation5 + $0x78] sm:$0xff] %v1232
        $region152: #{universal_transformer_decoder_forward.1} parent=83 // pred_fallthru
          _
        %v1249 = vld [vmem:[#allocation24] sm:$0xff]
        %v1250 = vld [vmem:[#allocation2] sm:$0xff]
        %v1251 = vld [vmem:[#allocation2 + $0x8] sm:$0xff]
        %v1252 = vld [vmem:[#allocation2 + $0x10] sm:$0xff]
        %v1253 = vld [vmem:[#allocation2 + $0x18] sm:$0xff]
        %v1254 = vld [vmem:[#allocation2 + $0x20] sm:$0xff]
        %v1255 = vld [vmem:[#allocation2 + $0x28] sm:$0xff]
        %v1256 = vld [vmem:[#allocation2 + $0x30] sm:$0xff]
        %v1257 = vld [vmem:[#allocation2 + $0x38] sm:$0xff]
        %v1258 = vld [vmem:[#allocation2 + $0x40] sm:$0xff]
        %v1259 = vld [vmem:[#allocation2 + $0x48] sm:$0xff]
        %v1260 = vld [vmem:[#allocation2 + $0x50] sm:$0xff]
        %v1261 = vld [vmem:[#allocation2 + $0x58] sm:$0xff]
        %v1262 = vld [vmem:[#allocation2 + $0x60] sm:$0xff]
        %v1263 = vld [vmem:[#allocation2 + $0x68] sm:$0xff]
        %v1264 = vld [vmem:[#allocation2 + $0x70] sm:$0xff]
        %v1265 = vld [vmem:[#allocation2 + $0x78] sm:$0xff]
        %v1266 = vld [vmem:[#allocation11] sm:$0xff]
        %v1267 = vld [vmem:[#allocation11 + $0x8] sm:$0xff]
        %v1268 = vld [vmem:[#allocation11 + $0x10] sm:$0xff]
        %v1269 = vld [vmem:[#allocation11 + $0x18] sm:$0xff]
        %v1270 = vld [vmem:[#allocation11 + $0x20] sm:$0xff]
        %v1271 = vld [vmem:[#allocation11 + $0x28] sm:$0xff]
        %v1272 = vld [vmem:[#allocation11 + $0x30] sm:$0xff]
        %v1273 = vld [vmem:[#allocation11 + $0x38] sm:$0xff]
        %v1274 = vld [vmem:[#allocation11 + $0x40] sm:$0xff]
        %v1275 = vld [vmem:[#allocation11 + $0x48] sm:$0xff]
        %v1276 = vld [vmem:[#allocation11 + $0x50] sm:$0xff]
        %v1277 = vld [vmem:[#allocation11 + $0x58] sm:$0xff]
        %v1278 = vld [vmem:[#allocation11 + $0x60] sm:$0xff]
        %v1279 = vld [vmem:[#allocation11 + $0x68] sm:$0xff]
        %v1280 = vld [vmem:[#allocation11 + $0x70] sm:$0xff]
        %v1281 = vld [vmem:[#allocation11 + $0x78] sm:$0xff]
        %v1282 = vadd.f32 %v1250, %v1266
        %v1283 = vadd.f32 %v1251, %v1267
        %v1284 = vadd.f32 %v1252, %v1268
        %v1285 = vadd.f32 %v1253, %v1269
        %v1286 = vadd.f32 %v1254, %v1270
        %v1287 = vadd.f32 %v1255, %v1271
        %v1288 = vadd.f32 %v1256, %v1272
        %v1289 = vadd.f32 %v1257, %v1273
        %v1290 = vadd.f32 %v1258, %v1274
        %v1291 = vadd.f32 %v1259, %v1275
        %v1292 = vadd.f32 %v1260, %v1276
        %v1293 = vadd.f32 %v1261, %v1277
        %v1294 = vadd.f32 %v1262, %v1278
        %v1295 = vadd.f32 %v1263, %v1279
        %v1296 = vadd.f32 %v1264, %v1280
        %v1297 = vadd.f32 %v1265, %v1281
        %v1298 = vld [vmem:[%s753] sm:$0x1]
        %v1300 = vlaneseq
        %v1301 = vshrl.u32 %v1300, 7
        %v1302 = vsub.s32 0, %v1301
        %v1303 = vrot.slane %v1298, %v1302
        %v1305 = vadd.f32 %v1282, %v1303
        %v1306 = vadd.f32 %v1283, %v1303
        %v1307 = vadd.f32 %v1284, %v1303
        %v1308 = vadd.f32 %v1285, %v1303
        %v1309 = vadd.f32 %v1286, %v1303
        %v1310 = vadd.f32 %v1287, %v1303
        %v1311 = vadd.f32 %v1288, %v1303
        %v1312 = vadd.f32 %v1289, %v1303
        %v1313 = vadd.f32 %v1290, %v1303
        %v1314 = vadd.f32 %v1291, %v1303
        %v1315 = vadd.f32 %v1292, %v1303
        %v1316 = vadd.f32 %v1293, %v1303
        %v1317 = vadd.f32 %v1294, %v1303
        %v1318 = vadd.f32 %v1295, %v1303
        %v1319 = vadd.f32 %v1296, %v1303
        %v1320 = vadd.f32 %v1297, %v1303
        %1321 = vadd.xlane.f32.xlu0 %v1305
        %v1322 = vpop.xlane.xlu0 %1321
        %1323 = vadd.xlane.f32.xlu0 %v1306
        %v1324 = vpop.xlane.xlu0 %1323
        %1325 = vadd.xlane.f32.xlu0 %v1307
        %v1326 = vpop.xlane.xlu0 %1325
        %1327 = vadd.xlane.f32.xlu0 %v1308
        %v1328 = vpop.xlane.xlu0 %1327
        %1329 = vadd.xlane.f32.xlu0 %v1309
        %v1330 = vpop.xlane.xlu0 %1329
        %1331 = vadd.xlane.f32.xlu0 %v1310
        %v1332 = vpop.xlane.xlu0 %1331
        %1333 = vadd.xlane.f32.xlu0 %v1311
        %v1334 = vpop.xlane.xlu0 %1333
        %1335 = vadd.xlane.f32.xlu0 %v1312
        %v1336 = vpop.xlane.xlu0 %1335
        %1337 = vadd.xlane.f32.xlu0 %v1313
        %v1338 = vpop.xlane.xlu0 %1337
        %1339 = vadd.xlane.f32.xlu0 %v1314
        %v1340 = vpop.xlane.xlu0 %1339
        %1341 = vadd.xlane.f32.xlu0 %v1315
        %v1342 = vpop.xlane.xlu0 %1341
        %1343 = vadd.xlane.f32.xlu0 %v1316
        %v1344 = vpop.xlane.xlu0 %1343
        %1345 = vadd.xlane.f32.xlu0 %v1317
        %v1346 = vpop.xlane.xlu0 %1345
        %1347 = vadd.xlane.f32.xlu0 %v1318
        %v1348 = vpop.xlane.xlu0 %1347
        %1349 = vadd.xlane.f32.xlu0 %v1319
        %v1350 = vpop.xlane.xlu0 %1349
        %1351 = vadd.xlane.f32.xlu0 %v1320
        %v1352 = vpop.xlane.xlu0 %1351
        %v1353 = vrcp.pop 128.0
        %v1354 = vmul.f32 %v1322, %v1353
        %v1355 = vmul.f32 %v1324, %v1353
        %v1356 = vmul.f32 %v1326, %v1353
        %v1357 = vmul.f32 %v1328, %v1353
        %v1358 = vmul.f32 %v1330, %v1353
        %v1359 = vmul.f32 %v1332, %v1353
        %v1360 = vmul.f32 %v1334, %v1353
        %v1361 = vmul.f32 %v1336, %v1353
        %v1362 = vmul.f32 %v1338, %v1353
        %v1363 = vmul.f32 %v1340, %v1353
        %v1364 = vmul.f32 %v1342, %v1353
        %v1365 = vmul.f32 %v1344, %v1353
        %v1366 = vmul.f32 %v1346, %v1353
        %v1367 = vmul.f32 %v1348, %v1353
        %v1368 = vmul.f32 %v1350, %v1353
        %v1369 = vmul.f32 %v1352, %v1353
        %v1370 = vsub.f32 %v1305, %v1354
        %v1371 = vsub.f32 %v1306, %v1355
        %v1372 = vsub.f32 %v1307, %v1356
        %v1373 = vsub.f32 %v1308, %v1357
        %v1374 = vsub.f32 %v1309, %v1358
        %v1375 = vsub.f32 %v1310, %v1359
        %v1376 = vsub.f32 %v1311, %v1360
        %v1377 = vsub.f32 %v1312, %v1361
        %v1378 = vsub.f32 %v1313, %v1362
        %v1379 = vsub.f32 %v1314, %v1363
        %v1380 = vsub.f32 %v1315, %v1364
        %v1381 = vsub.f32 %v1316, %v1365
        %v1382 = vsub.f32 %v1317, %v1366
        %v1383 = vsub.f32 %v1318, %v1367
        %v1384 = vsub.f32 %v1319, %v1368
        %v1385 = vsub.f32 %v1320, %v1369
        %v1386 = vmul.f32 %v1370, %v1370
        %v1387 = vmul.f32 %v1371, %v1371
        %v1388 = vmul.f32 %v1372, %v1372
        %v1389 = vmul.f32 %v1373, %v1373
        %v1390 = vmul.f32 %v1374, %v1374
        %v1391 = vmul.f32 %v1375, %v1375
        %v1392 = vmul.f32 %v1376, %v1376
        %v1393 = vmul.f32 %v1377, %v1377
        %v1394 = vmul.f32 %v1378, %v1378
        %v1395 = vmul.f32 %v1379, %v1379
        %v1396 = vmul.f32 %v1380, %v1380
        %v1397 = vmul.f32 %v1381, %v1381
        %v1398 = vmul.f32 %v1382, %v1382
        %v1399 = vmul.f32 %v1383, %v1383
        %v1400 = vmul.f32 %v1384, %v1384
        %v1401 = vmul.f32 %v1385, %v1385
        %1402 = vadd.xlane.f32.xlu0 %v1386
        %v1403 = vpop.xlane.xlu0 %1402
        %1404 = vadd.xlane.f32.xlu0 %v1387
        %v1405 = vpop.xlane.xlu0 %1404
        %1406 = vadd.xlane.f32.xlu0 %v1388
        %v1407 = vpop.xlane.xlu0 %1406
        %1408 = vadd.xlane.f32.xlu0 %v1389
        %v1409 = vpop.xlane.xlu0 %1408
        %1410 = vadd.xlane.f32.xlu0 %v1390
        %v1411 = vpop.xlane.xlu0 %1410
        %1412 = vadd.xlane.f32.xlu0 %v1391
        %v1413 = vpop.xlane.xlu0 %1412
        %1414 = vadd.xlane.f32.xlu0 %v1392
        %v1415 = vpop.xlane.xlu0 %1414
        %1416 = vadd.xlane.f32.xlu0 %v1393
        %v1417 = vpop.xlane.xlu0 %1416
        %1418 = vadd.xlane.f32.xlu0 %v1394
        %v1419 = vpop.xlane.xlu0 %1418
        %1420 = vadd.xlane.f32.xlu0 %v1395
        %v1421 = vpop.xlane.xlu0 %1420
        %1422 = vadd.xlane.f32.xlu0 %v1396
        %v1423 = vpop.xlane.xlu0 %1422
        %1424 = vadd.xlane.f32.xlu0 %v1397
        %v1425 = vpop.xlane.xlu0 %1424
        %1426 = vadd.xlane.f32.xlu0 %v1398
        %v1427 = vpop.xlane.xlu0 %1426
        %1428 = vadd.xlane.f32.xlu0 %v1399
        %v1429 = vpop.xlane.xlu0 %1428
        %1430 = vadd.xlane.f32.xlu0 %v1400
        %v1431 = vpop.xlane.xlu0 %1430
        %1432 = vadd.xlane.f32.xlu0 %v1401
        %v1433 = vpop.xlane.xlu0 %1432
        %v1434 = vmul.f32 %v1403, %v1353
        %v1435 = vmul.f32 %v1405, %v1353
        %v1436 = vmul.f32 %v1407, %v1353
        %v1437 = vmul.f32 %v1409, %v1353
        %v1438 = vmul.f32 %v1411, %v1353
        %v1439 = vmul.f32 %v1413, %v1353
        %v1440 = vmul.f32 %v1415, %v1353
        %v1441 = vmul.f32 %v1417, %v1353
        %v1442 = vmul.f32 %v1419, %v1353
        %v1443 = vmul.f32 %v1421, %v1353
        %v1444 = vmul.f32 %v1423, %v1353
        %v1445 = vmul.f32 %v1425, %v1353
        %v1446 = vmul.f32 %v1427, %v1353
        %v1447 = vmul.f32 %v1429, %v1353
        %v1448 = vmul.f32 %v1431, %v1353
        %v1449 = vmul.f32 %v1433, %v1353
        %v1450 = vadd.f32 %v1434, 1e-05
        %v1451 = vadd.f32 %v1435, 1e-05
        %v1452 = vadd.f32 %v1436, 1e-05
        %v1453 = vadd.f32 %v1437, 1e-05
        %v1454 = vadd.f32 %v1438, 1e-05
        %v1455 = vadd.f32 %v1439, 1e-05
        %v1456 = vadd.f32 %v1440, 1e-05
        %v1457 = vadd.f32 %v1441, 1e-05
        %v1458 = vadd.f32 %v1442, 1e-05
        %v1459 = vadd.f32 %v1443, 1e-05
        %v1460 = vadd.f32 %v1444, 1e-05
        %v1461 = vadd.f32 %v1445, 1e-05
        %v1462 = vadd.f32 %v1446, 1e-05
        %v1463 = vadd.f32 %v1447, 1e-05
        %v1464 = vadd.f32 %v1448, 1e-05
        %v1465 = vadd.f32 %v1449, 1e-05
        %v1466 = vrsqrt.pop %v1450
        %v1467 = vrsqrt.pop %v1451
        %v1468 = vrsqrt.pop %v1452
        %v1469 = vrsqrt.pop %v1453
        %v1470 = vrsqrt.pop %v1454
        %v1471 = vrsqrt.pop %v1455
        %v1472 = vrsqrt.pop %v1456
        %v1473 = vrsqrt.pop %v1457
        %v1474 = vrsqrt.pop %v1458
        %v1475 = vrsqrt.pop %v1459
        %v1476 = vrsqrt.pop %v1460
        %v1477 = vrsqrt.pop %v1461
        %v1478 = vrsqrt.pop %v1462
        %v1479 = vrsqrt.pop %v1463
        %v1480 = vrsqrt.pop %v1464
        %v1481 = vrsqrt.pop %v1465
        %v1482 = vmul.f32 %v1370, %v1466
        %v1483 = vmul.f32 %v1371, %v1467
        %v1484 = vmul.f32 %v1372, %v1468
        %v1485 = vmul.f32 %v1373, %v1469
        %v1486 = vmul.f32 %v1374, %v1470
        %v1487 = vmul.f32 %v1375, %v1471
        %v1488 = vmul.f32 %v1376, %v1472
        %v1489 = vmul.f32 %v1377, %v1473
        %v1490 = vmul.f32 %v1378, %v1474
        %v1491 = vmul.f32 %v1379, %v1475
        %v1492 = vmul.f32 %v1380, %v1476
        %v1493 = vmul.f32 %v1381, %v1477
        %v1494 = vmul.f32 %v1382, %v1478
        %v1495 = vmul.f32 %v1383, %v1479
        %v1496 = vmul.f32 %v1384, %v1480
        %v1497 = vmul.f32 %v1385, %v1481
        %v1498 = vlaneseq
        %v1499 = vshrl.u32 %v1498, 7
        %v1500 = vsub.s32 0, %v1499
        %v1501 = vrot.slane %v1249, %v1500
        %v1502 = vmul.f32 %v1482, %v1501
        %v1503 = vmul.f32 %v1483, %v1501
        %v1504 = vmul.f32 %v1484, %v1501
        %v1505 = vmul.f32 %v1485, %v1501
        %v1506 = vmul.f32 %v1486, %v1501
        %v1507 = vmul.f32 %v1487, %v1501
        %v1508 = vmul.f32 %v1488, %v1501
        %v1509 = vmul.f32 %v1489, %v1501
        %v1510 = vmul.f32 %v1490, %v1501
        %v1511 = vmul.f32 %v1491, %v1501
        %v1512 = vmul.f32 %v1492, %v1501
        %v1513 = vmul.f32 %v1493, %v1501
        %v1514 = vmul.f32 %v1494, %v1501
        %v1515 = vmul.f32 %v1495, %v1501
        %v1516 = vmul.f32 %v1496, %v1501
        %v1517 = vmul.f32 %v1497, %v1501
        %v1518 = vlaneseq
        %v1519 = vshrl.u32 %v1518, 7
        %v1520 = vsub.s32 1, %v1519
        %v1521 = vrot.slane %v1249, %v1520
        %v1522 = vadd.f32 %v1502, %v1521
        %v1523 = vadd.f32 %v1503, %v1521
        %v1524 = vadd.f32 %v1504, %v1521
        %v1525 = vadd.f32 %v1505, %v1521
        %v1526 = vadd.f32 %v1506, %v1521
        %v1527 = vadd.f32 %v1507, %v1521
        %v1528 = vadd.f32 %v1508, %v1521
        %v1529 = vadd.f32 %v1509, %v1521
        %v1530 = vadd.f32 %v1510, %v1521
        %v1531 = vadd.f32 %v1511, %v1521
        %v1532 = vadd.f32 %v1512, %v1521
        %v1533 = vadd.f32 %v1513, %v1521
        %v1534 = vadd.f32 %v1514, %v1521
        %v1535 = vadd.f32 %v1515, %v1521
        %v1536 = vadd.f32 %v1516, %v1521
        %v1537 = vadd.f32 %v1517, %v1521
        %v1538 = vld [vmem:[#allocation17] sm:$0xff]
        %v1539 = vld [vmem:[#allocation17 + $0x8] sm:$0xff]
        %v1540 = vld [vmem:[#allocation17 + $0x10] sm:$0xff]
        %v1541 = vld [vmem:[#allocation17 + $0x18] sm:$0xff]
        %v1542 = vld [vmem:[#allocation17 + $0x20] sm:$0xff]
        %v1543 = vld [vmem:[#allocation17 + $0x28] sm:$0xff]
        %v1544 = vld [vmem:[#allocation17 + $0x30] sm:$0xff]
        %v1545 = vld [vmem:[#allocation17 + $0x38] sm:$0xff]
        %v1546 = vld [vmem:[#allocation17 + $0x40] sm:$0xff]
        %v1547 = vld [vmem:[#allocation17 + $0x48] sm:$0xff]
        %v1548 = vld [vmem:[#allocation17 + $0x50] sm:$0xff]
        %v1549 = vld [vmem:[#allocation17 + $0x58] sm:$0xff]
        %v1550 = vld [vmem:[#allocation17 + $0x60] sm:$0xff]
        %v1551 = vld [vmem:[#allocation17 + $0x68] sm:$0xff]
        %v1552 = vld [vmem:[#allocation17 + $0x70] sm:$0xff]
        %v1553 = vld [vmem:[#allocation17 + $0x78] sm:$0xff]
        %v1554 = vld [vmem:[#allocation17 + $0x80] sm:$0xff]
        %v1555 = vld [vmem:[#allocation17 + $0x88] sm:$0xff]
        %v1556 = vld [vmem:[#allocation17 + $0x90] sm:$0xff]
        %v1557 = vld [vmem:[#allocation17 + $0x98] sm:$0xff]
        %v1558 = vld [vmem:[#allocation17 + $0xa0] sm:$0xff]
        %v1559 = vld [vmem:[#allocation17 + $0xa8] sm:$0xff]
        %v1560 = vld [vmem:[#allocation17 + $0xb0] sm:$0xff]
        %v1561 = vld [vmem:[#allocation17 + $0xb8] sm:$0xff]
        %v1562 = vld [vmem:[#allocation17 + $0xc0] sm:$0xff]
        %v1563 = vld [vmem:[#allocation17 + $0xc8] sm:$0xff]
        %v1564 = vld [vmem:[#allocation17 + $0xd0] sm:$0xff]
        %v1565 = vld [vmem:[#allocation17 + $0xd8] sm:$0xff]
        %v1566 = vld [vmem:[#allocation17 + $0xe0] sm:$0xff]
        %v1567 = vld [vmem:[#allocation17 + $0xe8] sm:$0xff]
        %v1568 = vld [vmem:[#allocation17 + $0xf0] sm:$0xff]
        %v1569 = vld [vmem:[#allocation17 + $0xf8] sm:$0xff]
        %v1570 = vld [vmem:[#allocation17 + $0x100] sm:$0xff]
        %v1571 = vld [vmem:[#allocation17 + $0x108] sm:$0xff]
        %v1572 = vld [vmem:[#allocation17 + $0x110] sm:$0xff]
        %v1573 = vld [vmem:[#allocation17 + $0x118] sm:$0xff]
        %v1574 = vld [vmem:[#allocation17 + $0x120] sm:$0xff]
        %v1575 = vld [vmem:[#allocation17 + $0x128] sm:$0xff]
        %v1576 = vld [vmem:[#allocation17 + $0x130] sm:$0xff]
        %v1577 = vld [vmem:[#allocation17 + $0x138] sm:$0xff]
        %v1578 = vld [vmem:[#allocation17 + $0x140] sm:$0xff]
        %v1579 = vld [vmem:[#allocation17 + $0x148] sm:$0xff]
        %v1580 = vld [vmem:[#allocation17 + $0x150] sm:$0xff]
        %v1581 = vld [vmem:[#allocation17 + $0x158] sm:$0xff]
        %v1582 = vld [vmem:[#allocation17 + $0x160] sm:$0xff]
        %v1583 = vld [vmem:[#allocation17 + $0x168] sm:$0xff]
        %v1584 = vld [vmem:[#allocation17 + $0x170] sm:$0xff]
        %v1585 = vld [vmem:[#allocation17 + $0x178] sm:$0xff]
        %1586 = vmatprep.subr.mxu0 %v1539
        %1587 = vmatpush1.msra.mxu0 %v1538
        %1588 = vmatprep.subr.mxu0 %v1542
        %1589 = vmatpush1.msra.mxu0 %v1541
        %1590 = vmatprep.subr.mxu0 %v1545
        %1591 = vmatpush1.msra.mxu0 %v1544
        %1592 = vmatprep.subr.mxu0 %v1548
        %1593 = vmatpush1.msra.mxu0 %v1547
        %1594 = vmatprep.subr.mxu0 %v1551
        %1595 = vmatpush1.msra.mxu0 %v1550
        %1596 = vmatprep.subr.mxu0 %v1554
        %1597 = vmatpush1.msra.mxu0 %v1553
        %1598 = vmatprep.subr.mxu0 %v1557
        %1599 = vmatpush1.msra.mxu0 %v1556
        %1600 = vmatprep.subr.mxu0 %v1560
        %1601 = vmatpush1.msra.mxu0 %v1559
        %1602 = vmatprep.subr.mxu0 %v1563
        %1603 = vmatpush1.msra.mxu0 %v1562
        %1604 = vmatprep.subr.mxu0 %v1566
        %1605 = vmatpush1.msra.mxu0 %v1565
        %1606 = vmatprep.subr.mxu0 %v1569
        %1607 = vmatpush1.msra.mxu0 %v1568
        %1608 = vmatprep.subr.mxu0 %v1572
        %1609 = vmatpush1.msra.mxu0 %v1571
        %1610 = vmatprep.subr.mxu0 %v1575
        %1611 = vmatpush1.msra.mxu0 %v1574
        %1612 = vmatprep.subr.mxu0 %v1578
        %1613 = vmatpush1.msra.mxu0 %v1577
        %1614 = vmatprep.subr.mxu0 %v1581
        %1615 = vmatpush1.msra.mxu0 %v1580
        %1616 = vmatprep.subr.mxu0 %v1584
        %1617 = vmatpush1.msra.mxu0 %v1583
        %1618 = vmatprep.subr.mxu0 0.0
        %1619 = vmatpush1.msra.mxu0 0.0
        %1620 = vmatprep.subr.mxu0 0.0
        %1621 = vmatpush1.msra.mxu0 0.0
        %1622 = vmatprep.subr.mxu0 0.0
        %1623 = vmatpush1.msra.mxu0 0.0
        %1624 = vmatprep.subr.mxu0 0.0
        %1625 = vmatpush1.msra.mxu0 0.0
        %1626 = vmatprep.subr.mxu0 0.0
        %1627 = vmatpush1.msra.mxu0 0.0
        %1628 = vmatprep.subr.mxu0 0.0
        %1629 = vmatpush1.msra.mxu0 0.0
        %1630 = vmatprep.subr.mxu0 0.0
        %1631 = vmatpush1.msra.mxu0 0.0
        %1632 = vmatprep.subr.mxu0 0.0
        %1633 = vmatpush1.msra.mxu0 0.0
        %1634 = vmatprep.subr.mxu0 0.0
        %1635 = vmatpush1.msra.mxu0 0.0
        %1636 = vmatprep.subr.mxu0 0.0
        %1637 = vmatpush1.msra.mxu0 0.0
        %1638 = vmatprep.subr.mxu0 0.0
        %1639 = vmatpush1.msra.mxu0 0.0
        %1640 = vmatprep.subr.mxu0 0.0
        %1641 = vmatpush1.msra.mxu0 0.0
        %1642 = vmatprep.subr.mxu0 0.0
        %1643 = vmatpush1.msra.mxu0 0.0
        %1644 = vmatprep.subr.mxu0 0.0
        %1645 = vmatpush1.msra.mxu0 0.0
        %1646 = vmatprep.subr.mxu0 0.0
        %1647 = vmatpush1.msra.mxu0 0.0
        %1648 = vmatprep.subr.mxu0 0.0
        %1649 = vmatpush1.msra.mxu0 0.0
        %1650 = vmatprep.mubr.f32.mxu0 0.0
        %1651 = vmatmul.mubr.f32.gmra.mrb[0].mxu0 %v1522
        %v1652 = vpop.f32.mrb[0].mxu0
        %v1653 = vadd.f32 0.0, %v1652
        %v1654 = vpop.f32.mrb[0].mxu0
        %v1655 = vadd.f32 0.0, %v1654
        %1656 = vmatprep.mubr.f32.mxu0 0.0
        %1657 = vmatmul.mubr.f32.gmra.mrb[0].mxu0 %v1523
        %v1658 = vpop.f32.mrb[0].mxu0
        %v1659 = vadd.f32 0.0, %v1658
        %v1660 = vpop.f32.mrb[0].mxu0
        %v1661 = vadd.f32 0.0, %v1660
        %1662 = vmatprep.mubr.f32.mxu0 0.0
        %1663 = vmatmul.mubr.f32.gmra.mrb[0].mxu0 %v1524
        %v1664 = vpop.f32.mrb[0].mxu0
        %v1665 = vadd.f32 0.0, %v1664
        %v1666 = vpop.f32.mrb[0].mxu0
        %v1667 = vadd.f32 0.0, %v1666
        %1668 = vmatprep.mubr.f32.mxu0 0.0
        %1669 = vmatmul.mubr.f32.gmra.mrb[0].mxu0 %v1525
        %v1670 = vpop.f32.mrb[0].mxu0
        %v1671 = vadd.f32 0.0, %v1670
        %v1672 = vpop.f32.mrb[0].mxu0
        %v1673 = vadd.f32 0.0, %v1672
        %1674 = vmatprep.mubr.f32.mxu0 0.0
        %1675 = vmatmul.mubr.f32.gmra.mrb[0].mxu0 %v1526
        %v1676 = vpop.f32.mrb[0].mxu0
        %v1677 = vadd.f32 0.0, %v1676
        %v1678 = vpop.f32.mrb[0].mxu0
        %v1679 = vadd.f32 0.0, %v1678
        %1680 = vmatprep.mubr.f32.mxu0 0.0
        %1681 = vmatmul.mubr.f32.gmra.mrb[0].mxu0 %v1527
        %v1682 = vpop.f32.mrb[0].mxu0
        %v1683 = vadd.f32 0.0, %v1682
        %v1684 = vpop.f32.mrb[0].mxu0
        %v1685 = vadd.f32 0.0, %v1684
        %1686 = vmatprep.mubr.f32.mxu0 0.0
        %1687 = vmatmul.mubr.f32.gmra.mrb[0].mxu0 %v1528
        %v1688 = vpop.f32.mrb[0].mxu0
        %v1689 = vadd.f32 0.0, %v1688
        %v1690 = vpop.f32.mrb[0].mxu0
        %v1691 = vadd.f32 0.0, %v1690
        %1692 = vmatprep.mubr.f32.mxu0 0.0
        %1693 = vmatmul.mubr.f32.gmra.mrb[0].mxu0 %v1529
        %v1694 = vpop.f32.mrb[0].mxu0
        %v1695 = vadd.f32 0.0, %v1694
        %v1696 = vpop.f32.mrb[0].mxu0
        %v1697 = vadd.f32 0.0, %v1696
        %1698 = vmatprep.mubr.f32.mxu0 0.0
        %1699 = vmatmul.mubr.f32.gmra.mrb[0].mxu0 %v1530
        %v1700 = vpop.f32.mrb[0].mxu0
        %v1701 = vadd.f32 0.0, %v1700
        %v1702 = vpop.f32.mrb[0].mxu0
        %v1703 = vadd.f32 0.0, %v1702
        %1704 = vmatprep.mubr.f32.mxu0 0.0
        %1705 = vmatmul.mubr.f32.gmra.mrb[0].mxu0 %v1531
        %v1706 = vpop.f32.mrb[0].mxu0
        %v1707 = vadd.f32 0.0, %v1706
        %v1708 = vpop.f32.mrb[0].mxu0
        %v1709 = vadd.f32 0.0, %v1708
        %1710 = vmatprep.mubr.f32.mxu0 0.0
        %1711 = vmatmul.mubr.f32.gmra.mrb[0].mxu0 %v1532
        %v1712 = vpop.f32.mrb[0].mxu0
        %v1713 = vadd.f32 0.0, %v1712
        %v1714 = vpop.f32.mrb[0].mxu0
        %v1715 = vadd.f32 0.0, %v1714
        %1716 = vmatprep.mubr.f32.mxu0 0.0
        %1717 = vmatmul.mubr.f32.gmra.mrb[0].mxu0 %v1533
        %v1718 = vpop.f32.mrb[0].mxu0
        %v1719 = vadd.f32 0.0, %v1718
        %v1720 = vpop.f32.mrb[0].mxu0
        %v1721 = vadd.f32 0.0, %v1720
        %1722 = vmatprep.mubr.f32.mxu0 0.0
        %1723 = vmatmul.mubr.f32.gmra.mrb[0].mxu0 %v1534
        %v1724 = vpop.f32.mrb[0].mxu0
        %v1725 = vadd.f32 0.0, %v1724
        %v1726 = vpop.f32.mrb[0].mxu0
        %v1727 = vadd.f32 0.0, %v1726
        %1728 = vmatprep.mubr.f32.mxu0 0.0
        %1729 = vmatmul.mubr.f32.gmra.mrb[0].mxu0 %v1535
        %v1730 = vpop.f32.mrb[0].mxu0
        %v1731 = vadd.f32 0.0, %v1730
        %v1732 = vpop.f32.mrb[0].mxu0
        %v1733 = vadd.f32 0.0, %v1732
        %1734 = vmatprep.mubr.f32.mxu0 0.0
        %1735 = vmatmul.mubr.f32.gmra.mrb[0].mxu0 %v1536
        %v1736 = vpop.f32.mrb[0].mxu0
        %v1737 = vadd.f32 0.0, %v1736
        %v1738 = vpop.f32.mrb[0].mxu0
        %v1739 = vadd.f32 0.0, %v1738
        %1740 = vmatprep.mubr.f32.mxu0 0.0
        %1741 = vmatmul.mubr.f32.gmra.mrb[0].mxu0 %v1537
        %v1742 = vpop.f32.mrb[0].mxu0
        %v1743 = vadd.f32 0.0, %v1742
        %v1744 = vpop.f32.mrb[0].mxu0
        %v1745 = vadd.f32 0.0, %v1744
        %1746 = vdwg.mxu0
        %1747 = vmatprep.subr.mxu0 0.0
        %1748 = vmatpush1.msra.mxu0 %v1540
        %1749 = vmatprep.subr.mxu0 0.0
        %1750 = vmatpush1.msra.mxu0 %v1543
        %1751 = vmatprep.subr.mxu0 0.0
        %1752 = vmatpush1.msra.mxu0 %v1546
        %1753 = vmatprep.subr.mxu0 0.0
        %1754 = vmatpush1.msra.mxu0 %v1549
        %1755 = vmatprep.subr.mxu0 0.0
        %1756 = vmatpush1.msra.mxu0 %v1552
        %1757 = vmatprep.subr.mxu0 0.0
        %1758 = vmatpush1.msra.mxu0 %v1555
        %1759 = vmatprep.subr.mxu0 0.0
        %1760 = vmatpush1.msra.mxu0 %v1558
        %1761 = vmatprep.subr.mxu0 0.0
        %1762 = vmatpush1.msra.mxu0 %v1561
        %1763 = vmatprep.subr.mxu0 0.0
        %1764 = vmatpush1.msra.mxu0 %v1564
        %1765 = vmatprep.subr.mxu0 0.0
        %1766 = vmatpush1.msra.mxu0 %v1567
        %1767 = vmatprep.subr.mxu0 0.0
        %1768 = vmatpush1.msra.mxu0 %v1570
        %1769 = vmatprep.subr.mxu0 0.0
        %1770 = vmatpush1.msra.mxu0 %v1573
        %1771 = vmatprep.subr.mxu0 0.0
        %1772 = vmatpush1.msra.mxu0 %v1576
        %1773 = vmatprep.subr.mxu0 0.0
        %1774 = vmatpush1.msra.mxu0 %v1579
        %1775 = vmatprep.subr.mxu0 0.0
        %1776 = vmatpush1.msra.mxu0 %v1582
        %1777 = vmatprep.subr.mxu0 0.0
        %1778 = vmatpush1.msra.mxu0 %v1585
        %1779 = vmatprep.subr.mxu0 0.0
        %1780 = vmatpush1.msra.mxu0 0.0
        %1781 = vmatprep.subr.mxu0 0.0
        %1782 = vmatpush1.msra.mxu0 0.0
        %1783 = vmatprep.subr.mxu0 0.0
        %1784 = vmatpush1.msra.mxu0 0.0
        %1785 = vmatprep.subr.mxu0 0.0
        %1786 = vmatpush1.msra.mxu0 0.0
        %1787 = vmatprep.subr.mxu0 0.0
        %1788 = vmatpush1.msra.mxu0 0.0
        %1789 = vmatprep.subr.mxu0 0.0
        %1790 = vmatpush1.msra.mxu0 0.0
        %1791 = vmatprep.subr.mxu0 0.0
        %1792 = vmatpush1.msra.mxu0 0.0
        %1793 = vmatprep.subr.mxu0 0.0
        %1794 = vmatpush1.msra.mxu0 0.0
        %1795 = vmatprep.subr.mxu0 0.0
        %1796 = vmatpush1.msra.mxu0 0.0
        %1797 = vmatprep.subr.mxu0 0.0
        %1798 = vmatpush1.msra.mxu0 0.0
        %1799 = vmatprep.subr.mxu0 0.0
        %1800 = vmatpush1.msra.mxu0 0.0
        %1801 = vmatprep.subr.mxu0 0.0
        %1802 = vmatpush1.msra.mxu0 0.0
        %1803 = vmatprep.subr.mxu0 0.0
        %1804 = vmatpush1.msra.mxu0 0.0
        %1805 = vmatprep.subr.mxu0 0.0
        %1806 = vmatpush1.msra.mxu0 0.0
        %1807 = vmatprep.subr.mxu0 0.0
        %1808 = vmatpush1.msra.mxu0 0.0
        %1809 = vmatprep.subr.mxu0 0.0
        %1810 = vmatpush1.msra.mxu0 0.0
        %1811 = vmatprep.mubr.f32.mxu0 0.0
        %1812 = vmatmul.mubr.f32.gmra.mrb[0].mxu0 %v1522
        %v1813 = vpop.f32.mrb[0].mxu0
        %v1814 = vadd.f32 0.0, %v1813
        %v1815 = vpop.f32.mrb[0].mxu0
        %1816 = vmatprep.mubr.f32.mxu0 0.0
        %1817 = vmatmul.mubr.f32.gmra.mrb[0].mxu0 %v1523
        %v1818 = vpop.f32.mrb[0].mxu0
        %v1819 = vadd.f32 0.0, %v1818
        %v1820 = vpop.f32.mrb[0].mxu0
        %1821 = vmatprep.mubr.f32.mxu0 0.0
        %1822 = vmatmul.mubr.f32.gmra.mrb[0].mxu0 %v1524
        %v1823 = vpop.f32.mrb[0].mxu0
        %v1824 = vadd.f32 0.0, %v1823
        %v1825 = vpop.f32.mrb[0].mxu0
        %1826 = vmatprep.mubr.f32.mxu0 0.0
        %1827 = vmatmul.mubr.f32.gmra.mrb[0].mxu0 %v1525
        %v1828 = vpop.f32.mrb[0].mxu0
        %v1829 = vadd.f32 0.0, %v1828
        %v1830 = vpop.f32.mrb[0].mxu0
        %1831 = vmatprep.mubr.f32.mxu0 0.0
        %1832 = vmatmul.mubr.f32.gmra.mrb[0].mxu0 %v1526
        %v1833 = vpop.f32.mrb[0].mxu0
        %v1834 = vadd.f32 0.0, %v1833
        %v1835 = vpop.f32.mrb[0].mxu0
        %1836 = vmatprep.mubr.f32.mxu0 0.0
        %1837 = vmatmul.mubr.f32.gmra.mrb[0].mxu0 %v1527
        %v1838 = vpop.f32.mrb[0].mxu0
        %v1839 = vadd.f32 0.0, %v1838
        %v1840 = vpop.f32.mrb[0].mxu0
        %1841 = vmatprep.mubr.f32.mxu0 0.0
        %1842 = vmatmul.mubr.f32.gmra.mrb[0].mxu0 %v1528
        %v1843 = vpop.f32.mrb[0].mxu0
        %v1844 = vadd.f32 0.0, %v1843
        %v1845 = vpop.f32.mrb[0].mxu0
        %1846 = vmatprep.mubr.f32.mxu0 0.0
        %1847 = vmatmul.mubr.f32.gmra.mrb[0].mxu0 %v1529
        %v1848 = vpop.f32.mrb[0].mxu0
        %v1849 = vadd.f32 0.0, %v1848
        %v1850 = vpop.f32.mrb[0].mxu0
        %1851 = vmatprep.mubr.f32.mxu0 0.0
        %1852 = vmatmul.mubr.f32.gmra.mrb[0].mxu0 %v1530
        %v1853 = vpop.f32.mrb[0].mxu0
        %v1854 = vadd.f32 0.0, %v1853
        %v1855 = vpop.f32.mrb[0].mxu0
        %1856 = vmatprep.mubr.f32.mxu0 0.0
        %1857 = vmatmul.mubr.f32.gmra.mrb[0].mxu0 %v1531
        %v1858 = vpop.f32.mrb[0].mxu0
        %v1859 = vadd.f32 0.0, %v1858
        %v1860 = vpop.f32.mrb[0].mxu0
        %1861 = vmatprep.mubr.f32.mxu0 0.0
        %1862 = vmatmul.mubr.f32.gmra.mrb[0].mxu0 %v1532
        %v1863 = vpop.f32.mrb[0].mxu0
        %v1864 = vadd.f32 0.0, %v1863
        %v1865 = vpop.f32.mrb[0].mxu0
        %1866 = vmatprep.mubr.f32.mxu0 0.0
        %1867 = vmatmul.mubr.f32.gmra.mrb[0].mxu0 %v1533
        %v1868 = vpop.f32.mrb[0].mxu0
        %v1869 = vadd.f32 0.0, %v1868
        %v1870 = vpop.f32.mrb[0].mxu0
        %1871 = vmatprep.mubr.f32.mxu0 0.0
        %1872 = vmatmul.mubr.f32.gmra.mrb[0].mxu0 %v1534
        %v1873 = vpop.f32.mrb[0].mxu0
        %v1874 = vadd.f32 0.0, %v1873
        %v1875 = vpop.f32.mrb[0].mxu0
        %1876 = vmatprep.mubr.f32.mxu0 0.0
        %1877 = vmatmul.mubr.f32.gmra.mrb[0].mxu0 %v1535
        %v1878 = vpop.f32.mrb[0].mxu0
        %v1879 = vadd.f32 0.0, %v1878
        %v1880 = vpop.f32.mrb[0].mxu0
        %1881 = vmatprep.mubr.f32.mxu0 0.0
        %1882 = vmatmul.mubr.f32.gmra.mrb[0].mxu0 %v1536
        %v1883 = vpop.f32.mrb[0].mxu0
        %v1884 = vadd.f32 0.0, %v1883
        %v1885 = vpop.f32.mrb[0].mxu0
        %1886 = vmatprep.mubr.f32.mxu0 0.0
        %1887 = vmatmul.mubr.f32.gmra.mrb[0].mxu0 %v1537
        %v1888 = vpop.f32.mrb[0].mxu0
        %v1889 = vadd.f32 0.0, %v1888
        %v1890 = vpop.f32.mrb[0].mxu0
        %1891 = vdwg.mxu0
        %v1892 = vld [vmem:[#allocation5] sm:$0xff]
        %v1893 = vld [vmem:[#allocation5 + $0x8] sm:$0xff]
        %v1894 = vld [vmem:[#allocation5 + $0x10] sm:$0xff]
        %v1895 = vld [vmem:[#allocation5 + $0x18] sm:$0xff]
        %v1896 = vld [vmem:[#allocation5 + $0x20] sm:$0xff]
        %v1897 = vld [vmem:[#allocation5 + $0x28] sm:$0xff]
        %v1898 = vld [vmem:[#allocation5 + $0x30] sm:$0xff]
        %v1899 = vld [vmem:[#allocation5 + $0x38] sm:$0xff]
        %v1900 = vld [vmem:[#allocation5 + $0x40] sm:$0xff]
        %v1901 = vld [vmem:[#allocation5 + $0x48] sm:$0xff]
        %v1902 = vld [vmem:[#allocation5 + $0x50] sm:$0xff]
        %v1903 = vld [vmem:[#allocation5 + $0x58] sm:$0xff]
        %v1904 = vld [vmem:[#allocation5 + $0x60] sm:$0xff]
        %v1905 = vld [vmem:[#allocation5 + $0x68] sm:$0xff]
        %v1906 = vld [vmem:[#allocation5 + $0x70] sm:$0xff]
        %v1907 = vld [vmem:[#allocation5 + $0x78] sm:$0xff]
        %vm1908 = vcmask 261120
        %v1910 = vsel %vm1908, %v1653, 0
        %v1913 = vsel %vm1908, %v1659, 0
        %v1916 = vsel %vm1908, %v1665, 0
        %v1919 = vsel %vm1908, %v1671, 0
        %v1922 = vsel %vm1908, %v1677, 0
        %v1925 = vsel %vm1908, %v1683, 0
        %v1928 = vsel %vm1908, %v1689, 0
        %v1931 = vsel %vm1908, %v1695, 0
        %v1934 = vsel %vm1908, %v1701, 0
        %v1937 = vsel %vm1908, %v1707, 0
        %v1940 = vsel %vm1908, %v1713, 0
        %v1943 = vsel %vm1908, %v1719, 0
        %v1946 = vsel %vm1908, %v1725, 0
        %v1949 = vsel %vm1908, %v1731, 0
        %v1952 = vsel %vm1908, %v1737, 0
        %v1955 = vsel %vm1908, %v1743, 0
        %v1958 = vsel %vm1908, %v1655, 0
        %v1961 = vsel %vm1908, %v1661, 0
        %v1964 = vsel %vm1908, %v1667, 0
        %v1967 = vsel %vm1908, %v1673, 0
        %v1970 = vsel %vm1908, %v1679, 0
        %v1973 = vsel %vm1908, %v1685, 0
        %v1976 = vsel %vm1908, %v1691, 0
        %v1979 = vsel %vm1908, %v1697, 0
        %v1982 = vsel %vm1908, %v1703, 0
        %v1985 = vsel %vm1908, %v1709, 0
        %v1988 = vsel %vm1908, %v1715, 0
        %v1991 = vsel %vm1908, %v1721, 0
        %v1994 = vsel %vm1908, %v1727, 0
        %v1997 = vsel %vm1908, %v1733, 0
        %v2000 = vsel %vm1908, %v1739, 0
        %v2003 = vsel %vm1908, %v1745, 0
        %2005 = vmatprep.subr.mxu0 0.0
        %2006 = vmatpush1.xpose.msra.mxu0 %v1958
        %2007 = vmatprep.subr.mxu0 0.0
        %2008 = vmatpush1.xpose.msra.mxu0 %v1961
        %2009 = vmatprep.subr.mxu0 0.0
        %2010 = vmatpush1.xpose.msra.mxu0 %v1964
        %2011 = vmatprep.subr.mxu0 0.0
        %2012 = vmatpush1.xpose.msra.mxu0 %v1967
        %2013 = vmatprep.subr.mxu0 0.0
        %2014 = vmatpush1.xpose.msra.mxu0 %v1970
        %2015 = vmatprep.subr.mxu0 0.0
        %2016 = vmatpush1.xpose.msra.mxu0 %v1973
        %2017 = vmatprep.subr.mxu0 0.0
        %2018 = vmatpush1.xpose.msra.mxu0 %v1976
        %2019 = vmatprep.subr.mxu0 0.0
        %2020 = vmatpush1.xpose.msra.mxu0 %v1979
        %2021 = vmatprep.subr.mxu0 0.0
        %2022 = vmatpush1.xpose.msra.mxu0 %v1982
        %2023 = vmatprep.subr.mxu0 0.0
        %2024 = vmatpush1.xpose.msra.mxu0 %v1985
        %2025 = vmatprep.subr.mxu0 0.0
        %2026 = vmatpush1.xpose.msra.mxu0 %v1988
        %2027 = vmatprep.subr.mxu0 0.0
        %2028 = vmatpush1.xpose.msra.mxu0 %v1991
        %2029 = vmatprep.subr.mxu0 0.0
        %2030 = vmatpush1.xpose.msra.mxu0 %v1994
        %2031 = vmatprep.subr.mxu0 0.0
        %2032 = vmatpush1.xpose.msra.mxu0 %v1997
        %2033 = vmatprep.subr.mxu0 0.0
        %2034 = vmatpush1.xpose.msra.mxu0 %v2000
        %2035 = vmatprep.subr.mxu0 0.0
        %2036 = vmatpush1.xpose.msra.mxu0 %v2003
        %2037 = vmatprep.subr.mxu0 0.0
        %2038 = vmatpush1.xpose.msra.mxu0 0.0
        %2039 = vmatprep.subr.mxu0 0.0
        %2040 = vmatpush1.xpose.msra.mxu0 0.0
        %2041 = vmatprep.subr.mxu0 0.0
        %2042 = vmatpush1.xpose.msra.mxu0 0.0
        %2043 = vmatprep.subr.mxu0 0.0
        %2044 = vmatpush1.xpose.msra.mxu0 0.0
        %2045 = vmatprep.subr.mxu0 0.0
        %2046 = vmatpush1.xpose.msra.mxu0 0.0
        %2047 = vmatprep.subr.mxu0 0.0
        %2048 = vmatpush1.xpose.msra.mxu0 0.0
        %2049 = vmatprep.subr.mxu0 0.0
        %2050 = vmatpush1.xpose.msra.mxu0 0.0
        %2051 = vmatprep.subr.mxu0 0.0
        %2052 = vmatpush1.xpose.msra.mxu0 0.0
        %2053 = vmatprep.subr.mxu0 0.0
        %2054 = vmatpush1.xpose.msra.mxu0 0.0
        %2055 = vmatprep.subr.mxu0 0.0
        %2056 = vmatpush1.xpose.msra.mxu0 0.0
        %2057 = vmatprep.subr.mxu0 0.0
        %2058 = vmatpush1.xpose.msra.mxu0 0.0
        %2059 = vmatprep.subr.mxu0 0.0
        %2060 = vmatpush1.xpose.msra.mxu0 0.0
        %2061 = vmatprep.subr.mxu0 0.0
        %2062 = vmatpush1.xpose.msra.mxu0 0.0
        %2063 = vmatprep.subr.mxu0 0.0
        %2064 = vmatpush1.xpose.msra.mxu0 0.0
        %2065 = vmatprep.subr.mxu0 0.0
        %2066 = vmatpush1.xpose.msra.mxu0 0.0
        %2067 = vmatprep.subr.mxu0 0.0
        %2068 = vmatpush1.xpose.msra.mxu0 0.0
        %2069 = vmatprep.mubr.f32.mxu0 0.0
        %2070 = vmatmul.mubr.f32.gmra.mrb[0].mxu0 %v1910
        %v2071 = vpop.f32.mrb[0].mxu0
        %v2072 = vadd.f32 %v1892, %v2071
        %v2073 = vpop.f32.mrb[0].mxu0
        %2074 = vmatprep.mubr.f32.mxu0 0.0
        %2075 = vmatmul.mubr.f32.gmra.mrb[0].mxu0 %v1913
        %v2076 = vpop.f32.mrb[0].mxu0
        %v2077 = vadd.f32 %v1893, %v2076
        %v2078 = vpop.f32.mrb[0].mxu0
        %2079 = vmatprep.mubr.f32.mxu0 0.0
        %2080 = vmatmul.mubr.f32.gmra.mrb[0].mxu0 %v1916
        %v2081 = vpop.f32.mrb[0].mxu0
        %v2082 = vadd.f32 %v1894, %v2081
        %v2083 = vpop.f32.mrb[0].mxu0
        %2084 = vmatprep.mubr.f32.mxu0 0.0
        %2085 = vmatmul.mubr.f32.gmra.mrb[0].mxu0 %v1919
        %v2086 = vpop.f32.mrb[0].mxu0
        %v2087 = vadd.f32 %v1895, %v2086
        %v2088 = vpop.f32.mrb[0].mxu0
        %2089 = vmatprep.mubr.f32.mxu0 0.0
        %2090 = vmatmul.mubr.f32.gmra.mrb[0].mxu0 %v1922
        %v2091 = vpop.f32.mrb[0].mxu0
        %v2092 = vadd.f32 %v1896, %v2091
        %v2093 = vpop.f32.mrb[0].mxu0
        %2094 = vmatprep.mubr.f32.mxu0 0.0
        %2095 = vmatmul.mubr.f32.gmra.mrb[0].mxu0 %v1925
        %v2096 = vpop.f32.mrb[0].mxu0
        %v2097 = vadd.f32 %v1897, %v2096
        %v2098 = vpop.f32.mrb[0].mxu0
        %2099 = vmatprep.mubr.f32.mxu0 0.0
        %2100 = vmatmul.mubr.f32.gmra.mrb[0].mxu0 %v1928
        %v2101 = vpop.f32.mrb[0].mxu0
        %v2102 = vadd.f32 %v1898, %v2101
        %v2103 = vpop.f32.mrb[0].mxu0
        %2104 = vmatprep.mubr.f32.mxu0 0.0
        %2105 = vmatmul.mubr.f32.gmra.mrb[0].mxu0 %v1931
        %v2106 = vpop.f32.mrb[0].mxu0
        %v2107 = vadd.f32 %v1899, %v2106
        %v2108 = vpop.f32.mrb[0].mxu0
        %2109 = vmatprep.mubr.f32.mxu0 0.0
        %2110 = vmatmul.mubr.f32.gmra.mrb[0].mxu0 %v1934
        %v2111 = vpop.f32.mrb[0].mxu0
        %v2112 = vadd.f32 %v1900, %v2111
        %v2113 = vpop.f32.mrb[0].mxu0
        %2114 = vmatprep.mubr.f32.mxu0 0.0
        %2115 = vmatmul.mubr.f32.gmra.mrb[0].mxu0 %v1937
        %v2116 = vpop.f32.mrb[0].mxu0
        %v2117 = vadd.f32 %v1901, %v2116
        %v2118 = vpop.f32.mrb[0].mxu0
        %2119 = vmatprep.mubr.f32.mxu0 0.0
        %2120 = vmatmul.mubr.f32.gmra.mrb[0].mxu0 %v1940
        %v2121 = vpop.f32.mrb[0].mxu0
        %v2122 = vadd.f32 %v1902, %v2121
        %v2123 = vpop.f32.mrb[0].mxu0
        %2124 = vmatprep.mubr.f32.mxu0 0.0
        %2125 = vmatmul.mubr.f32.gmra.mrb[0].mxu0 %v1943
        %v2126 = vpop.f32.mrb[0].mxu0
        %v2127 = vadd.f32 %v1903, %v2126
        %v2128 = vpop.f32.mrb[0].mxu0
        %2129 = vmatprep.mubr.f32.mxu0 0.0
        %2130 = vmatmul.mubr.f32.gmra.mrb[0].mxu0 %v1946
        %v2131 = vpop.f32.mrb[0].mxu0
        %v2132 = vadd.f32 %v1904, %v2131
        %v2133 = vpop.f32.mrb[0].mxu0
        %2134 = vmatprep.mubr.f32.mxu0 0.0
        %2135 = vmatmul.mubr.f32.gmra.mrb[0].mxu0 %v1949
        %v2136 = vpop.f32.mrb[0].mxu0
        %v2137 = vadd.f32 %v1905, %v2136
        %v2138 = vpop.f32.mrb[0].mxu0
        %2139 = vmatprep.mubr.f32.mxu0 0.0
        %2140 = vmatmul.mubr.f32.gmra.mrb[0].mxu0 %v1952
        %v2141 = vpop.f32.mrb[0].mxu0
        %v2142 = vadd.f32 %v1906, %v2141
        %v2143 = vpop.f32.mrb[0].mxu0
        %2144 = vmatprep.mubr.f32.mxu0 0.0
        %2145 = vmatmul.mubr.f32.gmra.mrb[0].mxu0 %v1955
        %v2146 = vpop.f32.mrb[0].mxu0
        %v2147 = vadd.f32 %v1907, %v2146
        %v2148 = vpop.f32.mrb[0].mxu0
        %2149 = vdwg.mxu0
        %2150 = vmax.xlane.f32.xlu0 %v2072
        %v2151 = vpop.xlane.xlu0 %2150
        %2152 = vmax.xlane.f32.xlu0 %v2077
        %v2153 = vpop.xlane.xlu0 %2152
        %2154 = vmax.xlane.f32.xlu0 %v2082
        %v2155 = vpop.xlane.xlu0 %2154
        %2156 = vmax.xlane.f32.xlu0 %v2087
        %v2157 = vpop.xlane.xlu0 %2156
        %2158 = vmax.xlane.f32.xlu0 %v2092
        %v2159 = vpop.xlane.xlu0 %2158
        %2160 = vmax.xlane.f32.xlu0 %v2097
        %v2161 = vpop.xlane.xlu0 %2160
        %2162 = vmax.xlane.f32.xlu0 %v2102
        %v2163 = vpop.xlane.xlu0 %2162
        %2164 = vmax.xlane.f32.xlu0 %v2107
        %v2165 = vpop.xlane.xlu0 %2164
        %2166 = vmax.xlane.f32.xlu0 %v2112
        %v2167 = vpop.xlane.xlu0 %2166
        %2168 = vmax.xlane.f32.xlu0 %v2117
        %v2169 = vpop.xlane.xlu0 %2168
        %2170 = vmax.xlane.f32.xlu0 %v2122
        %v2171 = vpop.xlane.xlu0 %2170
        %2172 = vmax.xlane.f32.xlu0 %v2127
        %v2173 = vpop.xlane.xlu0 %2172
        %2174 = vmax.xlane.f32.xlu0 %v2132
        %v2175 = vpop.xlane.xlu0 %2174
        %2176 = vmax.xlane.f32.xlu0 %v2137
        %v2177 = vpop.xlane.xlu0 %2176
        %2178 = vmax.xlane.f32.xlu0 %v2142
        %v2179 = vpop.xlane.xlu0 %2178
        %2180 = vmax.xlane.f32.xlu0 %v2147
        %v2181 = vpop.xlane.xlu0 %2180
        %v2182 = vsub.f32 %v2072, %v2151
        %v2183 = vsub.f32 %v2077, %v2153
        %v2184 = vsub.f32 %v2082, %v2155
        %v2185 = vsub.f32 %v2087, %v2157
        %v2186 = vsub.f32 %v2092, %v2159
        %v2187 = vsub.f32 %v2097, %v2161
        %v2188 = vsub.f32 %v2102, %v2163
        %v2189 = vsub.f32 %v2107, %v2165
        %v2190 = vsub.f32 %v2112, %v2167
        %v2191 = vsub.f32 %v2117, %v2169
        %v2192 = vsub.f32 %v2122, %v2171
        %v2193 = vsub.f32 %v2127, %v2173
        %v2194 = vsub.f32 %v2132, %v2175
        %v2195 = vsub.f32 %v2137, %v2177
        %v2196 = vsub.f32 %v2142, %v2179
        %v2197 = vsub.f32 %v2147, %v2181
        %v2198 = vmul.f32 %v2182, 1.442695
        %v2199 = vpow.pop %v2198
        %v2200 = vmul.f32 %v2183, 1.442695
        %v2201 = vpow.pop %v2200
        %v2202 = vmul.f32 %v2184, 1.442695
        %v2203 = vpow.pop %v2202
        %v2204 = vmul.f32 %v2185, 1.442695
        %v2205 = vpow.pop %v2204
        %v2206 = vmul.f32 %v2186, 1.442695
        %v2207 = vpow.pop %v2206
        %v2208 = vmul.f32 %v2187, 1.442695
        %v2209 = vpow.pop %v2208
        %v2210 = vmul.f32 %v2188, 1.442695
        %v2211 = vpow.pop %v2210
        %v2212 = vmul.f32 %v2189, 1.442695
        %v2213 = vpow.pop %v2212
        %v2214 = vmul.f32 %v2190, 1.442695
        %v2215 = vpow.pop %v2214
        %v2216 = vmul.f32 %v2191, 1.442695
        %v2217 = vpow.pop %v2216
        %v2218 = vmul.f32 %v2192, 1.442695
        %v2219 = vpow.pop %v2218
        %v2220 = vmul.f32 %v2193, 1.442695
        %v2221 = vpow.pop %v2220
        %v2222 = vmul.f32 %v2194, 1.442695
        %v2223 = vpow.pop %v2222
        %v2224 = vmul.f32 %v2195, 1.442695
        %v2225 = vpow.pop %v2224
        %v2226 = vmul.f32 %v2196, 1.442695
        %v2227 = vpow.pop %v2226
        %v2228 = vmul.f32 %v2197, 1.442695
        %v2229 = vpow.pop %v2228
        %2230 = vadd.xlane.f32.xlu0 %v2199
        %v2231 = vpop.xlane.xlu0 %2230
        %2232 = vadd.xlane.f32.xlu0 %v2201
        %v2233 = vpop.xlane.xlu0 %2232
        %2234 = vadd.xlane.f32.xlu0 %v2203
        %v2235 = vpop.xlane.xlu0 %2234
        %2236 = vadd.xlane.f32.xlu0 %v2205
        %v2237 = vpop.xlane.xlu0 %2236
        %2238 = vadd.xlane.f32.xlu0 %v2207
        %v2239 = vpop.xlane.xlu0 %2238
        %2240 = vadd.xlane.f32.xlu0 %v2209
        %v2241 = vpop.xlane.xlu0 %2240
        %2242 = vadd.xlane.f32.xlu0 %v2211
        %v2243 = vpop.xlane.xlu0 %2242
        %2244 = vadd.xlane.f32.xlu0 %v2213
        %v2245 = vpop.xlane.xlu0 %2244
        %2246 = vadd.xlane.f32.xlu0 %v2215
        %v2247 = vpop.xlane.xlu0 %2246
        %2248 = vadd.xlane.f32.xlu0 %v2217
        %v2249 = vpop.xlane.xlu0 %2248
        %2250 = vadd.xlane.f32.xlu0 %v2219
        %v2251 = vpop.xlane.xlu0 %2250
        %2252 = vadd.xlane.f32.xlu0 %v2221
        %v2253 = vpop.xlane.xlu0 %2252
        %2254 = vadd.xlane.f32.xlu0 %v2223
        %v2255 = vpop.xlane.xlu0 %2254
        %2256 = vadd.xlane.f32.xlu0 %v2225
        %v2257 = vpop.xlane.xlu0 %2256
        %2258 = vadd.xlane.f32.xlu0 %v2227
        %v2259 = vpop.xlane.xlu0 %2258
        %2260 = vadd.xlane.f32.xlu0 %v2229
        %v2261 = vpop.xlane.xlu0 %2260
        %v2262 = vrcp.pop %v2231
        %v2263 = vmul.f32 %v2199, %v2262
        %v2264 = vrcp.pop %v2233
        %v2265 = vmul.f32 %v2201, %v2264
        %v2266 = vrcp.pop %v2235
        %v2267 = vmul.f32 %v2203, %v2266
        %v2268 = vrcp.pop %v2237
        %v2269 = vmul.f32 %v2205, %v2268
        %v2270 = vrcp.pop %v2239
        %v2271 = vmul.f32 %v2207, %v2270
        %v2272 = vrcp.pop %v2241
        %v2273 = vmul.f32 %v2209, %v2272
        %v2274 = vrcp.pop %v2243
        %v2275 = vmul.f32 %v2211, %v2274
        %v2276 = vrcp.pop %v2245
        %v2277 = vmul.f32 %v2213, %v2276
        %v2278 = vrcp.pop %v2247
        %v2279 = vmul.f32 %v2215, %v2278
        %v2280 = vrcp.pop %v2249
        %v2281 = vmul.f32 %v2217, %v2280
        %v2282 = vrcp.pop %v2251
        %v2283 = vmul.f32 %v2219, %v2282
        %v2284 = vrcp.pop %v2253
        %v2285 = vmul.f32 %v2221, %v2284
        %v2286 = vrcp.pop %v2255
        %v2287 = vmul.f32 %v2223, %v2286
        %v2288 = vrcp.pop %v2257
        %v2289 = vmul.f32 %v2225, %v2288
        %v2290 = vrcp.pop %v2259
        %v2291 = vmul.f32 %v2227, %v2290
        %v2292 = vrcp.pop %v2261
        %v2293 = vmul.f32 %v2229, %v2292
        %2294 = vmatprep.subr.mxu0 0.0
        %2295 = vmatpush1.msra.mxu0 %v1814
        %2296 = vmatprep.subr.mxu0 0.0
        %2297 = vmatpush1.msra.mxu0 %v1819
        %2298 = vmatprep.subr.mxu0 0.0
        %2299 = vmatpush1.msra.mxu0 %v1824
        %2300 = vmatprep.subr.mxu0 0.0
        %2301 = vmatpush1.msra.mxu0 %v1829
        %2302 = vmatprep.subr.mxu0 0.0
        %2303 = vmatpush1.msra.mxu0 %v1834
        %2304 = vmatprep.subr.mxu0 0.0
        %2305 = vmatpush1.msra.mxu0 %v1839
        %2306 = vmatprep.subr.mxu0 0.0
        %2307 = vmatpush1.msra.mxu0 %v1844
        %2308 = vmatprep.subr.mxu0 0.0
        %2309 = vmatpush1.msra.mxu0 %v1849
        %2310 = vmatprep.subr.mxu0 0.0
        %2311 = vmatpush1.msra.mxu0 %v1854
        %2312 = vmatprep.subr.mxu0 0.0
        %2313 = vmatpush1.msra.mxu0 %v1859
        %2314 = vmatprep.subr.mxu0 0.0
        %2315 = vmatpush1.msra.mxu0 %v1864
        %2316 = vmatprep.subr.mxu0 0.0
        %2317 = vmatpush1.msra.mxu0 %v1869
        %2318 = vmatprep.subr.mxu0 0.0
        %2319 = vmatpush1.msra.mxu0 %v1874
        %2320 = vmatprep.subr.mxu0 0.0
        %2321 = vmatpush1.msra.mxu0 %v1879
        %2322 = vmatprep.subr.mxu0 0.0
        %2323 = vmatpush1.msra.mxu0 %v1884
        %2324 = vmatprep.subr.mxu0 0.0
        %2325 = vmatpush1.msra.mxu0 %v1889
        %2326 = vmatprep.subr.mxu0 0.0
        %2327 = vmatpush1.msra.mxu0 0.0
        %2328 = vmatprep.subr.mxu0 0.0
        %2329 = vmatpush1.msra.mxu0 0.0
        %2330 = vmatprep.subr.mxu0 0.0
        %2331 = vmatpush1.msra.mxu0 0.0
        %2332 = vmatprep.subr.mxu0 0.0
        %2333 = vmatpush1.msra.mxu0 0.0
        %2334 = vmatprep.subr.mxu0 0.0
        %2335 = vmatpush1.msra.mxu0 0.0
        %2336 = vmatprep.subr.mxu0 0.0
        %2337 = vmatpush1.msra.mxu0 0.0
        %2338 = vmatprep.subr.mxu0 0.0
        %2339 = vmatpush1.msra.mxu0 0.0
        %2340 = vmatprep.subr.mxu0 0.0
        %2341 = vmatpush1.msra.mxu0 0.0
        %2342 = vmatprep.subr.mxu0 0.0
        %2343 = vmatpush1.msra.mxu0 0.0
        %2344 = vmatprep.subr.mxu0 0.0
        %2345 = vmatpush1.msra.mxu0 0.0
        %2346 = vmatprep.subr.mxu0 0.0
        %2347 = vmatpush1.msra.mxu0 0.0
        %2348 = vmatprep.subr.mxu0 0.0
        %2349 = vmatpush1.msra.mxu0 0.0
        %2350 = vmatprep.subr.mxu0 0.0
        %2351 = vmatpush1.msra.mxu0 0.0
        %2352 = vmatprep.subr.mxu0 0.0
        %2353 = vmatpush1.msra.mxu0 0.0
        %2354 = vmatprep.subr.mxu0 0.0
        %2355 = vmatpush1.msra.mxu0 0.0
        %2356 = vmatprep.subr.mxu0 0.0
        %2357 = vmatpush1.msra.mxu0 0.0
        %2358 = vmatprep.mubr.f32.mxu0 0.0
        %2359 = vmatmul.mubr.f32.gmra.mrb[0].mxu0 %v2263
        %v2360 = vpop.f32.mrb[0].mxu0
        %v2361 = vadd.f32 0.0, %v2360
        %v2362 = vpop.f32.mrb[0].mxu0
        %2363 = vmatprep.mubr.f32.mxu0 0.0
        %2364 = vmatmul.mubr.f32.gmra.mrb[0].mxu0 %v2265
        %v2365 = vpop.f32.mrb[0].mxu0
        %v2366 = vadd.f32 0.0, %v2365
        %v2367 = vpop.f32.mrb[0].mxu0
        %2368 = vmatprep.mubr.f32.mxu0 0.0
        %2369 = vmatmul.mubr.f32.gmra.mrb[0].mxu0 %v2267
        %v2370 = vpop.f32.mrb[0].mxu0
        %v2371 = vadd.f32 0.0, %v2370
        %v2372 = vpop.f32.mrb[0].mxu0
        %2373 = vmatprep.mubr.f32.mxu0 0.0
        %2374 = vmatmul.mubr.f32.gmra.mrb[0].mxu0 %v2269
        %v2375 = vpop.f32.mrb[0].mxu0
        %v2376 = vadd.f32 0.0, %v2375
        %v2377 = vpop.f32.mrb[0].mxu0
        %2378 = vmatprep.mubr.f32.mxu0 0.0
        %2379 = vmatmul.mubr.f32.gmra.mrb[0].mxu0 %v2271
        %v2380 = vpop.f32.mrb[0].mxu0
        %v2381 = vadd.f32 0.0, %v2380
        %v2382 = vpop.f32.mrb[0].mxu0
        %2383 = vmatprep.mubr.f32.mxu0 0.0
        %2384 = vmatmul.mubr.f32.gmra.mrb[0].mxu0 %v2273
        %v2385 = vpop.f32.mrb[0].mxu0
        %v2386 = vadd.f32 0.0, %v2385
        %v2387 = vpop.f32.mrb[0].mxu0
        %2388 = vmatprep.mubr.f32.mxu0 0.0
        %2389 = vmatmul.mubr.f32.gmra.mrb[0].mxu0 %v2275
        %v2390 = vpop.f32.mrb[0].mxu0
        %v2391 = vadd.f32 0.0, %v2390
        %v2392 = vpop.f32.mrb[0].mxu0
        %2393 = vmatprep.mubr.f32.mxu0 0.0
        %2394 = vmatmul.mubr.f32.gmra.mrb[0].mxu0 %v2277
        %v2395 = vpop.f32.mrb[0].mxu0
        %v2396 = vadd.f32 0.0, %v2395
        %v2397 = vpop.f32.mrb[0].mxu0
        %2398 = vmatprep.mubr.f32.mxu0 0.0
        %2399 = vmatmul.mubr.f32.gmra.mrb[0].mxu0 %v2279
        %v2400 = vpop.f32.mrb[0].mxu0
        %v2401 = vadd.f32 0.0, %v2400
        %v2402 = vpop.f32.mrb[0].mxu0
        %2403 = vmatprep.mubr.f32.mxu0 0.0
        %2404 = vmatmul.mubr.f32.gmra.mrb[0].mxu0 %v2281
        %v2405 = vpop.f32.mrb[0].mxu0
        %v2406 = vadd.f32 0.0, %v2405
        %v2407 = vpop.f32.mrb[0].mxu0
        %2408 = vmatprep.mubr.f32.mxu0 0.0
        %2409 = vmatmul.mubr.f32.gmra.mrb[0].mxu0 %v2283
        %v2410 = vpop.f32.mrb[0].mxu0
        %v2411 = vadd.f32 0.0, %v2410
        %v2412 = vpop.f32.mrb[0].mxu0
        %2413 = vmatprep.mubr.f32.mxu0 0.0
        %2414 = vmatmul.mubr.f32.gmra.mrb[0].mxu0 %v2285
        %v2415 = vpop.f32.mrb[0].mxu0
        %v2416 = vadd.f32 0.0, %v2415
        %v2417 = vpop.f32.mrb[0].mxu0
        %2418 = vmatprep.mubr.f32.mxu0 0.0
        %2419 = vmatmul.mubr.f32.gmra.mrb[0].mxu0 %v2287
        %v2420 = vpop.f32.mrb[0].mxu0
        %v2421 = vadd.f32 0.0, %v2420
        %v2422 = vpop.f32.mrb[0].mxu0
        %2423 = vmatprep.mubr.f32.mxu0 0.0
        %2424 = vmatmul.mubr.f32.gmra.mrb[0].mxu0 %v2289
        %v2425 = vpop.f32.mrb[0].mxu0
        %v2426 = vadd.f32 0.0, %v2425
        %v2427 = vpop.f32.mrb[0].mxu0
        %2428 = vmatprep.mubr.f32.mxu0 0.0
        %2429 = vmatmul.mubr.f32.gmra.mrb[0].mxu0 %v2291
        %v2430 = vpop.f32.mrb[0].mxu0
        %v2431 = vadd.f32 0.0, %v2430
        %v2432 = vpop.f32.mrb[0].mxu0
        %2433 = vmatprep.mubr.f32.mxu0 0.0
        %2434 = vmatmul.mubr.f32.gmra.mrb[0].mxu0 %v2293
        %v2435 = vpop.f32.mrb[0].mxu0
        %v2436 = vadd.f32 0.0, %v2435
        %v2437 = vpop.f32.mrb[0].mxu0
        %2438 = vdwg.mxu0
        %2439 = vrot.lane.b32.xlu0 %v1653, 96
        %v2440 = vpop.permute.xlu0 %2439
        %2441 = vrot.lane.b32.xlu0 %v1659, 96
        %v2442 = vpop.permute.xlu0 %2441
        %2443 = vrot.lane.b32.xlu0 %v1665, 96
        %v2444 = vpop.permute.xlu0 %2443
        %2445 = vrot.lane.b32.xlu0 %v1671, 96
        %v2446 = vpop.permute.xlu0 %2445
        %2447 = vrot.lane.b32.xlu0 %v1677, 96
        %v2448 = vpop.permute.xlu0 %2447
        %2449 = vrot.lane.b32.xlu0 %v1683, 96
        %v2450 = vpop.permute.xlu0 %2449
        %2451 = vrot.lane.b32.xlu0 %v1689, 96
        %v2452 = vpop.permute.xlu0 %2451
        %2453 = vrot.lane.b32.xlu0 %v1695, 96
        %v2454 = vpop.permute.xlu0 %2453
        %2455 = vrot.lane.b32.xlu0 %v1701, 96
        %v2456 = vpop.permute.xlu0 %2455
        %2457 = vrot.lane.b32.xlu0 %v1707, 96
        %v2458 = vpop.permute.xlu0 %2457
        %2459 = vrot.lane.b32.xlu0 %v1713, 96
        %v2460 = vpop.permute.xlu0 %2459
        %2461 = vrot.lane.b32.xlu0 %v1719, 96
        %v2462 = vpop.permute.xlu0 %2461
        %2463 = vrot.lane.b32.xlu0 %v1725, 96
        %v2464 = vpop.permute.xlu0 %2463
        %2465 = vrot.lane.b32.xlu0 %v1731, 96
        %v2466 = vpop.permute.xlu0 %2465
        %2467 = vrot.lane.b32.xlu0 %v1737, 96
        %v2468 = vpop.permute.xlu0 %2467
        %2469 = vrot.lane.b32.xlu0 %v1743, 96
        %v2470 = vpop.permute.xlu0 %2469
        %2471 = vrot.lane.b32.xlu0 %v1655, 96
        %v2472 = vpop.permute.xlu0 %2471
        %2473 = vrot.lane.b32.xlu0 %v1661, 96
        %v2474 = vpop.permute.xlu0 %2473
        %2475 = vrot.lane.b32.xlu0 %v1667, 96
        %v2476 = vpop.permute.xlu0 %2475
        %2477 = vrot.lane.b32.xlu0 %v1673, 96
        %v2478 = vpop.permute.xlu0 %2477
        %2479 = vrot.lane.b32.xlu0 %v1679, 96
        %v2480 = vpop.permute.xlu0 %2479
        %2481 = vrot.lane.b32.xlu0 %v1685, 96
        %v2482 = vpop.permute.xlu0 %2481
        %2483 = vrot.lane.b32.xlu0 %v1691, 96
        %v2484 = vpop.permute.xlu0 %2483
        %2485 = vrot.lane.b32.xlu0 %v1697, 96
        %v2486 = vpop.permute.xlu0 %2485
        %2487 = vrot.lane.b32.xlu0 %v1703, 96
        %v2488 = vpop.permute.xlu0 %2487
        %2489 = vrot.lane.b32.xlu0 %v1709, 96
        %v2490 = vpop.permute.xlu0 %2489
        %2491 = vrot.lane.b32.xlu0 %v1715, 96
        %v2492 = vpop.permute.xlu0 %2491
        %2493 = vrot.lane.b32.xlu0 %v1721, 96
        %v2494 = vpop.permute.xlu0 %2493
        %2495 = vrot.lane.b32.xlu0 %v1727, 96
        %v2496 = vpop.permute.xlu0 %2495
        %2497 = vrot.lane.b32.xlu0 %v1733, 96
        %v2498 = vpop.permute.xlu0 %2497
        %2499 = vrot.lane.b32.xlu0 %v1739, 96
        %v2500 = vpop.permute.xlu0 %2499
        %2501 = vrot.lane.b32.xlu0 %v1745, 96
        %v2502 = vpop.permute.xlu0 %2501
        %v2503 = vsel %vm1908, %v2440, 0
        %v2505 = vsel %vm1908, %v2442, 0
        %v2507 = vsel %vm1908, %v2444, 0
        %v2509 = vsel %vm1908, %v2446, 0
        %v2511 = vsel %vm1908, %v2448, 0
        %v2513 = vsel %vm1908, %v2450, 0
        %v2515 = vsel %vm1908, %v2452, 0
        %v2517 = vsel %vm1908, %v2454, 0
        %v2519 = vsel %vm1908, %v2456, 0
        %v2521 = vsel %vm1908, %v2458, 0
        %v2523 = vsel %vm1908, %v2460, 0
        %v2525 = vsel %vm1908, %v2462, 0
        %v2527 = vsel %vm1908, %v2464, 0
        %v2529 = vsel %vm1908, %v2466, 0
        %v2531 = vsel %vm1908, %v2468, 0
        %v2533 = vsel %vm1908, %v2470, 0
        %v2535 = vsel %vm1908, %v2472, 0
        %v2537 = vsel %vm1908, %v2474, 0
        %v2539 = vsel %vm1908, %v2476, 0
        %v2541 = vsel %vm1908, %v2478, 0
        %v2543 = vsel %vm1908, %v2480, 0
        %v2545 = vsel %vm1908, %v2482, 0
        %v2547 = vsel %vm1908, %v2484, 0
        %v2549 = vsel %vm1908, %v2486, 0
        %v2551 = vsel %vm1908, %v2488, 0
        %v2553 = vsel %vm1908, %v2490, 0
        %v2555 = vsel %vm1908, %v2492, 0
        %v2557 = vsel %vm1908, %v2494, 0
        %v2559 = vsel %vm1908, %v2496, 0
        %v2561 = vsel %vm1908, %v2498, 0
        %v2563 = vsel %vm1908, %v2500, 0
        %v2565 = vsel %vm1908, %v2502, 0
        %2567 = vmatprep.subr.mxu0 0.0
        %2568 = vmatpush1.xpose.msra.mxu0 %v2535
        %2569 = vmatprep.subr.mxu0 0.0
        %2570 = vmatpush1.xpose.msra.mxu0 %v2537
        %2571 = vmatprep.subr.mxu0 0.0
        %2572 = vmatpush1.xpose.msra.mxu0 %v2539
        %2573 = vmatprep.subr.mxu0 0.0
        %2574 = vmatpush1.xpose.msra.mxu0 %v2541
        %2575 = vmatprep.subr.mxu0 0.0
        %2576 = vmatpush1.xpose.msra.mxu0 %v2543
        %2577 = vmatprep.subr.mxu0 0.0
        %2578 = vmatpush1.xpose.msra.mxu0 %v2545
        %2579 = vmatprep.subr.mxu0 0.0
        %2580 = vmatpush1.xpose.msra.mxu0 %v2547
        %2581 = vmatprep.subr.mxu0 0.0
        %2582 = vmatpush1.xpose.msra.mxu0 %v2549
        %2583 = vmatprep.subr.mxu0 0.0
        %2584 = vmatpush1.xpose.msra.mxu0 %v2551
        %2585 = vmatprep.subr.mxu0 0.0
        %2586 = vmatpush1.xpose.msra.mxu0 %v2553
        %2587 = vmatprep.subr.mxu0 0.0
        %2588 = vmatpush1.xpose.msra.mxu0 %v2555
        %2589 = vmatprep.subr.mxu0 0.0
        %2590 = vmatpush1.xpose.msra.mxu0 %v2557
        %2591 = vmatprep.subr.mxu0 0.0
        %2592 = vmatpush1.xpose.msra.mxu0 %v2559
        %2593 = vmatprep.subr.mxu0 0.0
        %2594 = vmatpush1.xpose.msra.mxu0 %v2561
        %2595 = vmatprep.subr.mxu0 0.0
        %2596 = vmatpush1.xpose.msra.mxu0 %v2563
        %2597 = vmatprep.subr.mxu0 0.0
        %2598 = vmatpush1.xpose.msra.mxu0 %v2565
        %2599 = vmatprep.subr.mxu0 0.0
        %2600 = vmatpush1.xpose.msra.mxu0 0.0
        %2601 = vmatprep.subr.mxu0 0.0
        %2602 = vmatpush1.xpose.msra.mxu0 0.0
        %2603 = vmatprep.subr.mxu0 0.0
        %2604 = vmatpush1.xpose.msra.mxu0 0.0
        %2605 = vmatprep.subr.mxu0 0.0
        %2606 = vmatpush1.xpose.msra.mxu0 0.0
        %2607 = vmatprep.subr.mxu0 0.0
        %2608 = vmatpush1.xpose.msra.mxu0 0.0
        %2609 = vmatprep.subr.mxu0 0.0
        %2610 = vmatpush1.xpose.msra.mxu0 0.0
        %2611 = vmatprep.subr.mxu0 0.0
        %2612 = vmatpush1.xpose.msra.mxu0 0.0
        %2613 = vmatprep.subr.mxu0 0.0
        %2614 = vmatpush1.xpose.msra.mxu0 0.0
        %2615 = vmatprep.subr.mxu0 0.0
        %2616 = vmatpush1.xpose.msra.mxu0 0.0
        %2617 = vmatprep.subr.mxu0 0.0
        %2618 = vmatpush1.xpose.msra.mxu0 0.0
        %2619 = vmatprep.subr.mxu0 0.0
        %2620 = vmatpush1.xpose.msra.mxu0 0.0
        %2621 = vmatprep.subr.mxu0 0.0
        %2622 = vmatpush1.xpose.msra.mxu0 0.0
        %2623 = vmatprep.subr.mxu0 0.0
        %2624 = vmatpush1.xpose.msra.mxu0 0.0
        %2625 = vmatprep.subr.mxu0 0.0
        %2626 = vmatpush1.xpose.msra.mxu0 0.0
        %2627 = vmatprep.subr.mxu0 0.0
        %2628 = vmatpush1.xpose.msra.mxu0 0.0
        %2629 = vmatprep.subr.mxu0 0.0
        %2630 = vmatpush1.xpose.msra.mxu0 0.0
        %2631 = vmatprep.mubr.f32.mxu0 0.0
        %2632 = vmatmul.mubr.f32.gmra.mrb[0].mxu0 %v2503
        %v2633 = vpop.f32.mrb[0].mxu0
        %v2634 = vadd.f32 %v1892, %v2633
        %v2635 = vpop.f32.mrb[0].mxu0
        %2636 = vmatprep.mubr.f32.mxu0 0.0
        %2637 = vmatmul.mubr.f32.gmra.mrb[0].mxu0 %v2505
        %v2638 = vpop.f32.mrb[0].mxu0
        %v2639 = vadd.f32 %v1893, %v2638
        %v2640 = vpop.f32.mrb[0].mxu0
        %2641 = vmatprep.mubr.f32.mxu0 0.0
        %2642 = vmatmul.mubr.f32.gmra.mrb[0].mxu0 %v2507
        %v2643 = vpop.f32.mrb[0].mxu0
        %v2644 = vadd.f32 %v1894, %v2643
        %v2645 = vpop.f32.mrb[0].mxu0
        %2646 = vmatprep.mubr.f32.mxu0 0.0
        %2647 = vmatmul.mubr.f32.gmra.mrb[0].mxu0 %v2509
        %v2648 = vpop.f32.mrb[0].mxu0
        %v2649 = vadd.f32 %v1895, %v2648
        %v2650 = vpop.f32.mrb[0].mxu0
        %2651 = vmatprep.mubr.f32.mxu0 0.0
        %2652 = vmatmul.mubr.f32.gmra.mrb[0].mxu0 %v2511
        %v2653 = vpop.f32.mrb[0].mxu0
        %v2654 = vadd.f32 %v1896, %v2653
        %v2655 = vpop.f32.mrb[0].mxu0
        %2656 = vmatprep.mubr.f32.mxu0 0.0
        %2657 = vmatmul.mubr.f32.gmra.mrb[0].mxu0 %v2513
        %v2658 = vpop.f32.mrb[0].mxu0
        %v2659 = vadd.f32 %v1897, %v2658
        %v2660 = vpop.f32.mrb[0].mxu0
        %2661 = vmatprep.mubr.f32.mxu0 0.0
        %2662 = vmatmul.mubr.f32.gmra.mrb[0].mxu0 %v2515
        %v2663 = vpop.f32.mrb[0].mxu0
        %v2664 = vadd.f32 %v1898, %v2663
        %v2665 = vpop.f32.mrb[0].mxu0
        %2666 = vmatprep.mubr.f32.mxu0 0.0
        %2667 = vmatmul.mubr.f32.gmra.mrb[0].mxu0 %v2517
        %v2668 = vpop.f32.mrb[0].mxu0
        %v2669 = vadd.f32 %v1899, %v2668
        %v2670 = vpop.f32.mrb[0].mxu0
        %2671 = vmatprep.mubr.f32.mxu0 0.0
        %2672 = vmatmul.mubr.f32.gmra.mrb[0].mxu0 %v2519
        %v2673 = vpop.f32.mrb[0].mxu0
        %v2674 = vadd.f32 %v1900, %v2673
        %v2675 = vpop.f32.mrb[0].mxu0
        %2676 = vmatprep.mubr.f32.mxu0 0.0
        %2677 = vmatmul.mubr.f32.gmra.mrb[0].mxu0 %v2521
        %v2678 = vpop.f32.mrb[0].mxu0
        %v2679 = vadd.f32 %v1901, %v2678
        %v2680 = vpop.f32.mrb[0].mxu0
        %2681 = vmatprep.mubr.f32.mxu0 0.0
        %2682 = vmatmul.mubr.f32.gmra.mrb[0].mxu0 %v2523
        %v2683 = vpop.f32.mrb[0].mxu0
        %v2684 = vadd.f32 %v1902, %v2683
        %v2685 = vpop.f32.mrb[0].mxu0
        %2686 = vmatprep.mubr.f32.mxu0 0.0
        %2687 = vmatmul.mubr.f32.gmra.mrb[0].mxu0 %v2525
        %v2688 = vpop.f32.mrb[0].mxu0
        %v2689 = vadd.f32 %v1903, %v2688
        %v2690 = vpop.f32.mrb[0].mxu0
        %2691 = vmatprep.mubr.f32.mxu0 0.0
        %2692 = vmatmul.mubr.f32.gmra.mrb[0].mxu0 %v2527
        %v2693 = vpop.f32.mrb[0].mxu0
        %v2694 = vadd.f32 %v1904, %v2693
        %v2695 = vpop.f32.mrb[0].mxu0
        %2696 = vmatprep.mubr.f32.mxu0 0.0
        %2697 = vmatmul.mubr.f32.gmra.mrb[0].mxu0 %v2529
        %v2698 = vpop.f32.mrb[0].mxu0
        %v2699 = vadd.f32 %v1905, %v2698
        %v2700 = vpop.f32.mrb[0].mxu0
        %2701 = vmatprep.mubr.f32.mxu0 0.0
        %2702 = vmatmul.mubr.f32.gmra.mrb[0].mxu0 %v2531
        %v2703 = vpop.f32.mrb[0].mxu0
        %v2704 = vadd.f32 %v1906, %v2703
        %v2705 = vpop.f32.mrb[0].mxu0
        %2706 = vmatprep.mubr.f32.mxu0 0.0
        %2707 = vmatmul.mubr.f32.gmra.mrb[0].mxu0 %v2533
        %v2708 = vpop.f32.mrb[0].mxu0
        %v2709 = vadd.f32 %v1907, %v2708
        %v2710 = vpop.f32.mrb[0].mxu0
        %2711 = vdwg.mxu0
        %2712 = vmax.xlane.f32.xlu0 %v2634
        %v2713 = vpop.xlane.xlu0 %2712
        %2714 = vmax.xlane.f32.xlu0 %v2639
        %v2715 = vpop.xlane.xlu0 %2714
        %2716 = vmax.xlane.f32.xlu0 %v2644
        %v2717 = vpop.xlane.xlu0 %2716
        %2718 = vmax.xlane.f32.xlu0 %v2649
        %v2719 = vpop.xlane.xlu0 %2718
        %2720 = vmax.xlane.f32.xlu0 %v2654
        %v2721 = vpop.xlane.xlu0 %2720
        %2722 = vmax.xlane.f32.xlu0 %v2659
        %v2723 = vpop.xlane.xlu0 %2722
        %2724 = vmax.xlane.f32.xlu0 %v2664
        %v2725 = vpop.xlane.xlu0 %2724
        %2726 = vmax.xlane.f32.xlu0 %v2669
        %v2727 = vpop.xlane.xlu0 %2726
        %2728 = vmax.xlane.f32.xlu0 %v2674
        %v2729 = vpop.xlane.xlu0 %2728
        %2730 = vmax.xlane.f32.xlu0 %v2679
        %v2731 = vpop.xlane.xlu0 %2730
        %2732 = vmax.xlane.f32.xlu0 %v2684
        %v2733 = vpop.xlane.xlu0 %2732
        %2734 = vmax.xlane.f32.xlu0 %v2689
        %v2735 = vpop.xlane.xlu0 %2734
        %2736 = vmax.xlane.f32.xlu0 %v2694
        %v2737 = vpop.xlane.xlu0 %2736
        %2738 = vmax.xlane.f32.xlu0 %v2699
        %v2739 = vpop.xlane.xlu0 %2738
        %2740 = vmax.xlane.f32.xlu0 %v2704
        %v2741 = vpop.xlane.xlu0 %2740
        %2742 = vmax.xlane.f32.xlu0 %v2709
        %v2743 = vpop.xlane.xlu0 %2742
        %v2744 = vsub.f32 %v2634, %v2713
        %v2745 = vsub.f32 %v2639, %v2715
        %v2746 = vsub.f32 %v2644, %v2717
        %v2747 = vsub.f32 %v2649, %v2719
        %v2748 = vsub.f32 %v2654, %v2721
        %v2749 = vsub.f32 %v2659, %v2723
        %v2750 = vsub.f32 %v2664, %v2725
        %v2751 = vsub.f32 %v2669, %v2727
        %v2752 = vsub.f32 %v2674, %v2729
        %v2753 = vsub.f32 %v2679, %v2731
        %v2754 = vsub.f32 %v2684, %v2733
        %v2755 = vsub.f32 %v2689, %v2735
        %v2756 = vsub.f32 %v2694, %v2737
        %v2757 = vsub.f32 %v2699, %v2739
        %v2758 = vsub.f32 %v2704, %v2741
        %v2759 = vsub.f32 %v2709, %v2743
        %v2760 = vmul.f32 %v2744, 1.442695
        %v2761 = vpow.pop %v2760
        %v2762 = vmul.f32 %v2745, 1.442695
        %v2763 = vpow.pop %v2762
        %v2764 = vmul.f32 %v2746, 1.442695
        %v2765 = vpow.pop %v2764
        %v2766 = vmul.f32 %v2747, 1.442695
        %v2767 = vpow.pop %v2766
        %v2768 = vmul.f32 %v2748, 1.442695
        %v2769 = vpow.pop %v2768
        %v2770 = vmul.f32 %v2749, 1.442695
        %v2771 = vpow.pop %v2770
        %v2772 = vmul.f32 %v2750, 1.442695
        %v2773 = vpow.pop %v2772
        %v2774 = vmul.f32 %v2751, 1.442695
        %v2775 = vpow.pop %v2774
        %v2776 = vmul.f32 %v2752, 1.442695
        %v2777 = vpow.pop %v2776
        %v2778 = vmul.f32 %v2753, 1.442695
        %v2779 = vpow.pop %v2778
        %v2780 = vmul.f32 %v2754, 1.442695
        %v2781 = vpow.pop %v2780
        %v2782 = vmul.f32 %v2755, 1.442695
        %v2783 = vpow.pop %v2782
        %v2784 = vmul.f32 %v2756, 1.442695
        %v2785 = vpow.pop %v2784
        %v2786 = vmul.f32 %v2757, 1.442695
        %v2787 = vpow.pop %v2786
        %v2788 = vmul.f32 %v2758, 1.442695
        %v2789 = vpow.pop %v2788
        %v2790 = vmul.f32 %v2759, 1.442695
        %v2791 = vpow.pop %v2790
        %2792 = vadd.xlane.f32.xlu0 %v2761
        %v2793 = vpop.xlane.xlu0 %2792
        %2794 = vadd.xlane.f32.xlu0 %v2763
        %v2795 = vpop.xlane.xlu0 %2794
        %2796 = vadd.xlane.f32.xlu0 %v2765
        %v2797 = vpop.xlane.xlu0 %2796
        %2798 = vadd.xlane.f32.xlu0 %v2767
        %v2799 = vpop.xlane.xlu0 %2798
        %2800 = vadd.xlane.f32.xlu0 %v2769
        %v2801 = vpop.xlane.xlu0 %2800
        %2802 = vadd.xlane.f32.xlu0 %v2771
        %v2803 = vpop.xlane.xlu0 %2802
        %2804 = vadd.xlane.f32.xlu0 %v2773
        %v2805 = vpop.xlane.xlu0 %2804
        %2806 = vadd.xlane.f32.xlu0 %v2775
        %v2807 = vpop.xlane.xlu0 %2806
        %2808 = vadd.xlane.f32.xlu0 %v2777
        %v2809 = vpop.xlane.xlu0 %2808
        %2810 = vadd.xlane.f32.xlu0 %v2779
        %v2811 = vpop.xlane.xlu0 %2810
        %2812 = vadd.xlane.f32.xlu0 %v2781
        %v2813 = vpop.xlane.xlu0 %2812
        %2814 = vadd.xlane.f32.xlu0 %v2783
        %v2815 = vpop.xlane.xlu0 %2814
        %2816 = vadd.xlane.f32.xlu0 %v2785
        %v2817 = vpop.xlane.xlu0 %2816
        %2818 = vadd.xlane.f32.xlu0 %v2787
        %v2819 = vpop.xlane.xlu0 %2818
        %2820 = vadd.xlane.f32.xlu0 %v2789
        %v2821 = vpop.xlane.xlu0 %2820
        %2822 = vadd.xlane.f32.xlu0 %v2791
        %v2823 = vpop.xlane.xlu0 %2822
        %v2824 = vrcp.pop %v2793
        %v2825 = vmul.f32 %v2761, %v2824
        %v2826 = vrcp.pop %v2795
        %v2827 = vmul.f32 %v2763, %v2826
        %v2828 = vrcp.pop %v2797
        %v2829 = vmul.f32 %v2765, %v2828
        %v2830 = vrcp.pop %v2799
        %v2831 = vmul.f32 %v2767, %v2830
        %v2832 = vrcp.pop %v2801
        %v2833 = vmul.f32 %v2769, %v2832
        %v2834 = vrcp.pop %v2803
        %v2835 = vmul.f32 %v2771, %v2834
        %v2836 = vrcp.pop %v2805
        %v2837 = vmul.f32 %v2773, %v2836
        %v2838 = vrcp.pop %v2807
        %v2839 = vmul.f32 %v2775, %v2838
        %v2840 = vrcp.pop %v2809
        %v2841 = vmul.f32 %v2777, %v2840
        %v2842 = vrcp.pop %v2811
        %v2843 = vmul.f32 %v2779, %v2842
        %v2844 = vrcp.pop %v2813
        %v2845 = vmul.f32 %v2781, %v2844
        %v2846 = vrcp.pop %v2815
        %v2847 = vmul.f32 %v2783, %v2846
        %v2848 = vrcp.pop %v2817
        %v2849 = vmul.f32 %v2785, %v2848
        %v2850 = vrcp.pop %v2819
        %v2851 = vmul.f32 %v2787, %v2850
        %v2852 = vrcp.pop %v2821
        %v2853 = vmul.f32 %v2789, %v2852
        %v2854 = vrcp.pop %v2823
        %v2855 = vmul.f32 %v2791, %v2854
        %2872 = vrot.lane.b32.xlu0 %v1814, 96
        %v2873 = vpop.permute.xlu0 %2872
        %2874 = vrot.lane.b32.xlu0 %v1819, 96
        %v2875 = vpop.permute.xlu0 %2874
        %2876 = vrot.lane.b32.xlu0 %v1824, 96
        %v2877 = vpop.permute.xlu0 %2876
        %2878 = vrot.lane.b32.xlu0 %v1829, 96
        %v2879 = vpop.permute.xlu0 %2878
        %2880 = vrot.lane.b32.xlu0 %v1834, 96
        %v2881 = vpop.permute.xlu0 %2880
        %2882 = vrot.lane.b32.xlu0 %v1839, 96
        %v2883 = vpop.permute.xlu0 %2882
        %2884 = vrot.lane.b32.xlu0 %v1844, 96
        %v2885 = vpop.permute.xlu0 %2884
        %2886 = vrot.lane.b32.xlu0 %v1849, 96
        %v2887 = vpop.permute.xlu0 %2886
        %2888 = vrot.lane.b32.xlu0 %v1854, 96
        %v2889 = vpop.permute.xlu0 %2888
        %2890 = vrot.lane.b32.xlu0 %v1859, 96
        %v2891 = vpop.permute.xlu0 %2890
        %2892 = vrot.lane.b32.xlu0 %v1864, 96
        %v2893 = vpop.permute.xlu0 %2892
        %2894 = vrot.lane.b32.xlu0 %v1869, 96
        %v2895 = vpop.permute.xlu0 %2894
        %2896 = vrot.lane.b32.xlu0 %v1874, 96
        %v2897 = vpop.permute.xlu0 %2896
        %2898 = vrot.lane.b32.xlu0 %v1879, 96
        %v2899 = vpop.permute.xlu0 %2898
        %2900 = vrot.lane.b32.xlu0 %v1884, 96
        %v2901 = vpop.permute.xlu0 %2900
        %2902 = vrot.lane.b32.xlu0 %v1889, 96
        %v2903 = vpop.permute.xlu0 %2902
        %2920 = vmatprep.subr.mxu0 0.0
        %2921 = vmatpush1.msra.mxu0 %v2873
        %2922 = vmatprep.subr.mxu0 0.0
        %2923 = vmatpush1.msra.mxu0 %v2875
        %2924 = vmatprep.subr.mxu0 0.0
        %2925 = vmatpush1.msra.mxu0 %v2877
        %2926 = vmatprep.subr.mxu0 0.0
        %2927 = vmatpush1.msra.mxu0 %v2879
        %2928 = vmatprep.subr.mxu0 0.0
        %2929 = vmatpush1.msra.mxu0 %v2881
        %2930 = vmatprep.subr.mxu0 0.0
        %2931 = vmatpush1.msra.mxu0 %v2883
        %2932 = vmatprep.subr.mxu0 0.0
        %2933 = vmatpush1.msra.mxu0 %v2885
        %2934 = vmatprep.subr.mxu0 0.0
        %2935 = vmatpush1.msra.mxu0 %v2887
        %2936 = vmatprep.subr.mxu0 0.0
        %2937 = vmatpush1.msra.mxu0 %v2889
        %2938 = vmatprep.subr.mxu0 0.0
        %2939 = vmatpush1.msra.mxu0 %v2891
        %2940 = vmatprep.subr.mxu0 0.0
        %2941 = vmatpush1.msra.mxu0 %v2893
        %2942 = vmatprep.subr.mxu0 0.0
        %2943 = vmatpush1.msra.mxu0 %v2895
        %2944 = vmatprep.subr.mxu0 0.0
        %2945 = vmatpush1.msra.mxu0 %v2897
        %2946 = vmatprep.subr.mxu0 0.0
        %2947 = vmatpush1.msra.mxu0 %v2899
        %2948 = vmatprep.subr.mxu0 0.0
        %2949 = vmatpush1.msra.mxu0 %v2901
        %2950 = vmatprep.subr.mxu0 0.0
        %2951 = vmatpush1.msra.mxu0 %v2903
        %2952 = vmatprep.subr.mxu0 0.0
        %2953 = vmatpush1.msra.mxu0 0.0
        %2954 = vmatprep.subr.mxu0 0.0
        %2955 = vmatpush1.msra.mxu0 0.0
        %2956 = vmatprep.subr.mxu0 0.0
        %2957 = vmatpush1.msra.mxu0 0.0
        %2958 = vmatprep.subr.mxu0 0.0
        %2959 = vmatpush1.msra.mxu0 0.0
        %2960 = vmatprep.subr.mxu0 0.0
        %2961 = vmatpush1.msra.mxu0 0.0
        %2962 = vmatprep.subr.mxu0 0.0
        %2963 = vmatpush1.msra.mxu0 0.0
        %2964 = vmatprep.subr.mxu0 0.0
        %2965 = vmatpush1.msra.mxu0 0.0
        %2966 = vmatprep.subr.mxu0 0.0
        %2967 = vmatpush1.msra.mxu0 0.0
        %2968 = vmatprep.subr.mxu0 0.0
        %2969 = vmatpush1.msra.mxu0 0.0
        %2970 = vmatprep.subr.mxu0 0.0
        %2971 = vmatpush1.msra.mxu0 0.0
        %2972 = vmatprep.subr.mxu0 0.0
        %2973 = vmatpush1.msra.mxu0 0.0
        %2974 = vmatprep.subr.mxu0 0.0
        %2975 = vmatpush1.msra.mxu0 0.0
        %2976 = vmatprep.subr.mxu0 0.0
        %2977 = vmatpush1.msra.mxu0 0.0
        %2978 = vmatprep.subr.mxu0 0.0
        %2979 = vmatpush1.msra.mxu0 0.0
        %2980 = vmatprep.subr.mxu0 0.0
        %2981 = vmatpush1.msra.mxu0 0.0
        %2982 = vmatprep.subr.mxu0 0.0
        %2983 = vmatpush1.msra.mxu0 0.0
        %2984 = vmatprep.mubr.f32.mxu0 0.0
        %2985 = vmatmul.mubr.f32.gmra.mrb[0].mxu0 %v2825
        %v2986 = vpop.f32.mrb[0].mxu0
        %v2987 = vadd.f32 0.0, %v2986
        %v2988 = vpop.f32.mrb[0].mxu0
        %2989 = vmatprep.mubr.f32.mxu0 0.0
        %2990 = vmatmul.mubr.f32.gmra.mrb[0].mxu0 %v2827
        %v2991 = vpop.f32.mrb[0].mxu0
        %v2992 = vadd.f32 0.0, %v2991
        %v2993 = vpop.f32.mrb[0].mxu0
        %2994 = vmatprep.mubr.f32.mxu0 0.0
        %2995 = vmatmul.mubr.f32.gmra.mrb[0].mxu0 %v2829
        %v2996 = vpop.f32.mrb[0].mxu0
        %v2997 = vadd.f32 0.0, %v2996
        %v2998 = vpop.f32.mrb[0].mxu0
        %2999 = vmatprep.mubr.f32.mxu0 0.0
        %3000 = vmatmul.mubr.f32.gmra.mrb[0].mxu0 %v2831
        %v3001 = vpop.f32.mrb[0].mxu0
        %v3002 = vadd.f32 0.0, %v3001
        %v3003 = vpop.f32.mrb[0].mxu0
        %3004 = vmatprep.mubr.f32.mxu0 0.0
        %3005 = vmatmul.mubr.f32.gmra.mrb[0].mxu0 %v2833
        %v3006 = vpop.f32.mrb[0].mxu0
        %v3007 = vadd.f32 0.0, %v3006
        %v3008 = vpop.f32.mrb[0].mxu0
        %3009 = vmatprep.mubr.f32.mxu0 0.0
        %3010 = vmatmul.mubr.f32.gmra.mrb[0].mxu0 %v2835
        %v3011 = vpop.f32.mrb[0].mxu0
        %v3012 = vadd.f32 0.0, %v3011
        %v3013 = vpop.f32.mrb[0].mxu0
        %3014 = vmatprep.mubr.f32.mxu0 0.0
        %3015 = vmatmul.mubr.f32.gmra.mrb[0].mxu0 %v2837
        %v3016 = vpop.f32.mrb[0].mxu0
        %v3017 = vadd.f32 0.0, %v3016
        %v3018 = vpop.f32.mrb[0].mxu0
        %3019 = vmatprep.mubr.f32.mxu0 0.0
        %3020 = vmatmul.mubr.f32.gmra.mrb[0].mxu0 %v2839
        %v3021 = vpop.f32.mrb[0].mxu0
        %v3022 = vadd.f32 0.0, %v3021
        %v3023 = vpop.f32.mrb[0].mxu0
        %3024 = vmatprep.mubr.f32.mxu0 0.0
        %3025 = vmatmul.mubr.f32.gmra.mrb[0].mxu0 %v2841
        %v3026 = vpop.f32.mrb[0].mxu0
        %v3027 = vadd.f32 0.0, %v3026
        %v3028 = vpop.f32.mrb[0].mxu0
        %3029 = vmatprep.mubr.f32.mxu0 0.0
        %3030 = vmatmul.mubr.f32.gmra.mrb[0].mxu0 %v2843
        %v3031 = vpop.f32.mrb[0].mxu0
        %v3032 = vadd.f32 0.0, %v3031
        %v3033 = vpop.f32.mrb[0].mxu0
        %3034 = vmatprep.mubr.f32.mxu0 0.0
        %3035 = vmatmul.mubr.f32.gmra.mrb[0].mxu0 %v2845
        %v3036 = vpop.f32.mrb[0].mxu0
        %v3037 = vadd.f32 0.0, %v3036
        %v3038 = vpop.f32.mrb[0].mxu0
        %3039 = vmatprep.mubr.f32.mxu0 0.0
        %3040 = vmatmul.mubr.f32.gmra.mrb[0].mxu0 %v2847
        %v3041 = vpop.f32.mrb[0].mxu0
        %v3042 = vadd.f32 0.0, %v3041
        %v3043 = vpop.f32.mrb[0].mxu0
        %3044 = vmatprep.mubr.f32.mxu0 0.0
        %3045 = vmatmul.mubr.f32.gmra.mrb[0].mxu0 %v2849
        %v3046 = vpop.f32.mrb[0].mxu0
        %v3047 = vadd.f32 0.0, %v3046
        %v3048 = vpop.f32.mrb[0].mxu0
        %3049 = vmatprep.mubr.f32.mxu0 0.0
        %3050 = vmatmul.mubr.f32.gmra.mrb[0].mxu0 %v2851
        %v3051 = vpop.f32.mrb[0].mxu0
        %v3052 = vadd.f32 0.0, %v3051
        %v3053 = vpop.f32.mrb[0].mxu0
        %3054 = vmatprep.mubr.f32.mxu0 0.0
        %3055 = vmatmul.mubr.f32.gmra.mrb[0].mxu0 %v2853
        %v3056 = vpop.f32.mrb[0].mxu0
        %v3057 = vadd.f32 0.0, %v3056
        %v3058 = vpop.f32.mrb[0].mxu0
        %3059 = vmatprep.mubr.f32.mxu0 0.0
        %3060 = vmatmul.mubr.f32.gmra.mrb[0].mxu0 %v2855
        %v3061 = vpop.f32.mrb[0].mxu0
        %v3062 = vadd.f32 0.0, %v3061
        %v3063 = vpop.f32.mrb[0].mxu0
        %3064 = vdwg.mxu0
        %3065 = vrot.lane.b32.xlu0 %v1653, 64
        %v3066 = vpop.permute.xlu0 %3065
        %3067 = vrot.lane.b32.xlu0 %v1659, 64
        %v3068 = vpop.permute.xlu0 %3067
        %3069 = vrot.lane.b32.xlu0 %v1665, 64
        %v3070 = vpop.permute.xlu0 %3069
        %3071 = vrot.lane.b32.xlu0 %v1671, 64
        %v3072 = vpop.permute.xlu0 %3071
        %3073 = vrot.lane.b32.xlu0 %v1677, 64
        %v3074 = vpop.permute.xlu0 %3073
        %3075 = vrot.lane.b32.xlu0 %v1683, 64
        %v3076 = vpop.permute.xlu0 %3075
        %3077 = vrot.lane.b32.xlu0 %v1689, 64
        %v3078 = vpop.permute.xlu0 %3077
        %3079 = vrot.lane.b32.xlu0 %v1695, 64
        %v3080 = vpop.permute.xlu0 %3079
        %3081 = vrot.lane.b32.xlu0 %v1701, 64
        %v3082 = vpop.permute.xlu0 %3081
        %3083 = vrot.lane.b32.xlu0 %v1707, 64
        %v3084 = vpop.permute.xlu0 %3083
        %3085 = vrot.lane.b32.xlu0 %v1713, 64
        %v3086 = vpop.permute.xlu0 %3085
        %3087 = vrot.lane.b32.xlu0 %v1719, 64
        %v3088 = vpop.permute.xlu0 %3087
        %3089 = vrot.lane.b32.xlu0 %v1725, 64
        %v3090 = vpop.permute.xlu0 %3089
        %3091 = vrot.lane.b32.xlu0 %v1731, 64
        %v3092 = vpop.permute.xlu0 %3091
        %3093 = vrot.lane.b32.xlu0 %v1737, 64
        %v3094 = vpop.permute.xlu0 %3093
        %3095 = vrot.lane.b32.xlu0 %v1743, 64
        %v3096 = vpop.permute.xlu0 %3095
        %3097 = vrot.lane.b32.xlu0 %v1655, 64
        %v3098 = vpop.permute.xlu0 %3097
        %3099 = vrot.lane.b32.xlu0 %v1661, 64
        %v3100 = vpop.permute.xlu0 %3099
        %3101 = vrot.lane.b32.xlu0 %v1667, 64
        %v3102 = vpop.permute.xlu0 %3101
        %3103 = vrot.lane.b32.xlu0 %v1673, 64
        %v3104 = vpop.permute.xlu0 %3103
        %3105 = vrot.lane.b32.xlu0 %v1679, 64
        %v3106 = vpop.permute.xlu0 %3105
        %3107 = vrot.lane.b32.xlu0 %v1685, 64
        %v3108 = vpop.permute.xlu0 %3107
        %3109 = vrot.lane.b32.xlu0 %v1691, 64
        %v3110 = vpop.permute.xlu0 %3109
        %3111 = vrot.lane.b32.xlu0 %v1697, 64
        %v3112 = vpop.permute.xlu0 %3111
        %3113 = vrot.lane.b32.xlu0 %v1703, 64
        %v3114 = vpop.permute.xlu0 %3113
        %3115 = vrot.lane.b32.xlu0 %v1709, 64
        %v3116 = vpop.permute.xlu0 %3115
        %3117 = vrot.lane.b32.xlu0 %v1715, 64
        %v3118 = vpop.permute.xlu0 %3117
        %3119 = vrot.lane.b32.xlu0 %v1721, 64
        %v3120 = vpop.permute.xlu0 %3119
        %3121 = vrot.lane.b32.xlu0 %v1727, 64
        %v3122 = vpop.permute.xlu0 %3121
        %3123 = vrot.lane.b32.xlu0 %v1733, 64
        %v3124 = vpop.permute.xlu0 %3123
        %3125 = vrot.lane.b32.xlu0 %v1739, 64
        %v3126 = vpop.permute.xlu0 %3125
        %3127 = vrot.lane.b32.xlu0 %v1745, 64
        %v3128 = vpop.permute.xlu0 %3127
        %v3129 = vsel %vm1908, %v3066, 0
        %v3131 = vsel %vm1908, %v3068, 0
        %v3133 = vsel %vm1908, %v3070, 0
        %v3135 = vsel %vm1908, %v3072, 0
        %v3137 = vsel %vm1908, %v3074, 0
        %v3139 = vsel %vm1908, %v3076, 0
        %v3141 = vsel %vm1908, %v3078, 0
        %v3143 = vsel %vm1908, %v3080, 0
        %v3145 = vsel %vm1908, %v3082, 0
        %v3147 = vsel %vm1908, %v3084, 0
        %v3149 = vsel %vm1908, %v3086, 0
        %v3151 = vsel %vm1908, %v3088, 0
        %v3153 = vsel %vm1908, %v3090, 0
        %v3155 = vsel %vm1908, %v3092, 0
        %v3157 = vsel %vm1908, %v3094, 0
        %v3159 = vsel %vm1908, %v3096, 0
        %v3161 = vsel %vm1908, %v3098, 0
        %v3163 = vsel %vm1908, %v3100, 0
        %v3165 = vsel %vm1908, %v3102, 0
        %v3167 = vsel %vm1908, %v3104, 0
        %v3169 = vsel %vm1908, %v3106, 0
        %v3171 = vsel %vm1908, %v3108, 0
        %v3173 = vsel %vm1908, %v3110, 0
        %v3175 = vsel %vm1908, %v3112, 0
        %v3177 = vsel %vm1908, %v3114, 0
        %v3179 = vsel %vm1908, %v3116, 0
        %v3181 = vsel %vm1908, %v3118, 0
        %v3183 = vsel %vm1908, %v3120, 0
        %v3185 = vsel %vm1908, %v3122, 0
        %v3187 = vsel %vm1908, %v3124, 0
        %v3189 = vsel %vm1908, %v3126, 0
        %v3191 = vsel %vm1908, %v3128, 0
        %3193 = vmatprep.subr.mxu0 0.0
        %3194 = vmatpush1.xpose.msra.mxu0 %v3161
        %3195 = vmatprep.subr.mxu0 0.0
        %3196 = vmatpush1.xpose.msra.mxu0 %v3163
        %3197 = vmatprep.subr.mxu0 0.0
        %3198 = vmatpush1.xpose.msra.mxu0 %v3165
        %3199 = vmatprep.subr.mxu0 0.0
        %3200 = vmatpush1.xpose.msra.mxu0 %v3167
        %3201 = vmatprep.subr.mxu0 0.0
        %3202 = vmatpush1.xpose.msra.mxu0 %v3169
        %3203 = vmatprep.subr.mxu0 0.0
        %3204 = vmatpush1.xpose.msra.mxu0 %v3171
        %3205 = vmatprep.subr.mxu0 0.0
        %3206 = vmatpush1.xpose.msra.mxu0 %v3173
        %3207 = vmatprep.subr.mxu0 0.0
        %3208 = vmatpush1.xpose.msra.mxu0 %v3175
        %3209 = vmatprep.subr.mxu0 0.0
        %3210 = vmatpush1.xpose.msra.mxu0 %v3177
        %3211 = vmatprep.subr.mxu0 0.0
        %3212 = vmatpush1.xpose.msra.mxu0 %v3179
        %3213 = vmatprep.subr.mxu0 0.0
        %3214 = vmatpush1.xpose.msra.mxu0 %v3181
        %3215 = vmatprep.subr.mxu0 0.0
        %3216 = vmatpush1.xpose.msra.mxu0 %v3183
        %3217 = vmatprep.subr.mxu0 0.0
        %3218 = vmatpush1.xpose.msra.mxu0 %v3185
        %3219 = vmatprep.subr.mxu0 0.0
        %3220 = vmatpush1.xpose.msra.mxu0 %v3187
        %3221 = vmatprep.subr.mxu0 0.0
        %3222 = vmatpush1.xpose.msra.mxu0 %v3189
        %3223 = vmatprep.subr.mxu0 0.0
        %3224 = vmatpush1.xpose.msra.mxu0 %v3191
        %3225 = vmatprep.subr.mxu0 0.0
        %3226 = vmatpush1.xpose.msra.mxu0 0.0
        %3227 = vmatprep.subr.mxu0 0.0
        %3228 = vmatpush1.xpose.msra.mxu0 0.0
        %3229 = vmatprep.subr.mxu0 0.0
        %3230 = vmatpush1.xpose.msra.mxu0 0.0
        %3231 = vmatprep.subr.mxu0 0.0
        %3232 = vmatpush1.xpose.msra.mxu0 0.0
        %3233 = vmatprep.subr.mxu0 0.0
        %3234 = vmatpush1.xpose.msra.mxu0 0.0
        %3235 = vmatprep.subr.mxu0 0.0
        %3236 = vmatpush1.xpose.msra.mxu0 0.0
        %3237 = vmatprep.subr.mxu0 0.0
        %3238 = vmatpush1.xpose.msra.mxu0 0.0
        %3239 = vmatprep.subr.mxu0 0.0
        %3240 = vmatpush1.xpose.msra.mxu0 0.0
        %3241 = vmatprep.subr.mxu0 0.0
        %3242 = vmatpush1.xpose.msra.mxu0 0.0
        %3243 = vmatprep.subr.mxu0 0.0
        %3244 = vmatpush1.xpose.msra.mxu0 0.0
        %3245 = vmatprep.subr.mxu0 0.0
        %3246 = vmatpush1.xpose.msra.mxu0 0.0
        %3247 = vmatprep.subr.mxu0 0.0
        %3248 = vmatpush1.xpose.msra.mxu0 0.0
        %3249 = vmatprep.subr.mxu0 0.0
        %3250 = vmatpush1.xpose.msra.mxu0 0.0
        %3251 = vmatprep.subr.mxu0 0.0
        %3252 = vmatpush1.xpose.msra.mxu0 0.0
        %3253 = vmatprep.subr.mxu0 0.0
        %3254 = vmatpush1.xpose.msra.mxu0 0.0
        %3255 = vmatprep.subr.mxu0 0.0
        %3256 = vmatpush1.xpose.msra.mxu0 0.0
        %3257 = vmatprep.mubr.f32.mxu0 0.0
        %3258 = vmatmul.mubr.f32.gmra.mrb[0].mxu0 %v3129
        %v3259 = vpop.f32.mrb[0].mxu0
        %v3260 = vadd.f32 %v1892, %v3259
        %v3261 = vpop.f32.mrb[0].mxu0
        %3262 = vmatprep.mubr.f32.mxu0 0.0
        %3263 = vmatmul.mubr.f32.gmra.mrb[0].mxu0 %v3131
        %v3264 = vpop.f32.mrb[0].mxu0
        %v3265 = vadd.f32 %v1893, %v3264
        %v3266 = vpop.f32.mrb[0].mxu0
        %3267 = vmatprep.mubr.f32.mxu0 0.0
        %3268 = vmatmul.mubr.f32.gmra.mrb[0].mxu0 %v3133
        %v3269 = vpop.f32.mrb[0].mxu0
        %v3270 = vadd.f32 %v1894, %v3269
        %v3271 = vpop.f32.mrb[0].mxu0
        %3272 = vmatprep.mubr.f32.mxu0 0.0
        %3273 = vmatmul.mubr.f32.gmra.mrb[0].mxu0 %v3135
        %v3274 = vpop.f32.mrb[0].mxu0
        %v3275 = vadd.f32 %v1895, %v3274
        %v3276 = vpop.f32.mrb[0].mxu0
        %3277 = vmatprep.mubr.f32.mxu0 0.0
        %3278 = vmatmul.mubr.f32.gmra.mrb[0].mxu0 %v3137
        %v3279 = vpop.f32.mrb[0].mxu0
        %v3280 = vadd.f32 %v1896, %v3279
        %v3281 = vpop.f32.mrb[0].mxu0
        %3282 = vmatprep.mubr.f32.mxu0 0.0
        %3283 = vmatmul.mubr.f32.gmra.mrb[0].mxu0 %v3139
        %v3284 = vpop.f32.mrb[0].mxu0
        %v3285 = vadd.f32 %v1897, %v3284
        %v3286 = vpop.f32.mrb[0].mxu0
        %3287 = vmatprep.mubr.f32.mxu0 0.0
        %3288 = vmatmul.mubr.f32.gmra.mrb[0].mxu0 %v3141
        %v3289 = vpop.f32.mrb[0].mxu0
        %v3290 = vadd.f32 %v1898, %v3289
        %v3291 = vpop.f32.mrb[0].mxu0
        %3292 = vmatprep.mubr.f32.mxu0 0.0
        %3293 = vmatmul.mubr.f32.gmra.mrb[0].mxu0 %v3143
        %v3294 = vpop.f32.mrb[0].mxu0
        %v3295 = vadd.f32 %v1899, %v3294
        %v3296 = vpop.f32.mrb[0].mxu0
        %3297 = vmatprep.mubr.f32.mxu0 0.0
        %3298 = vmatmul.mubr.f32.gmra.mrb[0].mxu0 %v3145
        %v3299 = vpop.f32.mrb[0].mxu0
        %v3300 = vadd.f32 %v1900, %v3299
        %v3301 = vpop.f32.mrb[0].mxu0
        %3302 = vmatprep.mubr.f32.mxu0 0.0
        %3303 = vmatmul.mubr.f32.gmra.mrb[0].mxu0 %v3147
        %v3304 = vpop.f32.mrb[0].mxu0
        %v3305 = vadd.f32 %v1901, %v3304
        %v3306 = vpop.f32.mrb[0].mxu0
        %3307 = vmatprep.mubr.f32.mxu0 0.0
        %3308 = vmatmul.mubr.f32.gmra.mrb[0].mxu0 %v3149
        %v3309 = vpop.f32.mrb[0].mxu0
        %v3310 = vadd.f32 %v1902, %v3309
        %v3311 = vpop.f32.mrb[0].mxu0
        %3312 = vmatprep.mubr.f32.mxu0 0.0
        %3313 = vmatmul.mubr.f32.gmra.mrb[0].mxu0 %v3151
        %v3314 = vpop.f32.mrb[0].mxu0
        %v3315 = vadd.f32 %v1903, %v3314
        %v3316 = vpop.f32.mrb[0].mxu0
        %3317 = vmatprep.mubr.f32.mxu0 0.0
        %3318 = vmatmul.mubr.f32.gmra.mrb[0].mxu0 %v3153
        %v3319 = vpop.f32.mrb[0].mxu0
        %v3320 = vadd.f32 %v1904, %v3319
        %v3321 = vpop.f32.mrb[0].mxu0
        %3322 = vmatprep.mubr.f32.mxu0 0.0
        %3323 = vmatmul.mubr.f32.gmra.mrb[0].mxu0 %v3155
        %v3324 = vpop.f32.mrb[0].mxu0
        %v3325 = vadd.f32 %v1905, %v3324
        %v3326 = vpop.f32.mrb[0].mxu0
        %3327 = vmatprep.mubr.f32.mxu0 0.0
        %3328 = vmatmul.mubr.f32.gmra.mrb[0].mxu0 %v3157
        %v3329 = vpop.f32.mrb[0].mxu0
        %v3330 = vadd.f32 %v1906, %v3329
        %v3331 = vpop.f32.mrb[0].mxu0
        %3332 = vmatprep.mubr.f32.mxu0 0.0
        %3333 = vmatmul.mubr.f32.gmra.mrb[0].mxu0 %v3159
        %v3334 = vpop.f32.mrb[0].mxu0
        %v3335 = vadd.f32 %v1907, %v3334
        %v3336 = vpop.f32.mrb[0].mxu0
        %3337 = vdwg.mxu0
        %3338 = vmax.xlane.f32.xlu0 %v3260
        %v3339 = vpop.xlane.xlu0 %3338
        %3340 = vmax.xlane.f32.xlu0 %v3265
        %v3341 = vpop.xlane.xlu0 %3340
        %3342 = vmax.xlane.f32.xlu0 %v3270
        %v3343 = vpop.xlane.xlu0 %3342
        %3344 = vmax.xlane.f32.xlu0 %v3275
        %v3345 = vpop.xlane.xlu0 %3344
        %3346 = vmax.xlane.f32.xlu0 %v3280
        %v3347 = vpop.xlane.xlu0 %3346
        %3348 = vmax.xlane.f32.xlu0 %v3285
        %v3349 = vpop.xlane.xlu0 %3348
        %3350 = vmax.xlane.f32.xlu0 %v3290
        %v3351 = vpop.xlane.xlu0 %3350
        %3352 = vmax.xlane.f32.xlu0 %v3295
        %v3353 = vpop.xlane.xlu0 %3352
        %3354 = vmax.xlane.f32.xlu0 %v3300
        %v3355 = vpop.xlane.xlu0 %3354
        %3356 = vmax.xlane.f32.xlu0 %v3305
        %v3357 = vpop.xlane.xlu0 %3356
        %3358 = vmax.xlane.f32.xlu0 %v3310
        %v3359 = vpop.xlane.xlu0 %3358
        %3360 = vmax.xlane.f32.xlu0 %v3315
        %v3361 = vpop.xlane.xlu0 %3360
        %3362 = vmax.xlane.f32.xlu0 %v3320
        %v3363 = vpop.xlane.xlu0 %3362
        %3364 = vmax.xlane.f32.xlu0 %v3325
        %v3365 = vpop.xlane.xlu0 %3364
        %3366 = vmax.xlane.f32.xlu0 %v3330
        %v3367 = vpop.xlane.xlu0 %3366
        %3368 = vmax.xlane.f32.xlu0 %v3335
        %v3369 = vpop.xlane.xlu0 %3368
        %v3370 = vsub.f32 %v3260, %v3339
        %v3371 = vsub.f32 %v3265, %v3341
        %v3372 = vsub.f32 %v3270, %v3343
        %v3373 = vsub.f32 %v3275, %v3345
        %v3374 = vsub.f32 %v3280, %v3347
        %v3375 = vsub.f32 %v3285, %v3349
        %v3376 = vsub.f32 %v3290, %v3351
        %v3377 = vsub.f32 %v3295, %v3353
        %v3378 = vsub.f32 %v3300, %v3355
        %v3379 = vsub.f32 %v3305, %v3357
        %v3380 = vsub.f32 %v3310, %v3359
        %v3381 = vsub.f32 %v3315, %v3361
        %v3382 = vsub.f32 %v3320, %v3363
        %v3383 = vsub.f32 %v3325, %v3365
        %v3384 = vsub.f32 %v3330, %v3367
        %v3385 = vsub.f32 %v3335, %v3369
        %v3386 = vmul.f32 %v3370, 1.442695
        %v3387 = vpow.pop %v3386
        %v3388 = vmul.f32 %v3371, 1.442695
        %v3389 = vpow.pop %v3388
        %v3390 = vmul.f32 %v3372, 1.442695
        %v3391 = vpow.pop %v3390
        %v3392 = vmul.f32 %v3373, 1.442695
        %v3393 = vpow.pop %v3392
        %v3394 = vmul.f32 %v3374, 1.442695
        %v3395 = vpow.pop %v3394
        %v3396 = vmul.f32 %v3375, 1.442695
        %v3397 = vpow.pop %v3396
        %v3398 = vmul.f32 %v3376, 1.442695
        %v3399 = vpow.pop %v3398
        %v3400 = vmul.f32 %v3377, 1.442695
        %v3401 = vpow.pop %v3400
        %v3402 = vmul.f32 %v3378, 1.442695
        %v3403 = vpow.pop %v3402
        %v3404 = vmul.f32 %v3379, 1.442695
        %v3405 = vpow.pop %v3404
        %v3406 = vmul.f32 %v3380, 1.442695
        %v3407 = vpow.pop %v3406
        %v3408 = vmul.f32 %v3381, 1.442695
        %v3409 = vpow.pop %v3408
        %v3410 = vmul.f32 %v3382, 1.442695
        %v3411 = vpow.pop %v3410
        %v3412 = vmul.f32 %v3383, 1.442695
        %v3413 = vpow.pop %v3412
        %v3414 = vmul.f32 %v3384, 1.442695
        %v3415 = vpow.pop %v3414
        %v3416 = vmul.f32 %v3385, 1.442695
        %v3417 = vpow.pop %v3416
        %3418 = vadd.xlane.f32.xlu0 %v3387
        %v3419 = vpop.xlane.xlu0 %3418
        %3420 = vadd.xlane.f32.xlu0 %v3389
        %v3421 = vpop.xlane.xlu0 %3420
        %3422 = vadd.xlane.f32.xlu0 %v3391
        %v3423 = vpop.xlane.xlu0 %3422
        %3424 = vadd.xlane.f32.xlu0 %v3393
        %v3425 = vpop.xlane.xlu0 %3424
        %3426 = vadd.xlane.f32.xlu0 %v3395
        %v3427 = vpop.xlane.xlu0 %3426
        %3428 = vadd.xlane.f32.xlu0 %v3397
        %v3429 = vpop.xlane.xlu0 %3428
        %3430 = vadd.xlane.f32.xlu0 %v3399
        %v3431 = vpop.xlane.xlu0 %3430
        %3432 = vadd.xlane.f32.xlu0 %v3401
        %v3433 = vpop.xlane.xlu0 %3432
        %3434 = vadd.xlane.f32.xlu0 %v3403
        %v3435 = vpop.xlane.xlu0 %3434
        %3436 = vadd.xlane.f32.xlu0 %v3405
        %v3437 = vpop.xlane.xlu0 %3436
        %3438 = vadd.xlane.f32.xlu0 %v3407
        %v3439 = vpop.xlane.xlu0 %3438
        %3440 = vadd.xlane.f32.xlu0 %v3409
        %v3441 = vpop.xlane.xlu0 %3440
        %3442 = vadd.xlane.f32.xlu0 %v3411
        %v3443 = vpop.xlane.xlu0 %3442
        %3444 = vadd.xlane.f32.xlu0 %v3413
        %v3445 = vpop.xlane.xlu0 %3444
        %3446 = vadd.xlane.f32.xlu0 %v3415
        %v3447 = vpop.xlane.xlu0 %3446
        %3448 = vadd.xlane.f32.xlu0 %v3417
        %v3449 = vpop.xlane.xlu0 %3448
        %v3450 = vrcp.pop %v3419
        %v3451 = vmul.f32 %v3387, %v3450
        %v3452 = vrcp.pop %v3421
        %v3453 = vmul.f32 %v3389, %v3452
        %v3454 = vrcp.pop %v3423
        %v3455 = vmul.f32 %v3391, %v3454
        %v3456 = vrcp.pop %v3425
        %v3457 = vmul.f32 %v3393, %v3456
        %v3458 = vrcp.pop %v3427
        %v3459 = vmul.f32 %v3395, %v3458
        %v3460 = vrcp.pop %v3429
        %v3461 = vmul.f32 %v3397, %v3460
        %v3462 = vrcp.pop %v3431
        %v3463 = vmul.f32 %v3399, %v3462
        %v3464 = vrcp.pop %v3433
        %v3465 = vmul.f32 %v3401, %v3464
        %v3466 = vrcp.pop %v3435
        %v3467 = vmul.f32 %v3403, %v3466
        %v3468 = vrcp.pop %v3437
        %v3469 = vmul.f32 %v3405, %v3468
        %v3470 = vrcp.pop %v3439
        %v3471 = vmul.f32 %v3407, %v3470
        %v3472 = vrcp.pop %v3441
        %v3473 = vmul.f32 %v3409, %v3472
        %v3474 = vrcp.pop %v3443
        %v3475 = vmul.f32 %v3411, %v3474
        %v3476 = vrcp.pop %v3445
        %v3477 = vmul.f32 %v3413, %v3476
        %v3478 = vrcp.pop %v3447
        %v3479 = vmul.f32 %v3415, %v3478
        %v3480 = vrcp.pop %v3449
        %v3481 = vmul.f32 %v3417, %v3480
        %3482 = vrot.lane.b32.xlu0 %v1814, 64
        %v3483 = vpop.permute.xlu0 %3482
        %3484 = vrot.lane.b32.xlu0 %v1819, 64
        %v3485 = vpop.permute.xlu0 %3484
        %3486 = vrot.lane.b32.xlu0 %v1824, 64
        %v3487 = vpop.permute.xlu0 %3486
        %3488 = vrot.lane.b32.xlu0 %v1829, 64
        %v3489 = vpop.permute.xlu0 %3488
        %3490 = vrot.lane.b32.xlu0 %v1834, 64
        %v3491 = vpop.permute.xlu0 %3490
        %3492 = vrot.lane.b32.xlu0 %v1839, 64
        %v3493 = vpop.permute.xlu0 %3492
        %3494 = vrot.lane.b32.xlu0 %v1844, 64
        %v3495 = vpop.permute.xlu0 %3494
        %3496 = vrot.lane.b32.xlu0 %v1849, 64
        %v3497 = vpop.permute.xlu0 %3496
        %3498 = vrot.lane.b32.xlu0 %v1854, 64
        %v3499 = vpop.permute.xlu0 %3498
        %3500 = vrot.lane.b32.xlu0 %v1859, 64
        %v3501 = vpop.permute.xlu0 %3500
        %3502 = vrot.lane.b32.xlu0 %v1864, 64
        %v3503 = vpop.permute.xlu0 %3502
        %3504 = vrot.lane.b32.xlu0 %v1869, 64
        %v3505 = vpop.permute.xlu0 %3504
        %3506 = vrot.lane.b32.xlu0 %v1874, 64
        %v3507 = vpop.permute.xlu0 %3506
        %3508 = vrot.lane.b32.xlu0 %v1879, 64
        %v3509 = vpop.permute.xlu0 %3508
        %3510 = vrot.lane.b32.xlu0 %v1884, 64
        %v3511 = vpop.permute.xlu0 %3510
        %3512 = vrot.lane.b32.xlu0 %v1889, 64
        %v3513 = vpop.permute.xlu0 %3512
        %3530 = vmatprep.subr.mxu0 0.0
        %3531 = vmatpush1.msra.mxu0 %v3483
        %3532 = vmatprep.subr.mxu0 0.0
        %3533 = vmatpush1.msra.mxu0 %v3485
        %3534 = vmatprep.subr.mxu0 0.0
        %3535 = vmatpush1.msra.mxu0 %v3487
        %3536 = vmatprep.subr.mxu0 0.0
        %3537 = vmatpush1.msra.mxu0 %v3489
        %3538 = vmatprep.subr.mxu0 0.0
        %3539 = vmatpush1.msra.mxu0 %v3491
        %3540 = vmatprep.subr.mxu0 0.0
        %3541 = vmatpush1.msra.mxu0 %v3493
        %3542 = vmatprep.subr.mxu0 0.0
        %3543 = vmatpush1.msra.mxu0 %v3495
        %3544 = vmatprep.subr.mxu0 0.0
        %3545 = vmatpush1.msra.mxu0 %v3497
        %3546 = vmatprep.subr.mxu0 0.0
        %3547 = vmatpush1.msra.mxu0 %v3499
        %3548 = vmatprep.subr.mxu0 0.0
        %3549 = vmatpush1.msra.mxu0 %v3501
        %3550 = vmatprep.subr.mxu0 0.0
        %3551 = vmatpush1.msra.mxu0 %v3503
        %3552 = vmatprep.subr.mxu0 0.0
        %3553 = vmatpush1.msra.mxu0 %v3505
        %3554 = vmatprep.subr.mxu0 0.0
        %3555 = vmatpush1.msra.mxu0 %v3507
        %3556 = vmatprep.subr.mxu0 0.0
        %3557 = vmatpush1.msra.mxu0 %v3509
        %3558 = vmatprep.subr.mxu0 0.0
        %3559 = vmatpush1.msra.mxu0 %v3511
        %3560 = vmatprep.subr.mxu0 0.0
        %3561 = vmatpush1.msra.mxu0 %v3513
        %3562 = vmatprep.subr.mxu0 0.0
        %3563 = vmatpush1.msra.mxu0 0.0
        %3564 = vmatprep.subr.mxu0 0.0
        %3565 = vmatpush1.msra.mxu0 0.0
        %3566 = vmatprep.subr.mxu0 0.0
        %3567 = vmatpush1.msra.mxu0 0.0
        %3568 = vmatprep.subr.mxu0 0.0
        %3569 = vmatpush1.msra.mxu0 0.0
        %3570 = vmatprep.subr.mxu0 0.0
        %3571 = vmatpush1.msra.mxu0 0.0
        %3572 = vmatprep.subr.mxu0 0.0
        %3573 = vmatpush1.msra.mxu0 0.0
        %3574 = vmatprep.subr.mxu0 0.0
        %3575 = vmatpush1.msra.mxu0 0.0
        %3576 = vmatprep.subr.mxu0 0.0
        %3577 = vmatpush1.msra.mxu0 0.0
        %3578 = vmatprep.subr.mxu0 0.0
        %3579 = vmatpush1.msra.mxu0 0.0
        %3580 = vmatprep.subr.mxu0 0.0
        %3581 = vmatpush1.msra.mxu0 0.0
        %3582 = vmatprep.subr.mxu0 0.0
        %3583 = vmatpush1.msra.mxu0 0.0
        %3584 = vmatprep.subr.mxu0 0.0
        %3585 = vmatpush1.msra.mxu0 0.0
        %3586 = vmatprep.subr.mxu0 0.0
        %3587 = vmatpush1.msra.mxu0 0.0
        %3588 = vmatprep.subr.mxu0 0.0
        %3589 = vmatpush1.msra.mxu0 0.0
        %3590 = vmatprep.subr.mxu0 0.0
        %3591 = vmatpush1.msra.mxu0 0.0
        %3592 = vmatprep.subr.mxu0 0.0
        %3593 = vmatpush1.msra.mxu0 0.0
        %3594 = vmatprep.mubr.f32.mxu0 0.0
        %3595 = vmatmul.mubr.f32.gmra.mrb[0].mxu0 %v3451
        %v3596 = vpop.f32.mrb[0].mxu0
        %v3597 = vadd.f32 0.0, %v3596
        %v3598 = vpop.f32.mrb[0].mxu0
        %3599 = vmatprep.mubr.f32.mxu0 0.0
        %3600 = vmatmul.mubr.f32.gmra.mrb[0].mxu0 %v3453
        %v3601 = vpop.f32.mrb[0].mxu0
        %v3602 = vadd.f32 0.0, %v3601
        %v3603 = vpop.f32.mrb[0].mxu0
        %3604 = vmatprep.mubr.f32.mxu0 0.0
        %3605 = vmatmul.mubr.f32.gmra.mrb[0].mxu0 %v3455
        %v3606 = vpop.f32.mrb[0].mxu0
        %v3607 = vadd.f32 0.0, %v3606
        %v3608 = vpop.f32.mrb[0].mxu0
        %3609 = vmatprep.mubr.f32.mxu0 0.0
        %3610 = vmatmul.mubr.f32.gmra.mrb[0].mxu0 %v3457
        %v3611 = vpop.f32.mrb[0].mxu0
        %v3612 = vadd.f32 0.0, %v3611
        %v3613 = vpop.f32.mrb[0].mxu0
        %3614 = vmatprep.mubr.f32.mxu0 0.0
        %3615 = vmatmul.mubr.f32.gmra.mrb[0].mxu0 %v3459
        %v3616 = vpop.f32.mrb[0].mxu0
        %v3617 = vadd.f32 0.0, %v3616
        %v3618 = vpop.f32.mrb[0].mxu0
        %3619 = vmatprep.mubr.f32.mxu0 0.0
        %3620 = vmatmul.mubr.f32.gmra.mrb[0].mxu0 %v3461
        %v3621 = vpop.f32.mrb[0].mxu0
        %v3622 = vadd.f32 0.0, %v3621
        %v3623 = vpop.f32.mrb[0].mxu0
        %3624 = vmatprep.mubr.f32.mxu0 0.0
        %3625 = vmatmul.mubr.f32.gmra.mrb[0].mxu0 %v3463
        %v3626 = vpop.f32.mrb[0].mxu0
        %v3627 = vadd.f32 0.0, %v3626
        %v3628 = vpop.f32.mrb[0].mxu0
        %3629 = vmatprep.mubr.f32.mxu0 0.0
        %3630 = vmatmul.mubr.f32.gmra.mrb[0].mxu0 %v3465
        %v3631 = vpop.f32.mrb[0].mxu0
        %v3632 = vadd.f32 0.0, %v3631
        %v3633 = vpop.f32.mrb[0].mxu0
        %3634 = vmatprep.mubr.f32.mxu0 0.0
        %3635 = vmatmul.mubr.f32.gmra.mrb[0].mxu0 %v3467
        %v3636 = vpop.f32.mrb[0].mxu0
        %v3637 = vadd.f32 0.0, %v3636
        %v3638 = vpop.f32.mrb[0].mxu0
        %3639 = vmatprep.mubr.f32.mxu0 0.0
        %3640 = vmatmul.mubr.f32.gmra.mrb[0].mxu0 %v3469
        %v3641 = vpop.f32.mrb[0].mxu0
        %v3642 = vadd.f32 0.0, %v3641
        %v3643 = vpop.f32.mrb[0].mxu0
        %3644 = vmatprep.mubr.f32.mxu0 0.0
        %3645 = vmatmul.mubr.f32.gmra.mrb[0].mxu0 %v3471
        %v3646 = vpop.f32.mrb[0].mxu0
        %v3647 = vadd.f32 0.0, %v3646
        %v3648 = vpop.f32.mrb[0].mxu0
        %3649 = vmatprep.mubr.f32.mxu0 0.0
        %3650 = vmatmul.mubr.f32.gmra.mrb[0].mxu0 %v3473
        %v3651 = vpop.f32.mrb[0].mxu0
        %v3652 = vadd.f32 0.0, %v3651
        %v3653 = vpop.f32.mrb[0].mxu0
        %3654 = vmatprep.mubr.f32.mxu0 0.0
        %3655 = vmatmul.mubr.f32.gmra.mrb[0].mxu0 %v3475
        %v3656 = vpop.f32.mrb[0].mxu0
        %v3657 = vadd.f32 0.0, %v3656
        %v3658 = vpop.f32.mrb[0].mxu0
        %3659 = vmatprep.mubr.f32.mxu0 0.0
        %3660 = vmatmul.mubr.f32.gmra.mrb[0].mxu0 %v3477
        %v3661 = vpop.f32.mrb[0].mxu0
        %v3662 = vadd.f32 0.0, %v3661
        %v3663 = vpop.f32.mrb[0].mxu0
        %3664 = vmatprep.mubr.f32.mxu0 0.0
        %3665 = vmatmul.mubr.f32.gmra.mrb[0].mxu0 %v3479
        %v3666 = vpop.f32.mrb[0].mxu0
        %v3667 = vadd.f32 0.0, %v3666
        %v3668 = vpop.f32.mrb[0].mxu0
        %3669 = vmatprep.mubr.f32.mxu0 0.0
        %3670 = vmatmul.mubr.f32.gmra.mrb[0].mxu0 %v3481
        %v3671 = vpop.f32.mrb[0].mxu0
        %v3672 = vadd.f32 0.0, %v3671
        %v3673 = vpop.f32.mrb[0].mxu0
        %3674 = vdwg.mxu0
        %3675 = vrot.lane.b32.xlu0 %v1653, 32
        %v3676 = vpop.permute.xlu0 %3675
        %3677 = vrot.lane.b32.xlu0 %v1659, 32
        %v3678 = vpop.permute.xlu0 %3677
        %3679 = vrot.lane.b32.xlu0 %v1665, 32
        %v3680 = vpop.permute.xlu0 %3679
        %3681 = vrot.lane.b32.xlu0 %v1671, 32
        %v3682 = vpop.permute.xlu0 %3681
        %3683 = vrot.lane.b32.xlu0 %v1677, 32
        %v3684 = vpop.permute.xlu0 %3683
        %3685 = vrot.lane.b32.xlu0 %v1683, 32
        %v3686 = vpop.permute.xlu0 %3685
        %3687 = vrot.lane.b32.xlu0 %v1689, 32
        %v3688 = vpop.permute.xlu0 %3687
        %3689 = vrot.lane.b32.xlu0 %v1695, 32
        %v3690 = vpop.permute.xlu0 %3689
        %3691 = vrot.lane.b32.xlu0 %v1701, 32
        %v3692 = vpop.permute.xlu0 %3691
        %3693 = vrot.lane.b32.xlu0 %v1707, 32
        %v3694 = vpop.permute.xlu0 %3693
        %3695 = vrot.lane.b32.xlu0 %v1713, 32
        %v3696 = vpop.permute.xlu0 %3695
        %3697 = vrot.lane.b32.xlu0 %v1719, 32
        %v3698 = vpop.permute.xlu0 %3697
        %3699 = vrot.lane.b32.xlu0 %v1725, 32
        %v3700 = vpop.permute.xlu0 %3699
        %3701 = vrot.lane.b32.xlu0 %v1731, 32
        %v3702 = vpop.permute.xlu0 %3701
        %3703 = vrot.lane.b32.xlu0 %v1737, 32
        %v3704 = vpop.permute.xlu0 %3703
        %3705 = vrot.lane.b32.xlu0 %v1743, 32
        %v3706 = vpop.permute.xlu0 %3705
        %3707 = vrot.lane.b32.xlu0 %v1655, 32
        %v3708 = vpop.permute.xlu0 %3707
        %3709 = vrot.lane.b32.xlu0 %v1661, 32
        %v3710 = vpop.permute.xlu0 %3709
        %3711 = vrot.lane.b32.xlu0 %v1667, 32
        %v3712 = vpop.permute.xlu0 %3711
        %3713 = vrot.lane.b32.xlu0 %v1673, 32
        %v3714 = vpop.permute.xlu0 %3713
        %3715 = vrot.lane.b32.xlu0 %v1679, 32
        %v3716 = vpop.permute.xlu0 %3715
        %3717 = vrot.lane.b32.xlu0 %v1685, 32
        %v3718 = vpop.permute.xlu0 %3717
        %3719 = vrot.lane.b32.xlu0 %v1691, 32
        %v3720 = vpop.permute.xlu0 %3719
        %3721 = vrot.lane.b32.xlu0 %v1697, 32
        %v3722 = vpop.permute.xlu0 %3721
        %3723 = vrot.lane.b32.xlu0 %v1703, 32
        %v3724 = vpop.permute.xlu0 %3723
        %3725 = vrot.lane.b32.xlu0 %v1709, 32
        %v3726 = vpop.permute.xlu0 %3725
        %3727 = vrot.lane.b32.xlu0 %v1715, 32
        %v3728 = vpop.permute.xlu0 %3727
        %3729 = vrot.lane.b32.xlu0 %v1721, 32
        %v3730 = vpop.permute.xlu0 %3729
        %3731 = vrot.lane.b32.xlu0 %v1727, 32
        %v3732 = vpop.permute.xlu0 %3731
        %3733 = vrot.lane.b32.xlu0 %v1733, 32
        %v3734 = vpop.permute.xlu0 %3733
        %3735 = vrot.lane.b32.xlu0 %v1739, 32
        %v3736 = vpop.permute.xlu0 %3735
        %3737 = vrot.lane.b32.xlu0 %v1745, 32
        %v3738 = vpop.permute.xlu0 %3737
        %v3739 = vsel %vm1908, %v3676, 0
        %v3741 = vsel %vm1908, %v3678, 0
        %v3743 = vsel %vm1908, %v3680, 0
        %v3745 = vsel %vm1908, %v3682, 0
        %v3747 = vsel %vm1908, %v3684, 0
        %v3749 = vsel %vm1908, %v3686, 0
        %v3751 = vsel %vm1908, %v3688, 0
        %v3753 = vsel %vm1908, %v3690, 0
        %v3755 = vsel %vm1908, %v3692, 0
        %v3757 = vsel %vm1908, %v3694, 0
        %v3759 = vsel %vm1908, %v3696, 0
        %v3761 = vsel %vm1908, %v3698, 0
        %v3763 = vsel %vm1908, %v3700, 0
        %v3765 = vsel %vm1908, %v3702, 0
        %v3767 = vsel %vm1908, %v3704, 0
        %v3769 = vsel %vm1908, %v3706, 0
        %v3771 = vsel %vm1908, %v3708, 0
        %v3773 = vsel %vm1908, %v3710, 0
        %v3775 = vsel %vm1908, %v3712, 0
        %v3777 = vsel %vm1908, %v3714, 0
        %v3779 = vsel %vm1908, %v3716, 0
        %v3781 = vsel %vm1908, %v3718, 0
        %v3783 = vsel %vm1908, %v3720, 0
        %v3785 = vsel %vm1908, %v3722, 0
        %v3787 = vsel %vm1908, %v3724, 0
        %v3789 = vsel %vm1908, %v3726, 0
        %v3791 = vsel %vm1908, %v3728, 0
        %v3793 = vsel %vm1908, %v3730, 0
        %v3795 = vsel %vm1908, %v3732, 0
        %v3797 = vsel %vm1908, %v3734, 0
        %v3799 = vsel %vm1908, %v3736, 0
        %v3801 = vsel %vm1908, %v3738, 0
        %3803 = vmatprep.subr.mxu0 0.0
        %3804 = vmatpush1.xpose.msra.mxu0 %v3771
        %3805 = vmatprep.subr.mxu0 0.0
        %3806 = vmatpush1.xpose.msra.mxu0 %v3773
        %3807 = vmatprep.subr.mxu0 0.0
        %3808 = vmatpush1.xpose.msra.mxu0 %v3775
        %3809 = vmatprep.subr.mxu0 0.0
        %3810 = vmatpush1.xpose.msra.mxu0 %v3777
        %3811 = vmatprep.subr.mxu0 0.0
        %3812 = vmatpush1.xpose.msra.mxu0 %v3779
        %3813 = vmatprep.subr.mxu0 0.0
        %3814 = vmatpush1.xpose.msra.mxu0 %v3781
        %3815 = vmatprep.subr.mxu0 0.0
        %3816 = vmatpush1.xpose.msra.mxu0 %v3783
        %3817 = vmatprep.subr.mxu0 0.0
        %3818 = vmatpush1.xpose.msra.mxu0 %v3785
        %3819 = vmatprep.subr.mxu0 0.0
        %3820 = vmatpush1.xpose.msra.mxu0 %v3787
        %3821 = vmatprep.subr.mxu0 0.0
        %3822 = vmatpush1.xpose.msra.mxu0 %v3789
        %3823 = vmatprep.subr.mxu0 0.0
        %3824 = vmatpush1.xpose.msra.mxu0 %v3791
        %3825 = vmatprep.subr.mxu0 0.0
        %3826 = vmatpush1.xpose.msra.mxu0 %v3793
        %3827 = vmatprep.subr.mxu0 0.0
        %3828 = vmatpush1.xpose.msra.mxu0 %v3795
        %3829 = vmatprep.subr.mxu0 0.0
        %3830 = vmatpush1.xpose.msra.mxu0 %v3797
        %3831 = vmatprep.subr.mxu0 0.0
        %3832 = vmatpush1.xpose.msra.mxu0 %v3799
        %3833 = vmatprep.subr.mxu0 0.0
        %3834 = vmatpush1.xpose.msra.mxu0 %v3801
        %3835 = vmatprep.subr.mxu0 0.0
        %3836 = vmatpush1.xpose.msra.mxu0 0.0
        %3837 = vmatprep.subr.mxu0 0.0
        %3838 = vmatpush1.xpose.msra.mxu0 0.0
        %3839 = vmatprep.subr.mxu0 0.0
        %3840 = vmatpush1.xpose.msra.mxu0 0.0
        %3841 = vmatprep.subr.mxu0 0.0
        %3842 = vmatpush1.xpose.msra.mxu0 0.0
        %3843 = vmatprep.subr.mxu0 0.0
        %3844 = vmatpush1.xpose.msra.mxu0 0.0
        %3845 = vmatprep.subr.mxu0 0.0
        %3846 = vmatpush1.xpose.msra.mxu0 0.0
        %3847 = vmatprep.subr.mxu0 0.0
        %3848 = vmatpush1.xpose.msra.mxu0 0.0
        %3849 = vmatprep.subr.mxu0 0.0
        %3850 = vmatpush1.xpose.msra.mxu0 0.0
        %3851 = vmatprep.subr.mxu0 0.0
        %3852 = vmatpush1.xpose.msra.mxu0 0.0
        %3853 = vmatprep.subr.mxu0 0.0
        %3854 = vmatpush1.xpose.msra.mxu0 0.0
        %3855 = vmatprep.subr.mxu0 0.0
        %3856 = vmatpush1.xpose.msra.mxu0 0.0
        %3857 = vmatprep.subr.mxu0 0.0
        %3858 = vmatpush1.xpose.msra.mxu0 0.0
        %3859 = vmatprep.subr.mxu0 0.0
        %3860 = vmatpush1.xpose.msra.mxu0 0.0
        %3861 = vmatprep.subr.mxu0 0.0
        %3862 = vmatpush1.xpose.msra.mxu0 0.0
        %3863 = vmatprep.subr.mxu0 0.0
        %3864 = vmatpush1.xpose.msra.mxu0 0.0
        %3865 = vmatprep.subr.mxu0 0.0
        %3866 = vmatpush1.xpose.msra.mxu0 0.0
        %3867 = vmatprep.mubr.f32.mxu0 0.0
        %3868 = vmatmul.mubr.f32.gmra.mrb[0].mxu0 %v3739
        %v3869 = vpop.f32.mrb[0].mxu0
        %v3870 = vadd.f32 %v1892, %v3869
        %v3871 = vpop.f32.mrb[0].mxu0
        %3872 = vmatprep.mubr.f32.mxu0 0.0
        %3873 = vmatmul.mubr.f32.gmra.mrb[0].mxu0 %v3741
        %v3874 = vpop.f32.mrb[0].mxu0
        %v3875 = vadd.f32 %v1893, %v3874
        %v3876 = vpop.f32.mrb[0].mxu0
        %3877 = vmatprep.mubr.f32.mxu0 0.0
        %3878 = vmatmul.mubr.f32.gmra.mrb[0].mxu0 %v3743
        %v3879 = vpop.f32.mrb[0].mxu0
        %v3880 = vadd.f32 %v1894, %v3879
        %v3881 = vpop.f32.mrb[0].mxu0
        %3882 = vmatprep.mubr.f32.mxu0 0.0
        %3883 = vmatmul.mubr.f32.gmra.mrb[0].mxu0 %v3745
        %v3884 = vpop.f32.mrb[0].mxu0
        %v3885 = vadd.f32 %v1895, %v3884
        %v3886 = vpop.f32.mrb[0].mxu0
        %3887 = vmatprep.mubr.f32.mxu0 0.0
        %3888 = vmatmul.mubr.f32.gmra.mrb[0].mxu0 %v3747
        %v3889 = vpop.f32.mrb[0].mxu0
        %v3890 = vadd.f32 %v1896, %v3889
        %v3891 = vpop.f32.mrb[0].mxu0
        %3892 = vmatprep.mubr.f32.mxu0 0.0
        %3893 = vmatmul.mubr.f32.gmra.mrb[0].mxu0 %v3749
        %v3894 = vpop.f32.mrb[0].mxu0
        %v3895 = vadd.f32 %v1897, %v3894
        %v3896 = vpop.f32.mrb[0].mxu0
        %3897 = vmatprep.mubr.f32.mxu0 0.0
        %3898 = vmatmul.mubr.f32.gmra.mrb[0].mxu0 %v3751
        %v3899 = vpop.f32.mrb[0].mxu0
        %v3900 = vadd.f32 %v1898, %v3899
        %v3901 = vpop.f32.mrb[0].mxu0
        %3902 = vmatprep.mubr.f32.mxu0 0.0
        %3903 = vmatmul.mubr.f32.gmra.mrb[0].mxu0 %v3753
        %v3904 = vpop.f32.mrb[0].mxu0
        %v3905 = vadd.f32 %v1899, %v3904
        %v3906 = vpop.f32.mrb[0].mxu0
        %3907 = vmatprep.mubr.f32.mxu0 0.0
        %3908 = vmatmul.mubr.f32.gmra.mrb[0].mxu0 %v3755
        %v3909 = vpop.f32.mrb[0].mxu0
        %v3910 = vadd.f32 %v1900, %v3909
        %v3911 = vpop.f32.mrb[0].mxu0
        %3912 = vmatprep.mubr.f32.mxu0 0.0
        %3913 = vmatmul.mubr.f32.gmra.mrb[0].mxu0 %v3757
        %v3914 = vpop.f32.mrb[0].mxu0
        %v3915 = vadd.f32 %v1901, %v3914
        %v3916 = vpop.f32.mrb[0].mxu0
        %3917 = vmatprep.mubr.f32.mxu0 0.0
        %3918 = vmatmul.mubr.f32.gmra.mrb[0].mxu0 %v3759
        %v3919 = vpop.f32.mrb[0].mxu0
        %v3920 = vadd.f32 %v1902, %v3919
        %v3921 = vpop.f32.mrb[0].mxu0
        %3922 = vmatprep.mubr.f32.mxu0 0.0
        %3923 = vmatmul.mubr.f32.gmra.mrb[0].mxu0 %v3761
        %v3924 = vpop.f32.mrb[0].mxu0
        %v3925 = vadd.f32 %v1903, %v3924
        %v3926 = vpop.f32.mrb[0].mxu0
        %3927 = vmatprep.mubr.f32.mxu0 0.0
        %3928 = vmatmul.mubr.f32.gmra.mrb[0].mxu0 %v3763
        %v3929 = vpop.f32.mrb[0].mxu0
        %v3930 = vadd.f32 %v1904, %v3929
        %v3931 = vpop.f32.mrb[0].mxu0
        %3932 = vmatprep.mubr.f32.mxu0 0.0
        %3933 = vmatmul.mubr.f32.gmra.mrb[0].mxu0 %v3765
        %v3934 = vpop.f32.mrb[0].mxu0
        %v3935 = vadd.f32 %v1905, %v3934
        %v3936 = vpop.f32.mrb[0].mxu0
        %3937 = vmatprep.mubr.f32.mxu0 0.0
        %3938 = vmatmul.mubr.f32.gmra.mrb[0].mxu0 %v3767
        %v3939 = vpop.f32.mrb[0].mxu0
        %v3940 = vadd.f32 %v1906, %v3939
        %v3941 = vpop.f32.mrb[0].mxu0
        %3942 = vmatprep.mubr.f32.mxu0 0.0
        %3943 = vmatmul.mubr.f32.gmra.mrb[0].mxu0 %v3769
        %v3944 = vpop.f32.mrb[0].mxu0
        %v3945 = vadd.f32 %v1907, %v3944
        %v3946 = vpop.f32.mrb[0].mxu0
        %3947 = vdwg.mxu0
        %3948 = vmax.xlane.f32.xlu0 %v3870
        %v3949 = vpop.xlane.xlu0 %3948
        %3950 = vmax.xlane.f32.xlu0 %v3875
        %v3951 = vpop.xlane.xlu0 %3950
        %3952 = vmax.xlane.f32.xlu0 %v3880
        %v3953 = vpop.xlane.xlu0 %3952
        %3954 = vmax.xlane.f32.xlu0 %v3885
        %v3955 = vpop.xlane.xlu0 %3954
        %3956 = vmax.xlane.f32.xlu0 %v3890
        %v3957 = vpop.xlane.xlu0 %3956
        %3958 = vmax.xlane.f32.xlu0 %v3895
        %v3959 = vpop.xlane.xlu0 %3958
        %3960 = vmax.xlane.f32.xlu0 %v3900
        %v3961 = vpop.xlane.xlu0 %3960
        %3962 = vmax.xlane.f32.xlu0 %v3905
        %v3963 = vpop.xlane.xlu0 %3962
        %3964 = vmax.xlane.f32.xlu0 %v3910
        %v3965 = vpop.xlane.xlu0 %3964
        %3966 = vmax.xlane.f32.xlu0 %v3915
        %v3967 = vpop.xlane.xlu0 %3966
        %3968 = vmax.xlane.f32.xlu0 %v3920
        %v3969 = vpop.xlane.xlu0 %3968
        %3970 = vmax.xlane.f32.xlu0 %v3925
        %v3971 = vpop.xlane.xlu0 %3970
        %3972 = vmax.xlane.f32.xlu0 %v3930
        %v3973 = vpop.xlane.xlu0 %3972
        %3974 = vmax.xlane.f32.xlu0 %v3935
        %v3975 = vpop.xlane.xlu0 %3974
        %3976 = vmax.xlane.f32.xlu0 %v3940
        %v3977 = vpop.xlane.xlu0 %3976
        %3978 = vmax.xlane.f32.xlu0 %v3945
        %v3979 = vpop.xlane.xlu0 %3978
        %v3980 = vsub.f32 %v3870, %v3949
        %v3981 = vsub.f32 %v3875, %v3951
        %v3982 = vsub.f32 %v3880, %v3953
        %v3983 = vsub.f32 %v3885, %v3955
        %v3984 = vsub.f32 %v3890, %v3957
        %v3985 = vsub.f32 %v3895, %v3959
        %v3986 = vsub.f32 %v3900, %v3961
        %v3987 = vsub.f32 %v3905, %v3963
        %v3988 = vsub.f32 %v3910, %v3965
        %v3989 = vsub.f32 %v3915, %v3967
        %v3990 = vsub.f32 %v3920, %v3969
        %v3991 = vsub.f32 %v3925, %v3971
        %v3992 = vsub.f32 %v3930, %v3973
        %v3993 = vsub.f32 %v3935, %v3975
        %v3994 = vsub.f32 %v3940, %v3977
        %v3995 = vsub.f32 %v3945, %v3979
        %v3996 = vmul.f32 %v3980, 1.442695
        %v3997 = vpow.pop %v3996
        %v3998 = vmul.f32 %v3981, 1.442695
        %v3999 = vpow.pop %v3998
        %v4000 = vmul.f32 %v3982, 1.442695
        %v4001 = vpow.pop %v4000
        %v4002 = vmul.f32 %v3983, 1.442695
        %v4003 = vpow.pop %v4002
        %v4004 = vmul.f32 %v3984, 1.442695
        %v4005 = vpow.pop %v4004
        %v4006 = vmul.f32 %v3985, 1.442695
        %v4007 = vpow.pop %v4006
        %v4008 = vmul.f32 %v3986, 1.442695
        %v4009 = vpow.pop %v4008
        %v4010 = vmul.f32 %v3987, 1.442695
        %v4011 = vpow.pop %v4010
        %v4012 = vmul.f32 %v3988, 1.442695
        %v4013 = vpow.pop %v4012
        %v4014 = vmul.f32 %v3989, 1.442695
        %v4015 = vpow.pop %v4014
        %v4016 = vmul.f32 %v3990, 1.442695
        %v4017 = vpow.pop %v4016
        %v4018 = vmul.f32 %v3991, 1.442695
        %v4019 = vpow.pop %v4018
        %v4020 = vmul.f32 %v3992, 1.442695
        %v4021 = vpow.pop %v4020
        %v4022 = vmul.f32 %v3993, 1.442695
        %v4023 = vpow.pop %v4022
        %v4024 = vmul.f32 %v3994, 1.442695
        %v4025 = vpow.pop %v4024
        %v4026 = vmul.f32 %v3995, 1.442695
        %v4027 = vpow.pop %v4026
        %4028 = vadd.xlane.f32.xlu0 %v3997
        %v4029 = vpop.xlane.xlu0 %4028
        %4030 = vadd.xlane.f32.xlu0 %v3999
        %v4031 = vpop.xlane.xlu0 %4030
        %4032 = vadd.xlane.f32.xlu0 %v4001
        %v4033 = vpop.xlane.xlu0 %4032
        %4034 = vadd.xlane.f32.xlu0 %v4003
        %v4035 = vpop.xlane.xlu0 %4034
        %4036 = vadd.xlane.f32.xlu0 %v4005
        %v4037 = vpop.xlane.xlu0 %4036
        %4038 = vadd.xlane.f32.xlu0 %v4007
        %v4039 = vpop.xlane.xlu0 %4038
        %4040 = vadd.xlane.f32.xlu0 %v4009
        %v4041 = vpop.xlane.xlu0 %4040
        %4042 = vadd.xlane.f32.xlu0 %v4011
        %v4043 = vpop.xlane.xlu0 %4042
        %4044 = vadd.xlane.f32.xlu0 %v4013
        %v4045 = vpop.xlane.xlu0 %4044
        %4046 = vadd.xlane.f32.xlu0 %v4015
        %v4047 = vpop.xlane.xlu0 %4046
        %4048 = vadd.xlane.f32.xlu0 %v4017
        %v4049 = vpop.xlane.xlu0 %4048
        %4050 = vadd.xlane.f32.xlu0 %v4019
        %v4051 = vpop.xlane.xlu0 %4050
        %4052 = vadd.xlane.f32.xlu0 %v4021
        %v4053 = vpop.xlane.xlu0 %4052
        %4054 = vadd.xlane.f32.xlu0 %v4023
        %v4055 = vpop.xlane.xlu0 %4054
        %4056 = vadd.xlane.f32.xlu0 %v4025
        %v4057 = vpop.xlane.xlu0 %4056
        %4058 = vadd.xlane.f32.xlu0 %v4027
        %v4059 = vpop.xlane.xlu0 %4058
        %v4060 = vrcp.pop %v4029
        %v4061 = vmul.f32 %v3997, %v4060
        %v4062 = vrcp.pop %v4031
        %v4063 = vmul.f32 %v3999, %v4062
        %v4064 = vrcp.pop %v4033
        %v4065 = vmul.f32 %v4001, %v4064
        %v4066 = vrcp.pop %v4035
        %v4067 = vmul.f32 %v4003, %v4066
        %v4068 = vrcp.pop %v4037
        %v4069 = vmul.f32 %v4005, %v4068
        %v4070 = vrcp.pop %v4039
        %v4071 = vmul.f32 %v4007, %v4070
        %v4072 = vrcp.pop %v4041
        %v4073 = vmul.f32 %v4009, %v4072
        %v4074 = vrcp.pop %v4043
        %v4075 = vmul.f32 %v4011, %v4074
        %v4076 = vrcp.pop %v4045
        %v4077 = vmul.f32 %v4013, %v4076
        %v4078 = vrcp.pop %v4047
        %v4079 = vmul.f32 %v4015, %v4078
        %v4080 = vrcp.pop %v4049
        %v4081 = vmul.f32 %v4017, %v4080
        %v4082 = vrcp.pop %v4051
        %v4083 = vmul.f32 %v4019, %v4082
        %v4084 = vrcp.pop %v4053
        %v4085 = vmul.f32 %v4021, %v4084
        %v4086 = vrcp.pop %v4055
        %v4087 = vmul.f32 %v4023, %v4086
        %v4088 = vrcp.pop %v4057
        %v4089 = vmul.f32 %v4025, %v4088
        %v4090 = vrcp.pop %v4059
        %v4091 = vmul.f32 %v4027, %v4090
        %4092 = vrot.lane.b32.xlu0 %v1814, 32
        %v4093 = vpop.permute.xlu0 %4092
        %4094 = vrot.lane.b32.xlu0 %v1819, 32
        %v4095 = vpop.permute.xlu0 %4094
        %4096 = vrot.lane.b32.xlu0 %v1824, 32
        %v4097 = vpop.permute.xlu0 %4096
        %4098 = vrot.lane.b32.xlu0 %v1829, 32
        %v4099 = vpop.permute.xlu0 %4098
        %4100 = vrot.lane.b32.xlu0 %v1834, 32
        %v4101 = vpop.permute.xlu0 %4100
        %4102 = vrot.lane.b32.xlu0 %v1839, 32
        %v4103 = vpop.permute.xlu0 %4102
        %4104 = vrot.lane.b32.xlu0 %v1844, 32
        %v4105 = vpop.permute.xlu0 %4104
        %4106 = vrot.lane.b32.xlu0 %v1849, 32
        %v4107 = vpop.permute.xlu0 %4106
        %4108 = vrot.lane.b32.xlu0 %v1854, 32
        %v4109 = vpop.permute.xlu0 %4108
        %4110 = vrot.lane.b32.xlu0 %v1859, 32
        %v4111 = vpop.permute.xlu0 %4110
        %4112 = vrot.lane.b32.xlu0 %v1864, 32
        %v4113 = vpop.permute.xlu0 %4112
        %4114 = vrot.lane.b32.xlu0 %v1869, 32
        %v4115 = vpop.permute.xlu0 %4114
        %4116 = vrot.lane.b32.xlu0 %v1874, 32
        %v4117 = vpop.permute.xlu0 %4116
        %4118 = vrot.lane.b32.xlu0 %v1879, 32
        %v4119 = vpop.permute.xlu0 %4118
        %4120 = vrot.lane.b32.xlu0 %v1884, 32
        %v4121 = vpop.permute.xlu0 %4120
        %4122 = vrot.lane.b32.xlu0 %v1889, 32
        %v4123 = vpop.permute.xlu0 %4122
        %4140 = vmatprep.subr.mxu0 0.0
        %4141 = vmatpush1.msra.mxu0 %v4093
        %4142 = vmatprep.subr.mxu0 0.0
        %4143 = vmatpush1.msra.mxu0 %v4095
        %4144 = vmatprep.subr.mxu0 0.0
        %4145 = vmatpush1.msra.mxu0 %v4097
        %4146 = vmatprep.subr.mxu0 0.0
        %4147 = vmatpush1.msra.mxu0 %v4099
        %4148 = vmatprep.subr.mxu0 0.0
        %4149 = vmatpush1.msra.mxu0 %v4101
        %4150 = vmatprep.subr.mxu0 0.0
        %4151 = vmatpush1.msra.mxu0 %v4103
        %4152 = vmatprep.subr.mxu0 0.0
        %4153 = vmatpush1.msra.mxu0 %v4105
        %4154 = vmatprep.subr.mxu0 0.0
        %4155 = vmatpush1.msra.mxu0 %v4107
        %4156 = vmatprep.subr.mxu0 0.0
        %4157 = vmatpush1.msra.mxu0 %v4109
        %4158 = vmatprep.subr.mxu0 0.0
        %4159 = vmatpush1.msra.mxu0 %v4111
        %4160 = vmatprep.subr.mxu0 0.0
        %4161 = vmatpush1.msra.mxu0 %v4113
        %4162 = vmatprep.subr.mxu0 0.0
        %4163 = vmatpush1.msra.mxu0 %v4115
        %4164 = vmatprep.subr.mxu0 0.0
        %4165 = vmatpush1.msra.mxu0 %v4117
        %4166 = vmatprep.subr.mxu0 0.0
        %4167 = vmatpush1.msra.mxu0 %v4119
        %4168 = vmatprep.subr.mxu0 0.0
        %4169 = vmatpush1.msra.mxu0 %v4121
        %4170 = vmatprep.subr.mxu0 0.0
        %4171 = vmatpush1.msra.mxu0 %v4123
        %4172 = vmatprep.subr.mxu0 0.0
        %4173 = vmatpush1.msra.mxu0 0.0
        %4174 = vmatprep.subr.mxu0 0.0
        %4175 = vmatpush1.msra.mxu0 0.0
        %4176 = vmatprep.subr.mxu0 0.0
        %4177 = vmatpush1.msra.mxu0 0.0
        %4178 = vmatprep.subr.mxu0 0.0
        %4179 = vmatpush1.msra.mxu0 0.0
        %4180 = vmatprep.subr.mxu0 0.0
        %4181 = vmatpush1.msra.mxu0 0.0
        %4182 = vmatprep.subr.mxu0 0.0
        %4183 = vmatpush1.msra.mxu0 0.0
        %4184 = vmatprep.subr.mxu0 0.0
        %4185 = vmatpush1.msra.mxu0 0.0
        %4186 = vmatprep.subr.mxu0 0.0
        %4187 = vmatpush1.msra.mxu0 0.0
        %4188 = vmatprep.subr.mxu0 0.0
        %4189 = vmatpush1.msra.mxu0 0.0
        %4190 = vmatprep.subr.mxu0 0.0
        %4191 = vmatpush1.msra.mxu0 0.0
        %4192 = vmatprep.subr.mxu0 0.0
        %4193 = vmatpush1.msra.mxu0 0.0
        %4194 = vmatprep.subr.mxu0 0.0
        %4195 = vmatpush1.msra.mxu0 0.0
        %4196 = vmatprep.subr.mxu0 0.0
        %4197 = vmatpush1.msra.mxu0 0.0
        %4198 = vmatprep.subr.mxu0 0.0
        %4199 = vmatpush1.msra.mxu0 0.0
        %4200 = vmatprep.subr.mxu0 0.0
        %4201 = vmatpush1.msra.mxu0 0.0
        %4202 = vmatprep.subr.mxu0 0.0
        %4203 = vmatpush1.msra.mxu0 0.0
        %4204 = vmatprep.mubr.f32.mxu0 0.0
        %4205 = vmatmul.mubr.f32.gmra.mrb[0].mxu0 %v4061
        %v4206 = vpop.f32.mrb[0].mxu0
        %v4207 = vadd.f32 0.0, %v4206
        %v4208 = vpop.f32.mrb[0].mxu0
        %4209 = vmatprep.mubr.f32.mxu0 0.0
        %4210 = vmatmul.mubr.f32.gmra.mrb[0].mxu0 %v4063
        %v4211 = vpop.f32.mrb[0].mxu0
        %v4212 = vadd.f32 0.0, %v4211
        %v4213 = vpop.f32.mrb[0].mxu0
        %4214 = vmatprep.mubr.f32.mxu0 0.0
        %4215 = vmatmul.mubr.f32.gmra.mrb[0].mxu0 %v4065
        %v4216 = vpop.f32.mrb[0].mxu0
        %v4217 = vadd.f32 0.0, %v4216
        %v4218 = vpop.f32.mrb[0].mxu0
        %4219 = vmatprep.mubr.f32.mxu0 0.0
        %4220 = vmatmul.mubr.f32.gmra.mrb[0].mxu0 %v4067
        %v4221 = vpop.f32.mrb[0].mxu0
        %v4222 = vadd.f32 0.0, %v4221
        %v4223 = vpop.f32.mrb[0].mxu0
        %4224 = vmatprep.mubr.f32.mxu0 0.0
        %4225 = vmatmul.mubr.f32.gmra.mrb[0].mxu0 %v4069
        %v4226 = vpop.f32.mrb[0].mxu0
        %v4227 = vadd.f32 0.0, %v4226
        %v4228 = vpop.f32.mrb[0].mxu0
        %4229 = vmatprep.mubr.f32.mxu0 0.0
        %4230 = vmatmul.mubr.f32.gmra.mrb[0].mxu0 %v4071
        %v4231 = vpop.f32.mrb[0].mxu0
        %v4232 = vadd.f32 0.0, %v4231
        %v4233 = vpop.f32.mrb[0].mxu0
        %4234 = vmatprep.mubr.f32.mxu0 0.0
        %4235 = vmatmul.mubr.f32.gmra.mrb[0].mxu0 %v4073
        %v4236 = vpop.f32.mrb[0].mxu0
        %v4237 = vadd.f32 0.0, %v4236
        %v4238 = vpop.f32.mrb[0].mxu0
        %4239 = vmatprep.mubr.f32.mxu0 0.0
        %4240 = vmatmul.mubr.f32.gmra.mrb[0].mxu0 %v4075
        %v4241 = vpop.f32.mrb[0].mxu0
        %v4242 = vadd.f32 0.0, %v4241
        %v4243 = vpop.f32.mrb[0].mxu0
        %4244 = vmatprep.mubr.f32.mxu0 0.0
        %4245 = vmatmul.mubr.f32.gmra.mrb[0].mxu0 %v4077
        %v4246 = vpop.f32.mrb[0].mxu0
        %v4247 = vadd.f32 0.0, %v4246
        %v4248 = vpop.f32.mrb[0].mxu0
        %4249 = vmatprep.mubr.f32.mxu0 0.0
        %4250 = vmatmul.mubr.f32.gmra.mrb[0].mxu0 %v4079
        %v4251 = vpop.f32.mrb[0].mxu0
        %v4252 = vadd.f32 0.0, %v4251
        %v4253 = vpop.f32.mrb[0].mxu0
        %4254 = vmatprep.mubr.f32.mxu0 0.0
        %4255 = vmatmul.mubr.f32.gmra.mrb[0].mxu0 %v4081
        %v4256 = vpop.f32.mrb[0].mxu0
        %v4257 = vadd.f32 0.0, %v4256
        %v4258 = vpop.f32.mrb[0].mxu0
        %4259 = vmatprep.mubr.f32.mxu0 0.0
        %4260 = vmatmul.mubr.f32.gmra.mrb[0].mxu0 %v4083
        %v4261 = vpop.f32.mrb[0].mxu0
        %v4262 = vadd.f32 0.0, %v4261
        %v4263 = vpop.f32.mrb[0].mxu0
        %4264 = vmatprep.mubr.f32.mxu0 0.0
        %4265 = vmatmul.mubr.f32.gmra.mrb[0].mxu0 %v4085
        %v4266 = vpop.f32.mrb[0].mxu0
        %v4267 = vadd.f32 0.0, %v4266
        %v4268 = vpop.f32.mrb[0].mxu0
        %4269 = vmatprep.mubr.f32.mxu0 0.0
        %4270 = vmatmul.mubr.f32.gmra.mrb[0].mxu0 %v4087
        %v4271 = vpop.f32.mrb[0].mxu0
        %v4272 = vadd.f32 0.0, %v4271
        %v4273 = vpop.f32.mrb[0].mxu0
        %4274 = vmatprep.mubr.f32.mxu0 0.0
        %4275 = vmatmul.mubr.f32.gmra.mrb[0].mxu0 %v4089
        %v4276 = vpop.f32.mrb[0].mxu0
        %v4277 = vadd.f32 0.0, %v4276
        %v4278 = vpop.f32.mrb[0].mxu0
        %4279 = vmatprep.mubr.f32.mxu0 0.0
        %4280 = vmatmul.mubr.f32.gmra.mrb[0].mxu0 %v4091
        %v4281 = vpop.f32.mrb[0].mxu0
        %v4282 = vadd.f32 0.0, %v4281
        %v4283 = vpop.f32.mrb[0].mxu0
        %4284 = vdwg.mxu0
        %4301 = vrot.lane.b32.xlu0 %v2987, 32
        %v4302 = vpop.permute.xlu0 %4301
        %4303 = vrot.lane.b32.xlu0 %v2992, 32
        %v4304 = vpop.permute.xlu0 %4303
        %4305 = vrot.lane.b32.xlu0 %v2997, 32
        %v4306 = vpop.permute.xlu0 %4305
        %4307 = vrot.lane.b32.xlu0 %v3002, 32
        %v4308 = vpop.permute.xlu0 %4307
        %4309 = vrot.lane.b32.xlu0 %v3007, 32
        %v4310 = vpop.permute.xlu0 %4309
        %4311 = vrot.lane.b32.xlu0 %v3012, 32
        %v4312 = vpop.permute.xlu0 %4311
        %4313 = vrot.lane.b32.xlu0 %v3017, 32
        %v4314 = vpop.permute.xlu0 %4313
        %4315 = vrot.lane.b32.xlu0 %v3022, 32
        %v4316 = vpop.permute.xlu0 %4315
        %4317 = vrot.lane.b32.xlu0 %v3027, 32
        %v4318 = vpop.permute.xlu0 %4317
        %4319 = vrot.lane.b32.xlu0 %v3032, 32
        %v4320 = vpop.permute.xlu0 %4319
        %4321 = vrot.lane.b32.xlu0 %v3037, 32
        %v4322 = vpop.permute.xlu0 %4321
        %4323 = vrot.lane.b32.xlu0 %v3042, 32
        %v4324 = vpop.permute.xlu0 %4323
        %4325 = vrot.lane.b32.xlu0 %v3047, 32
        %v4326 = vpop.permute.xlu0 %4325
        %4327 = vrot.lane.b32.xlu0 %v3052, 32
        %v4328 = vpop.permute.xlu0 %4327
        %4329 = vrot.lane.b32.xlu0 %v3057, 32
        %v4330 = vpop.permute.xlu0 %4329
        %4331 = vrot.lane.b32.xlu0 %v3062, 32
        %v4332 = vpop.permute.xlu0 %4331
        %4365 = vrot.lane.b32.xlu0 %v3597, 64
        %v4366 = vpop.permute.xlu0 %4365
        %4367 = vrot.lane.b32.xlu0 %v3602, 64
        %v4368 = vpop.permute.xlu0 %4367
        %4369 = vrot.lane.b32.xlu0 %v3607, 64
        %v4370 = vpop.permute.xlu0 %4369
        %4371 = vrot.lane.b32.xlu0 %v3612, 64
        %v4372 = vpop.permute.xlu0 %4371
        %4373 = vrot.lane.b32.xlu0 %v3617, 64
        %v4374 = vpop.permute.xlu0 %4373
        %4375 = vrot.lane.b32.xlu0 %v3622, 64
        %v4376 = vpop.permute.xlu0 %4375
        %4377 = vrot.lane.b32.xlu0 %v3627, 64
        %v4378 = vpop.permute.xlu0 %4377
        %4379 = vrot.lane.b32.xlu0 %v3632, 64
        %v4380 = vpop.permute.xlu0 %4379
        %4381 = vrot.lane.b32.xlu0 %v3637, 64
        %v4382 = vpop.permute.xlu0 %4381
        %4383 = vrot.lane.b32.xlu0 %v3642, 64
        %v4384 = vpop.permute.xlu0 %4383
        %4385 = vrot.lane.b32.xlu0 %v3647, 64
        %v4386 = vpop.permute.xlu0 %4385
        %4387 = vrot.lane.b32.xlu0 %v3652, 64
        %v4388 = vpop.permute.xlu0 %4387
        %4389 = vrot.lane.b32.xlu0 %v3657, 64
        %v4390 = vpop.permute.xlu0 %4389
        %4391 = vrot.lane.b32.xlu0 %v3662, 64
        %v4392 = vpop.permute.xlu0 %4391
        %4393 = vrot.lane.b32.xlu0 %v3667, 64
        %v4394 = vpop.permute.xlu0 %4393
        %4395 = vrot.lane.b32.xlu0 %v3672, 64
        %v4396 = vpop.permute.xlu0 %4395
        %4429 = vrot.lane.b32.xlu0 %v4207, 96
        %v4430 = vpop.permute.xlu0 %4429
        %4431 = vrot.lane.b32.xlu0 %v4212, 96
        %v4432 = vpop.permute.xlu0 %4431
        %4433 = vrot.lane.b32.xlu0 %v4217, 96
        %v4434 = vpop.permute.xlu0 %4433
        %4435 = vrot.lane.b32.xlu0 %v4222, 96
        %v4436 = vpop.permute.xlu0 %4435
        %4437 = vrot.lane.b32.xlu0 %v4227, 96
        %v4438 = vpop.permute.xlu0 %4437
        %4439 = vrot.lane.b32.xlu0 %v4232, 96
        %v4440 = vpop.permute.xlu0 %4439
        %4441 = vrot.lane.b32.xlu0 %v4237, 96
        %v4442 = vpop.permute.xlu0 %4441
        %4443 = vrot.lane.b32.xlu0 %v4242, 96
        %v4444 = vpop.permute.xlu0 %4443
        %4445 = vrot.lane.b32.xlu0 %v4247, 96
        %v4446 = vpop.permute.xlu0 %4445
        %4447 = vrot.lane.b32.xlu0 %v4252, 96
        %v4448 = vpop.permute.xlu0 %4447
        %4449 = vrot.lane.b32.xlu0 %v4257, 96
        %v4450 = vpop.permute.xlu0 %4449
        %4451 = vrot.lane.b32.xlu0 %v4262, 96
        %v4452 = vpop.permute.xlu0 %4451
        %4453 = vrot.lane.b32.xlu0 %v4267, 96
        %v4454 = vpop.permute.xlu0 %4453
        %4455 = vrot.lane.b32.xlu0 %v4272, 96
        %v4456 = vpop.permute.xlu0 %4455
        %4457 = vrot.lane.b32.xlu0 %v4277, 96
        %v4458 = vpop.permute.xlu0 %4457
        %4459 = vrot.lane.b32.xlu0 %v4282, 96
        %v4460 = vpop.permute.xlu0 %4459
        %v4477 = vsel %vm1908, %v2361, %v4302
        %v4478 = vsel %vm1908, %v2366, %v4304
        %v4479 = vsel %vm1908, %v2371, %v4306
        %v4480 = vsel %vm1908, %v2376, %v4308
        %v4481 = vsel %vm1908, %v2381, %v4310
        %v4482 = vsel %vm1908, %v2386, %v4312
        %v4483 = vsel %vm1908, %v2391, %v4314
        %v4484 = vsel %vm1908, %v2396, %v4316
        %v4485 = vsel %vm1908, %v2401, %v4318
        %v4486 = vsel %vm1908, %v2406, %v4320
        %v4487 = vsel %vm1908, %v2411, %v4322
        %v4488 = vsel %vm1908, %v2416, %v4324
        %v4489 = vsel %vm1908, %v2421, %v4326
        %v4490 = vsel %vm1908, %v2426, %v4328
        %v4491 = vsel %vm1908, %v2431, %v4330
        %v4492 = vsel %vm1908, %v2436, %v4332
        %vm4493 = vcmask 523264
        %v4494 = vsel %vm4493, %v4477, %v4366
        %v4495 = vsel %vm4493, %v4478, %v4368
        %v4496 = vsel %vm4493, %v4479, %v4370
        %v4497 = vsel %vm4493, %v4480, %v4372
        %v4498 = vsel %vm4493, %v4481, %v4374
        %v4499 = vsel %vm4493, %v4482, %v4376
        %v4500 = vsel %vm4493, %v4483, %v4378
        %v4501 = vsel %vm4493, %v4484, %v4380
        %v4502 = vsel %vm4493, %v4485, %v4382
        %v4503 = vsel %vm4493, %v4486, %v4384
        %v4504 = vsel %vm4493, %v4487, %v4386
        %v4505 = vsel %vm4493, %v4488, %v4388
        %v4506 = vsel %vm4493, %v4489, %v4390
        %v4507 = vsel %vm4493, %v4490, %v4392
        %v4508 = vsel %vm4493, %v4491, %v4394
        %v4509 = vsel %vm4493, %v4492, %v4396
        %vm4510 = vcmask 785408
        %v4511 = vsel %vm4510, %v4494, %v4430
        %v4512 = vsel %vm4510, %v4495, %v4432
        %v4513 = vsel %vm4510, %v4496, %v4434
        %v4514 = vsel %vm4510, %v4497, %v4436
        %v4515 = vsel %vm4510, %v4498, %v4438
        %v4516 = vsel %vm4510, %v4499, %v4440
        %v4517 = vsel %vm4510, %v4500, %v4442
        %v4518 = vsel %vm4510, %v4501, %v4444
        %v4519 = vsel %vm4510, %v4502, %v4446
        %v4520 = vsel %vm4510, %v4503, %v4448
        %v4521 = vsel %vm4510, %v4504, %v4450
        %v4522 = vsel %vm4510, %v4505, %v4452
        %v4523 = vsel %vm4510, %v4506, %v4454
        %v4524 = vsel %vm4510, %v4507, %v4456
        %v4525 = vsel %vm4510, %v4508, %v4458
        %v4526 = vsel %vm4510, %v4509, %v4460
        %v4527 = vld [vmem:[#allocation18] sm:$0xff]
        %v4528 = vld [vmem:[#allocation18 + $0x8] sm:$0xff]
        %v4529 = vld [vmem:[#allocation18 + $0x10] sm:$0xff]
        %v4530 = vld [vmem:[#allocation18 + $0x18] sm:$0xff]
        %v4531 = vld [vmem:[#allocation18 + $0x20] sm:$0xff]
        %v4532 = vld [vmem:[#allocation18 + $0x28] sm:$0xff]
        %v4533 = vld [vmem:[#allocation18 + $0x30] sm:$0xff]
        %v4534 = vld [vmem:[#allocation18 + $0x38] sm:$0xff]
        %v4535 = vld [vmem:[#allocation18 + $0x40] sm:$0xff]
        %v4536 = vld [vmem:[#allocation18 + $0x48] sm:$0xff]
        %v4537 = vld [vmem:[#allocation18 + $0x50] sm:$0xff]
        %v4538 = vld [vmem:[#allocation18 + $0x58] sm:$0xff]
        %v4539 = vld [vmem:[#allocation18 + $0x60] sm:$0xff]
        %v4540 = vld [vmem:[#allocation18 + $0x68] sm:$0xff]
        %v4541 = vld [vmem:[#allocation18 + $0x70] sm:$0xff]
        %v4542 = vld [vmem:[#allocation18 + $0x78] sm:$0xff]
        %4543 = vmatprep.subr.mxu0 0.0
        %4544 = vmatpush1.msra.mxu0 %v4527
        %4545 = vmatprep.subr.mxu0 0.0
        %4546 = vmatpush1.msra.mxu0 %v4528
        %4547 = vmatprep.subr.mxu0 0.0
        %4548 = vmatpush1.msra.mxu0 %v4529
        %4549 = vmatprep.subr.mxu0 0.0
        %4550 = vmatpush1.msra.mxu0 %v4530
        %4551 = vmatprep.subr.mxu0 0.0
        %4552 = vmatpush1.msra.mxu0 %v4531
        %4553 = vmatprep.subr.mxu0 0.0
        %4554 = vmatpush1.msra.mxu0 %v4532
        %4555 = vmatprep.subr.mxu0 0.0
        %4556 = vmatpush1.msra.mxu0 %v4533
        %4557 = vmatprep.subr.mxu0 0.0
        %4558 = vmatpush1.msra.mxu0 %v4534
        %4559 = vmatprep.subr.mxu0 0.0
        %4560 = vmatpush1.msra.mxu0 %v4535
        %4561 = vmatprep.subr.mxu0 0.0
        %4562 = vmatpush1.msra.mxu0 %v4536
        %4563 = vmatprep.subr.mxu0 0.0
        %4564 = vmatpush1.msra.mxu0 %v4537
        %4565 = vmatprep.subr.mxu0 0.0
        %4566 = vmatpush1.msra.mxu0 %v4538
        %4567 = vmatprep.subr.mxu0 0.0
        %4568 = vmatpush1.msra.mxu0 %v4539
        %4569 = vmatprep.subr.mxu0 0.0
        %4570 = vmatpush1.msra.mxu0 %v4540
        %4571 = vmatprep.subr.mxu0 0.0
        %4572 = vmatpush1.msra.mxu0 %v4541
        %4573 = vmatprep.subr.mxu0 0.0
        %4574 = vmatpush1.msra.mxu0 %v4542
        %4575 = vmatprep.subr.mxu0 0.0
        %4576 = vmatpush1.msra.mxu0 0.0
        %4577 = vmatprep.subr.mxu0 0.0
        %4578 = vmatpush1.msra.mxu0 0.0
        %4579 = vmatprep.subr.mxu0 0.0
        %4580 = vmatpush1.msra.mxu0 0.0
        %4581 = vmatprep.subr.mxu0 0.0
        %4582 = vmatpush1.msra.mxu0 0.0
        %4583 = vmatprep.subr.mxu0 0.0
        %4584 = vmatpush1.msra.mxu0 0.0
        %4585 = vmatprep.subr.mxu0 0.0
        %4586 = vmatpush1.msra.mxu0 0.0
        %4587 = vmatprep.subr.mxu0 0.0
        %4588 = vmatpush1.msra.mxu0 0.0
        %4589 = vmatprep.subr.mxu0 0.0
        %4590 = vmatpush1.msra.mxu0 0.0
        %4591 = vmatprep.subr.mxu0 0.0
        %4592 = vmatpush1.msra.mxu0 0.0
        %4593 = vmatprep.subr.mxu0 0.0
        %4594 = vmatpush1.msra.mxu0 0.0
        %4595 = vmatprep.subr.mxu0 0.0
        %4596 = vmatpush1.msra.mxu0 0.0
        %4597 = vmatprep.subr.mxu0 0.0
        %4598 = vmatpush1.msra.mxu0 0.0
        %4599 = vmatprep.subr.mxu0 0.0
        %4600 = vmatpush1.msra.mxu0 0.0
        %4601 = vmatprep.subr.mxu0 0.0
        %4602 = vmatpush1.msra.mxu0 0.0
        %4603 = vmatprep.subr.mxu0 0.0
        %4604 = vmatpush1.msra.mxu0 0.0
        %4605 = vmatprep.subr.mxu0 0.0
        %4606 = vmatpush1.msra.mxu0 0.0
        %4607 = vmatprep.mubr.f32.mxu0 0.0
        %4608 = vmatmul.mubr.f32.gmra.mrb[0].mxu0 %v4511
        %v4609 = vpop.f32.mrb[0].mxu0
        %v4610 = vadd.f32 0.0, %v4609
        %v4611 = vpop.f32.mrb[0].mxu0
        %4612 = vmatprep.mubr.f32.mxu0 0.0
        %4613 = vmatmul.mubr.f32.gmra.mrb[0].mxu0 %v4512
        %v4614 = vpop.f32.mrb[0].mxu0
        %v4615 = vadd.f32 0.0, %v4614
        %v4616 = vpop.f32.mrb[0].mxu0
        %4617 = vmatprep.mubr.f32.mxu0 0.0
        %4618 = vmatmul.mubr.f32.gmra.mrb[0].mxu0 %v4513
        %v4619 = vpop.f32.mrb[0].mxu0
        %v4620 = vadd.f32 0.0, %v4619
        %v4621 = vpop.f32.mrb[0].mxu0
        %4622 = vmatprep.mubr.f32.mxu0 0.0
        %4623 = vmatmul.mubr.f32.gmra.mrb[0].mxu0 %v4514
        %v4624 = vpop.f32.mrb[0].mxu0
        %v4625 = vadd.f32 0.0, %v4624
        %v4626 = vpop.f32.mrb[0].mxu0
        %4627 = vmatprep.mubr.f32.mxu0 0.0
        %4628 = vmatmul.mubr.f32.gmra.mrb[0].mxu0 %v4515
        %v4629 = vpop.f32.mrb[0].mxu0
        %v4630 = vadd.f32 0.0, %v4629
        %v4631 = vpop.f32.mrb[0].mxu0
        %4632 = vmatprep.mubr.f32.mxu0 0.0
        %4633 = vmatmul.mubr.f32.gmra.mrb[0].mxu0 %v4516
        %v4634 = vpop.f32.mrb[0].mxu0
        %v4635 = vadd.f32 0.0, %v4634
        %v4636 = vpop.f32.mrb[0].mxu0
        %4637 = vmatprep.mubr.f32.mxu0 0.0
        %4638 = vmatmul.mubr.f32.gmra.mrb[0].mxu0 %v4517
        %v4639 = vpop.f32.mrb[0].mxu0
        %v4640 = vadd.f32 0.0, %v4639
        %v4641 = vpop.f32.mrb[0].mxu0
        %4642 = vmatprep.mubr.f32.mxu0 0.0
        %4643 = vmatmul.mubr.f32.gmra.mrb[0].mxu0 %v4518
        %v4644 = vpop.f32.mrb[0].mxu0
        %v4645 = vadd.f32 0.0, %v4644
        %v4646 = vpop.f32.mrb[0].mxu0
        %4647 = vmatprep.mubr.f32.mxu0 0.0
        %4648 = vmatmul.mubr.f32.gmra.mrb[0].mxu0 %v4519
        %v4649 = vpop.f32.mrb[0].mxu0
        %v4650 = vadd.f32 0.0, %v4649
        %v4651 = vpop.f32.mrb[0].mxu0
        %4652 = vmatprep.mubr.f32.mxu0 0.0
        %4653 = vmatmul.mubr.f32.gmra.mrb[0].mxu0 %v4520
        %v4654 = vpop.f32.mrb[0].mxu0
        %v4655 = vadd.f32 0.0, %v4654
        %v4656 = vpop.f32.mrb[0].mxu0
        %4657 = vmatprep.mubr.f32.mxu0 0.0
        %4658 = vmatmul.mubr.f32.gmra.mrb[0].mxu0 %v4521
        %v4659 = vpop.f32.mrb[0].mxu0
        %v4660 = vadd.f32 0.0, %v4659
        %v4661 = vpop.f32.mrb[0].mxu0
        %4662 = vmatprep.mubr.f32.mxu0 0.0
        %4663 = vmatmul.mubr.f32.gmra.mrb[0].mxu0 %v4522
        %v4664 = vpop.f32.mrb[0].mxu0
        %v4665 = vadd.f32 0.0, %v4664
        %v4666 = vpop.f32.mrb[0].mxu0
        %4667 = vmatprep.mubr.f32.mxu0 0.0
        %4668 = vmatmul.mubr.f32.gmra.mrb[0].mxu0 %v4523
        %v4669 = vpop.f32.mrb[0].mxu0
        %v4670 = vadd.f32 0.0, %v4669
        %v4671 = vpop.f32.mrb[0].mxu0
        %4672 = vmatprep.mubr.f32.mxu0 0.0
        %4673 = vmatmul.mubr.f32.gmra.mrb[0].mxu0 %v4524
        %v4674 = vpop.f32.mrb[0].mxu0
        %v4675 = vadd.f32 0.0, %v4674
        %v4676 = vpop.f32.mrb[0].mxu0
        %4677 = vmatprep.mubr.f32.mxu0 0.0
        %4678 = vmatmul.mubr.f32.gmra.mrb[0].mxu0 %v4525
        %v4679 = vpop.f32.mrb[0].mxu0
        %v4680 = vadd.f32 0.0, %v4679
        %v4681 = vpop.f32.mrb[0].mxu0
        %4682 = vmatprep.mubr.f32.mxu0 0.0
        %4683 = vmatmul.mubr.f32.gmra.mrb[0].mxu0 %v4526
        %v4684 = vpop.f32.mrb[0].mxu0
        %v4685 = vadd.f32 0.0, %v4684
        %v4686 = vpop.f32.mrb[0].mxu0
        %4687 = vdwg.mxu0
        %v4688 = vadd.f32 %v1305, %v4610
        %v4689 = vadd.f32 %v1306, %v4615
        %v4690 = vadd.f32 %v1307, %v4620
        %v4691 = vadd.f32 %v1308, %v4625
        %v4692 = vadd.f32 %v1309, %v4630
        %v4693 = vadd.f32 %v1310, %v4635
        %v4694 = vadd.f32 %v1311, %v4640
        %v4695 = vadd.f32 %v1312, %v4645
        %v4696 = vadd.f32 %v1313, %v4650
        %v4697 = vadd.f32 %v1314, %v4655
        %v4698 = vadd.f32 %v1315, %v4660
        %v4699 = vadd.f32 %v1316, %v4665
        %v4700 = vadd.f32 %v1317, %v4670
        %v4701 = vadd.f32 %v1318, %v4675
        %v4702 = vadd.f32 %v1319, %v4680
        %v4703 = vadd.f32 %v1320, %v4685
        %4704 = vadd.xlane.f32.xlu0 %v4688
        %v4705 = vpop.xlane.xlu0 %4704
        %4706 = vadd.xlane.f32.xlu0 %v4689
        %v4707 = vpop.xlane.xlu0 %4706
        %4708 = vadd.xlane.f32.xlu0 %v4690
        %v4709 = vpop.xlane.xlu0 %4708
        %4710 = vadd.xlane.f32.xlu0 %v4691
        %v4711 = vpop.xlane.xlu0 %4710
        %4712 = vadd.xlane.f32.xlu0 %v4692
        %v4713 = vpop.xlane.xlu0 %4712
        %4714 = vadd.xlane.f32.xlu0 %v4693
        %v4715 = vpop.xlane.xlu0 %4714
        %4716 = vadd.xlane.f32.xlu0 %v4694
        %v4717 = vpop.xlane.xlu0 %4716
        %4718 = vadd.xlane.f32.xlu0 %v4695
        %v4719 = vpop.xlane.xlu0 %4718
        %4720 = vadd.xlane.f32.xlu0 %v4696
        %v4721 = vpop.xlane.xlu0 %4720
        %4722 = vadd.xlane.f32.xlu0 %v4697
        %v4723 = vpop.xlane.xlu0 %4722
        %4724 = vadd.xlane.f32.xlu0 %v4698
        %v4725 = vpop.xlane.xlu0 %4724
        %4726 = vadd.xlane.f32.xlu0 %v4699
        %v4727 = vpop.xlane.xlu0 %4726
        %4728 = vadd.xlane.f32.xlu0 %v4700
        %v4729 = vpop.xlane.xlu0 %4728
        %4730 = vadd.xlane.f32.xlu0 %v4701
        %v4731 = vpop.xlane.xlu0 %4730
        %4732 = vadd.xlane.f32.xlu0 %v4702
        %v4733 = vpop.xlane.xlu0 %4732
        %4734 = vadd.xlane.f32.xlu0 %v4703
        %v4735 = vpop.xlane.xlu0 %4734
        %v4736 = vmul.f32 %v4705, %v1353
        %v4737 = vmul.f32 %v4707, %v1353
        %v4738 = vmul.f32 %v4709, %v1353
        %v4739 = vmul.f32 %v4711, %v1353
        %v4740 = vmul.f32 %v4713, %v1353
        %v4741 = vmul.f32 %v4715, %v1353
        %v4742 = vmul.f32 %v4717, %v1353
        %v4743 = vmul.f32 %v4719, %v1353
        %v4744 = vmul.f32 %v4721, %v1353
        %v4745 = vmul.f32 %v4723, %v1353
        %v4746 = vmul.f32 %v4725, %v1353
        %v4747 = vmul.f32 %v4727, %v1353
        %v4748 = vmul.f32 %v4729, %v1353
        %v4749 = vmul.f32 %v4731, %v1353
        %v4750 = vmul.f32 %v4733, %v1353
        %v4751 = vmul.f32 %v4735, %v1353
        %v4752 = vsub.f32 %v4688, %v4736
        %v4753 = vsub.f32 %v4689, %v4737
        %v4754 = vsub.f32 %v4690, %v4738
        %v4755 = vsub.f32 %v4691, %v4739
        %v4756 = vsub.f32 %v4692, %v4740
        %v4757 = vsub.f32 %v4693, %v4741
        %v4758 = vsub.f32 %v4694, %v4742
        %v4759 = vsub.f32 %v4695, %v4743
        %v4760 = vsub.f32 %v4696, %v4744
        %v4761 = vsub.f32 %v4697, %v4745
        %v4762 = vsub.f32 %v4698, %v4746
        %v4763 = vsub.f32 %v4699, %v4747
        %v4764 = vsub.f32 %v4700, %v4748
        %v4765 = vsub.f32 %v4701, %v4749
        %v4766 = vsub.f32 %v4702, %v4750
        %v4767 = vsub.f32 %v4703, %v4751
        %v4768 = vmul.f32 %v4752, %v4752
        %v4769 = vmul.f32 %v4753, %v4753
        %v4770 = vmul.f32 %v4754, %v4754
        %v4771 = vmul.f32 %v4755, %v4755
        %v4772 = vmul.f32 %v4756, %v4756
        %v4773 = vmul.f32 %v4757, %v4757
        %v4774 = vmul.f32 %v4758, %v4758
        %v4775 = vmul.f32 %v4759, %v4759
        %v4776 = vmul.f32 %v4760, %v4760
        %v4777 = vmul.f32 %v4761, %v4761
        %v4778 = vmul.f32 %v4762, %v4762
        %v4779 = vmul.f32 %v4763, %v4763
        %v4780 = vmul.f32 %v4764, %v4764
        %v4781 = vmul.f32 %v4765, %v4765
        %v4782 = vmul.f32 %v4766, %v4766
        %v4783 = vmul.f32 %v4767, %v4767
        %4784 = vadd.xlane.f32.xlu0 %v4768
        %v4785 = vpop.xlane.xlu0 %4784
        %4786 = vadd.xlane.f32.xlu0 %v4769
        %v4787 = vpop.xlane.xlu0 %4786
        %4788 = vadd.xlane.f32.xlu0 %v4770
        %v4789 = vpop.xlane.xlu0 %4788
        %4790 = vadd.xlane.f32.xlu0 %v4771
        %v4791 = vpop.xlane.xlu0 %4790
        %4792 = vadd.xlane.f32.xlu0 %v4772
        %v4793 = vpop.xlane.xlu0 %4792
        %4794 = vadd.xlane.f32.xlu0 %v4773
        %v4795 = vpop.xlane.xlu0 %4794
        %4796 = vadd.xlane.f32.xlu0 %v4774
        %v4797 = vpop.xlane.xlu0 %4796
        %4798 = vadd.xlane.f32.xlu0 %v4775
        %v4799 = vpop.xlane.xlu0 %4798
        %4800 = vadd.xlane.f32.xlu0 %v4776
        %v4801 = vpop.xlane.xlu0 %4800
        %4802 = vadd.xlane.f32.xlu0 %v4777
        %v4803 = vpop.xlane.xlu0 %4802
        %4804 = vadd.xlane.f32.xlu0 %v4778
        %v4805 = vpop.xlane.xlu0 %4804
        %4806 = vadd.xlane.f32.xlu0 %v4779
        %v4807 = vpop.xlane.xlu0 %4806
        %4808 = vadd.xlane.f32.xlu0 %v4780
        %v4809 = vpop.xlane.xlu0 %4808
        %4810 = vadd.xlane.f32.xlu0 %v4781
        %v4811 = vpop.xlane.xlu0 %4810
        %4812 = vadd.xlane.f32.xlu0 %v4782
        %v4813 = vpop.xlane.xlu0 %4812
        %4814 = vadd.xlane.f32.xlu0 %v4783
        %v4815 = vpop.xlane.xlu0 %4814
        %v4816 = vmul.f32 %v4785, %v1353
        %v4817 = vmul.f32 %v4787, %v1353
        %v4818 = vmul.f32 %v4789, %v1353
        %v4819 = vmul.f32 %v4791, %v1353
        %v4820 = vmul.f32 %v4793, %v1353
        %v4821 = vmul.f32 %v4795, %v1353
        %v4822 = vmul.f32 %v4797, %v1353
        %v4823 = vmul.f32 %v4799, %v1353
        %v4824 = vmul.f32 %v4801, %v1353
        %v4825 = vmul.f32 %v4803, %v1353
        %v4826 = vmul.f32 %v4805, %v1353
        %v4827 = vmul.f32 %v4807, %v1353
        %v4828 = vmul.f32 %v4809, %v1353
        %v4829 = vmul.f32 %v4811, %v1353
        %v4830 = vmul.f32 %v4813, %v1353
        %v4831 = vmul.f32 %v4815, %v1353
        %v4832 = vadd.f32 %v4816, 1e-05
        %v4833 = vadd.f32 %v4817, 1e-05
        %v4834 = vadd.f32 %v4818, 1e-05
        %v4835 = vadd.f32 %v4819, 1e-05
        %v4836 = vadd.f32 %v4820, 1e-05
        %v4837 = vadd.f32 %v4821, 1e-05
        %v4838 = vadd.f32 %v4822, 1e-05
        %v4839 = vadd.f32 %v4823, 1e-05
        %v4840 = vadd.f32 %v4824, 1e-05
        %v4841 = vadd.f32 %v4825, 1e-05
        %v4842 = vadd.f32 %v4826, 1e-05
        %v4843 = vadd.f32 %v4827, 1e-05
        %v4844 = vadd.f32 %v4828, 1e-05
        %v4845 = vadd.f32 %v4829, 1e-05
        %v4846 = vadd.f32 %v4830, 1e-05
        %v4847 = vadd.f32 %v4831, 1e-05
        %v4848 = vrsqrt.pop %v4832
        %v4849 = vrsqrt.pop %v4833
        %v4850 = vrsqrt.pop %v4834
        %v4851 = vrsqrt.pop %v4835
        %v4852 = vrsqrt.pop %v4836
        %v4853 = vrsqrt.pop %v4837
        %v4854 = vrsqrt.pop %v4838
        %v4855 = vrsqrt.pop %v4839
        %v4856 = vrsqrt.pop %v4840
        %v4857 = vrsqrt.pop %v4841
        %v4858 = vrsqrt.pop %v4842
        %v4859 = vrsqrt.pop %v4843
        %v4860 = vrsqrt.pop %v4844
        %v4861 = vrsqrt.pop %v4845
        %v4862 = vrsqrt.pop %v4846
        %v4863 = vrsqrt.pop %v4847
        %v4864 = vmul.f32 %v4752, %v4848
        %v4865 = vmul.f32 %v4753, %v4849
        %v4866 = vmul.f32 %v4754, %v4850
        %v4867 = vmul.f32 %v4755, %v4851
        %v4868 = vmul.f32 %v4756, %v4852
        %v4869 = vmul.f32 %v4757, %v4853
        %v4870 = vmul.f32 %v4758, %v4854
        %v4871 = vmul.f32 %v4759, %v4855
        %v4872 = vmul.f32 %v4760, %v4856
        %v4873 = vmul.f32 %v4761, %v4857
        %v4874 = vmul.f32 %v4762, %v4858
        %v4875 = vmul.f32 %v4763, %v4859
        %v4876 = vmul.f32 %v4764, %v4860
        %v4877 = vmul.f32 %v4765, %v4861
        %v4878 = vmul.f32 %v4766, %v4862
        %v4879 = vmul.f32 %v4767, %v4863
        %v4880 = vlaneseq
        %v4881 = vshrl.u32 %v4880, 7
        %v4882 = vsub.s32 2, %v4881
        %v4883 = vrot.slane %v1249, %v4882
        %v4884 = vmul.f32 %v4864, %v4883
        %v4885 = vmul.f32 %v4865, %v4883
        %v4886 = vmul.f32 %v4866, %v4883
        %v4887 = vmul.f32 %v4867, %v4883
        %v4888 = vmul.f32 %v4868, %v4883
        %v4889 = vmul.f32 %v4869, %v4883
        %v4890 = vmul.f32 %v4870, %v4883
        %v4891 = vmul.f32 %v4871, %v4883
        %v4892 = vmul.f32 %v4872, %v4883
        %v4893 = vmul.f32 %v4873, %v4883
        %v4894 = vmul.f32 %v4874, %v4883
        %v4895 = vmul.f32 %v4875, %v4883
        %v4896 = vmul.f32 %v4876, %v4883
        %v4897 = vmul.f32 %v4877, %v4883
        %v4898 = vmul.f32 %v4878, %v4883
        %v4899 = vmul.f32 %v4879, %v4883
        %v4900 = vlaneseq
        %v4901 = vshrl.u32 %v4900, 7
        %v4902 = vsub.s32 3, %v4901
        %v4903 = vrot.slane %v1249, %v4902
        %v4904 = vadd.f32 %v4884, %v4903
        %v4905 = vadd.f32 %v4885, %v4903
        %v4906 = vadd.f32 %v4886, %v4903
        %v4907 = vadd.f32 %v4887, %v4903
        %v4908 = vadd.f32 %v4888, %v4903
        %v4909 = vadd.f32 %v4889, %v4903
        %v4910 = vadd.f32 %v4890, %v4903
        %v4911 = vadd.f32 %v4891, %v4903
        %v4912 = vadd.f32 %v4892, %v4903
        %v4913 = vadd.f32 %v4893, %v4903
        %v4914 = vadd.f32 %v4894, %v4903
        %v4915 = vadd.f32 %v4895, %v4903
        %v4916 = vadd.f32 %v4896, %v4903
        %v4917 = vadd.f32 %v4897, %v4903
        %v4918 = vadd.f32 %v4898, %v4903
        %v4919 = vadd.f32 %v4899, %v4903
        %v4920 = vld [vmem:[#allocation20] sm:$0xff]
        %v4921 = vld [vmem:[#allocation20 + $0x8] sm:$0xff]
        %v4922 = vld [vmem:[#allocation20 + $0x10] sm:$0xff]
        %v4923 = vld [vmem:[#allocation20 + $0x18] sm:$0xff]
        %v4924 = vld [vmem:[#allocation20 + $0x20] sm:$0xff]
        %v4925 = vld [vmem:[#allocation20 + $0x28] sm:$0xff]
        %v4926 = vld [vmem:[#allocation20 + $0x30] sm:$0xff]
        %v4927 = vld [vmem:[#allocation20 + $0x38] sm:$0xff]
        %v4928 = vld [vmem:[#allocation20 + $0x40] sm:$0xff]
        %v4929 = vld [vmem:[#allocation20 + $0x48] sm:$0xff]
        %v4930 = vld [vmem:[#allocation20 + $0x50] sm:$0xff]
        %v4931 = vld [vmem:[#allocation20 + $0x58] sm:$0xff]
        %v4932 = vld [vmem:[#allocation20 + $0x60] sm:$0xff]
        %v4933 = vld [vmem:[#allocation20 + $0x68] sm:$0xff]
        %v4934 = vld [vmem:[#allocation20 + $0x70] sm:$0xff]
        %v4935 = vld [vmem:[#allocation20 + $0x78] sm:$0xff]
        %4936 = vmatprep.subr.mxu0 0.0
        %4937 = vmatpush1.msra.mxu0 %v4920
        %4938 = vmatprep.subr.mxu0 0.0
        %4939 = vmatpush1.msra.mxu0 %v4921
        %4940 = vmatprep.subr.mxu0 0.0
        %4941 = vmatpush1.msra.mxu0 %v4922
        %4942 = vmatprep.subr.mxu0 0.0
        %4943 = vmatpush1.msra.mxu0 %v4923
        %4944 = vmatprep.subr.mxu0 0.0
        %4945 = vmatpush1.msra.mxu0 %v4924
        %4946 = vmatprep.subr.mxu0 0.0
        %4947 = vmatpush1.msra.mxu0 %v4925
        %4948 = vmatprep.subr.mxu0 0.0
        %4949 = vmatpush1.msra.mxu0 %v4926
        %4950 = vmatprep.subr.mxu0 0.0
        %4951 = vmatpush1.msra.mxu0 %v4927
        %4952 = vmatprep.subr.mxu0 0.0
        %4953 = vmatpush1.msra.mxu0 %v4928
        %4954 = vmatprep.subr.mxu0 0.0
        %4955 = vmatpush1.msra.mxu0 %v4929
        %4956 = vmatprep.subr.mxu0 0.0
        %4957 = vmatpush1.msra.mxu0 %v4930
        %4958 = vmatprep.subr.mxu0 0.0
        %4959 = vmatpush1.msra.mxu0 %v4931
        %4960 = vmatprep.subr.mxu0 0.0
        %4961 = vmatpush1.msra.mxu0 %v4932
        %4962 = vmatprep.subr.mxu0 0.0
        %4963 = vmatpush1.msra.mxu0 %v4933
        %4964 = vmatprep.subr.mxu0 0.0
        %4965 = vmatpush1.msra.mxu0 %v4934
        %4966 = vmatprep.subr.mxu0 0.0
        %4967 = vmatpush1.msra.mxu0 %v4935
        %4968 = vmatprep.subr.mxu0 0.0
        %4969 = vmatpush1.msra.mxu0 0.0
        %4970 = vmatprep.subr.mxu0 0.0
        %4971 = vmatpush1.msra.mxu0 0.0
        %4972 = vmatprep.subr.mxu0 0.0
        %4973 = vmatpush1.msra.mxu0 0.0
        %4974 = vmatprep.subr.mxu0 0.0
        %4975 = vmatpush1.msra.mxu0 0.0
        %4976 = vmatprep.subr.mxu0 0.0
        %4977 = vmatpush1.msra.mxu0 0.0
        %4978 = vmatprep.subr.mxu0 0.0
        %4979 = vmatpush1.msra.mxu0 0.0
        %4980 = vmatprep.subr.mxu0 0.0
        %4981 = vmatpush1.msra.mxu0 0.0
        %4982 = vmatprep.subr.mxu0 0.0
        %4983 = vmatpush1.msra.mxu0 0.0
        %4984 = vmatprep.subr.mxu0 0.0
        %4985 = vmatpush1.msra.mxu0 0.0
        %4986 = vmatprep.subr.mxu0 0.0
        %4987 = vmatpush1.msra.mxu0 0.0
        %4988 = vmatprep.subr.mxu0 0.0
        %4989 = vmatpush1.msra.mxu0 0.0
        %4990 = vmatprep.subr.mxu0 0.0
        %4991 = vmatpush1.msra.mxu0 0.0
        %4992 = vmatprep.subr.mxu0 0.0
        %4993 = vmatpush1.msra.mxu0 0.0
        %4994 = vmatprep.subr.mxu0 0.0
        %4995 = vmatpush1.msra.mxu0 0.0
        %4996 = vmatprep.subr.mxu0 0.0
        %4997 = vmatpush1.msra.mxu0 0.0
        %4998 = vmatprep.subr.mxu0 0.0
        %4999 = vmatpush1.msra.mxu0 0.0
        %5000 = vmatprep.mubr.f32.mxu0 0.0
        %5001 = vmatmul.mubr.f32.gmra.mrb[0].mxu0 %v4904
        %v5002 = vpop.f32.mrb[0].mxu0
        %v5003 = vadd.f32 0.0, %v5002
        %v5004 = vpop.f32.mrb[0].mxu0
        %5005 = vmatprep.mubr.f32.mxu0 0.0
        %5006 = vmatmul.mubr.f32.gmra.mrb[0].mxu0 %v4905
        %v5007 = vpop.f32.mrb[0].mxu0
        %v5008 = vadd.f32 0.0, %v5007
        %v5009 = vpop.f32.mrb[0].mxu0
        %5010 = vmatprep.mubr.f32.mxu0 0.0
        %5011 = vmatmul.mubr.f32.gmra.mrb[0].mxu0 %v4906
        %v5012 = vpop.f32.mrb[0].mxu0
        %v5013 = vadd.f32 0.0, %v5012
        %v5014 = vpop.f32.mrb[0].mxu0
        %5015 = vmatprep.mubr.f32.mxu0 0.0
        %5016 = vmatmul.mubr.f32.gmra.mrb[0].mxu0 %v4907
        %v5017 = vpop.f32.mrb[0].mxu0
        %v5018 = vadd.f32 0.0, %v5017
        %v5019 = vpop.f32.mrb[0].mxu0
        %5020 = vmatprep.mubr.f32.mxu0 0.0
        %5021 = vmatmul.mubr.f32.gmra.mrb[0].mxu0 %v4908
        %v5022 = vpop.f32.mrb[0].mxu0
        %v5023 = vadd.f32 0.0, %v5022
        %v5024 = vpop.f32.mrb[0].mxu0
        %5025 = vmatprep.mubr.f32.mxu0 0.0
        %5026 = vmatmul.mubr.f32.gmra.mrb[0].mxu0 %v4909
        %v5027 = vpop.f32.mrb[0].mxu0
        %v5028 = vadd.f32 0.0, %v5027
        %v5029 = vpop.f32.mrb[0].mxu0
        %5030 = vmatprep.mubr.f32.mxu0 0.0
        %5031 = vmatmul.mubr.f32.gmra.mrb[0].mxu0 %v4910
        %v5032 = vpop.f32.mrb[0].mxu0
        %v5033 = vadd.f32 0.0, %v5032
        %v5034 = vpop.f32.mrb[0].mxu0
        %5035 = vmatprep.mubr.f32.mxu0 0.0
        %5036 = vmatmul.mubr.f32.gmra.mrb[0].mxu0 %v4911
        %v5037 = vpop.f32.mrb[0].mxu0
        %v5038 = vadd.f32 0.0, %v5037
        %v5039 = vpop.f32.mrb[0].mxu0
        %5040 = vmatprep.mubr.f32.mxu0 0.0
        %5041 = vmatmul.mubr.f32.gmra.mrb[0].mxu0 %v4912
        %v5042 = vpop.f32.mrb[0].mxu0
        %v5043 = vadd.f32 0.0, %v5042
        %v5044 = vpop.f32.mrb[0].mxu0
        %5045 = vmatprep.mubr.f32.mxu0 0.0
        %5046 = vmatmul.mubr.f32.gmra.mrb[0].mxu0 %v4913
        %v5047 = vpop.f32.mrb[0].mxu0
        %v5048 = vadd.f32 0.0, %v5047
        %v5049 = vpop.f32.mrb[0].mxu0
        %5050 = vmatprep.mubr.f32.mxu0 0.0
        %5051 = vmatmul.mubr.f32.gmra.mrb[0].mxu0 %v4914
        %v5052 = vpop.f32.mrb[0].mxu0
        %v5053 = vadd.f32 0.0, %v5052
        %v5054 = vpop.f32.mrb[0].mxu0
        %5055 = vmatprep.mubr.f32.mxu0 0.0
        %5056 = vmatmul.mubr.f32.gmra.mrb[0].mxu0 %v4915
        %v5057 = vpop.f32.mrb[0].mxu0
        %v5058 = vadd.f32 0.0, %v5057
        %v5059 = vpop.f32.mrb[0].mxu0
        %5060 = vmatprep.mubr.f32.mxu0 0.0
        %5061 = vmatmul.mubr.f32.gmra.mrb[0].mxu0 %v4916
        %v5062 = vpop.f32.mrb[0].mxu0
        %v5063 = vadd.f32 0.0, %v5062
        %v5064 = vpop.f32.mrb[0].mxu0
        %5065 = vmatprep.mubr.f32.mxu0 0.0
        %5066 = vmatmul.mubr.f32.gmra.mrb[0].mxu0 %v4917
        %v5067 = vpop.f32.mrb[0].mxu0
        %v5068 = vadd.f32 0.0, %v5067
        %v5069 = vpop.f32.mrb[0].mxu0
        %5070 = vmatprep.mubr.f32.mxu0 0.0
        %5071 = vmatmul.mubr.f32.gmra.mrb[0].mxu0 %v4918
        %v5072 = vpop.f32.mrb[0].mxu0
        %v5073 = vadd.f32 0.0, %v5072
        %v5074 = vpop.f32.mrb[0].mxu0
        %5075 = vmatprep.mubr.f32.mxu0 0.0
        %5076 = vmatmul.mubr.f32.gmra.mrb[0].mxu0 %v4919
        %v5077 = vpop.f32.mrb[0].mxu0
        %v5078 = vadd.f32 0.0, %v5077
        %v5079 = vpop.f32.mrb[0].mxu0
        %5080 = vdwg.mxu0
        %v5081 = vld [vmem:[#allocation3] sm:$0xff]
        %v5082 = vld [vmem:[#allocation3 + $0x8] sm:$0xff]
        %v5083 = vld [vmem:[#allocation3 + $0x10] sm:$0xff]
        %v5084 = vld [vmem:[#allocation3 + $0x18] sm:$0xff]
        %v5085 = vld [vmem:[#allocation3 + $0x20] sm:$0xff]
        %v5086 = vld [vmem:[#allocation3 + $0x28] sm:$0xff]
        %v5087 = vld [vmem:[#allocation3 + $0x30] sm:$0xff]
        %v5088 = vld [vmem:[#allocation3 + $0x38] sm:$0xff]
        %v5089 = vld [vmem:[#allocation3 + $0x40] sm:$0xff]
        %v5090 = vld [vmem:[#allocation3 + $0x48] sm:$0xff]
        %v5091 = vld [vmem:[#allocation3 + $0x50] sm:$0xff]
        %v5092 = vld [vmem:[#allocation3 + $0x58] sm:$0xff]
        %v5093 = vld [vmem:[#allocation3 + $0x60] sm:$0xff]
        %v5094 = vld [vmem:[#allocation3 + $0x68] sm:$0xff]
        %v5095 = vld [vmem:[#allocation3 + $0x70] sm:$0xff]
        %v5096 = vld [vmem:[#allocation3 + $0x78] sm:$0xff]
        %v5097 = vld [vmem:[#allocation4] sm:$0xff]
        %v5098 = vld [vmem:[#allocation4 + $0x8] sm:$0xff]
        %v5099 = vld [vmem:[#allocation4 + $0x10] sm:$0xff]
        %v5100 = vld [vmem:[#allocation4 + $0x18] sm:$0xff]
        %v5101 = vld [vmem:[#allocation4 + $0x20] sm:$0xff]
        %v5102 = vld [vmem:[#allocation4 + $0x28] sm:$0xff]
        %v5103 = vld [vmem:[#allocation4 + $0x30] sm:$0xff]
        %v5104 = vld [vmem:[#allocation4 + $0x38] sm:$0xff]
        %v5105 = vld [vmem:[#allocation4 + $0x40] sm:$0xff]
        %v5106 = vld [vmem:[#allocation4 + $0x48] sm:$0xff]
        %v5107 = vld [vmem:[#allocation4 + $0x50] sm:$0xff]
        %v5108 = vld [vmem:[#allocation4 + $0x58] sm:$0xff]
        %v5109 = vld [vmem:[#allocation4 + $0x60] sm:$0xff]
        %v5110 = vld [vmem:[#allocation4 + $0x68] sm:$0xff]
        %v5111 = vld [vmem:[#allocation4 + $0x70] sm:$0xff]
        %v5112 = vld [vmem:[#allocation4 + $0x78] sm:$0xff]
        %v5113 = vld [vmem:[%s769] sm:$0x1]
        %v5115 = vlaneseq
        %v5116 = vshrl.u32 %v5115, 7
        %v5117 = vsub.s32 0, %v5116
        %v5118 = vrot.slane %v5113, %v5117
        %v5121 = vsel %vm1908, %v5003, 0
        %v5124 = vsel %vm1908, %v5008, 0
        %v5127 = vsel %vm1908, %v5013, 0
        %v5130 = vsel %vm1908, %v5018, 0
        %v5133 = vsel %vm1908, %v5023, 0
        %v5136 = vsel %vm1908, %v5028, 0
        %v5139 = vsel %vm1908, %v5033, 0
        %v5142 = vsel %vm1908, %v5038, 0
        %v5145 = vsel %vm1908, %v5043, 0
        %v5148 = vsel %vm1908, %v5048, 0
        %v5151 = vsel %vm1908, %v5053, 0
        %v5154 = vsel %vm1908, %v5058, 0
        %v5157 = vsel %vm1908, %v5063, 0
        %v5160 = vsel %vm1908, %v5068, 0
        %v5163 = vsel %vm1908, %v5073, 0
        %v5166 = vsel %vm1908, %v5078, 0
        %v5169 = vsel %vm1908, %v5081, 0
        %v5172 = vsel %vm1908, %v5082, 0
        %v5175 = vsel %vm1908, %v5083, 0
        %v5178 = vsel %vm1908, %v5084, 0
        %v5181 = vsel %vm1908, %v5085, 0
        %v5184 = vsel %vm1908, %v5086, 0
        %v5187 = vsel %vm1908, %v5087, 0
        %v5190 = vsel %vm1908, %v5088, 0
        %v5193 = vsel %vm1908, %v5089, 0
        %v5196 = vsel %vm1908, %v5090, 0
        %v5199 = vsel %vm1908, %v5091, 0
        %v5202 = vsel %vm1908, %v5092, 0
        %v5205 = vsel %vm1908, %v5093, 0
        %v5208 = vsel %vm1908, %v5094, 0
        %v5211 = vsel %vm1908, %v5095, 0
        %v5214 = vsel %vm1908, %v5096, 0
        %5216 = vmatprep.subr.mxu0 0.0
        %5217 = vmatpush1.xpose.msra.mxu0 %v5169
        %5218 = vmatprep.subr.mxu0 0.0
        %5219 = vmatpush1.xpose.msra.mxu0 %v5172
        %5220 = vmatprep.subr.mxu0 0.0
        %5221 = vmatpush1.xpose.msra.mxu0 %v5175
        %5222 = vmatprep.subr.mxu0 0.0
        %5223 = vmatpush1.xpose.msra.mxu0 %v5178
        %5224 = vmatprep.subr.mxu0 0.0
        %5225 = vmatpush1.xpose.msra.mxu0 %v5181
        %5226 = vmatprep.subr.mxu0 0.0
        %5227 = vmatpush1.xpose.msra.mxu0 %v5184
        %5228 = vmatprep.subr.mxu0 0.0
        %5229 = vmatpush1.xpose.msra.mxu0 %v5187
        %5230 = vmatprep.subr.mxu0 0.0
        %5231 = vmatpush1.xpose.msra.mxu0 %v5190
        %5232 = vmatprep.subr.mxu0 0.0
        %5233 = vmatpush1.xpose.msra.mxu0 %v5193
        %5234 = vmatprep.subr.mxu0 0.0
        %5235 = vmatpush1.xpose.msra.mxu0 %v5196
        %5236 = vmatprep.subr.mxu0 0.0
        %5237 = vmatpush1.xpose.msra.mxu0 %v5199
        %5238 = vmatprep.subr.mxu0 0.0
        %5239 = vmatpush1.xpose.msra.mxu0 %v5202
        %5240 = vmatprep.subr.mxu0 0.0
        %5241 = vmatpush1.xpose.msra.mxu0 %v5205
        %5242 = vmatprep.subr.mxu0 0.0
        %5243 = vmatpush1.xpose.msra.mxu0 %v5208
        %5244 = vmatprep.subr.mxu0 0.0
        %5245 = vmatpush1.xpose.msra.mxu0 %v5211
        %5246 = vmatprep.subr.mxu0 0.0
        %5247 = vmatpush1.xpose.msra.mxu0 %v5214
        %5248 = vmatprep.subr.mxu0 0.0
        %5249 = vmatpush1.xpose.msra.mxu0 0.0
        %5250 = vmatprep.subr.mxu0 0.0
        %5251 = vmatpush1.xpose.msra.mxu0 0.0
        %5252 = vmatprep.subr.mxu0 0.0
        %5253 = vmatpush1.xpose.msra.mxu0 0.0
        %5254 = vmatprep.subr.mxu0 0.0
        %5255 = vmatpush1.xpose.msra.mxu0 0.0
        %5256 = vmatprep.subr.mxu0 0.0
        %5257 = vmatpush1.xpose.msra.mxu0 0.0
        %5258 = vmatprep.subr.mxu0 0.0
        %5259 = vmatpush1.xpose.msra.mxu0 0.0
        %5260 = vmatprep.subr.mxu0 0.0
        %5261 = vmatpush1.xpose.msra.mxu0 0.0
        %5262 = vmatprep.subr.mxu0 0.0
        %5263 = vmatpush1.xpose.msra.mxu0 0.0
        %5264 = vmatprep.subr.mxu0 0.0
        %5265 = vmatpush1.xpose.msra.mxu0 0.0
        %5266 = vmatprep.subr.mxu0 0.0
        %5267 = vmatpush1.xpose.msra.mxu0 0.0
        %5268 = vmatprep.subr.mxu0 0.0
        %5269 = vmatpush1.xpose.msra.mxu0 0.0
        %5270 = vmatprep.subr.mxu0 0.0
        %5271 = vmatpush1.xpose.msra.mxu0 0.0
        %5272 = vmatprep.subr.mxu0 0.0
        %5273 = vmatpush1.xpose.msra.mxu0 0.0
        %5274 = vmatprep.subr.mxu0 0.0
        %5275 = vmatpush1.xpose.msra.mxu0 0.0
        %5276 = vmatprep.subr.mxu0 0.0
        %5277 = vmatpush1.xpose.msra.mxu0 0.0
        %5278 = vmatprep.subr.mxu0 0.0
        %5279 = vmatpush1.xpose.msra.mxu0 0.0
        %5280 = vmatprep.mubr.f32.mxu0 0.0
        %5281 = vmatmul.mubr.f32.gmra.mrb[0].mxu0 %v5121
        %v5282 = vpop.f32.mrb[0].mxu0
        %v5283 = vadd.f32 %v5118, %v5282
        %v5284 = vpop.f32.mrb[0].mxu0
        %5285 = vmatprep.mubr.f32.mxu0 0.0
        %5286 = vmatmul.mubr.f32.gmra.mrb[0].mxu0 %v5124
        %v5287 = vpop.f32.mrb[0].mxu0
        %v5288 = vadd.f32 %v5118, %v5287
        %v5289 = vpop.f32.mrb[0].mxu0
        %5290 = vmatprep.mubr.f32.mxu0 0.0
        %5291 = vmatmul.mubr.f32.gmra.mrb[0].mxu0 %v5127
        %v5292 = vpop.f32.mrb[0].mxu0
        %v5293 = vadd.f32 %v5118, %v5292
        %v5294 = vpop.f32.mrb[0].mxu0
        %5295 = vmatprep.mubr.f32.mxu0 0.0
        %5296 = vmatmul.mubr.f32.gmra.mrb[0].mxu0 %v5130
        %v5297 = vpop.f32.mrb[0].mxu0
        %v5298 = vadd.f32 %v5118, %v5297
        %v5299 = vpop.f32.mrb[0].mxu0
        %5300 = vmatprep.mubr.f32.mxu0 0.0
        %5301 = vmatmul.mubr.f32.gmra.mrb[0].mxu0 %v5133
        %v5302 = vpop.f32.mrb[0].mxu0
        %v5303 = vadd.f32 %v5118, %v5302
        %v5304 = vpop.f32.mrb[0].mxu0
        %5305 = vmatprep.mubr.f32.mxu0 0.0
        %5306 = vmatmul.mubr.f32.gmra.mrb[0].mxu0 %v5136
        %v5307 = vpop.f32.mrb[0].mxu0
        %v5308 = vadd.f32 %v5118, %v5307
        %v5309 = vpop.f32.mrb[0].mxu0
        %5310 = vmatprep.mubr.f32.mxu0 0.0
        %5311 = vmatmul.mubr.f32.gmra.mrb[0].mxu0 %v5139
        %v5312 = vpop.f32.mrb[0].mxu0
        %v5313 = vadd.f32 %v5118, %v5312
        %v5314 = vpop.f32.mrb[0].mxu0
        %5315 = vmatprep.mubr.f32.mxu0 0.0
        %5316 = vmatmul.mubr.f32.gmra.mrb[0].mxu0 %v5142
        %v5317 = vpop.f32.mrb[0].mxu0
        %v5318 = vadd.f32 %v5118, %v5317
        %v5319 = vpop.f32.mrb[0].mxu0
        %5320 = vmatprep.mubr.f32.mxu0 0.0
        %5321 = vmatmul.mubr.f32.gmra.mrb[0].mxu0 %v5145
        %v5322 = vpop.f32.mrb[0].mxu0
        %v5323 = vadd.f32 %v5118, %v5322
        %v5324 = vpop.f32.mrb[0].mxu0
        %5325 = vmatprep.mubr.f32.mxu0 0.0
        %5326 = vmatmul.mubr.f32.gmra.mrb[0].mxu0 %v5148
        %v5327 = vpop.f32.mrb[0].mxu0
        %v5328 = vadd.f32 %v5118, %v5327
        %v5329 = vpop.f32.mrb[0].mxu0
        %5330 = vmatprep.mubr.f32.mxu0 0.0
        %5331 = vmatmul.mubr.f32.gmra.mrb[0].mxu0 %v5151
        %v5332 = vpop.f32.mrb[0].mxu0
        %v5333 = vadd.f32 %v5118, %v5332
        %v5334 = vpop.f32.mrb[0].mxu0
        %5335 = vmatprep.mubr.f32.mxu0 0.0
        %5336 = vmatmul.mubr.f32.gmra.mrb[0].mxu0 %v5154
        %v5337 = vpop.f32.mrb[0].mxu0
        %v5338 = vadd.f32 %v5118, %v5337
        %v5339 = vpop.f32.mrb[0].mxu0
        %5340 = vmatprep.mubr.f32.mxu0 0.0
        %5341 = vmatmul.mubr.f32.gmra.mrb[0].mxu0 %v5157
        %v5342 = vpop.f32.mrb[0].mxu0
        %v5343 = vadd.f32 %v5118, %v5342
        %v5344 = vpop.f32.mrb[0].mxu0
        %5345 = vmatprep.mubr.f32.mxu0 0.0
        %5346 = vmatmul.mubr.f32.gmra.mrb[0].mxu0 %v5160
        %v5347 = vpop.f32.mrb[0].mxu0
        %v5348 = vadd.f32 %v5118, %v5347
        %v5349 = vpop.f32.mrb[0].mxu0
        %5350 = vmatprep.mubr.f32.mxu0 0.0
        %5351 = vmatmul.mubr.f32.gmra.mrb[0].mxu0 %v5163
        %v5352 = vpop.f32.mrb[0].mxu0
        %v5353 = vadd.f32 %v5118, %v5352
        %v5354 = vpop.f32.mrb[0].mxu0
        %5355 = vmatprep.mubr.f32.mxu0 0.0
        %5356 = vmatmul.mubr.f32.gmra.mrb[0].mxu0 %v5166
        %v5357 = vpop.f32.mrb[0].mxu0
        %v5358 = vadd.f32 %v5118, %v5357
        %v5359 = vpop.f32.mrb[0].mxu0
        %5360 = vdwg.mxu0
        %5361 = vmax.xlane.f32.xlu0 %v5283
        %v5362 = vpop.xlane.xlu0 %5361
        %5363 = vmax.xlane.f32.xlu0 %v5288
        %v5364 = vpop.xlane.xlu0 %5363
        %5365 = vmax.xlane.f32.xlu0 %v5293
        %v5366 = vpop.xlane.xlu0 %5365
        %5367 = vmax.xlane.f32.xlu0 %v5298
        %v5368 = vpop.xlane.xlu0 %5367
        %5369 = vmax.xlane.f32.xlu0 %v5303
        %v5370 = vpop.xlane.xlu0 %5369
        %5371 = vmax.xlane.f32.xlu0 %v5308
        %v5372 = vpop.xlane.xlu0 %5371
        %5373 = vmax.xlane.f32.xlu0 %v5313
        %v5374 = vpop.xlane.xlu0 %5373
        %5375 = vmax.xlane.f32.xlu0 %v5318
        %v5376 = vpop.xlane.xlu0 %5375
        %5377 = vmax.xlane.f32.xlu0 %v5323
        %v5378 = vpop.xlane.xlu0 %5377
        %5379 = vmax.xlane.f32.xlu0 %v5328
        %v5380 = vpop.xlane.xlu0 %5379
        %5381 = vmax.xlane.f32.xlu0 %v5333
        %v5382 = vpop.xlane.xlu0 %5381
        %5383 = vmax.xlane.f32.xlu0 %v5338
        %v5384 = vpop.xlane.xlu0 %5383
        %5385 = vmax.xlane.f32.xlu0 %v5343
        %v5386 = vpop.xlane.xlu0 %5385
        %5387 = vmax.xlane.f32.xlu0 %v5348
        %v5388 = vpop.xlane.xlu0 %5387
        %5389 = vmax.xlane.f32.xlu0 %v5353
        %v5390 = vpop.xlane.xlu0 %5389
        %5391 = vmax.xlane.f32.xlu0 %v5358
        %v5392 = vpop.xlane.xlu0 %5391
        %v5393 = vsub.f32 %v5283, %v5362
        %v5394 = vsub.f32 %v5288, %v5364
        %v5395 = vsub.f32 %v5293, %v5366
        %v5396 = vsub.f32 %v5298, %v5368
        %v5397 = vsub.f32 %v5303, %v5370
        %v5398 = vsub.f32 %v5308, %v5372
        %v5399 = vsub.f32 %v5313, %v5374
        %v5400 = vsub.f32 %v5318, %v5376
        %v5401 = vsub.f32 %v5323, %v5378
        %v5402 = vsub.f32 %v5328, %v5380
        %v5403 = vsub.f32 %v5333, %v5382
        %v5404 = vsub.f32 %v5338, %v5384
        %v5405 = vsub.f32 %v5343, %v5386
        %v5406 = vsub.f32 %v5348, %v5388
        %v5407 = vsub.f32 %v5353, %v5390
        %v5408 = vsub.f32 %v5358, %v5392
        %v5409 = vmul.f32 %v5393, 1.442695
        %v5410 = vpow.pop %v5409
        %v5411 = vmul.f32 %v5394, 1.442695
        %v5412 = vpow.pop %v5411
        %v5413 = vmul.f32 %v5395, 1.442695
        %v5414 = vpow.pop %v5413
        %v5415 = vmul.f32 %v5396, 1.442695
        %v5416 = vpow.pop %v5415
        %v5417 = vmul.f32 %v5397, 1.442695
        %v5418 = vpow.pop %v5417
        %v5419 = vmul.f32 %v5398, 1.442695
        %v5420 = vpow.pop %v5419
        %v5421 = vmul.f32 %v5399, 1.442695
        %v5422 = vpow.pop %v5421
        %v5423 = vmul.f32 %v5400, 1.442695
        %v5424 = vpow.pop %v5423
        %v5425 = vmul.f32 %v5401, 1.442695
        %v5426 = vpow.pop %v5425
        %v5427 = vmul.f32 %v5402, 1.442695
        %v5428 = vpow.pop %v5427
        %v5429 = vmul.f32 %v5403, 1.442695
        %v5430 = vpow.pop %v5429
        %v5431 = vmul.f32 %v5404, 1.442695
        %v5432 = vpow.pop %v5431
        %v5433 = vmul.f32 %v5405, 1.442695
        %v5434 = vpow.pop %v5433
        %v5435 = vmul.f32 %v5406, 1.442695
        %v5436 = vpow.pop %v5435
        %v5437 = vmul.f32 %v5407, 1.442695
        %v5438 = vpow.pop %v5437
        %v5439 = vmul.f32 %v5408, 1.442695
        %v5440 = vpow.pop %v5439
        %5441 = vadd.xlane.f32.xlu0 %v5410
        %v5442 = vpop.xlane.xlu0 %5441
        %5443 = vadd.xlane.f32.xlu0 %v5412
        %v5444 = vpop.xlane.xlu0 %5443
        %5445 = vadd.xlane.f32.xlu0 %v5414
        %v5446 = vpop.xlane.xlu0 %5445
        %5447 = vadd.xlane.f32.xlu0 %v5416
        %v5448 = vpop.xlane.xlu0 %5447
        %5449 = vadd.xlane.f32.xlu0 %v5418
        %v5450 = vpop.xlane.xlu0 %5449
        %5451 = vadd.xlane.f32.xlu0 %v5420
        %v5452 = vpop.xlane.xlu0 %5451
        %5453 = vadd.xlane.f32.xlu0 %v5422
        %v5454 = vpop.xlane.xlu0 %5453
        %5455 = vadd.xlane.f32.xlu0 %v5424
        %v5456 = vpop.xlane.xlu0 %5455
        %5457 = vadd.xlane.f32.xlu0 %v5426
        %v5458 = vpop.xlane.xlu0 %5457
        %5459 = vadd.xlane.f32.xlu0 %v5428
        %v5460 = vpop.xlane.xlu0 %5459
        %5461 = vadd.xlane.f32.xlu0 %v5430
        %v5462 = vpop.xlane.xlu0 %5461
        %5463 = vadd.xlane.f32.xlu0 %v5432
        %v5464 = vpop.xlane.xlu0 %5463
        %5465 = vadd.xlane.f32.xlu0 %v5434
        %v5466 = vpop.xlane.xlu0 %5465
        %5467 = vadd.xlane.f32.xlu0 %v5436
        %v5468 = vpop.xlane.xlu0 %5467
        %5469 = vadd.xlane.f32.xlu0 %v5438
        %v5470 = vpop.xlane.xlu0 %5469
        %5471 = vadd.xlane.f32.xlu0 %v5440
        %v5472 = vpop.xlane.xlu0 %5471
        %v5473 = vrcp.pop %v5442
        %v5474 = vmul.f32 %v5410, %v5473
        %v5475 = vrcp.pop %v5444
        %v5476 = vmul.f32 %v5412, %v5475
        %v5477 = vrcp.pop %v5446
        %v5478 = vmul.f32 %v5414, %v5477
        %v5479 = vrcp.pop %v5448
        %v5480 = vmul.f32 %v5416, %v5479
        %v5481 = vrcp.pop %v5450
        %v5482 = vmul.f32 %v5418, %v5481
        %v5483 = vrcp.pop %v5452
        %v5484 = vmul.f32 %v5420, %v5483
        %v5485 = vrcp.pop %v5454
        %v5486 = vmul.f32 %v5422, %v5485
        %v5487 = vrcp.pop %v5456
        %v5488 = vmul.f32 %v5424, %v5487
        %v5489 = vrcp.pop %v5458
        %v5490 = vmul.f32 %v5426, %v5489
        %v5491 = vrcp.pop %v5460
        %v5492 = vmul.f32 %v5428, %v5491
        %v5493 = vrcp.pop %v5462
        %v5494 = vmul.f32 %v5430, %v5493
        %v5495 = vrcp.pop %v5464
        %v5496 = vmul.f32 %v5432, %v5495
        %v5497 = vrcp.pop %v5466
        %v5498 = vmul.f32 %v5434, %v5497
        %v5499 = vrcp.pop %v5468
        %v5500 = vmul.f32 %v5436, %v5499
        %v5501 = vrcp.pop %v5470
        %v5502 = vmul.f32 %v5438, %v5501
        %v5503 = vrcp.pop %v5472
        %v5504 = vmul.f32 %v5440, %v5503
        %5505 = vmatprep.subr.mxu0 0.0
        %5506 = vmatpush1.msra.mxu0 %v5097
        %5507 = vmatprep.subr.mxu0 0.0
        %5508 = vmatpush1.msra.mxu0 %v5098
        %5509 = vmatprep.subr.mxu0 0.0
        %5510 = vmatpush1.msra.mxu0 %v5099
        %5511 = vmatprep.subr.mxu0 0.0
        %5512 = vmatpush1.msra.mxu0 %v5100
        %5513 = vmatprep.subr.mxu0 0.0
        %5514 = vmatpush1.msra.mxu0 %v5101
        %5515 = vmatprep.subr.mxu0 0.0
        %5516 = vmatpush1.msra.mxu0 %v5102
        %5517 = vmatprep.subr.mxu0 0.0
        %5518 = vmatpush1.msra.mxu0 %v5103
        %5519 = vmatprep.subr.mxu0 0.0
        %5520 = vmatpush1.msra.mxu0 %v5104
        %5521 = vmatprep.subr.mxu0 0.0
        %5522 = vmatpush1.msra.mxu0 %v5105
        %5523 = vmatprep.subr.mxu0 0.0
        %5524 = vmatpush1.msra.mxu0 %v5106
        %5525 = vmatprep.subr.mxu0 0.0
        %5526 = vmatpush1.msra.mxu0 %v5107
        %5527 = vmatprep.subr.mxu0 0.0
        %5528 = vmatpush1.msra.mxu0 %v5108
        %5529 = vmatprep.subr.mxu0 0.0
        %5530 = vmatpush1.msra.mxu0 %v5109
        %5531 = vmatprep.subr.mxu0 0.0
        %5532 = vmatpush1.msra.mxu0 %v5110
        %5533 = vmatprep.subr.mxu0 0.0
        %5534 = vmatpush1.msra.mxu0 %v5111
        %5535 = vmatprep.subr.mxu0 0.0
        %5536 = vmatpush1.msra.mxu0 %v5112
        %5537 = vmatprep.subr.mxu0 0.0
        %5538 = vmatpush1.msra.mxu0 0.0
        %5539 = vmatprep.subr.mxu0 0.0
        %5540 = vmatpush1.msra.mxu0 0.0
        %5541 = vmatprep.subr.mxu0 0.0
        %5542 = vmatpush1.msra.mxu0 0.0
        %5543 = vmatprep.subr.mxu0 0.0
        %5544 = vmatpush1.msra.mxu0 0.0
        %5545 = vmatprep.subr.mxu0 0.0
        %5546 = vmatpush1.msra.mxu0 0.0
        %5547 = vmatprep.subr.mxu0 0.0
        %5548 = vmatpush1.msra.mxu0 0.0
        %5549 = vmatprep.subr.mxu0 0.0
        %5550 = vmatpush1.msra.mxu0 0.0
        %5551 = vmatprep.subr.mxu0 0.0
        %5552 = vmatpush1.msra.mxu0 0.0
        %5553 = vmatprep.subr.mxu0 0.0
        %5554 = vmatpush1.msra.mxu0 0.0
        %5555 = vmatprep.subr.mxu0 0.0
        %5556 = vmatpush1.msra.mxu0 0.0
        %5557 = vmatprep.subr.mxu0 0.0
        %5558 = vmatpush1.msra.mxu0 0.0
        %5559 = vmatprep.subr.mxu0 0.0
        %5560 = vmatpush1.msra.mxu0 0.0
        %5561 = vmatprep.subr.mxu0 0.0
        %5562 = vmatpush1.msra.mxu0 0.0
        %5563 = vmatprep.subr.mxu0 0.0
        %5564 = vmatpush1.msra.mxu0 0.0
        %5565 = vmatprep.subr.mxu0 0.0
        %5566 = vmatpush1.msra.mxu0 0.0
        %5567 = vmatprep.subr.mxu0 0.0
        %5568 = vmatpush1.msra.mxu0 0.0
        %5569 = vmatprep.mubr.f32.mxu0 0.0
        %5570 = vmatmul.mubr.f32.gmra.mrb[0].mxu0 %v5474
        %v5571 = vpop.f32.mrb[0].mxu0
        %v5572 = vadd.f32 0.0, %v5571
        %v5573 = vpop.f32.mrb[0].mxu0
        %5574 = vmatprep.mubr.f32.mxu0 0.0
        %5575 = vmatmul.mubr.f32.gmra.mrb[0].mxu0 %v5476
        %v5576 = vpop.f32.mrb[0].mxu0
        %v5577 = vadd.f32 0.0, %v5576
        %v5578 = vpop.f32.mrb[0].mxu0
        %5579 = vmatprep.mubr.f32.mxu0 0.0
        %5580 = vmatmul.mubr.f32.gmra.mrb[0].mxu0 %v5478
        %v5581 = vpop.f32.mrb[0].mxu0
        %v5582 = vadd.f32 0.0, %v5581
        %v5583 = vpop.f32.mrb[0].mxu0
        %5584 = vmatprep.mubr.f32.mxu0 0.0
        %5585 = vmatmul.mubr.f32.gmra.mrb[0].mxu0 %v5480
        %v5586 = vpop.f32.mrb[0].mxu0
        %v5587 = vadd.f32 0.0, %v5586
        %v5588 = vpop.f32.mrb[0].mxu0
        %5589 = vmatprep.mubr.f32.mxu0 0.0
        %5590 = vmatmul.mubr.f32.gmra.mrb[0].mxu0 %v5482
        %v5591 = vpop.f32.mrb[0].mxu0
        %v5592 = vadd.f32 0.0, %v5591
        %v5593 = vpop.f32.mrb[0].mxu0
        %5594 = vmatprep.mubr.f32.mxu0 0.0
        %5595 = vmatmul.mubr.f32.gmra.mrb[0].mxu0 %v5484
        %v5596 = vpop.f32.mrb[0].mxu0
        %v5597 = vadd.f32 0.0, %v5596
        %v5598 = vpop.f32.mrb[0].mxu0
        %5599 = vmatprep.mubr.f32.mxu0 0.0
        %5600 = vmatmul.mubr.f32.gmra.mrb[0].mxu0 %v5486
        %v5601 = vpop.f32.mrb[0].mxu0
        %v5602 = vadd.f32 0.0, %v5601
        %v5603 = vpop.f32.mrb[0].mxu0
        %5604 = vmatprep.mubr.f32.mxu0 0.0
        %5605 = vmatmul.mubr.f32.gmra.mrb[0].mxu0 %v5488
        %v5606 = vpop.f32.mrb[0].mxu0
        %v5607 = vadd.f32 0.0, %v5606
        %v5608 = vpop.f32.mrb[0].mxu0
        %5609 = vmatprep.mubr.f32.mxu0 0.0
        %5610 = vmatmul.mubr.f32.gmra.mrb[0].mxu0 %v5490
        %v5611 = vpop.f32.mrb[0].mxu0
        %v5612 = vadd.f32 0.0, %v5611
        %v5613 = vpop.f32.mrb[0].mxu0
        %5614 = vmatprep.mubr.f32.mxu0 0.0
        %5615 = vmatmul.mubr.f32.gmra.mrb[0].mxu0 %v5492
        %v5616 = vpop.f32.mrb[0].mxu0
        %v5617 = vadd.f32 0.0, %v5616
        %v5618 = vpop.f32.mrb[0].mxu0
        %5619 = vmatprep.mubr.f32.mxu0 0.0
        %5620 = vmatmul.mubr.f32.gmra.mrb[0].mxu0 %v5494
        %v5621 = vpop.f32.mrb[0].mxu0
        %v5622 = vadd.f32 0.0, %v5621
        %v5623 = vpop.f32.mrb[0].mxu0
        %5624 = vmatprep.mubr.f32.mxu0 0.0
        %5625 = vmatmul.mubr.f32.gmra.mrb[0].mxu0 %v5496
        %v5626 = vpop.f32.mrb[0].mxu0
        %v5627 = vadd.f32 0.0, %v5626
        %v5628 = vpop.f32.mrb[0].mxu0
        %5629 = vmatprep.mubr.f32.mxu0 0.0
        %5630 = vmatmul.mubr.f32.gmra.mrb[0].mxu0 %v5498
        %v5631 = vpop.f32.mrb[0].mxu0
        %v5632 = vadd.f32 0.0, %v5631
        %v5633 = vpop.f32.mrb[0].mxu0
        %5634 = vmatprep.mubr.f32.mxu0 0.0
        %5635 = vmatmul.mubr.f32.gmra.mrb[0].mxu0 %v5500
        %v5636 = vpop.f32.mrb[0].mxu0
        %v5637 = vadd.f32 0.0, %v5636
        %v5638 = vpop.f32.mrb[0].mxu0
        %5639 = vmatprep.mubr.f32.mxu0 0.0
        %5640 = vmatmul.mubr.f32.gmra.mrb[0].mxu0 %v5502
        %v5641 = vpop.f32.mrb[0].mxu0
        %v5642 = vadd.f32 0.0, %v5641
        %v5643 = vpop.f32.mrb[0].mxu0
        %5644 = vmatprep.mubr.f32.mxu0 0.0
        %5645 = vmatmul.mubr.f32.gmra.mrb[0].mxu0 %v5504
        %v5646 = vpop.f32.mrb[0].mxu0
        %v5647 = vadd.f32 0.0, %v5646
        %v5648 = vpop.f32.mrb[0].mxu0
        %5649 = vdwg.mxu0
        %5650 = vrot.lane.b32.xlu0 %v5003, 96
        %v5651 = vpop.permute.xlu0 %5650
        %5652 = vrot.lane.b32.xlu0 %v5008, 96
        %v5653 = vpop.permute.xlu0 %5652
        %5654 = vrot.lane.b32.xlu0 %v5013, 96
        %v5655 = vpop.permute.xlu0 %5654
        %5656 = vrot.lane.b32.xlu0 %v5018, 96
        %v5657 = vpop.permute.xlu0 %5656
        %5658 = vrot.lane.b32.xlu0 %v5023, 96
        %v5659 = vpop.permute.xlu0 %5658
        %5660 = vrot.lane.b32.xlu0 %v5028, 96
        %v5661 = vpop.permute.xlu0 %5660
        %5662 = vrot.lane.b32.xlu0 %v5033, 96
        %v5663 = vpop.permute.xlu0 %5662
        %5664 = vrot.lane.b32.xlu0 %v5038, 96
        %v5665 = vpop.permute.xlu0 %5664
        %5666 = vrot.lane.b32.xlu0 %v5043, 96
        %v5667 = vpop.permute.xlu0 %5666
        %5668 = vrot.lane.b32.xlu0 %v5048, 96
        %v5669 = vpop.permute.xlu0 %5668
        %5670 = vrot.lane.b32.xlu0 %v5053, 96
        %v5671 = vpop.permute.xlu0 %5670
        %5672 = vrot.lane.b32.xlu0 %v5058, 96
        %v5673 = vpop.permute.xlu0 %5672
        %5674 = vrot.lane.b32.xlu0 %v5063, 96
        %v5675 = vpop.permute.xlu0 %5674
        %5676 = vrot.lane.b32.xlu0 %v5068, 96
        %v5677 = vpop.permute.xlu0 %5676
        %5678 = vrot.lane.b32.xlu0 %v5073, 96
        %v5679 = vpop.permute.xlu0 %5678
        %5680 = vrot.lane.b32.xlu0 %v5078, 96
        %v5681 = vpop.permute.xlu0 %5680
        %5682 = vrot.lane.b32.xlu0 %v5081, 96
        %v5683 = vpop.permute.xlu0 %5682
        %5684 = vrot.lane.b32.xlu0 %v5082, 96
        %v5685 = vpop.permute.xlu0 %5684
        %5686 = vrot.lane.b32.xlu0 %v5083, 96
        %v5687 = vpop.permute.xlu0 %5686
        %5688 = vrot.lane.b32.xlu0 %v5084, 96
        %v5689 = vpop.permute.xlu0 %5688
        %5690 = vrot.lane.b32.xlu0 %v5085, 96
        %v5691 = vpop.permute.xlu0 %5690
        %5692 = vrot.lane.b32.xlu0 %v5086, 96
        %v5693 = vpop.permute.xlu0 %5692
        %5694 = vrot.lane.b32.xlu0 %v5087, 96
        %v5695 = vpop.permute.xlu0 %5694
        %5696 = vrot.lane.b32.xlu0 %v5088, 96
        %v5697 = vpop.permute.xlu0 %5696
        %5698 = vrot.lane.b32.xlu0 %v5089, 96
        %v5699 = vpop.permute.xlu0 %5698
        %5700 = vrot.lane.b32.xlu0 %v5090, 96
        %v5701 = vpop.permute.xlu0 %5700
        %5702 = vrot.lane.b32.xlu0 %v5091, 96
        %v5703 = vpop.permute.xlu0 %5702
        %5704 = vrot.lane.b32.xlu0 %v5092, 96
        %v5705 = vpop.permute.xlu0 %5704
        %5706 = vrot.lane.b32.xlu0 %v5093, 96
        %v5707 = vpop.permute.xlu0 %5706
        %5708 = vrot.lane.b32.xlu0 %v5094, 96
        %v5709 = vpop.permute.xlu0 %5708
        %5710 = vrot.lane.b32.xlu0 %v5095, 96
        %v5711 = vpop.permute.xlu0 %5710
        %5712 = vrot.lane.b32.xlu0 %v5096, 96
        %v5713 = vpop.permute.xlu0 %5712
        %v5714 = vsel %vm1908, %v5651, 0
        %v5716 = vsel %vm1908, %v5653, 0
        %v5718 = vsel %vm1908, %v5655, 0
        %v5720 = vsel %vm1908, %v5657, 0
        %v5722 = vsel %vm1908, %v5659, 0
        %v5724 = vsel %vm1908, %v5661, 0
        %v5726 = vsel %vm1908, %v5663, 0
        %v5728 = vsel %vm1908, %v5665, 0
        %v5730 = vsel %vm1908, %v5667, 0
        %v5732 = vsel %vm1908, %v5669, 0
        %v5734 = vsel %vm1908, %v5671, 0
        %v5736 = vsel %vm1908, %v5673, 0
        %v5738 = vsel %vm1908, %v5675, 0
        %v5740 = vsel %vm1908, %v5677, 0
        %v5742 = vsel %vm1908, %v5679, 0
        %v5744 = vsel %vm1908, %v5681, 0
        %v5746 = vsel %vm1908, %v5683, 0
        %v5748 = vsel %vm1908, %v5685, 0
        %v5750 = vsel %vm1908, %v5687, 0
        %v5752 = vsel %vm1908, %v5689, 0
        %v5754 = vsel %vm1908, %v5691, 0
        %v5756 = vsel %vm1908, %v5693, 0
        %v5758 = vsel %vm1908, %v5695, 0
        %v5760 = vsel %vm1908, %v5697, 0
        %v5762 = vsel %vm1908, %v5699, 0
        %v5764 = vsel %vm1908, %v5701, 0
        %v5766 = vsel %vm1908, %v5703, 0
        %v5768 = vsel %vm1908, %v5705, 0
        %v5770 = vsel %vm1908, %v5707, 0
        %v5772 = vsel %vm1908, %v5709, 0
        %v5774 = vsel %vm1908, %v5711, 0
        %v5776 = vsel %vm1908, %v5713, 0
        %5778 = vmatprep.subr.mxu0 0.0
        %5779 = vmatpush1.xpose.msra.mxu0 %v5746
        %5780 = vmatprep.subr.mxu0 0.0
        %5781 = vmatpush1.xpose.msra.mxu0 %v5748
        %5782 = vmatprep.subr.mxu0 0.0
        %5783 = vmatpush1.xpose.msra.mxu0 %v5750
        %5784 = vmatprep.subr.mxu0 0.0
        %5785 = vmatpush1.xpose.msra.mxu0 %v5752
        %5786 = vmatprep.subr.mxu0 0.0
        %5787 = vmatpush1.xpose.msra.mxu0 %v5754
        %5788 = vmatprep.subr.mxu0 0.0
        %5789 = vmatpush1.xpose.msra.mxu0 %v5756
        %5790 = vmatprep.subr.mxu0 0.0
        %5791 = vmatpush1.xpose.msra.mxu0 %v5758
        %5792 = vmatprep.subr.mxu0 0.0
        %5793 = vmatpush1.xpose.msra.mxu0 %v5760
        %5794 = vmatprep.subr.mxu0 0.0
        %5795 = vmatpush1.xpose.msra.mxu0 %v5762
        %5796 = vmatprep.subr.mxu0 0.0
        %5797 = vmatpush1.xpose.msra.mxu0 %v5764
        %5798 = vmatprep.subr.mxu0 0.0
        %5799 = vmatpush1.xpose.msra.mxu0 %v5766
        %5800 = vmatprep.subr.mxu0 0.0
        %5801 = vmatpush1.xpose.msra.mxu0 %v5768
        %5802 = vmatprep.subr.mxu0 0.0
        %5803 = vmatpush1.xpose.msra.mxu0 %v5770
        %5804 = vmatprep.subr.mxu0 0.0
        %5805 = vmatpush1.xpose.msra.mxu0 %v5772
        %5806 = vmatprep.subr.mxu0 0.0
        %5807 = vmatpush1.xpose.msra.mxu0 %v5774
        %5808 = vmatprep.subr.mxu0 0.0
        %5809 = vmatpush1.xpose.msra.mxu0 %v5776
        %5810 = vmatprep.subr.mxu0 0.0
        %5811 = vmatpush1.xpose.msra.mxu0 0.0
        %5812 = vmatprep.subr.mxu0 0.0
        %5813 = vmatpush1.xpose.msra.mxu0 0.0
        %5814 = vmatprep.subr.mxu0 0.0
        %5815 = vmatpush1.xpose.msra.mxu0 0.0
        %5816 = vmatprep.subr.mxu0 0.0
        %5817 = vmatpush1.xpose.msra.mxu0 0.0
        %5818 = vmatprep.subr.mxu0 0.0
        %5819 = vmatpush1.xpose.msra.mxu0 0.0
        %5820 = vmatprep.subr.mxu0 0.0
        %5821 = vmatpush1.xpose.msra.mxu0 0.0
        %5822 = vmatprep.subr.mxu0 0.0
        %5823 = vmatpush1.xpose.msra.mxu0 0.0
        %5824 = vmatprep.subr.mxu0 0.0
        %5825 = vmatpush1.xpose.msra.mxu0 0.0
        %5826 = vmatprep.subr.mxu0 0.0
        %5827 = vmatpush1.xpose.msra.mxu0 0.0
        %5828 = vmatprep.subr.mxu0 0.0
        %5829 = vmatpush1.xpose.msra.mxu0 0.0
        %5830 = vmatprep.subr.mxu0 0.0
        %5831 = vmatpush1.xpose.msra.mxu0 0.0
        %5832 = vmatprep.subr.mxu0 0.0
        %5833 = vmatpush1.xpose.msra.mxu0 0.0
        %5834 = vmatprep.subr.mxu0 0.0
        %5835 = vmatpush1.xpose.msra.mxu0 0.0
        %5836 = vmatprep.subr.mxu0 0.0
        %5837 = vmatpush1.xpose.msra.mxu0 0.0
        %5838 = vmatprep.subr.mxu0 0.0
        %5839 = vmatpush1.xpose.msra.mxu0 0.0
        %5840 = vmatprep.subr.mxu0 0.0
        %5841 = vmatpush1.xpose.msra.mxu0 0.0
        %5842 = vmatprep.mubr.f32.mxu0 0.0
        %5843 = vmatmul.mubr.f32.gmra.mrb[0].mxu0 %v5714
        %v5844 = vpop.f32.mrb[0].mxu0
        %v5845 = vadd.f32 %v5118, %v5844
        %v5846 = vpop.f32.mrb[0].mxu0
        %5847 = vmatprep.mubr.f32.mxu0 0.0
        %5848 = vmatmul.mubr.f32.gmra.mrb[0].mxu0 %v5716
        %v5849 = vpop.f32.mrb[0].mxu0
        %v5850 = vadd.f32 %v5118, %v5849
        %v5851 = vpop.f32.mrb[0].mxu0
        %5852 = vmatprep.mubr.f32.mxu0 0.0
        %5853 = vmatmul.mubr.f32.gmra.mrb[0].mxu0 %v5718
        %v5854 = vpop.f32.mrb[0].mxu0
        %v5855 = vadd.f32 %v5118, %v5854
        %v5856 = vpop.f32.mrb[0].mxu0
        %5857 = vmatprep.mubr.f32.mxu0 0.0
        %5858 = vmatmul.mubr.f32.gmra.mrb[0].mxu0 %v5720
        %v5859 = vpop.f32.mrb[0].mxu0
        %v5860 = vadd.f32 %v5118, %v5859
        %v5861 = vpop.f32.mrb[0].mxu0
        %5862 = vmatprep.mubr.f32.mxu0 0.0
        %5863 = vmatmul.mubr.f32.gmra.mrb[0].mxu0 %v5722
        %v5864 = vpop.f32.mrb[0].mxu0
        %v5865 = vadd.f32 %v5118, %v5864
        %v5866 = vpop.f32.mrb[0].mxu0
        %5867 = vmatprep.mubr.f32.mxu0 0.0
        %5868 = vmatmul.mubr.f32.gmra.mrb[0].mxu0 %v5724
        %v5869 = vpop.f32.mrb[0].mxu0
        %v5870 = vadd.f32 %v5118, %v5869
        %v5871 = vpop.f32.mrb[0].mxu0
        %5872 = vmatprep.mubr.f32.mxu0 0.0
        %5873 = vmatmul.mubr.f32.gmra.mrb[0].mxu0 %v5726
        %v5874 = vpop.f32.mrb[0].mxu0
        %v5875 = vadd.f32 %v5118, %v5874
        %v5876 = vpop.f32.mrb[0].mxu0
        %5877 = vmatprep.mubr.f32.mxu0 0.0
        %5878 = vmatmul.mubr.f32.gmra.mrb[0].mxu0 %v5728
        %v5879 = vpop.f32.mrb[0].mxu0
        %v5880 = vadd.f32 %v5118, %v5879
        %v5881 = vpop.f32.mrb[0].mxu0
        %5882 = vmatprep.mubr.f32.mxu0 0.0
        %5883 = vmatmul.mubr.f32.gmra.mrb[0].mxu0 %v5730
        %v5884 = vpop.f32.mrb[0].mxu0
        %v5885 = vadd.f32 %v5118, %v5884
        %v5886 = vpop.f32.mrb[0].mxu0
        %5887 = vmatprep.mubr.f32.mxu0 0.0
        %5888 = vmatmul.mubr.f32.gmra.mrb[0].mxu0 %v5732
        %v5889 = vpop.f32.mrb[0].mxu0
        %v5890 = vadd.f32 %v5118, %v5889
        %v5891 = vpop.f32.mrb[0].mxu0
        %5892 = vmatprep.mubr.f32.mxu0 0.0
        %5893 = vmatmul.mubr.f32.gmra.mrb[0].mxu0 %v5734
        %v5894 = vpop.f32.mrb[0].mxu0
        %v5895 = vadd.f32 %v5118, %v5894
        %v5896 = vpop.f32.mrb[0].mxu0
        %5897 = vmatprep.mubr.f32.mxu0 0.0
        %5898 = vmatmul.mubr.f32.gmra.mrb[0].mxu0 %v5736
        %v5899 = vpop.f32.mrb[0].mxu0
        %v5900 = vadd.f32 %v5118, %v5899
        %v5901 = vpop.f32.mrb[0].mxu0
        %5902 = vmatprep.mubr.f32.mxu0 0.0
        %5903 = vmatmul.mubr.f32.gmra.mrb[0].mxu0 %v5738
        %v5904 = vpop.f32.mrb[0].mxu0
        %v5905 = vadd.f32 %v5118, %v5904
        %v5906 = vpop.f32.mrb[0].mxu0
        %5907 = vmatprep.mubr.f32.mxu0 0.0
        %5908 = vmatmul.mubr.f32.gmra.mrb[0].mxu0 %v5740
        %v5909 = vpop.f32.mrb[0].mxu0
        %v5910 = vadd.f32 %v5118, %v5909
        %v5911 = vpop.f32.mrb[0].mxu0
        %5912 = vmatprep.mubr.f32.mxu0 0.0
        %5913 = vmatmul.mubr.f32.gmra.mrb[0].mxu0 %v5742
        %v5914 = vpop.f32.mrb[0].mxu0
        %v5915 = vadd.f32 %v5118, %v5914
        %v5916 = vpop.f32.mrb[0].mxu0
        %5917 = vmatprep.mubr.f32.mxu0 0.0
        %5918 = vmatmul.mubr.f32.gmra.mrb[0].mxu0 %v5744
        %v5919 = vpop.f32.mrb[0].mxu0
        %v5920 = vadd.f32 %v5118, %v5919
        %v5921 = vpop.f32.mrb[0].mxu0
        %5922 = vdwg.mxu0
        %5923 = vmax.xlane.f32.xlu0 %v5845
        %v5924 = vpop.xlane.xlu0 %5923
        %5925 = vmax.xlane.f32.xlu0 %v5850
        %v5926 = vpop.xlane.xlu0 %5925
        %5927 = vmax.xlane.f32.xlu0 %v5855
        %v5928 = vpop.xlane.xlu0 %5927
        %5929 = vmax.xlane.f32.xlu0 %v5860
        %v5930 = vpop.xlane.xlu0 %5929
        %5931 = vmax.xlane.f32.xlu0 %v5865
        %v5932 = vpop.xlane.xlu0 %5931
        %5933 = vmax.xlane.f32.xlu0 %v5870
        %v5934 = vpop.xlane.xlu0 %5933
        %5935 = vmax.xlane.f32.xlu0 %v5875
        %v5936 = vpop.xlane.xlu0 %5935
        %5937 = vmax.xlane.f32.xlu0 %v5880
        %v5938 = vpop.xlane.xlu0 %5937
        %5939 = vmax.xlane.f32.xlu0 %v5885
        %v5940 = vpop.xlane.xlu0 %5939
        %5941 = vmax.xlane.f32.xlu0 %v5890
        %v5942 = vpop.xlane.xlu0 %5941
        %5943 = vmax.xlane.f32.xlu0 %v5895
        %v5944 = vpop.xlane.xlu0 %5943
        %5945 = vmax.xlane.f32.xlu0 %v5900
        %v5946 = vpop.xlane.xlu0 %5945
        %5947 = vmax.xlane.f32.xlu0 %v5905
        %v5948 = vpop.xlane.xlu0 %5947
        %5949 = vmax.xlane.f32.xlu0 %v5910
        %v5950 = vpop.xlane.xlu0 %5949
        %5951 = vmax.xlane.f32.xlu0 %v5915
        %v5952 = vpop.xlane.xlu0 %5951
        %5953 = vmax.xlane.f32.xlu0 %v5920
        %v5954 = vpop.xlane.xlu0 %5953
        %v5955 = vsub.f32 %v5845, %v5924
        %v5956 = vsub.f32 %v5850, %v5926
        %v5957 = vsub.f32 %v5855, %v5928
        %v5958 = vsub.f32 %v5860, %v5930
        %v5959 = vsub.f32 %v5865, %v5932
        %v5960 = vsub.f32 %v5870, %v5934
        %v5961 = vsub.f32 %v5875, %v5936
        %v5962 = vsub.f32 %v5880, %v5938
        %v5963 = vsub.f32 %v5885, %v5940
        %v5964 = vsub.f32 %v5890, %v5942
        %v5965 = vsub.f32 %v5895, %v5944
        %v5966 = vsub.f32 %v5900, %v5946
        %v5967 = vsub.f32 %v5905, %v5948
        %v5968 = vsub.f32 %v5910, %v5950
        %v5969 = vsub.f32 %v5915, %v5952
        %v5970 = vsub.f32 %v5920, %v5954
        %v5971 = vmul.f32 %v5955, 1.442695
        %v5972 = vpow.pop %v5971
        %v5973 = vmul.f32 %v5956, 1.442695
        %v5974 = vpow.pop %v5973
        %v5975 = vmul.f32 %v5957, 1.442695
        %v5976 = vpow.pop %v5975
        %v5977 = vmul.f32 %v5958, 1.442695
        %v5978 = vpow.pop %v5977
        %v5979 = vmul.f32 %v5959, 1.442695
        %v5980 = vpow.pop %v5979
        %v5981 = vmul.f32 %v5960, 1.442695
        %v5982 = vpow.pop %v5981
        %v5983 = vmul.f32 %v5961, 1.442695
        %v5984 = vpow.pop %v5983
        %v5985 = vmul.f32 %v5962, 1.442695
        %v5986 = vpow.pop %v5985
        %v5987 = vmul.f32 %v5963, 1.442695
        %v5988 = vpow.pop %v5987
        %v5989 = vmul.f32 %v5964, 1.442695
        %v5990 = vpow.pop %v5989
        %v5991 = vmul.f32 %v5965, 1.442695
        %v5992 = vpow.pop %v5991
        %v5993 = vmul.f32 %v5966, 1.442695
        %v5994 = vpow.pop %v5993
        %v5995 = vmul.f32 %v5967, 1.442695
        %v5996 = vpow.pop %v5995
        %v5997 = vmul.f32 %v5968, 1.442695
        %v5998 = vpow.pop %v5997
        %v5999 = vmul.f32 %v5969, 1.442695
        %v6000 = vpow.pop %v5999
        %v6001 = vmul.f32 %v5970, 1.442695
        %v6002 = vpow.pop %v6001
        %6003 = vadd.xlane.f32.xlu0 %v5972
        %v6004 = vpop.xlane.xlu0 %6003
        %6005 = vadd.xlane.f32.xlu0 %v5974
        %v6006 = vpop.xlane.xlu0 %6005
        %6007 = vadd.xlane.f32.xlu0 %v5976
        %v6008 = vpop.xlane.xlu0 %6007
        %6009 = vadd.xlane.f32.xlu0 %v5978
        %v6010 = vpop.xlane.xlu0 %6009
        %6011 = vadd.xlane.f32.xlu0 %v5980
        %v6012 = vpop.xlane.xlu0 %6011
        %6013 = vadd.xlane.f32.xlu0 %v5982
        %v6014 = vpop.xlane.xlu0 %6013
        %6015 = vadd.xlane.f32.xlu0 %v5984
        %v6016 = vpop.xlane.xlu0 %6015
        %6017 = vadd.xlane.f32.xlu0 %v5986
        %v6018 = vpop.xlane.xlu0 %6017
        %6019 = vadd.xlane.f32.xlu0 %v5988
        %v6020 = vpop.xlane.xlu0 %6019
        %6021 = vadd.xlane.f32.xlu0 %v5990
        %v6022 = vpop.xlane.xlu0 %6021
        %6023 = vadd.xlane.f32.xlu0 %v5992
        %v6024 = vpop.xlane.xlu0 %6023
        %6025 = vadd.xlane.f32.xlu0 %v5994
        %v6026 = vpop.xlane.xlu0 %6025
        %6027 = vadd.xlane.f32.xlu0 %v5996
        %v6028 = vpop.xlane.xlu0 %6027
        %6029 = vadd.xlane.f32.xlu0 %v5998
        %v6030 = vpop.xlane.xlu0 %6029
        %6031 = vadd.xlane.f32.xlu0 %v6000
        %v6032 = vpop.xlane.xlu0 %6031
        %6033 = vadd.xlane.f32.xlu0 %v6002
        %v6034 = vpop.xlane.xlu0 %6033
        %v6035 = vrcp.pop %v6004
        %v6036 = vmul.f32 %v5972, %v6035
        %v6037 = vrcp.pop %v6006
        %v6038 = vmul.f32 %v5974, %v6037
        %v6039 = vrcp.pop %v6008
        %v6040 = vmul.f32 %v5976, %v6039
        %v6041 = vrcp.pop %v6010
        %v6042 = vmul.f32 %v5978, %v6041
        %v6043 = vrcp.pop %v6012
        %v6044 = vmul.f32 %v5980, %v6043
        %v6045 = vrcp.pop %v6014
        %v6046 = vmul.f32 %v5982, %v6045
        %v6047 = vrcp.pop %v6016
        %v6048 = vmul.f32 %v5984, %v6047
        %v6049 = vrcp.pop %v6018
        %v6050 = vmul.f32 %v5986, %v6049
        %v6051 = vrcp.pop %v6020
        %v6052 = vmul.f32 %v5988, %v6051
        %v6053 = vrcp.pop %v6022
        %v6054 = vmul.f32 %v5990, %v6053
        %v6055 = vrcp.pop %v6024
        %v6056 = vmul.f32 %v5992, %v6055
        %v6057 = vrcp.pop %v6026
        %v6058 = vmul.f32 %v5994, %v6057
        %v6059 = vrcp.pop %v6028
        %v6060 = vmul.f32 %v5996, %v6059
        %v6061 = vrcp.pop %v6030
        %v6062 = vmul.f32 %v5998, %v6061
        %v6063 = vrcp.pop %v6032
        %v6064 = vmul.f32 %v6000, %v6063
        %v6065 = vrcp.pop %v6034
        %v6066 = vmul.f32 %v6002, %v6065
        %v6067 = vadd.f32 %v5474, %v6036
        %v6068 = vadd.f32 %v5476, %v6038
        %v6069 = vadd.f32 %v5478, %v6040
        %v6070 = vadd.f32 %v5480, %v6042
        %v6071 = vadd.f32 %v5482, %v6044
        %v6072 = vadd.f32 %v5484, %v6046
        %v6073 = vadd.f32 %v5486, %v6048
        %v6074 = vadd.f32 %v5488, %v6050
        %v6075 = vadd.f32 %v5490, %v6052
        %v6076 = vadd.f32 %v5492, %v6054
        %v6077 = vadd.f32 %v5494, %v6056
        %v6078 = vadd.f32 %v5496, %v6058
        %v6079 = vadd.f32 %v5498, %v6060
        %v6080 = vadd.f32 %v5500, %v6062
        %v6081 = vadd.f32 %v5502, %v6064
        %v6082 = vadd.f32 %v5504, %v6066
        %6099 = vrot.lane.b32.xlu0 %v5097, 96
        %v6100 = vpop.permute.xlu0 %6099
        %6101 = vrot.lane.b32.xlu0 %v5098, 96
        %v6102 = vpop.permute.xlu0 %6101
        %6103 = vrot.lane.b32.xlu0 %v5099, 96
        %v6104 = vpop.permute.xlu0 %6103
        %6105 = vrot.lane.b32.xlu0 %v5100, 96
        %v6106 = vpop.permute.xlu0 %6105
        %6107 = vrot.lane.b32.xlu0 %v5101, 96
        %v6108 = vpop.permute.xlu0 %6107
        %6109 = vrot.lane.b32.xlu0 %v5102, 96
        %v6110 = vpop.permute.xlu0 %6109
        %6111 = vrot.lane.b32.xlu0 %v5103, 96
        %v6112 = vpop.permute.xlu0 %6111
        %6113 = vrot.lane.b32.xlu0 %v5104, 96
        %v6114 = vpop.permute.xlu0 %6113
        %6115 = vrot.lane.b32.xlu0 %v5105, 96
        %v6116 = vpop.permute.xlu0 %6115
        %6117 = vrot.lane.b32.xlu0 %v5106, 96
        %v6118 = vpop.permute.xlu0 %6117
        %6119 = vrot.lane.b32.xlu0 %v5107, 96
        %v6120 = vpop.permute.xlu0 %6119
        %6121 = vrot.lane.b32.xlu0 %v5108, 96
        %v6122 = vpop.permute.xlu0 %6121
        %6123 = vrot.lane.b32.xlu0 %v5109, 96
        %v6124 = vpop.permute.xlu0 %6123
        %6125 = vrot.lane.b32.xlu0 %v5110, 96
        %v6126 = vpop.permute.xlu0 %6125
        %6127 = vrot.lane.b32.xlu0 %v5111, 96
        %v6128 = vpop.permute.xlu0 %6127
        %6129 = vrot.lane.b32.xlu0 %v5112, 96
        %v6130 = vpop.permute.xlu0 %6129
        %6147 = vmatprep.subr.mxu0 0.0
        %6148 = vmatpush1.msra.mxu0 %v6100
        %6149 = vmatprep.subr.mxu0 0.0
        %6150 = vmatpush1.msra.mxu0 %v6102
        %6151 = vmatprep.subr.mxu0 0.0
        %6152 = vmatpush1.msra.mxu0 %v6104
        %6153 = vmatprep.subr.mxu0 0.0
        %6154 = vmatpush1.msra.mxu0 %v6106
        %6155 = vmatprep.subr.mxu0 0.0
        %6156 = vmatpush1.msra.mxu0 %v6108
        %6157 = vmatprep.subr.mxu0 0.0
        %6158 = vmatpush1.msra.mxu0 %v6110
        %6159 = vmatprep.subr.mxu0 0.0
        %6160 = vmatpush1.msra.mxu0 %v6112
        %6161 = vmatprep.subr.mxu0 0.0
        %6162 = vmatpush1.msra.mxu0 %v6114
        %6163 = vmatprep.subr.mxu0 0.0
        %6164 = vmatpush1.msra.mxu0 %v6116
        %6165 = vmatprep.subr.mxu0 0.0
        %6166 = vmatpush1.msra.mxu0 %v6118
        %6167 = vmatprep.subr.mxu0 0.0
        %6168 = vmatpush1.msra.mxu0 %v6120
        %6169 = vmatprep.subr.mxu0 0.0
        %6170 = vmatpush1.msra.mxu0 %v6122
        %6171 = vmatprep.subr.mxu0 0.0
        %6172 = vmatpush1.msra.mxu0 %v6124
        %6173 = vmatprep.subr.mxu0 0.0
        %6174 = vmatpush1.msra.mxu0 %v6126
        %6175 = vmatprep.subr.mxu0 0.0
        %6176 = vmatpush1.msra.mxu0 %v6128
        %6177 = vmatprep.subr.mxu0 0.0
        %6178 = vmatpush1.msra.mxu0 %v6130
        %6179 = vmatprep.subr.mxu0 0.0
        %6180 = vmatpush1.msra.mxu0 0.0
        %6181 = vmatprep.subr.mxu0 0.0
        %6182 = vmatpush1.msra.mxu0 0.0
        %6183 = vmatprep.subr.mxu0 0.0
        %6184 = vmatpush1.msra.mxu0 0.0
        %6185 = vmatprep.subr.mxu0 0.0
        %6186 = vmatpush1.msra.mxu0 0.0
        %6187 = vmatprep.subr.mxu0 0.0
        %6188 = vmatpush1.msra.mxu0 0.0
        %6189 = vmatprep.subr.mxu0 0.0
        %6190 = vmatpush1.msra.mxu0 0.0
        %6191 = vmatprep.subr.mxu0 0.0
        %6192 = vmatpush1.msra.mxu0 0.0
        %6193 = vmatprep.subr.mxu0 0.0
        %6194 = vmatpush1.msra.mxu0 0.0
        %6195 = vmatprep.subr.mxu0 0.0
        %6196 = vmatpush1.msra.mxu0 0.0
        %6197 = vmatprep.subr.mxu0 0.0
        %6198 = vmatpush1.msra.mxu0 0.0
        %6199 = vmatprep.subr.mxu0 0.0
        %6200 = vmatpush1.msra.mxu0 0.0
        %6201 = vmatprep.subr.mxu0 0.0
        %6202 = vmatpush1.msra.mxu0 0.0
        %6203 = vmatprep.subr.mxu0 0.0
        %6204 = vmatpush1.msra.mxu0 0.0
        %6205 = vmatprep.subr.mxu0 0.0
        %6206 = vmatpush1.msra.mxu0 0.0
        %6207 = vmatprep.subr.mxu0 0.0
        %6208 = vmatpush1.msra.mxu0 0.0
        %6209 = vmatprep.subr.mxu0 0.0
        %6210 = vmatpush1.msra.mxu0 0.0
        %6211 = vmatprep.mubr.f32.mxu0 0.0
        %6212 = vmatmul.mubr.f32.gmra.mrb[0].mxu0 %v6036
        %v6213 = vpop.f32.mrb[0].mxu0
        %v6214 = vadd.f32 0.0, %v6213
        %v6215 = vpop.f32.mrb[0].mxu0
        %6216 = vmatprep.mubr.f32.mxu0 0.0
        %6217 = vmatmul.mubr.f32.gmra.mrb[0].mxu0 %v6038
        %v6218 = vpop.f32.mrb[0].mxu0
        %v6219 = vadd.f32 0.0, %v6218
        %v6220 = vpop.f32.mrb[0].mxu0
        %6221 = vmatprep.mubr.f32.mxu0 0.0
        %6222 = vmatmul.mubr.f32.gmra.mrb[0].mxu0 %v6040
        %v6223 = vpop.f32.mrb[0].mxu0
        %v6224 = vadd.f32 0.0, %v6223
        %v6225 = vpop.f32.mrb[0].mxu0
        %6226 = vmatprep.mubr.f32.mxu0 0.0
        %6227 = vmatmul.mubr.f32.gmra.mrb[0].mxu0 %v6042
        %v6228 = vpop.f32.mrb[0].mxu0
        %v6229 = vadd.f32 0.0, %v6228
        %v6230 = vpop.f32.mrb[0].mxu0
        %6231 = vmatprep.mubr.f32.mxu0 0.0
        %6232 = vmatmul.mubr.f32.gmra.mrb[0].mxu0 %v6044
        %v6233 = vpop.f32.mrb[0].mxu0
        %v6234 = vadd.f32 0.0, %v6233
        %v6235 = vpop.f32.mrb[0].mxu0
        %6236 = vmatprep.mubr.f32.mxu0 0.0
        %6237 = vmatmul.mubr.f32.gmra.mrb[0].mxu0 %v6046
        %v6238 = vpop.f32.mrb[0].mxu0
        %v6239 = vadd.f32 0.0, %v6238
        %v6240 = vpop.f32.mrb[0].mxu0
        %6241 = vmatprep.mubr.f32.mxu0 0.0
        %6242 = vmatmul.mubr.f32.gmra.mrb[0].mxu0 %v6048
        %v6243 = vpop.f32.mrb[0].mxu0
        %v6244 = vadd.f32 0.0, %v6243
        %v6245 = vpop.f32.mrb[0].mxu0
        %6246 = vmatprep.mubr.f32.mxu0 0.0
        %6247 = vmatmul.mubr.f32.gmra.mrb[0].mxu0 %v6050
        %v6248 = vpop.f32.mrb[0].mxu0
        %v6249 = vadd.f32 0.0, %v6248
        %v6250 = vpop.f32.mrb[0].mxu0
        %6251 = vmatprep.mubr.f32.mxu0 0.0
        %6252 = vmatmul.mubr.f32.gmra.mrb[0].mxu0 %v6052
        %v6253 = vpop.f32.mrb[0].mxu0
        %v6254 = vadd.f32 0.0, %v6253
        %v6255 = vpop.f32.mrb[0].mxu0
        %6256 = vmatprep.mubr.f32.mxu0 0.0
        %6257 = vmatmul.mubr.f32.gmra.mrb[0].mxu0 %v6054
        %v6258 = vpop.f32.mrb[0].mxu0
        %v6259 = vadd.f32 0.0, %v6258
        %v6260 = vpop.f32.mrb[0].mxu0
        %6261 = vmatprep.mubr.f32.mxu0 0.0
        %6262 = vmatmul.mubr.f32.gmra.mrb[0].mxu0 %v6056
        %v6263 = vpop.f32.mrb[0].mxu0
        %v6264 = vadd.f32 0.0, %v6263
        %v6265 = vpop.f32.mrb[0].mxu0
        %6266 = vmatprep.mubr.f32.mxu0 0.0
        %6267 = vmatmul.mubr.f32.gmra.mrb[0].mxu0 %v6058
        %v6268 = vpop.f32.mrb[0].mxu0
        %v6269 = vadd.f32 0.0, %v6268
        %v6270 = vpop.f32.mrb[0].mxu0
        %6271 = vmatprep.mubr.f32.mxu0 0.0
        %6272 = vmatmul.mubr.f32.gmra.mrb[0].mxu0 %v6060
        %v6273 = vpop.f32.mrb[0].mxu0
        %v6274 = vadd.f32 0.0, %v6273
        %v6275 = vpop.f32.mrb[0].mxu0
        %6276 = vmatprep.mubr.f32.mxu0 0.0
        %6277 = vmatmul.mubr.f32.gmra.mrb[0].mxu0 %v6062
        %v6278 = vpop.f32.mrb[0].mxu0
        %v6279 = vadd.f32 0.0, %v6278
        %v6280 = vpop.f32.mrb[0].mxu0
        %6281 = vmatprep.mubr.f32.mxu0 0.0
        %6282 = vmatmul.mubr.f32.gmra.mrb[0].mxu0 %v6064
        %v6283 = vpop.f32.mrb[0].mxu0
        %v6284 = vadd.f32 0.0, %v6283
        %v6285 = vpop.f32.mrb[0].mxu0
        %6286 = vmatprep.mubr.f32.mxu0 0.0
        %6287 = vmatmul.mubr.f32.gmra.mrb[0].mxu0 %v6066
        %v6288 = vpop.f32.mrb[0].mxu0
        %v6289 = vadd.f32 0.0, %v6288
        %v6290 = vpop.f32.mrb[0].mxu0
        %6291 = vdwg.mxu0
        %6292 = vrot.lane.b32.xlu0 %v5003, 64
        %v6293 = vpop.permute.xlu0 %6292
        %6294 = vrot.lane.b32.xlu0 %v5008, 64
        %v6295 = vpop.permute.xlu0 %6294
        %6296 = vrot.lane.b32.xlu0 %v5013, 64
        %v6297 = vpop.permute.xlu0 %6296
        %6298 = vrot.lane.b32.xlu0 %v5018, 64
        %v6299 = vpop.permute.xlu0 %6298
        %6300 = vrot.lane.b32.xlu0 %v5023, 64
        %v6301 = vpop.permute.xlu0 %6300
        %6302 = vrot.lane.b32.xlu0 %v5028, 64
        %v6303 = vpop.permute.xlu0 %6302
        %6304 = vrot.lane.b32.xlu0 %v5033, 64
        %v6305 = vpop.permute.xlu0 %6304
        %6306 = vrot.lane.b32.xlu0 %v5038, 64
        %v6307 = vpop.permute.xlu0 %6306
        %6308 = vrot.lane.b32.xlu0 %v5043, 64
        %v6309 = vpop.permute.xlu0 %6308
        %6310 = vrot.lane.b32.xlu0 %v5048, 64
        %v6311 = vpop.permute.xlu0 %6310
        %6312 = vrot.lane.b32.xlu0 %v5053, 64
        %v6313 = vpop.permute.xlu0 %6312
        %6314 = vrot.lane.b32.xlu0 %v5058, 64
        %v6315 = vpop.permute.xlu0 %6314
        %6316 = vrot.lane.b32.xlu0 %v5063, 64
        %v6317 = vpop.permute.xlu0 %6316
        %6318 = vrot.lane.b32.xlu0 %v5068, 64
        %v6319 = vpop.permute.xlu0 %6318
        %6320 = vrot.lane.b32.xlu0 %v5073, 64
        %v6321 = vpop.permute.xlu0 %6320
        %6322 = vrot.lane.b32.xlu0 %v5078, 64
        %v6323 = vpop.permute.xlu0 %6322
        %6324 = vrot.lane.b32.xlu0 %v5081, 64
        %v6325 = vpop.permute.xlu0 %6324
        %6326 = vrot.lane.b32.xlu0 %v5082, 64
        %v6327 = vpop.permute.xlu0 %6326
        %6328 = vrot.lane.b32.xlu0 %v5083, 64
        %v6329 = vpop.permute.xlu0 %6328
        %6330 = vrot.lane.b32.xlu0 %v5084, 64
        %v6331 = vpop.permute.xlu0 %6330
        %6332 = vrot.lane.b32.xlu0 %v5085, 64
        %v6333 = vpop.permute.xlu0 %6332
        %6334 = vrot.lane.b32.xlu0 %v5086, 64
        %v6335 = vpop.permute.xlu0 %6334
        %6336 = vrot.lane.b32.xlu0 %v5087, 64
        %v6337 = vpop.permute.xlu0 %6336
        %6338 = vrot.lane.b32.xlu0 %v5088, 64
        %v6339 = vpop.permute.xlu0 %6338
        %6340 = vrot.lane.b32.xlu0 %v5089, 64
        %v6341 = vpop.permute.xlu0 %6340
        %6342 = vrot.lane.b32.xlu0 %v5090, 64
        %v6343 = vpop.permute.xlu0 %6342
        %6344 = vrot.lane.b32.xlu0 %v5091, 64
        %v6345 = vpop.permute.xlu0 %6344
        %6346 = vrot.lane.b32.xlu0 %v5092, 64
        %v6347 = vpop.permute.xlu0 %6346
        %6348 = vrot.lane.b32.xlu0 %v5093, 64
        %v6349 = vpop.permute.xlu0 %6348
        %6350 = vrot.lane.b32.xlu0 %v5094, 64
        %v6351 = vpop.permute.xlu0 %6350
        %6352 = vrot.lane.b32.xlu0 %v5095, 64
        %v6353 = vpop.permute.xlu0 %6352
        %6354 = vrot.lane.b32.xlu0 %v5096, 64
        %v6355 = vpop.permute.xlu0 %6354
        %v6356 = vsel %vm1908, %v6293, 0
        %v6358 = vsel %vm1908, %v6295, 0
        %v6360 = vsel %vm1908, %v6297, 0
        %v6362 = vsel %vm1908, %v6299, 0
        %v6364 = vsel %vm1908, %v6301, 0
        %v6366 = vsel %vm1908, %v6303, 0
        %v6368 = vsel %vm1908, %v6305, 0
        %v6370 = vsel %vm1908, %v6307, 0
        %v6372 = vsel %vm1908, %v6309, 0
        %v6374 = vsel %vm1908, %v6311, 0
        %v6376 = vsel %vm1908, %v6313, 0
        %v6378 = vsel %vm1908, %v6315, 0
        %v6380 = vsel %vm1908, %v6317, 0
        %v6382 = vsel %vm1908, %v6319, 0
        %v6384 = vsel %vm1908, %v6321, 0
        %v6386 = vsel %vm1908, %v6323, 0
        %v6388 = vsel %vm1908, %v6325, 0
        %v6390 = vsel %vm1908, %v6327, 0
        %v6392 = vsel %vm1908, %v6329, 0
        %v6394 = vsel %vm1908, %v6331, 0
        %v6396 = vsel %vm1908, %v6333, 0
        %v6398 = vsel %vm1908, %v6335, 0
        %v6400 = vsel %vm1908, %v6337, 0
        %v6402 = vsel %vm1908, %v6339, 0
        %v6404 = vsel %vm1908, %v6341, 0
        %v6406 = vsel %vm1908, %v6343, 0
        %v6408 = vsel %vm1908, %v6345, 0
        %v6410 = vsel %vm1908, %v6347, 0
        %v6412 = vsel %vm1908, %v6349, 0
        %v6414 = vsel %vm1908, %v6351, 0
        %v6416 = vsel %vm1908, %v6353, 0
        %v6418 = vsel %vm1908, %v6355, 0
        %6420 = vmatprep.subr.mxu0 0.0
        %6421 = vmatpush1.xpose.msra.mxu0 %v6388
        %6422 = vmatprep.subr.mxu0 0.0
        %6423 = vmatpush1.xpose.msra.mxu0 %v6390
        %6424 = vmatprep.subr.mxu0 0.0
        %6425 = vmatpush1.xpose.msra.mxu0 %v6392
        %6426 = vmatprep.subr.mxu0 0.0
        %6427 = vmatpush1.xpose.msra.mxu0 %v6394
        %6428 = vmatprep.subr.mxu0 0.0
        %6429 = vmatpush1.xpose.msra.mxu0 %v6396
        %6430 = vmatprep.subr.mxu0 0.0
        %6431 = vmatpush1.xpose.msra.mxu0 %v6398
        %6432 = vmatprep.subr.mxu0 0.0
        %6433 = vmatpush1.xpose.msra.mxu0 %v6400
        %6434 = vmatprep.subr.mxu0 0.0
        %6435 = vmatpush1.xpose.msra.mxu0 %v6402
        %6436 = vmatprep.subr.mxu0 0.0
        %6437 = vmatpush1.xpose.msra.mxu0 %v6404
        %6438 = vmatprep.subr.mxu0 0.0
        %6439 = vmatpush1.xpose.msra.mxu0 %v6406
        %6440 = vmatprep.subr.mxu0 0.0
        %6441 = vmatpush1.xpose.msra.mxu0 %v6408
        %6442 = vmatprep.subr.mxu0 0.0
        %6443 = vmatpush1.xpose.msra.mxu0 %v6410
        %6444 = vmatprep.subr.mxu0 0.0
        %6445 = vmatpush1.xpose.msra.mxu0 %v6412
        %6446 = vmatprep.subr.mxu0 0.0
        %6447 = vmatpush1.xpose.msra.mxu0 %v6414
        %6448 = vmatprep.subr.mxu0 0.0
        %6449 = vmatpush1.xpose.msra.mxu0 %v6416
        %6450 = vmatprep.subr.mxu0 0.0
        %6451 = vmatpush1.xpose.msra.mxu0 %v6418
        %6452 = vmatprep.subr.mxu0 0.0
        %6453 = vmatpush1.xpose.msra.mxu0 0.0
        %6454 = vmatprep.subr.mxu0 0.0
        %6455 = vmatpush1.xpose.msra.mxu0 0.0
        %6456 = vmatprep.subr.mxu0 0.0
        %6457 = vmatpush1.xpose.msra.mxu0 0.0
        %6458 = vmatprep.subr.mxu0 0.0
        %6459 = vmatpush1.xpose.msra.mxu0 0.0
        %6460 = vmatprep.subr.mxu0 0.0
        %6461 = vmatpush1.xpose.msra.mxu0 0.0
        %6462 = vmatprep.subr.mxu0 0.0
        %6463 = vmatpush1.xpose.msra.mxu0 0.0
        %6464 = vmatprep.subr.mxu0 0.0
        %6465 = vmatpush1.xpose.msra.mxu0 0.0
        %6466 = vmatprep.subr.mxu0 0.0
        %6467 = vmatpush1.xpose.msra.mxu0 0.0
        %6468 = vmatprep.subr.mxu0 0.0
        %6469 = vmatpush1.xpose.msra.mxu0 0.0
        %6470 = vmatprep.subr.mxu0 0.0
        %6471 = vmatpush1.xpose.msra.mxu0 0.0
        %6472 = vmatprep.subr.mxu0 0.0
        %6473 = vmatpush1.xpose.msra.mxu0 0.0
        %6474 = vmatprep.subr.mxu0 0.0
        %6475 = vmatpush1.xpose.msra.mxu0 0.0
        %6476 = vmatprep.subr.mxu0 0.0
        %6477 = vmatpush1.xpose.msra.mxu0 0.0
        %6478 = vmatprep.subr.mxu0 0.0
        %6479 = vmatpush1.xpose.msra.mxu0 0.0
        %6480 = vmatprep.subr.mxu0 0.0
        %6481 = vmatpush1.xpose.msra.mxu0 0.0
        %6482 = vmatprep.subr.mxu0 0.0
        %6483 = vmatpush1.xpose.msra.mxu0 0.0
        %6484 = vmatprep.mubr.f32.mxu0 0.0
        %6485 = vmatmul.mubr.f32.gmra.mrb[0].mxu0 %v6356
        %v6486 = vpop.f32.mrb[0].mxu0
        %v6487 = vadd.f32 %v5118, %v6486
        %v6488 = vpop.f32.mrb[0].mxu0
        %6489 = vmatprep.mubr.f32.mxu0 0.0
        %6490 = vmatmul.mubr.f32.gmra.mrb[0].mxu0 %v6358
        %v6491 = vpop.f32.mrb[0].mxu0
        %v6492 = vadd.f32 %v5118, %v6491
        %v6493 = vpop.f32.mrb[0].mxu0
        %6494 = vmatprep.mubr.f32.mxu0 0.0
        %6495 = vmatmul.mubr.f32.gmra.mrb[0].mxu0 %v6360
        %v6496 = vpop.f32.mrb[0].mxu0
        %v6497 = vadd.f32 %v5118, %v6496
        %v6498 = vpop.f32.mrb[0].mxu0
        %6499 = vmatprep.mubr.f32.mxu0 0.0
        %6500 = vmatmul.mubr.f32.gmra.mrb[0].mxu0 %v6362
        %v6501 = vpop.f32.mrb[0].mxu0
        %v6502 = vadd.f32 %v5118, %v6501
        %v6503 = vpop.f32.mrb[0].mxu0
        %6504 = vmatprep.mubr.f32.mxu0 0.0
        %6505 = vmatmul.mubr.f32.gmra.mrb[0].mxu0 %v6364
        %v6506 = vpop.f32.mrb[0].mxu0
        %v6507 = vadd.f32 %v5118, %v6506
        %v6508 = vpop.f32.mrb[0].mxu0
        %6509 = vmatprep.mubr.f32.mxu0 0.0
        %6510 = vmatmul.mubr.f32.gmra.mrb[0].mxu0 %v6366
        %v6511 = vpop.f32.mrb[0].mxu0
        %v6512 = vadd.f32 %v5118, %v6511
        %v6513 = vpop.f32.mrb[0].mxu0
        %6514 = vmatprep.mubr.f32.mxu0 0.0
        %6515 = vmatmul.mubr.f32.gmra.mrb[0].mxu0 %v6368
        %v6516 = vpop.f32.mrb[0].mxu0
        %v6517 = vadd.f32 %v5118, %v6516
        %v6518 = vpop.f32.mrb[0].mxu0
        %6519 = vmatprep.mubr.f32.mxu0 0.0
        %6520 = vmatmul.mubr.f32.gmra.mrb[0].mxu0 %v6370
        %v6521 = vpop.f32.mrb[0].mxu0
        %v6522 = vadd.f32 %v5118, %v6521
        %v6523 = vpop.f32.mrb[0].mxu0
        %6524 = vmatprep.mubr.f32.mxu0 0.0
        %6525 = vmatmul.mubr.f32.gmra.mrb[0].mxu0 %v6372
        %v6526 = vpop.f32.mrb[0].mxu0
        %v6527 = vadd.f32 %v5118, %v6526
        %v6528 = vpop.f32.mrb[0].mxu0
        %6529 = vmatprep.mubr.f32.mxu0 0.0
        %6530 = vmatmul.mubr.f32.gmra.mrb[0].mxu0 %v6374
        %v6531 = vpop.f32.mrb[0].mxu0
        %v6532 = vadd.f32 %v5118, %v6531
        %v6533 = vpop.f32.mrb[0].mxu0
        %6534 = vmatprep.mubr.f32.mxu0 0.0
        %6535 = vmatmul.mubr.f32.gmra.mrb[0].mxu0 %v6376
        %v6536 = vpop.f32.mrb[0].mxu0
        %v6537 = vadd.f32 %v5118, %v6536
        %v6538 = vpop.f32.mrb[0].mxu0
        %6539 = vmatprep.mubr.f32.mxu0 0.0
        %6540 = vmatmul.mubr.f32.gmra.mrb[0].mxu0 %v6378
        %v6541 = vpop.f32.mrb[0].mxu0
        %v6542 = vadd.f32 %v5118, %v6541
        %v6543 = vpop.f32.mrb[0].mxu0
        %6544 = vmatprep.mubr.f32.mxu0 0.0
        %6545 = vmatmul.mubr.f32.gmra.mrb[0].mxu0 %v6380
        %v6546 = vpop.f32.mrb[0].mxu0
        %v6547 = vadd.f32 %v5118, %v6546
        %v6548 = vpop.f32.mrb[0].mxu0
        %6549 = vmatprep.mubr.f32.mxu0 0.0
        %6550 = vmatmul.mubr.f32.gmra.mrb[0].mxu0 %v6382
        %v6551 = vpop.f32.mrb[0].mxu0
        %v6552 = vadd.f32 %v5118, %v6551
        %v6553 = vpop.f32.mrb[0].mxu0
        %6554 = vmatprep.mubr.f32.mxu0 0.0
        %6555 = vmatmul.mubr.f32.gmra.mrb[0].mxu0 %v6384
        %v6556 = vpop.f32.mrb[0].mxu0
        %v6557 = vadd.f32 %v5118, %v6556
        %v6558 = vpop.f32.mrb[0].mxu0
        %6559 = vmatprep.mubr.f32.mxu0 0.0
        %6560 = vmatmul.mubr.f32.gmra.mrb[0].mxu0 %v6386
        %v6561 = vpop.f32.mrb[0].mxu0
        %v6562 = vadd.f32 %v5118, %v6561
        %v6563 = vpop.f32.mrb[0].mxu0
        %6564 = vdwg.mxu0
        %6565 = vmax.xlane.f32.xlu0 %v6487
        %v6566 = vpop.xlane.xlu0 %6565
        %6567 = vmax.xlane.f32.xlu0 %v6492
        %v6568 = vpop.xlane.xlu0 %6567
        %6569 = vmax.xlane.f32.xlu0 %v6497
        %v6570 = vpop.xlane.xlu0 %6569
        %6571 = vmax.xlane.f32.xlu0 %v6502
        %v6572 = vpop.xlane.xlu0 %6571
        %6573 = vmax.xlane.f32.xlu0 %v6507
        %v6574 = vpop.xlane.xlu0 %6573
        %6575 = vmax.xlane.f32.xlu0 %v6512
        %v6576 = vpop.xlane.xlu0 %6575
        %6577 = vmax.xlane.f32.xlu0 %v6517
        %v6578 = vpop.xlane.xlu0 %6577
        %6579 = vmax.xlane.f32.xlu0 %v6522
        %v6580 = vpop.xlane.xlu0 %6579
        %6581 = vmax.xlane.f32.xlu0 %v6527
        %v6582 = vpop.xlane.xlu0 %6581
        %6583 = vmax.xlane.f32.xlu0 %v6532
        %v6584 = vpop.xlane.xlu0 %6583
        %6585 = vmax.xlane.f32.xlu0 %v6537
        %v6586 = vpop.xlane.xlu0 %6585
        %6587 = vmax.xlane.f32.xlu0 %v6542
        %v6588 = vpop.xlane.xlu0 %6587
        %6589 = vmax.xlane.f32.xlu0 %v6547
        %v6590 = vpop.xlane.xlu0 %6589
        %6591 = vmax.xlane.f32.xlu0 %v6552
        %v6592 = vpop.xlane.xlu0 %6591
        %6593 = vmax.xlane.f32.xlu0 %v6557
        %v6594 = vpop.xlane.xlu0 %6593
        %6595 = vmax.xlane.f32.xlu0 %v6562
        %v6596 = vpop.xlane.xlu0 %6595
        %v6597 = vsub.f32 %v6487, %v6566
        %v6598 = vsub.f32 %v6492, %v6568
        %v6599 = vsub.f32 %v6497, %v6570
        %v6600 = vsub.f32 %v6502, %v6572
        %v6601 = vsub.f32 %v6507, %v6574
        %v6602 = vsub.f32 %v6512, %v6576
        %v6603 = vsub.f32 %v6517, %v6578
        %v6604 = vsub.f32 %v6522, %v6580
        %v6605 = vsub.f32 %v6527, %v6582
        %v6606 = vsub.f32 %v6532, %v6584
        %v6607 = vsub.f32 %v6537, %v6586
        %v6608 = vsub.f32 %v6542, %v6588
        %v6609 = vsub.f32 %v6547, %v6590
        %v6610 = vsub.f32 %v6552, %v6592
        %v6611 = vsub.f32 %v6557, %v6594
        %v6612 = vsub.f32 %v6562, %v6596
        %v6613 = vmul.f32 %v6597, 1.442695
        %v6614 = vpow.pop %v6613
        %v6615 = vmul.f32 %v6598, 1.442695
        %v6616 = vpow.pop %v6615
        %v6617 = vmul.f32 %v6599, 1.442695
        %v6618 = vpow.pop %v6617
        %v6619 = vmul.f32 %v6600, 1.442695
        %v6620 = vpow.pop %v6619
        %v6621 = vmul.f32 %v6601, 1.442695
        %v6622 = vpow.pop %v6621
        %v6623 = vmul.f32 %v6602, 1.442695
        %v6624 = vpow.pop %v6623
        %v6625 = vmul.f32 %v6603, 1.442695
        %v6626 = vpow.pop %v6625
        %v6627 = vmul.f32 %v6604, 1.442695
        %v6628 = vpow.pop %v6627
        %v6629 = vmul.f32 %v6605, 1.442695
        %v6630 = vpow.pop %v6629
        %v6631 = vmul.f32 %v6606, 1.442695
        %v6632 = vpow.pop %v6631
        %v6633 = vmul.f32 %v6607, 1.442695
        %v6634 = vpow.pop %v6633
        %v6635 = vmul.f32 %v6608, 1.442695
        %v6636 = vpow.pop %v6635
        %v6637 = vmul.f32 %v6609, 1.442695
        %v6638 = vpow.pop %v6637
        %v6639 = vmul.f32 %v6610, 1.442695
        %v6640 = vpow.pop %v6639
        %v6641 = vmul.f32 %v6611, 1.442695
        %v6642 = vpow.pop %v6641
        %v6643 = vmul.f32 %v6612, 1.442695
        %v6644 = vpow.pop %v6643
        %6645 = vadd.xlane.f32.xlu0 %v6614
        %v6646 = vpop.xlane.xlu0 %6645
        %6647 = vadd.xlane.f32.xlu0 %v6616
        %v6648 = vpop.xlane.xlu0 %6647
        %6649 = vadd.xlane.f32.xlu0 %v6618
        %v6650 = vpop.xlane.xlu0 %6649
        %6651 = vadd.xlane.f32.xlu0 %v6620
        %v6652 = vpop.xlane.xlu0 %6651
        %6653 = vadd.xlane.f32.xlu0 %v6622
        %v6654 = vpop.xlane.xlu0 %6653
        %6655 = vadd.xlane.f32.xlu0 %v6624
        %v6656 = vpop.xlane.xlu0 %6655
        %6657 = vadd.xlane.f32.xlu0 %v6626
        %v6658 = vpop.xlane.xlu0 %6657
        %6659 = vadd.xlane.f32.xlu0 %v6628
        %v6660 = vpop.xlane.xlu0 %6659
        %6661 = vadd.xlane.f32.xlu0 %v6630
        %v6662 = vpop.xlane.xlu0 %6661
        %6663 = vadd.xlane.f32.xlu0 %v6632
        %v6664 = vpop.xlane.xlu0 %6663
        %6665 = vadd.xlane.f32.xlu0 %v6634
        %v6666 = vpop.xlane.xlu0 %6665
        %6667 = vadd.xlane.f32.xlu0 %v6636
        %v6668 = vpop.xlane.xlu0 %6667
        %6669 = vadd.xlane.f32.xlu0 %v6638
        %v6670 = vpop.xlane.xlu0 %6669
        %6671 = vadd.xlane.f32.xlu0 %v6640
        %v6672 = vpop.xlane.xlu0 %6671
        %6673 = vadd.xlane.f32.xlu0 %v6642
        %v6674 = vpop.xlane.xlu0 %6673
        %6675 = vadd.xlane.f32.xlu0 %v6644
        %v6676 = vpop.xlane.xlu0 %6675
        %v6677 = vrcp.pop %v6646
        %v6678 = vmul.f32 %v6614, %v6677
        %v6679 = vrcp.pop %v6648
        %v6680 = vmul.f32 %v6616, %v6679
        %v6681 = vrcp.pop %v6650
        %v6682 = vmul.f32 %v6618, %v6681
        %v6683 = vrcp.pop %v6652
        %v6684 = vmul.f32 %v6620, %v6683
        %v6685 = vrcp.pop %v6654
        %v6686 = vmul.f32 %v6622, %v6685
        %v6687 = vrcp.pop %v6656
        %v6688 = vmul.f32 %v6624, %v6687
        %v6689 = vrcp.pop %v6658
        %v6690 = vmul.f32 %v6626, %v6689
        %v6691 = vrcp.pop %v6660
        %v6692 = vmul.f32 %v6628, %v6691
        %v6693 = vrcp.pop %v6662
        %v6694 = vmul.f32 %v6630, %v6693
        %v6695 = vrcp.pop %v6664
        %v6696 = vmul.f32 %v6632, %v6695
        %v6697 = vrcp.pop %v6666
        %v6698 = vmul.f32 %v6634, %v6697
        %v6699 = vrcp.pop %v6668
        %v6700 = vmul.f32 %v6636, %v6699
        %v6701 = vrcp.pop %v6670
        %v6702 = vmul.f32 %v6638, %v6701
        %v6703 = vrcp.pop %v6672
        %v6704 = vmul.f32 %v6640, %v6703
        %v6705 = vrcp.pop %v6674
        %v6706 = vmul.f32 %v6642, %v6705
        %v6707 = vrcp.pop %v6676
        %v6708 = vmul.f32 %v6644, %v6707
        %v6709 = vadd.f32 %v6067, %v6678
        %v6710 = vadd.f32 %v6068, %v6680
        %v6711 = vadd.f32 %v6069, %v6682
        %v6712 = vadd.f32 %v6070, %v6684
        %v6713 = vadd.f32 %v6071, %v6686
        %v6714 = vadd.f32 %v6072, %v6688
        %v6715 = vadd.f32 %v6073, %v6690
        %v6716 = vadd.f32 %v6074, %v6692
        %v6717 = vadd.f32 %v6075, %v6694
        %v6718 = vadd.f32 %v6076, %v6696
        %v6719 = vadd.f32 %v6077, %v6698
        %v6720 = vadd.f32 %v6078, %v6700
        %v6721 = vadd.f32 %v6079, %v6702
        %v6722 = vadd.f32 %v6080, %v6704
        %v6723 = vadd.f32 %v6081, %v6706
        %v6724 = vadd.f32 %v6082, %v6708
        %6725 = vrot.lane.b32.xlu0 %v5097, 64
        %v6726 = vpop.permute.xlu0 %6725
        %6727 = vrot.lane.b32.xlu0 %v5098, 64
        %v6728 = vpop.permute.xlu0 %6727
        %6729 = vrot.lane.b32.xlu0 %v5099, 64
        %v6730 = vpop.permute.xlu0 %6729
        %6731 = vrot.lane.b32.xlu0 %v5100, 64
        %v6732 = vpop.permute.xlu0 %6731
        %6733 = vrot.lane.b32.xlu0 %v5101, 64
        %v6734 = vpop.permute.xlu0 %6733
        %6735 = vrot.lane.b32.xlu0 %v5102, 64
        %v6736 = vpop.permute.xlu0 %6735
        %6737 = vrot.lane.b32.xlu0 %v5103, 64
        %v6738 = vpop.permute.xlu0 %6737
        %6739 = vrot.lane.b32.xlu0 %v5104, 64
        %v6740 = vpop.permute.xlu0 %6739
        %6741 = vrot.lane.b32.xlu0 %v5105, 64
        %v6742 = vpop.permute.xlu0 %6741
        %6743 = vrot.lane.b32.xlu0 %v5106, 64
        %v6744 = vpop.permute.xlu0 %6743
        %6745 = vrot.lane.b32.xlu0 %v5107, 64
        %v6746 = vpop.permute.xlu0 %6745
        %6747 = vrot.lane.b32.xlu0 %v5108, 64
        %v6748 = vpop.permute.xlu0 %6747
        %6749 = vrot.lane.b32.xlu0 %v5109, 64
        %v6750 = vpop.permute.xlu0 %6749
        %6751 = vrot.lane.b32.xlu0 %v5110, 64
        %v6752 = vpop.permute.xlu0 %6751
        %6753 = vrot.lane.b32.xlu0 %v5111, 64
        %v6754 = vpop.permute.xlu0 %6753
        %6755 = vrot.lane.b32.xlu0 %v5112, 64
        %v6756 = vpop.permute.xlu0 %6755
        %6773 = vmatprep.subr.mxu0 0.0
        %6774 = vmatpush1.msra.mxu0 %v6726
        %6775 = vmatprep.subr.mxu0 0.0
        %6776 = vmatpush1.msra.mxu0 %v6728
        %6777 = vmatprep.subr.mxu0 0.0
        %6778 = vmatpush1.msra.mxu0 %v6730
        %6779 = vmatprep.subr.mxu0 0.0
        %6780 = vmatpush1.msra.mxu0 %v6732
        %6781 = vmatprep.subr.mxu0 0.0
        %6782 = vmatpush1.msra.mxu0 %v6734
        %6783 = vmatprep.subr.mxu0 0.0
        %6784 = vmatpush1.msra.mxu0 %v6736
        %6785 = vmatprep.subr.mxu0 0.0
        %6786 = vmatpush1.msra.mxu0 %v6738
        %6787 = vmatprep.subr.mxu0 0.0
        %6788 = vmatpush1.msra.mxu0 %v6740
        %6789 = vmatprep.subr.mxu0 0.0
        %6790 = vmatpush1.msra.mxu0 %v6742
        %6791 = vmatprep.subr.mxu0 0.0
        %6792 = vmatpush1.msra.mxu0 %v6744
        %6793 = vmatprep.subr.mxu0 0.0
        %6794 = vmatpush1.msra.mxu0 %v6746
        %6795 = vmatprep.subr.mxu0 0.0
        %6796 = vmatpush1.msra.mxu0 %v6748
        %6797 = vmatprep.subr.mxu0 0.0
        %6798 = vmatpush1.msra.mxu0 %v6750
        %6799 = vmatprep.subr.mxu0 0.0
        %6800 = vmatpush1.msra.mxu0 %v6752
        %6801 = vmatprep.subr.mxu0 0.0
        %6802 = vmatpush1.msra.mxu0 %v6754
        %6803 = vmatprep.subr.mxu0 0.0
        %6804 = vmatpush1.msra.mxu0 %v6756
        %6805 = vmatprep.subr.mxu0 0.0
        %6806 = vmatpush1.msra.mxu0 0.0
        %6807 = vmatprep.subr.mxu0 0.0
        %6808 = vmatpush1.msra.mxu0 0.0
        %6809 = vmatprep.subr.mxu0 0.0
        %6810 = vmatpush1.msra.mxu0 0.0
        %6811 = vmatprep.subr.mxu0 0.0
        %6812 = vmatpush1.msra.mxu0 0.0
        %6813 = vmatprep.subr.mxu0 0.0
        %6814 = vmatpush1.msra.mxu0 0.0
        %6815 = vmatprep.subr.mxu0 0.0
        %6816 = vmatpush1.msra.mxu0 0.0
        %6817 = vmatprep.subr.mxu0 0.0
        %6818 = vmatpush1.msra.mxu0 0.0
        %6819 = vmatprep.subr.mxu0 0.0
        %6820 = vmatpush1.msra.mxu0 0.0
        %6821 = vmatprep.subr.mxu0 0.0
        %6822 = vmatpush1.msra.mxu0 0.0
        %6823 = vmatprep.subr.mxu0 0.0
        %6824 = vmatpush1.msra.mxu0 0.0
        %6825 = vmatprep.subr.mxu0 0.0
        %6826 = vmatpush1.msra.mxu0 0.0
        %6827 = vmatprep.subr.mxu0 0.0
        %6828 = vmatpush1.msra.mxu0 0.0
        %6829 = vmatprep.subr.mxu0 0.0
        %6830 = vmatpush1.msra.mxu0 0.0
        %6831 = vmatprep.subr.mxu0 0.0
        %6832 = vmatpush1.msra.mxu0 0.0
        %6833 = vmatprep.subr.mxu0 0.0
        %6834 = vmatpush1.msra.mxu0 0.0
        %6835 = vmatprep.subr.mxu0 0.0
        %6836 = vmatpush1.msra.mxu0 0.0
        %6837 = vmatprep.mubr.f32.mxu0 0.0
        %6838 = vmatmul.mubr.f32.gmra.mrb[0].mxu0 %v6678
        %v6839 = vpop.f32.mrb[0].mxu0
        %v6840 = vadd.f32 0.0, %v6839
        %v6841 = vpop.f32.mrb[0].mxu0
        %6842 = vmatprep.mubr.f32.mxu0 0.0
        %6843 = vmatmul.mubr.f32.gmra.mrb[0].mxu0 %v6680
        %v6844 = vpop.f32.mrb[0].mxu0
        %v6845 = vadd.f32 0.0, %v6844
        %v6846 = vpop.f32.mrb[0].mxu0
        %6847 = vmatprep.mubr.f32.mxu0 0.0
        %6848 = vmatmul.mubr.f32.gmra.mrb[0].mxu0 %v6682
        %v6849 = vpop.f32.mrb[0].mxu0
        %v6850 = vadd.f32 0.0, %v6849
        %v6851 = vpop.f32.mrb[0].mxu0
        %6852 = vmatprep.mubr.f32.mxu0 0.0
        %6853 = vmatmul.mubr.f32.gmra.mrb[0].mxu0 %v6684
        %v6854 = vpop.f32.mrb[0].mxu0
        %v6855 = vadd.f32 0.0, %v6854
        %v6856 = vpop.f32.mrb[0].mxu0
        %6857 = vmatprep.mubr.f32.mxu0 0.0
        %6858 = vmatmul.mubr.f32.gmra.mrb[0].mxu0 %v6686
        %v6859 = vpop.f32.mrb[0].mxu0
        %v6860 = vadd.f32 0.0, %v6859
        %v6861 = vpop.f32.mrb[0].mxu0
        %6862 = vmatprep.mubr.f32.mxu0 0.0
        %6863 = vmatmul.mubr.f32.gmra.mrb[0].mxu0 %v6688
        %v6864 = vpop.f32.mrb[0].mxu0
        %v6865 = vadd.f32 0.0, %v6864
        %v6866 = vpop.f32.mrb[0].mxu0
        %6867 = vmatprep.mubr.f32.mxu0 0.0
        %6868 = vmatmul.mubr.f32.gmra.mrb[0].mxu0 %v6690
        %v6869 = vpop.f32.mrb[0].mxu0
        %v6870 = vadd.f32 0.0, %v6869
        %v6871 = vpop.f32.mrb[0].mxu0
        %6872 = vmatprep.mubr.f32.mxu0 0.0
        %6873 = vmatmul.mubr.f32.gmra.mrb[0].mxu0 %v6692
        %v6874 = vpop.f32.mrb[0].mxu0
        %v6875 = vadd.f32 0.0, %v6874
        %v6876 = vpop.f32.mrb[0].mxu0
        %6877 = vmatprep.mubr.f32.mxu0 0.0
        %6878 = vmatmul.mubr.f32.gmra.mrb[0].mxu0 %v6694
        %v6879 = vpop.f32.mrb[0].mxu0
        %v6880 = vadd.f32 0.0, %v6879
        %v6881 = vpop.f32.mrb[0].mxu0
        %6882 = vmatprep.mubr.f32.mxu0 0.0
        %6883 = vmatmul.mubr.f32.gmra.mrb[0].mxu0 %v6696
        %v6884 = vpop.f32.mrb[0].mxu0
        %v6885 = vadd.f32 0.0, %v6884
        %v6886 = vpop.f32.mrb[0].mxu0
        %6887 = vmatprep.mubr.f32.mxu0 0.0
        %6888 = vmatmul.mubr.f32.gmra.mrb[0].mxu0 %v6698
        %v6889 = vpop.f32.mrb[0].mxu0
        %v6890 = vadd.f32 0.0, %v6889
        %v6891 = vpop.f32.mrb[0].mxu0
        %6892 = vmatprep.mubr.f32.mxu0 0.0
        %6893 = vmatmul.mubr.f32.gmra.mrb[0].mxu0 %v6700
        %v6894 = vpop.f32.mrb[0].mxu0
        %v6895 = vadd.f32 0.0, %v6894
        %v6896 = vpop.f32.mrb[0].mxu0
        %6897 = vmatprep.mubr.f32.mxu0 0.0
        %6898 = vmatmul.mubr.f32.gmra.mrb[0].mxu0 %v6702
        %v6899 = vpop.f32.mrb[0].mxu0
        %v6900 = vadd.f32 0.0, %v6899
        %v6901 = vpop.f32.mrb[0].mxu0
        %6902 = vmatprep.mubr.f32.mxu0 0.0
        %6903 = vmatmul.mubr.f32.gmra.mrb[0].mxu0 %v6704
        %v6904 = vpop.f32.mrb[0].mxu0
        %v6905 = vadd.f32 0.0, %v6904
        %v6906 = vpop.f32.mrb[0].mxu0
        %6907 = vmatprep.mubr.f32.mxu0 0.0
        %6908 = vmatmul.mubr.f32.gmra.mrb[0].mxu0 %v6706
        %v6909 = vpop.f32.mrb[0].mxu0
        %v6910 = vadd.f32 0.0, %v6909
        %v6911 = vpop.f32.mrb[0].mxu0
        %6912 = vmatprep.mubr.f32.mxu0 0.0
        %6913 = vmatmul.mubr.f32.gmra.mrb[0].mxu0 %v6708
        %v6914 = vpop.f32.mrb[0].mxu0
        %v6915 = vadd.f32 0.0, %v6914
        %v6916 = vpop.f32.mrb[0].mxu0
        %6917 = vdwg.mxu0
        %6918 = vrot.lane.b32.xlu0 %v5003, 32
        %v6919 = vpop.permute.xlu0 %6918
        %6920 = vrot.lane.b32.xlu0 %v5008, 32
        %v6921 = vpop.permute.xlu0 %6920
        %6922 = vrot.lane.b32.xlu0 %v5013, 32
        %v6923 = vpop.permute.xlu0 %6922
        %6924 = vrot.lane.b32.xlu0 %v5018, 32
        %v6925 = vpop.permute.xlu0 %6924
        %6926 = vrot.lane.b32.xlu0 %v5023, 32
        %v6927 = vpop.permute.xlu0 %6926
        %6928 = vrot.lane.b32.xlu0 %v5028, 32
        %v6929 = vpop.permute.xlu0 %6928
        %6930 = vrot.lane.b32.xlu0 %v5033, 32
        %v6931 = vpop.permute.xlu0 %6930
        %6932 = vrot.lane.b32.xlu0 %v5038, 32
        %v6933 = vpop.permute.xlu0 %6932
        %6934 = vrot.lane.b32.xlu0 %v5043, 32
        %v6935 = vpop.permute.xlu0 %6934
        %6936 = vrot.lane.b32.xlu0 %v5048, 32
        %v6937 = vpop.permute.xlu0 %6936
        %6938 = vrot.lane.b32.xlu0 %v5053, 32
        %v6939 = vpop.permute.xlu0 %6938
        %6940 = vrot.lane.b32.xlu0 %v5058, 32
        %v6941 = vpop.permute.xlu0 %6940
        %6942 = vrot.lane.b32.xlu0 %v5063, 32
        %v6943 = vpop.permute.xlu0 %6942
        %6944 = vrot.lane.b32.xlu0 %v5068, 32
        %v6945 = vpop.permute.xlu0 %6944
        %6946 = vrot.lane.b32.xlu0 %v5073, 32
        %v6947 = vpop.permute.xlu0 %6946
        %6948 = vrot.lane.b32.xlu0 %v5078, 32
        %v6949 = vpop.permute.xlu0 %6948
        %6950 = vrot.lane.b32.xlu0 %v5081, 32
        %v6951 = vpop.permute.xlu0 %6950
        %6952 = vrot.lane.b32.xlu0 %v5082, 32
        %v6953 = vpop.permute.xlu0 %6952
        %6954 = vrot.lane.b32.xlu0 %v5083, 32
        %v6955 = vpop.permute.xlu0 %6954
        %6956 = vrot.lane.b32.xlu0 %v5084, 32
        %v6957 = vpop.permute.xlu0 %6956
        %6958 = vrot.lane.b32.xlu0 %v5085, 32
        %v6959 = vpop.permute.xlu0 %6958
        %6960 = vrot.lane.b32.xlu0 %v5086, 32
        %v6961 = vpop.permute.xlu0 %6960
        %6962 = vrot.lane.b32.xlu0 %v5087, 32
        %v6963 = vpop.permute.xlu0 %6962
        %6964 = vrot.lane.b32.xlu0 %v5088, 32
        %v6965 = vpop.permute.xlu0 %6964
        %6966 = vrot.lane.b32.xlu0 %v5089, 32
        %v6967 = vpop.permute.xlu0 %6966
        %6968 = vrot.lane.b32.xlu0 %v5090, 32
        %v6969 = vpop.permute.xlu0 %6968
        %6970 = vrot.lane.b32.xlu0 %v5091, 32
        %v6971 = vpop.permute.xlu0 %6970
        %6972 = vrot.lane.b32.xlu0 %v5092, 32
        %v6973 = vpop.permute.xlu0 %6972
        %6974 = vrot.lane.b32.xlu0 %v5093, 32
        %v6975 = vpop.permute.xlu0 %6974
        %6976 = vrot.lane.b32.xlu0 %v5094, 32
        %v6977 = vpop.permute.xlu0 %6976
        %6978 = vrot.lane.b32.xlu0 %v5095, 32
        %v6979 = vpop.permute.xlu0 %6978
        %6980 = vrot.lane.b32.xlu0 %v5096, 32
        %v6981 = vpop.permute.xlu0 %6980
        %v6982 = vsel %vm1908, %v6919, 0
        %v6984 = vsel %vm1908, %v6921, 0
        %v6986 = vsel %vm1908, %v6923, 0
        %v6988 = vsel %vm1908, %v6925, 0
        %v6990 = vsel %vm1908, %v6927, 0
        %v6992 = vsel %vm1908, %v6929, 0
        %v6994 = vsel %vm1908, %v6931, 0
        %v6996 = vsel %vm1908, %v6933, 0
        %v6998 = vsel %vm1908, %v6935, 0
        %v7000 = vsel %vm1908, %v6937, 0
        %v7002 = vsel %vm1908, %v6939, 0
        %v7004 = vsel %vm1908, %v6941, 0
        %v7006 = vsel %vm1908, %v6943, 0
        %v7008 = vsel %vm1908, %v6945, 0
        %v7010 = vsel %vm1908, %v6947, 0
        %v7012 = vsel %vm1908, %v6949, 0
        %v7014 = vsel %vm1908, %v6951, 0
        %v7016 = vsel %vm1908, %v6953, 0
        %v7018 = vsel %vm1908, %v6955, 0
        %v7020 = vsel %vm1908, %v6957, 0
        %v7022 = vsel %vm1908, %v6959, 0
        %v7024 = vsel %vm1908, %v6961, 0
        %v7026 = vsel %vm1908, %v6963, 0
        %v7028 = vsel %vm1908, %v6965, 0
        %v7030 = vsel %vm1908, %v6967, 0
        %v7032 = vsel %vm1908, %v6969, 0
        %v7034 = vsel %vm1908, %v6971, 0
        %v7036 = vsel %vm1908, %v6973, 0
        %v7038 = vsel %vm1908, %v6975, 0
        %v7040 = vsel %vm1908, %v6977, 0
        %v7042 = vsel %vm1908, %v6979, 0
        %v7044 = vsel %vm1908, %v6981, 0
        %7046 = vmatprep.subr.mxu0 0.0
        %7047 = vmatpush1.xpose.msra.mxu0 %v7014
        %7048 = vmatprep.subr.mxu0 0.0
        %7049 = vmatpush1.xpose.msra.mxu0 %v7016
        %7050 = vmatprep.subr.mxu0 0.0
        %7051 = vmatpush1.xpose.msra.mxu0 %v7018
        %7052 = vmatprep.subr.mxu0 0.0
        %7053 = vmatpush1.xpose.msra.mxu0 %v7020
        %7054 = vmatprep.subr.mxu0 0.0
        %7055 = vmatpush1.xpose.msra.mxu0 %v7022
        %7056 = vmatprep.subr.mxu0 0.0
        %7057 = vmatpush1.xpose.msra.mxu0 %v7024
        %7058 = vmatprep.subr.mxu0 0.0
        %7059 = vmatpush1.xpose.msra.mxu0 %v7026
        %7060 = vmatprep.subr.mxu0 0.0
        %7061 = vmatpush1.xpose.msra.mxu0 %v7028
        %7062 = vmatprep.subr.mxu0 0.0
        %7063 = vmatpush1.xpose.msra.mxu0 %v7030
        %7064 = vmatprep.subr.mxu0 0.0
        %7065 = vmatpush1.xpose.msra.mxu0 %v7032
        %7066 = vmatprep.subr.mxu0 0.0
        %7067 = vmatpush1.xpose.msra.mxu0 %v7034
        %7068 = vmatprep.subr.mxu0 0.0
        %7069 = vmatpush1.xpose.msra.mxu0 %v7036
        %7070 = vmatprep.subr.mxu0 0.0
        %7071 = vmatpush1.xpose.msra.mxu0 %v7038
        %7072 = vmatprep.subr.mxu0 0.0
        %7073 = vmatpush1.xpose.msra.mxu0 %v7040
        %7074 = vmatprep.subr.mxu0 0.0
        %7075 = vmatpush1.xpose.msra.mxu0 %v7042
        %7076 = vmatprep.subr.mxu0 0.0
        %7077 = vmatpush1.xpose.msra.mxu0 %v7044
        %7078 = vmatprep.subr.mxu0 0.0
        %7079 = vmatpush1.xpose.msra.mxu0 0.0
        %7080 = vmatprep.subr.mxu0 0.0
        %7081 = vmatpush1.xpose.msra.mxu0 0.0
        %7082 = vmatprep.subr.mxu0 0.0
        %7083 = vmatpush1.xpose.msra.mxu0 0.0
        %7084 = vmatprep.subr.mxu0 0.0
        %7085 = vmatpush1.xpose.msra.mxu0 0.0
        %7086 = vmatprep.subr.mxu0 0.0
        %7087 = vmatpush1.xpose.msra.mxu0 0.0
        %7088 = vmatprep.subr.mxu0 0.0
        %7089 = vmatpush1.xpose.msra.mxu0 0.0
        %7090 = vmatprep.subr.mxu0 0.0
        %7091 = vmatpush1.xpose.msra.mxu0 0.0
        %7092 = vmatprep.subr.mxu0 0.0
        %7093 = vmatpush1.xpose.msra.mxu0 0.0
        %7094 = vmatprep.subr.mxu0 0.0
        %7095 = vmatpush1.xpose.msra.mxu0 0.0
        %7096 = vmatprep.subr.mxu0 0.0
        %7097 = vmatpush1.xpose.msra.mxu0 0.0
        %7098 = vmatprep.subr.mxu0 0.0
        %7099 = vmatpush1.xpose.msra.mxu0 0.0
        %7100 = vmatprep.subr.mxu0 0.0
        %7101 = vmatpush1.xpose.msra.mxu0 0.0
        %7102 = vmatprep.subr.mxu0 0.0
        %7103 = vmatpush1.xpose.msra.mxu0 0.0
        %7104 = vmatprep.subr.mxu0 0.0
        %7105 = vmatpush1.xpose.msra.mxu0 0.0
        %7106 = vmatprep.subr.mxu0 0.0
        %7107 = vmatpush1.xpose.msra.mxu0 0.0
        %7108 = vmatprep.subr.mxu0 0.0
        %7109 = vmatpush1.xpose.msra.mxu0 0.0
        %7110 = vmatprep.mubr.f32.mxu0 0.0
        %7111 = vmatmul.mubr.f32.gmra.mrb[0].mxu0 %v6982
        %v7112 = vpop.f32.mrb[0].mxu0
        %v7113 = vadd.f32 %v5118, %v7112
        %v7114 = vpop.f32.mrb[0].mxu0
        %7115 = vmatprep.mubr.f32.mxu0 0.0
        %7116 = vmatmul.mubr.f32.gmra.mrb[0].mxu0 %v6984
        %v7117 = vpop.f32.mrb[0].mxu0
        %v7118 = vadd.f32 %v5118, %v7117
        %v7119 = vpop.f32.mrb[0].mxu0
        %7120 = vmatprep.mubr.f32.mxu0 0.0
        %7121 = vmatmul.mubr.f32.gmra.mrb[0].mxu0 %v6986
        %v7122 = vpop.f32.mrb[0].mxu0
        %v7123 = vadd.f32 %v5118, %v7122
        %v7124 = vpop.f32.mrb[0].mxu0
        %7125 = vmatprep.mubr.f32.mxu0 0.0
        %7126 = vmatmul.mubr.f32.gmra.mrb[0].mxu0 %v6988
        %v7127 = vpop.f32.mrb[0].mxu0
        %v7128 = vadd.f32 %v5118, %v7127
        %v7129 = vpop.f32.mrb[0].mxu0
        %7130 = vmatprep.mubr.f32.mxu0 0.0
        %7131 = vmatmul.mubr.f32.gmra.mrb[0].mxu0 %v6990
        %v7132 = vpop.f32.mrb[0].mxu0
        %v7133 = vadd.f32 %v5118, %v7132
        %v7134 = vpop.f32.mrb[0].mxu0
        %7135 = vmatprep.mubr.f32.mxu0 0.0
        %7136 = vmatmul.mubr.f32.gmra.mrb[0].mxu0 %v6992
        %v7137 = vpop.f32.mrb[0].mxu0
        %v7138 = vadd.f32 %v5118, %v7137
        %v7139 = vpop.f32.mrb[0].mxu0
        %7140 = vmatprep.mubr.f32.mxu0 0.0
        %7141 = vmatmul.mubr.f32.gmra.mrb[0].mxu0 %v6994
        %v7142 = vpop.f32.mrb[0].mxu0
        %v7143 = vadd.f32 %v5118, %v7142
        %v7144 = vpop.f32.mrb[0].mxu0
        %7145 = vmatprep.mubr.f32.mxu0 0.0
        %7146 = vmatmul.mubr.f32.gmra.mrb[0].mxu0 %v6996
        %v7147 = vpop.f32.mrb[0].mxu0
        %v7148 = vadd.f32 %v5118, %v7147
        %v7149 = vpop.f32.mrb[0].mxu0
        %7150 = vmatprep.mubr.f32.mxu0 0.0
        %7151 = vmatmul.mubr.f32.gmra.mrb[0].mxu0 %v6998
        %v7152 = vpop.f32.mrb[0].mxu0
        %v7153 = vadd.f32 %v5118, %v7152
        %v7154 = vpop.f32.mrb[0].mxu0
        %7155 = vmatprep.mubr.f32.mxu0 0.0
        %7156 = vmatmul.mubr.f32.gmra.mrb[0].mxu0 %v7000
        %v7157 = vpop.f32.mrb[0].mxu0
        %v7158 = vadd.f32 %v5118, %v7157
        %v7159 = vpop.f32.mrb[0].mxu0
        %7160 = vmatprep.mubr.f32.mxu0 0.0
        %7161 = vmatmul.mubr.f32.gmra.mrb[0].mxu0 %v7002
        %v7162 = vpop.f32.mrb[0].mxu0
        %v7163 = vadd.f32 %v5118, %v7162
        %v7164 = vpop.f32.mrb[0].mxu0
        %7165 = vmatprep.mubr.f32.mxu0 0.0
        %7166 = vmatmul.mubr.f32.gmra.mrb[0].mxu0 %v7004
        %v7167 = vpop.f32.mrb[0].mxu0
        %v7168 = vadd.f32 %v5118, %v7167
        %v7169 = vpop.f32.mrb[0].mxu0
        %7170 = vmatprep.mubr.f32.mxu0 0.0
        %7171 = vmatmul.mubr.f32.gmra.mrb[0].mxu0 %v7006
        %v7172 = vpop.f32.mrb[0].mxu0
        %v7173 = vadd.f32 %v5118, %v7172
        %v7174 = vpop.f32.mrb[0].mxu0
        %7175 = vmatprep.mubr.f32.mxu0 0.0
        %7176 = vmatmul.mubr.f32.gmra.mrb[0].mxu0 %v7008
        %v7177 = vpop.f32.mrb[0].mxu0
        %v7178 = vadd.f32 %v5118, %v7177
        %v7179 = vpop.f32.mrb[0].mxu0
        %7180 = vmatprep.mubr.f32.mxu0 0.0
        %7181 = vmatmul.mubr.f32.gmra.mrb[0].mxu0 %v7010
        %v7182 = vpop.f32.mrb[0].mxu0
        %v7183 = vadd.f32 %v5118, %v7182
        %v7184 = vpop.f32.mrb[0].mxu0
        %7185 = vmatprep.mubr.f32.mxu0 0.0
        %7186 = vmatmul.mubr.f32.gmra.mrb[0].mxu0 %v7012
        %v7187 = vpop.f32.mrb[0].mxu0
        %v7188 = vadd.f32 %v5118, %v7187
        %v7189 = vpop.f32.mrb[0].mxu0
        %7190 = vdwg.mxu0
        %7191 = vmax.xlane.f32.xlu0 %v7113
        %v7192 = vpop.xlane.xlu0 %7191
        %7193 = vmax.xlane.f32.xlu0 %v7118
        %v7194 = vpop.xlane.xlu0 %7193
        %7195 = vmax.xlane.f32.xlu0 %v7123
        %v7196 = vpop.xlane.xlu0 %7195
        %7197 = vmax.xlane.f32.xlu0 %v7128
        %v7198 = vpop.xlane.xlu0 %7197
        %7199 = vmax.xlane.f32.xlu0 %v7133
        %v7200 = vpop.xlane.xlu0 %7199
        %7201 = vmax.xlane.f32.xlu0 %v7138
        %v7202 = vpop.xlane.xlu0 %7201
        %7203 = vmax.xlane.f32.xlu0 %v7143
        %v7204 = vpop.xlane.xlu0 %7203
        %7205 = vmax.xlane.f32.xlu0 %v7148
        %v7206 = vpop.xlane.xlu0 %7205
        %7207 = vmax.xlane.f32.xlu0 %v7153
        %v7208 = vpop.xlane.xlu0 %7207
        %7209 = vmax.xlane.f32.xlu0 %v7158
        %v7210 = vpop.xlane.xlu0 %7209
        %7211 = vmax.xlane.f32.xlu0 %v7163
        %v7212 = vpop.xlane.xlu0 %7211
        %7213 = vmax.xlane.f32.xlu0 %v7168
        %v7214 = vpop.xlane.xlu0 %7213
        %7215 = vmax.xlane.f32.xlu0 %v7173
        %v7216 = vpop.xlane.xlu0 %7215
        %7217 = vmax.xlane.f32.xlu0 %v7178
        %v7218 = vpop.xlane.xlu0 %7217
        %7219 = vmax.xlane.f32.xlu0 %v7183
        %v7220 = vpop.xlane.xlu0 %7219
        %7221 = vmax.xlane.f32.xlu0 %v7188
        %v7222 = vpop.xlane.xlu0 %7221
        %v7223 = vsub.f32 %v7113, %v7192
        %v7224 = vsub.f32 %v7118, %v7194
        %v7225 = vsub.f32 %v7123, %v7196
        %v7226 = vsub.f32 %v7128, %v7198
        %v7227 = vsub.f32 %v7133, %v7200
        %v7228 = vsub.f32 %v7138, %v7202
        %v7229 = vsub.f32 %v7143, %v7204
        %v7230 = vsub.f32 %v7148, %v7206
        %v7231 = vsub.f32 %v7153, %v7208
        %v7232 = vsub.f32 %v7158, %v7210
        %v7233 = vsub.f32 %v7163, %v7212
        %v7234 = vsub.f32 %v7168, %v7214
        %v7235 = vsub.f32 %v7173, %v7216
        %v7236 = vsub.f32 %v7178, %v7218
        %v7237 = vsub.f32 %v7183, %v7220
        %v7238 = vsub.f32 %v7188, %v7222
        %v7239 = vmul.f32 %v7223, 1.442695
        %v7240 = vpow.pop %v7239
        %v7241 = vmul.f32 %v7224, 1.442695
        %v7242 = vpow.pop %v7241
        %v7243 = vmul.f32 %v7225, 1.442695
        %v7244 = vpow.pop %v7243
        %v7245 = vmul.f32 %v7226, 1.442695
        %v7246 = vpow.pop %v7245
        %v7247 = vmul.f32 %v7227, 1.442695
        %v7248 = vpow.pop %v7247
        %v7249 = vmul.f32 %v7228, 1.442695
        %v7250 = vpow.pop %v7249
        %v7251 = vmul.f32 %v7229, 1.442695
        %v7252 = vpow.pop %v7251
        %v7253 = vmul.f32 %v7230, 1.442695
        %v7254 = vpow.pop %v7253
        %v7255 = vmul.f32 %v7231, 1.442695
        %v7256 = vpow.pop %v7255
        %v7257 = vmul.f32 %v7232, 1.442695
        %v7258 = vpow.pop %v7257
        %v7259 = vmul.f32 %v7233, 1.442695
        %v7260 = vpow.pop %v7259
        %v7261 = vmul.f32 %v7234, 1.442695
        %v7262 = vpow.pop %v7261
        %v7263 = vmul.f32 %v7235, 1.442695
        %v7264 = vpow.pop %v7263
        %v7265 = vmul.f32 %v7236, 1.442695
        %v7266 = vpow.pop %v7265
        %v7267 = vmul.f32 %v7237, 1.442695
        %v7268 = vpow.pop %v7267
        %v7269 = vmul.f32 %v7238, 1.442695
        %v7270 = vpow.pop %v7269
        %7271 = vadd.xlane.f32.xlu0 %v7240
        %v7272 = vpop.xlane.xlu0 %7271
        %7273 = vadd.xlane.f32.xlu0 %v7242
        %v7274 = vpop.xlane.xlu0 %7273
        %7275 = vadd.xlane.f32.xlu0 %v7244
        %v7276 = vpop.xlane.xlu0 %7275
        %7277 = vadd.xlane.f32.xlu0 %v7246
        %v7278 = vpop.xlane.xlu0 %7277
        %7279 = vadd.xlane.f32.xlu0 %v7248
        %v7280 = vpop.xlane.xlu0 %7279
        %7281 = vadd.xlane.f32.xlu0 %v7250
        %v7282 = vpop.xlane.xlu0 %7281
        %7283 = vadd.xlane.f32.xlu0 %v7252
        %v7284 = vpop.xlane.xlu0 %7283
        %7285 = vadd.xlane.f32.xlu0 %v7254
        %v7286 = vpop.xlane.xlu0 %7285
        %7287 = vadd.xlane.f32.xlu0 %v7256
        %v7288 = vpop.xlane.xlu0 %7287
        %7289 = vadd.xlane.f32.xlu0 %v7258
        %v7290 = vpop.xlane.xlu0 %7289
        %7291 = vadd.xlane.f32.xlu0 %v7260
        %v7292 = vpop.xlane.xlu0 %7291
        %7293 = vadd.xlane.f32.xlu0 %v7262
        %v7294 = vpop.xlane.xlu0 %7293
        %7295 = vadd.xlane.f32.xlu0 %v7264
        %v7296 = vpop.xlane.xlu0 %7295
        %7297 = vadd.xlane.f32.xlu0 %v7266
        %v7298 = vpop.xlane.xlu0 %7297
        %7299 = vadd.xlane.f32.xlu0 %v7268
        %v7300 = vpop.xlane.xlu0 %7299
        %7301 = vadd.xlane.f32.xlu0 %v7270
        %v7302 = vpop.xlane.xlu0 %7301
        %v7303 = vrcp.pop %v7272
        %v7304 = vmul.f32 %v7240, %v7303
        %v7305 = vrcp.pop %v7274
        %v7306 = vmul.f32 %v7242, %v7305
        %v7307 = vrcp.pop %v7276
        %v7308 = vmul.f32 %v7244, %v7307
        %v7309 = vrcp.pop %v7278
        %v7310 = vmul.f32 %v7246, %v7309
        %v7311 = vrcp.pop %v7280
        %v7312 = vmul.f32 %v7248, %v7311
        %v7313 = vrcp.pop %v7282
        %v7314 = vmul.f32 %v7250, %v7313
        %v7315 = vrcp.pop %v7284
        %v7316 = vmul.f32 %v7252, %v7315
        %v7317 = vrcp.pop %v7286
        %v7318 = vmul.f32 %v7254, %v7317
        %v7319 = vrcp.pop %v7288
        %v7320 = vmul.f32 %v7256, %v7319
        %v7321 = vrcp.pop %v7290
        %v7322 = vmul.f32 %v7258, %v7321
        %v7323 = vrcp.pop %v7292
        %v7324 = vmul.f32 %v7260, %v7323
        %v7325 = vrcp.pop %v7294
        %v7326 = vmul.f32 %v7262, %v7325
        %v7327 = vrcp.pop %v7296
        %v7328 = vmul.f32 %v7264, %v7327
        %v7329 = vrcp.pop %v7298
        %v7330 = vmul.f32 %v7266, %v7329
        %v7331 = vrcp.pop %v7300
        %v7332 = vmul.f32 %v7268, %v7331
        %v7333 = vrcp.pop %v7302
        %v7334 = vmul.f32 %v7270, %v7333
        %v7335 = vadd.f32 %v6709, %v7304
        %v7336 = vadd.f32 %v6710, %v7306
        %v7337 = vadd.f32 %v6711, %v7308
        %v7338 = vadd.f32 %v6712, %v7310
        %v7339 = vadd.f32 %v6713, %v7312
        %v7340 = vadd.f32 %v6714, %v7314
        %v7341 = vadd.f32 %v6715, %v7316
        %v7342 = vadd.f32 %v6716, %v7318
        %v7343 = vadd.f32 %v6717, %v7320
        %v7344 = vadd.f32 %v6718, %v7322
        %v7345 = vadd.f32 %v6719, %v7324
        %v7346 = vadd.f32 %v6720, %v7326
        %v7347 = vadd.f32 %v6721, %v7328
        %v7348 = vadd.f32 %v6722, %v7330
        %v7349 = vadd.f32 %v6723, %v7332
        %v7350 = vadd.f32 %v6724, %v7334
        %7351 = vrot.lane.b32.xlu0 %v5097, 32
        %v7352 = vpop.permute.xlu0 %7351
        %7353 = vrot.lane.b32.xlu0 %v5098, 32
        %v7354 = vpop.permute.xlu0 %7353
        %7355 = vrot.lane.b32.xlu0 %v5099, 32
        %v7356 = vpop.permute.xlu0 %7355
        %7357 = vrot.lane.b32.xlu0 %v5100, 32
        %v7358 = vpop.permute.xlu0 %7357
        %7359 = vrot.lane.b32.xlu0 %v5101, 32
        %v7360 = vpop.permute.xlu0 %7359
        %7361 = vrot.lane.b32.xlu0 %v5102, 32
        %v7362 = vpop.permute.xlu0 %7361
        %7363 = vrot.lane.b32.xlu0 %v5103, 32
        %v7364 = vpop.permute.xlu0 %7363
        %7365 = vrot.lane.b32.xlu0 %v5104, 32
        %v7366 = vpop.permute.xlu0 %7365
        %7367 = vrot.lane.b32.xlu0 %v5105, 32
        %v7368 = vpop.permute.xlu0 %7367
        %7369 = vrot.lane.b32.xlu0 %v5106, 32
        %v7370 = vpop.permute.xlu0 %7369
        %7371 = vrot.lane.b32.xlu0 %v5107, 32
        %v7372 = vpop.permute.xlu0 %7371
        %7373 = vrot.lane.b32.xlu0 %v5108, 32
        %v7374 = vpop.permute.xlu0 %7373
        %7375 = vrot.lane.b32.xlu0 %v5109, 32
        %v7376 = vpop.permute.xlu0 %7375
        %7377 = vrot.lane.b32.xlu0 %v5110, 32
        %v7378 = vpop.permute.xlu0 %7377
        %7379 = vrot.lane.b32.xlu0 %v5111, 32
        %v7380 = vpop.permute.xlu0 %7379
        %7381 = vrot.lane.b32.xlu0 %v5112, 32
        %v7382 = vpop.permute.xlu0 %7381
        %7399 = vmatprep.subr.mxu0 0.0
        %7400 = vmatpush1.msra.mxu0 %v7352
        %7401 = vmatprep.subr.mxu0 0.0
        %7402 = vmatpush1.msra.mxu0 %v7354
        %7403 = vmatprep.subr.mxu0 0.0
        %7404 = vmatpush1.msra.mxu0 %v7356
        %7405 = vmatprep.subr.mxu0 0.0
        %7406 = vmatpush1.msra.mxu0 %v7358
        %7407 = vmatprep.subr.mxu0 0.0
        %7408 = vmatpush1.msra.mxu0 %v7360
        %7409 = vmatprep.subr.mxu0 0.0
        %7410 = vmatpush1.msra.mxu0 %v7362
        %7411 = vmatprep.subr.mxu0 0.0
        %7412 = vmatpush1.msra.mxu0 %v7364
        %7413 = vmatprep.subr.mxu0 0.0
        %7414 = vmatpush1.msra.mxu0 %v7366
        %7415 = vmatprep.subr.mxu0 0.0
        %7416 = vmatpush1.msra.mxu0 %v7368
        %7417 = vmatprep.subr.mxu0 0.0
        %7418 = vmatpush1.msra.mxu0 %v7370
        %7419 = vmatprep.subr.mxu0 0.0
        %7420 = vmatpush1.msra.mxu0 %v7372
        %7421 = vmatprep.subr.mxu0 0.0
        %7422 = vmatpush1.msra.mxu0 %v7374
        %7423 = vmatprep.subr.mxu0 0.0
        %7424 = vmatpush1.msra.mxu0 %v7376
        %7425 = vmatprep.subr.mxu0 0.0
        %7426 = vmatpush1.msra.mxu0 %v7378
        %7427 = vmatprep.subr.mxu0 0.0
        %7428 = vmatpush1.msra.mxu0 %v7380
        %7429 = vmatprep.subr.mxu0 0.0
        %7430 = vmatpush1.msra.mxu0 %v7382
        %7431 = vmatprep.subr.mxu0 0.0
        %7432 = vmatpush1.msra.mxu0 0.0
        %7433 = vmatprep.subr.mxu0 0.0
        %7434 = vmatpush1.msra.mxu0 0.0
        %7435 = vmatprep.subr.mxu0 0.0
        %7436 = vmatpush1.msra.mxu0 0.0
        %7437 = vmatprep.subr.mxu0 0.0
        %7438 = vmatpush1.msra.mxu0 0.0
        %7439 = vmatprep.subr.mxu0 0.0
        %7440 = vmatpush1.msra.mxu0 0.0
        %7441 = vmatprep.subr.mxu0 0.0
        %7442 = vmatpush1.msra.mxu0 0.0
        %7443 = vmatprep.subr.mxu0 0.0
        %7444 = vmatpush1.msra.mxu0 0.0
        %7445 = vmatprep.subr.mxu0 0.0
        %7446 = vmatpush1.msra.mxu0 0.0
        %7447 = vmatprep.subr.mxu0 0.0
        %7448 = vmatpush1.msra.mxu0 0.0
        %7449 = vmatprep.subr.mxu0 0.0
        %7450 = vmatpush1.msra.mxu0 0.0
        %7451 = vmatprep.subr.mxu0 0.0
        %7452 = vmatpush1.msra.mxu0 0.0
        %7453 = vmatprep.subr.mxu0 0.0
        %7454 = vmatpush1.msra.mxu0 0.0
        %7455 = vmatprep.subr.mxu0 0.0
        %7456 = vmatpush1.msra.mxu0 0.0
        %7457 = vmatprep.subr.mxu0 0.0
        %7458 = vmatpush1.msra.mxu0 0.0
        %7459 = vmatprep.subr.mxu0 0.0
        %7460 = vmatpush1.msra.mxu0 0.0
        %7461 = vmatprep.subr.mxu0 0.0
        %7462 = vmatpush1.msra.mxu0 0.0
        %7463 = vmatprep.mubr.f32.mxu0 0.0
        %7464 = vmatmul.mubr.f32.gmra.mrb[0].mxu0 %v7304
        %v7465 = vpop.f32.mrb[0].mxu0
        %v7466 = vadd.f32 0.0, %v7465
        %v7467 = vpop.f32.mrb[0].mxu0
        %7468 = vmatprep.mubr.f32.mxu0 0.0
        %7469 = vmatmul.mubr.f32.gmra.mrb[0].mxu0 %v7306
        %v7470 = vpop.f32.mrb[0].mxu0
        %v7471 = vadd.f32 0.0, %v7470
        %v7472 = vpop.f32.mrb[0].mxu0
        %7473 = vmatprep.mubr.f32.mxu0 0.0
        %7474 = vmatmul.mubr.f32.gmra.mrb[0].mxu0 %v7308
        %v7475 = vpop.f32.mrb[0].mxu0
        %v7476 = vadd.f32 0.0, %v7475
        %v7477 = vpop.f32.mrb[0].mxu0
        %7478 = vmatprep.mubr.f32.mxu0 0.0
        %7479 = vmatmul.mubr.f32.gmra.mrb[0].mxu0 %v7310
        %v7480 = vpop.f32.mrb[0].mxu0
        %v7481 = vadd.f32 0.0, %v7480
        %v7482 = vpop.f32.mrb[0].mxu0
        %7483 = vmatprep.mubr.f32.mxu0 0.0
        %7484 = vmatmul.mubr.f32.gmra.mrb[0].mxu0 %v7312
        %v7485 = vpop.f32.mrb[0].mxu0
        %v7486 = vadd.f32 0.0, %v7485
        %v7487 = vpop.f32.mrb[0].mxu0
        %7488 = vmatprep.mubr.f32.mxu0 0.0
        %7489 = vmatmul.mubr.f32.gmra.mrb[0].mxu0 %v7314
        %v7490 = vpop.f32.mrb[0].mxu0
        %v7491 = vadd.f32 0.0, %v7490
        %v7492 = vpop.f32.mrb[0].mxu0
        %7493 = vmatprep.mubr.f32.mxu0 0.0
        %7494 = vmatmul.mubr.f32.gmra.mrb[0].mxu0 %v7316
        %v7495 = vpop.f32.mrb[0].mxu0
        %v7496 = vadd.f32 0.0, %v7495
        %v7497 = vpop.f32.mrb[0].mxu0
        %7498 = vmatprep.mubr.f32.mxu0 0.0
        %7499 = vmatmul.mubr.f32.gmra.mrb[0].mxu0 %v7318
        %v7500 = vpop.f32.mrb[0].mxu0
        %v7501 = vadd.f32 0.0, %v7500
        %v7502 = vpop.f32.mrb[0].mxu0
        %7503 = vmatprep.mubr.f32.mxu0 0.0
        %7504 = vmatmul.mubr.f32.gmra.mrb[0].mxu0 %v7320
        %v7505 = vpop.f32.mrb[0].mxu0
        %v7506 = vadd.f32 0.0, %v7505
        %v7507 = vpop.f32.mrb[0].mxu0
        %7508 = vmatprep.mubr.f32.mxu0 0.0
        %7509 = vmatmul.mubr.f32.gmra.mrb[0].mxu0 %v7322
        %v7510 = vpop.f32.mrb[0].mxu0
        %v7511 = vadd.f32 0.0, %v7510
        %v7512 = vpop.f32.mrb[0].mxu0
        %7513 = vmatprep.mubr.f32.mxu0 0.0
        %7514 = vmatmul.mubr.f32.gmra.mrb[0].mxu0 %v7324
        %v7515 = vpop.f32.mrb[0].mxu0
        %v7516 = vadd.f32 0.0, %v7515
        %v7517 = vpop.f32.mrb[0].mxu0
        %7518 = vmatprep.mubr.f32.mxu0 0.0
        %7519 = vmatmul.mubr.f32.gmra.mrb[0].mxu0 %v7326
        %v7520 = vpop.f32.mrb[0].mxu0
        %v7521 = vadd.f32 0.0, %v7520
        %v7522 = vpop.f32.mrb[0].mxu0
        %7523 = vmatprep.mubr.f32.mxu0 0.0
        %7524 = vmatmul.mubr.f32.gmra.mrb[0].mxu0 %v7328
        %v7525 = vpop.f32.mrb[0].mxu0
        %v7526 = vadd.f32 0.0, %v7525
        %v7527 = vpop.f32.mrb[0].mxu0
        %7528 = vmatprep.mubr.f32.mxu0 0.0
        %7529 = vmatmul.mubr.f32.gmra.mrb[0].mxu0 %v7330
        %v7530 = vpop.f32.mrb[0].mxu0
        %v7531 = vadd.f32 0.0, %v7530
        %v7532 = vpop.f32.mrb[0].mxu0
        %7533 = vmatprep.mubr.f32.mxu0 0.0
        %7534 = vmatmul.mubr.f32.gmra.mrb[0].mxu0 %v7332
        %v7535 = vpop.f32.mrb[0].mxu0
        %v7536 = vadd.f32 0.0, %v7535
        %v7537 = vpop.f32.mrb[0].mxu0
        %7538 = vmatprep.mubr.f32.mxu0 0.0
        %7539 = vmatmul.mubr.f32.gmra.mrb[0].mxu0 %v7334
        %v7540 = vpop.f32.mrb[0].mxu0
        %v7541 = vadd.f32 0.0, %v7540
        %v7542 = vpop.f32.mrb[0].mxu0
        %7543 = vdwg.mxu0
        %7560 = vrot.lane.b32.xlu0 %v6214, 32
        %v7561 = vpop.permute.xlu0 %7560
        %7562 = vrot.lane.b32.xlu0 %v6219, 32
        %v7563 = vpop.permute.xlu0 %7562
        %7564 = vrot.lane.b32.xlu0 %v6224, 32
        %v7565 = vpop.permute.xlu0 %7564
        %7566 = vrot.lane.b32.xlu0 %v6229, 32
        %v7567 = vpop.permute.xlu0 %7566
        %7568 = vrot.lane.b32.xlu0 %v6234, 32
        %v7569 = vpop.permute.xlu0 %7568
        %7570 = vrot.lane.b32.xlu0 %v6239, 32
        %v7571 = vpop.permute.xlu0 %7570
        %7572 = vrot.lane.b32.xlu0 %v6244, 32
        %v7573 = vpop.permute.xlu0 %7572
        %7574 = vrot.lane.b32.xlu0 %v6249, 32
        %v7575 = vpop.permute.xlu0 %7574
        %7576 = vrot.lane.b32.xlu0 %v6254, 32
        %v7577 = vpop.permute.xlu0 %7576
        %7578 = vrot.lane.b32.xlu0 %v6259, 32
        %v7579 = vpop.permute.xlu0 %7578
        %7580 = vrot.lane.b32.xlu0 %v6264, 32
        %v7581 = vpop.permute.xlu0 %7580
        %7582 = vrot.lane.b32.xlu0 %v6269, 32
        %v7583 = vpop.permute.xlu0 %7582
        %7584 = vrot.lane.b32.xlu0 %v6274, 32
        %v7585 = vpop.permute.xlu0 %7584
        %7586 = vrot.lane.b32.xlu0 %v6279, 32
        %v7587 = vpop.permute.xlu0 %7586
        %7588 = vrot.lane.b32.xlu0 %v6284, 32
        %v7589 = vpop.permute.xlu0 %7588
        %7590 = vrot.lane.b32.xlu0 %v6289, 32
        %v7591 = vpop.permute.xlu0 %7590
        %7624 = vrot.lane.b32.xlu0 %v6840, 64
        %v7625 = vpop.permute.xlu0 %7624
        %7626 = vrot.lane.b32.xlu0 %v6845, 64
        %v7627 = vpop.permute.xlu0 %7626
        %7628 = vrot.lane.b32.xlu0 %v6850, 64
        %v7629 = vpop.permute.xlu0 %7628
        %7630 = vrot.lane.b32.xlu0 %v6855, 64
        %v7631 = vpop.permute.xlu0 %7630
        %7632 = vrot.lane.b32.xlu0 %v6860, 64
        %v7633 = vpop.permute.xlu0 %7632
        %7634 = vrot.lane.b32.xlu0 %v6865, 64
        %v7635 = vpop.permute.xlu0 %7634
        %7636 = vrot.lane.b32.xlu0 %v6870, 64
        %v7637 = vpop.permute.xlu0 %7636
        %7638 = vrot.lane.b32.xlu0 %v6875, 64
        %v7639 = vpop.permute.xlu0 %7638
        %7640 = vrot.lane.b32.xlu0 %v6880, 64
        %v7641 = vpop.permute.xlu0 %7640
        %7642 = vrot.lane.b32.xlu0 %v6885, 64
        %v7643 = vpop.permute.xlu0 %7642
        %7644 = vrot.lane.b32.xlu0 %v6890, 64
        %v7645 = vpop.permute.xlu0 %7644
        %7646 = vrot.lane.b32.xlu0 %v6895, 64
        %v7647 = vpop.permute.xlu0 %7646
        %7648 = vrot.lane.b32.xlu0 %v6900, 64
        %v7649 = vpop.permute.xlu0 %7648
        %7650 = vrot.lane.b32.xlu0 %v6905, 64
        %v7651 = vpop.permute.xlu0 %7650
        %7652 = vrot.lane.b32.xlu0 %v6910, 64
        %v7653 = vpop.permute.xlu0 %7652
        %7654 = vrot.lane.b32.xlu0 %v6915, 64
        %v7655 = vpop.permute.xlu0 %7654
        %7688 = vrot.lane.b32.xlu0 %v7466, 96
        %v7689 = vpop.permute.xlu0 %7688
        %7690 = vrot.lane.b32.xlu0 %v7471, 96
        %v7691 = vpop.permute.xlu0 %7690
        %7692 = vrot.lane.b32.xlu0 %v7476, 96
        %v7693 = vpop.permute.xlu0 %7692
        %7694 = vrot.lane.b32.xlu0 %v7481, 96
        %v7695 = vpop.permute.xlu0 %7694
        %7696 = vrot.lane.b32.xlu0 %v7486, 96
        %v7697 = vpop.permute.xlu0 %7696
        %7698 = vrot.lane.b32.xlu0 %v7491, 96
        %v7699 = vpop.permute.xlu0 %7698
        %7700 = vrot.lane.b32.xlu0 %v7496, 96
        %v7701 = vpop.permute.xlu0 %7700
        %7702 = vrot.lane.b32.xlu0 %v7501, 96
        %v7703 = vpop.permute.xlu0 %7702
        %7704 = vrot.lane.b32.xlu0 %v7506, 96
        %v7705 = vpop.permute.xlu0 %7704
        %7706 = vrot.lane.b32.xlu0 %v7511, 96
        %v7707 = vpop.permute.xlu0 %7706
        %7708 = vrot.lane.b32.xlu0 %v7516, 96
        %v7709 = vpop.permute.xlu0 %7708
        %7710 = vrot.lane.b32.xlu0 %v7521, 96
        %v7711 = vpop.permute.xlu0 %7710
        %7712 = vrot.lane.b32.xlu0 %v7526, 96
        %v7713 = vpop.permute.xlu0 %7712
        %7714 = vrot.lane.b32.xlu0 %v7531, 96
        %v7715 = vpop.permute.xlu0 %7714
        %7716 = vrot.lane.b32.xlu0 %v7536, 96
        %v7717 = vpop.permute.xlu0 %7716
        %7718 = vrot.lane.b32.xlu0 %v7541, 96
        %v7719 = vpop.permute.xlu0 %7718
        %v7736 = vsel %vm1908, %v5572, %v7561
        %v7737 = vsel %vm1908, %v5577, %v7563
        %v7738 = vsel %vm1908, %v5582, %v7565
        %v7739 = vsel %vm1908, %v5587, %v7567
        %v7740 = vsel %vm1908, %v5592, %v7569
        %v7741 = vsel %vm1908, %v5597, %v7571
        %v7742 = vsel %vm1908, %v5602, %v7573
        %v7743 = vsel %vm1908, %v5607, %v7575
        %v7744 = vsel %vm1908, %v5612, %v7577
        %v7745 = vsel %vm1908, %v5617, %v7579
        %v7746 = vsel %vm1908, %v5622, %v7581
        %v7747 = vsel %vm1908, %v5627, %v7583
        %v7748 = vsel %vm1908, %v5632, %v7585
        %v7749 = vsel %vm1908, %v5637, %v7587
        %v7750 = vsel %vm1908, %v5642, %v7589
        %v7751 = vsel %vm1908, %v5647, %v7591
        %v7752 = vsel %vm4493, %v7736, %v7625
        %v7753 = vsel %vm4493, %v7737, %v7627
        %v7754 = vsel %vm4493, %v7738, %v7629
        %v7755 = vsel %vm4493, %v7739, %v7631
        %v7756 = vsel %vm4493, %v7740, %v7633
        %v7757 = vsel %vm4493, %v7741, %v7635
        %v7758 = vsel %vm4493, %v7742, %v7637
        %v7759 = vsel %vm4493, %v7743, %v7639
        %v7760 = vsel %vm4493, %v7744, %v7641
        %v7761 = vsel %vm4493, %v7745, %v7643
        %v7762 = vsel %vm4493, %v7746, %v7645
        %v7763 = vsel %vm4493, %v7747, %v7647
        %v7764 = vsel %vm4493, %v7748, %v7649
        %v7765 = vsel %vm4493, %v7749, %v7651
        %v7766 = vsel %vm4493, %v7750, %v7653
        %v7767 = vsel %vm4493, %v7751, %v7655
        %v7768 = vsel %vm4510, %v7752, %v7689
        %v7769 = vsel %vm4510, %v7753, %v7691
        %v7770 = vsel %vm4510, %v7754, %v7693
        %v7771 = vsel %vm4510, %v7755, %v7695
        %v7772 = vsel %vm4510, %v7756, %v7697
        %v7773 = vsel %vm4510, %v7757, %v7699
        %v7774 = vsel %vm4510, %v7758, %v7701
        %v7775 = vsel %vm4510, %v7759, %v7703
        %v7776 = vsel %vm4510, %v7760, %v7705
        %v7777 = vsel %vm4510, %v7761, %v7707
        %v7778 = vsel %vm4510, %v7762, %v7709
        %v7779 = vsel %vm4510, %v7763, %v7711
        %v7780 = vsel %vm4510, %v7764, %v7713
        %v7781 = vsel %vm4510, %v7765, %v7715
        %v7782 = vsel %vm4510, %v7766, %v7717
        %v7783 = vsel %vm4510, %v7767, %v7719
        %v7784 = vld [vmem:[#allocation23] sm:$0xff]
        %v7785 = vld [vmem:[#allocation23 + $0x8] sm:$0xff]
        %v7786 = vld [vmem:[#allocation23 + $0x10] sm:$0xff]
        %v7787 = vld [vmem:[#allocation23 + $0x18] sm:$0xff]
        %v7788 = vld [vmem:[#allocation23 + $0x20] sm:$0xff]
        %v7789 = vld [vmem:[#allocation23 + $0x28] sm:$0xff]
        %v7790 = vld [vmem:[#allocation23 + $0x30] sm:$0xff]
        %v7791 = vld [vmem:[#allocation23 + $0x38] sm:$0xff]
        %v7792 = vld [vmem:[#allocation23 + $0x40] sm:$0xff]
        %v7793 = vld [vmem:[#allocation23 + $0x48] sm:$0xff]
        %v7794 = vld [vmem:[#allocation23 + $0x50] sm:$0xff]
        %v7795 = vld [vmem:[#allocation23 + $0x58] sm:$0xff]
        %v7796 = vld [vmem:[#allocation23 + $0x60] sm:$0xff]
        %v7797 = vld [vmem:[#allocation23 + $0x68] sm:$0xff]
        %v7798 = vld [vmem:[#allocation23 + $0x70] sm:$0xff]
        %v7799 = vld [vmem:[#allocation23 + $0x78] sm:$0xff]
        %7800 = vmatprep.subr.mxu0 0.0
        %7801 = vmatpush1.msra.mxu0 %v7784
        %7802 = vmatprep.subr.mxu0 0.0
        %7803 = vmatpush1.msra.mxu0 %v7785
        %7804 = vmatprep.subr.mxu0 0.0
        %7805 = vmatpush1.msra.mxu0 %v7786
        %7806 = vmatprep.subr.mxu0 0.0
        %7807 = vmatpush1.msra.mxu0 %v7787
        %7808 = vmatprep.subr.mxu0 0.0
        %7809 = vmatpush1.msra.mxu0 %v7788
        %7810 = vmatprep.subr.mxu0 0.0
        %7811 = vmatpush1.msra.mxu0 %v7789
        %7812 = vmatprep.subr.mxu0 0.0
        %7813 = vmatpush1.msra.mxu0 %v7790
        %7814 = vmatprep.subr.mxu0 0.0
        %7815 = vmatpush1.msra.mxu0 %v7791
        %7816 = vmatprep.subr.mxu0 0.0
        %7817 = vmatpush1.msra.mxu0 %v7792
        %7818 = vmatprep.subr.mxu0 0.0
        %7819 = vmatpush1.msra.mxu0 %v7793
        %7820 = vmatprep.subr.mxu0 0.0
        %7821 = vmatpush1.msra.mxu0 %v7794
        %7822 = vmatprep.subr.mxu0 0.0
        %7823 = vmatpush1.msra.mxu0 %v7795
        %7824 = vmatprep.subr.mxu0 0.0
        %7825 = vmatpush1.msra.mxu0 %v7796
        %7826 = vmatprep.subr.mxu0 0.0
        %7827 = vmatpush1.msra.mxu0 %v7797
        %7828 = vmatprep.subr.mxu0 0.0
        %7829 = vmatpush1.msra.mxu0 %v7798
        %7830 = vmatprep.subr.mxu0 0.0
        %7831 = vmatpush1.msra.mxu0 %v7799
        %7832 = vmatprep.subr.mxu0 0.0
        %7833 = vmatpush1.msra.mxu0 0.0
        %7834 = vmatprep.subr.mxu0 0.0
        %7835 = vmatpush1.msra.mxu0 0.0
        %7836 = vmatprep.subr.mxu0 0.0
        %7837 = vmatpush1.msra.mxu0 0.0
        %7838 = vmatprep.subr.mxu0 0.0
        %7839 = vmatpush1.msra.mxu0 0.0
        %7840 = vmatprep.subr.mxu0 0.0
        %7841 = vmatpush1.msra.mxu0 0.0
        %7842 = vmatprep.subr.mxu0 0.0
        %7843 = vmatpush1.msra.mxu0 0.0
        %7844 = vmatprep.subr.mxu0 0.0
        %7845 = vmatpush1.msra.mxu0 0.0
        %7846 = vmatprep.subr.mxu0 0.0
        %7847 = vmatpush1.msra.mxu0 0.0
        %7848 = vmatprep.subr.mxu0 0.0
        %7849 = vmatpush1.msra.mxu0 0.0
        %7850 = vmatprep.subr.mxu0 0.0
        %7851 = vmatpush1.msra.mxu0 0.0
        %7852 = vmatprep.subr.mxu0 0.0
        %7853 = vmatpush1.msra.mxu0 0.0
        %7854 = vmatprep.subr.mxu0 0.0
        %7855 = vmatpush1.msra.mxu0 0.0
        %7856 = vmatprep.subr.mxu0 0.0
        %7857 = vmatpush1.msra.mxu0 0.0
        %7858 = vmatprep.subr.mxu0 0.0
        %7859 = vmatpush1.msra.mxu0 0.0
        %7860 = vmatprep.subr.mxu0 0.0
        %7861 = vmatpush1.msra.mxu0 0.0
        %7862 = vmatprep.subr.mxu0 0.0
        %7863 = vmatpush1.msra.mxu0 0.0
        %7864 = vmatprep.mubr.f32.mxu0 0.0
        %7865 = vmatmul.mubr.f32.gmra.mrb[0].mxu0 %v7768
        %v7866 = vpop.f32.mrb[0].mxu0
        %v7867 = vadd.f32 0.0, %v7866
        %v7868 = vpop.f32.mrb[0].mxu0
        %7869 = vmatprep.mubr.f32.mxu0 0.0
        %7870 = vmatmul.mubr.f32.gmra.mrb[0].mxu0 %v7769
        %v7871 = vpop.f32.mrb[0].mxu0
        %v7872 = vadd.f32 0.0, %v7871
        %v7873 = vpop.f32.mrb[0].mxu0
        %7874 = vmatprep.mubr.f32.mxu0 0.0
        %7875 = vmatmul.mubr.f32.gmra.mrb[0].mxu0 %v7770
        %v7876 = vpop.f32.mrb[0].mxu0
        %v7877 = vadd.f32 0.0, %v7876
        %v7878 = vpop.f32.mrb[0].mxu0
        %7879 = vmatprep.mubr.f32.mxu0 0.0
        %7880 = vmatmul.mubr.f32.gmra.mrb[0].mxu0 %v7771
        %v7881 = vpop.f32.mrb[0].mxu0
        %v7882 = vadd.f32 0.0, %v7881
        %v7883 = vpop.f32.mrb[0].mxu0
        %7884 = vmatprep.mubr.f32.mxu0 0.0
        %7885 = vmatmul.mubr.f32.gmra.mrb[0].mxu0 %v7772
        %v7886 = vpop.f32.mrb[0].mxu0
        %v7887 = vadd.f32 0.0, %v7886
        %v7888 = vpop.f32.mrb[0].mxu0
        %7889 = vmatprep.mubr.f32.mxu0 0.0
        %7890 = vmatmul.mubr.f32.gmra.mrb[0].mxu0 %v7773
        %v7891 = vpop.f32.mrb[0].mxu0
        %v7892 = vadd.f32 0.0, %v7891
        %v7893 = vpop.f32.mrb[0].mxu0
        %7894 = vmatprep.mubr.f32.mxu0 0.0
        %7895 = vmatmul.mubr.f32.gmra.mrb[0].mxu0 %v7774
        %v7896 = vpop.f32.mrb[0].mxu0
        %v7897 = vadd.f32 0.0, %v7896
        %v7898 = vpop.f32.mrb[0].mxu0
        %7899 = vmatprep.mubr.f32.mxu0 0.0
        %7900 = vmatmul.mubr.f32.gmra.mrb[0].mxu0 %v7775
        %v7901 = vpop.f32.mrb[0].mxu0
        %v7902 = vadd.f32 0.0, %v7901
        %v7903 = vpop.f32.mrb[0].mxu0
        %7904 = vmatprep.mubr.f32.mxu0 0.0
        %7905 = vmatmul.mubr.f32.gmra.mrb[0].mxu0 %v7776
        %v7906 = vpop.f32.mrb[0].mxu0
        %v7907 = vadd.f32 0.0, %v7906
        %v7908 = vpop.f32.mrb[0].mxu0
        %7909 = vmatprep.mubr.f32.mxu0 0.0
        %7910 = vmatmul.mubr.f32.gmra.mrb[0].mxu0 %v7777
        %v7911 = vpop.f32.mrb[0].mxu0
        %v7912 = vadd.f32 0.0, %v7911
        %v7913 = vpop.f32.mrb[0].mxu0
        %7914 = vmatprep.mubr.f32.mxu0 0.0
        %7915 = vmatmul.mubr.f32.gmra.mrb[0].mxu0 %v7778
        %v7916 = vpop.f32.mrb[0].mxu0
        %v7917 = vadd.f32 0.0, %v7916
        %v7918 = vpop.f32.mrb[0].mxu0
        %7919 = vmatprep.mubr.f32.mxu0 0.0
        %7920 = vmatmul.mubr.f32.gmra.mrb[0].mxu0 %v7779
        %v7921 = vpop.f32.mrb[0].mxu0
        %v7922 = vadd.f32 0.0, %v7921
        %v7923 = vpop.f32.mrb[0].mxu0
        %7924 = vmatprep.mubr.f32.mxu0 0.0
        %7925 = vmatmul.mubr.f32.gmra.mrb[0].mxu0 %v7780
        %v7926 = vpop.f32.mrb[0].mxu0
        %v7927 = vadd.f32 0.0, %v7926
        %v7928 = vpop.f32.mrb[0].mxu0
        %7929 = vmatprep.mubr.f32.mxu0 0.0
        %7930 = vmatmul.mubr.f32.gmra.mrb[0].mxu0 %v7781
        %v7931 = vpop.f32.mrb[0].mxu0
        %v7932 = vadd.f32 0.0, %v7931
        %v7933 = vpop.f32.mrb[0].mxu0
        %7934 = vmatprep.mubr.f32.mxu0 0.0
        %7935 = vmatmul.mubr.f32.gmra.mrb[0].mxu0 %v7782
        %v7936 = vpop.f32.mrb[0].mxu0
        %v7937 = vadd.f32 0.0, %v7936
        %v7938 = vpop.f32.mrb[0].mxu0
        %7939 = vmatprep.mubr.f32.mxu0 0.0
        %7940 = vmatmul.mubr.f32.gmra.mrb[0].mxu0 %v7783
        %v7941 = vpop.f32.mrb[0].mxu0
        %v7942 = vadd.f32 0.0, %v7941
        %v7943 = vpop.f32.mrb[0].mxu0
        %7944 = vdwg.mxu0
        %v7945 = vadd.f32 %v4688, %v7867
        %v7946 = vadd.f32 %v4689, %v7872
        %v7947 = vadd.f32 %v4690, %v7877
        %v7948 = vadd.f32 %v4691, %v7882
        %v7949 = vadd.f32 %v4692, %v7887
        %v7950 = vadd.f32 %v4693, %v7892
        %v7951 = vadd.f32 %v4694, %v7897
        %v7952 = vadd.f32 %v4695, %v7902
        %v7953 = vadd.f32 %v4696, %v7907
        %v7954 = vadd.f32 %v4697, %v7912
        %v7955 = vadd.f32 %v4698, %v7917
        %v7956 = vadd.f32 %v4699, %v7922
        %v7957 = vadd.f32 %v4700, %v7927
        %v7958 = vadd.f32 %v4701, %v7932
        %v7959 = vadd.f32 %v4702, %v7937
        %v7960 = vadd.f32 %v4703, %v7942
        %7961 = vadd.xlane.f32.xlu0 %v7945
        %v7962 = vpop.xlane.xlu0 %7961
        %7963 = vadd.xlane.f32.xlu0 %v7946
        %v7964 = vpop.xlane.xlu0 %7963
        %7965 = vadd.xlane.f32.xlu0 %v7947
        %v7966 = vpop.xlane.xlu0 %7965
        %7967 = vadd.xlane.f32.xlu0 %v7948
        %v7968 = vpop.xlane.xlu0 %7967
        %7969 = vadd.xlane.f32.xlu0 %v7949
        %v7970 = vpop.xlane.xlu0 %7969
        %7971 = vadd.xlane.f32.xlu0 %v7950
        %v7972 = vpop.xlane.xlu0 %7971
        %7973 = vadd.xlane.f32.xlu0 %v7951
        %v7974 = vpop.xlane.xlu0 %7973
        %7975 = vadd.xlane.f32.xlu0 %v7952
        %v7976 = vpop.xlane.xlu0 %7975
        %7977 = vadd.xlane.f32.xlu0 %v7953
        %v7978 = vpop.xlane.xlu0 %7977
        %7979 = vadd.xlane.f32.xlu0 %v7954
        %v7980 = vpop.xlane.xlu0 %7979
        %7981 = vadd.xlane.f32.xlu0 %v7955
        %v7982 = vpop.xlane.xlu0 %7981
        %7983 = vadd.xlane.f32.xlu0 %v7956
        %v7984 = vpop.xlane.xlu0 %7983
        %7985 = vadd.xlane.f32.xlu0 %v7957
        %v7986 = vpop.xlane.xlu0 %7985
        %7987 = vadd.xlane.f32.xlu0 %v7958
        %v7988 = vpop.xlane.xlu0 %7987
        %7989 = vadd.xlane.f32.xlu0 %v7959
        %v7990 = vpop.xlane.xlu0 %7989
        %7991 = vadd.xlane.f32.xlu0 %v7960
        %v7992 = vpop.xlane.xlu0 %7991
        %v7993 = vmul.f32 %v7962, %v1353
        %v7994 = vmul.f32 %v7964, %v1353
        %v7995 = vmul.f32 %v7966, %v1353
        %v7996 = vmul.f32 %v7968, %v1353
        %v7997 = vmul.f32 %v7970, %v1353
        %v7998 = vmul.f32 %v7972, %v1353
        %v7999 = vmul.f32 %v7974, %v1353
        %v8000 = vmul.f32 %v7976, %v1353
        %v8001 = vmul.f32 %v7978, %v1353
        %v8002 = vmul.f32 %v7980, %v1353
        %v8003 = vmul.f32 %v7982, %v1353
        %v8004 = vmul.f32 %v7984, %v1353
        %v8005 = vmul.f32 %v7986, %v1353
        %v8006 = vmul.f32 %v7988, %v1353
        %v8007 = vmul.f32 %v7990, %v1353
        %v8008 = vmul.f32 %v7992, %v1353
        %v8009 = vsub.f32 %v7945, %v7993
        %v8010 = vsub.f32 %v7946, %v7994
        %v8011 = vsub.f32 %v7947, %v7995
        %v8012 = vsub.f32 %v7948, %v7996
        %v8013 = vsub.f32 %v7949, %v7997
        %v8014 = vsub.f32 %v7950, %v7998
        %v8015 = vsub.f32 %v7951, %v7999
        %v8016 = vsub.f32 %v7952, %v8000
        %v8017 = vsub.f32 %v7953, %v8001
        %v8018 = vsub.f32 %v7954, %v8002
        %v8019 = vsub.f32 %v7955, %v8003
        %v8020 = vsub.f32 %v7956, %v8004
        %v8021 = vsub.f32 %v7957, %v8005
        %v8022 = vsub.f32 %v7958, %v8006
        %v8023 = vsub.f32 %v7959, %v8007
        %v8024 = vsub.f32 %v7960, %v8008
        %v8025 = vmul.f32 %v8009, %v8009
        %v8026 = vmul.f32 %v8010, %v8010
        %v8027 = vmul.f32 %v8011, %v8011
        %v8028 = vmul.f32 %v8012, %v8012
        %v8029 = vmul.f32 %v8013, %v8013
        %v8030 = vmul.f32 %v8014, %v8014
        %v8031 = vmul.f32 %v8015, %v8015
        %v8032 = vmul.f32 %v8016, %v8016
        %v8033 = vmul.f32 %v8017, %v8017
        %v8034 = vmul.f32 %v8018, %v8018
        %v8035 = vmul.f32 %v8019, %v8019
        %v8036 = vmul.f32 %v8020, %v8020
        %v8037 = vmul.f32 %v8021, %v8021
        %v8038 = vmul.f32 %v8022, %v8022
        %v8039 = vmul.f32 %v8023, %v8023
        %v8040 = vmul.f32 %v8024, %v8024
        %8041 = vadd.xlane.f32.xlu0 %v8025
        %v8042 = vpop.xlane.xlu0 %8041
        %8043 = vadd.xlane.f32.xlu0 %v8026
        %v8044 = vpop.xlane.xlu0 %8043
        %8045 = vadd.xlane.f32.xlu0 %v8027
        %v8046 = vpop.xlane.xlu0 %8045
        %8047 = vadd.xlane.f32.xlu0 %v8028
        %v8048 = vpop.xlane.xlu0 %8047
        %8049 = vadd.xlane.f32.xlu0 %v8029
        %v8050 = vpop.xlane.xlu0 %8049
        %8051 = vadd.xlane.f32.xlu0 %v8030
        %v8052 = vpop.xlane.xlu0 %8051
        %8053 = vadd.xlane.f32.xlu0 %v8031
        %v8054 = vpop.xlane.xlu0 %8053
        %8055 = vadd.xlane.f32.xlu0 %v8032
        %v8056 = vpop.xlane.xlu0 %8055
        %8057 = vadd.xlane.f32.xlu0 %v8033
        %v8058 = vpop.xlane.xlu0 %8057
        %8059 = vadd.xlane.f32.xlu0 %v8034
        %v8060 = vpop.xlane.xlu0 %8059
        %8061 = vadd.xlane.f32.xlu0 %v8035
        %v8062 = vpop.xlane.xlu0 %8061
        %8063 = vadd.xlane.f32.xlu0 %v8036
        %v8064 = vpop.xlane.xlu0 %8063
        %8065 = vadd.xlane.f32.xlu0 %v8037
        %v8066 = vpop.xlane.xlu0 %8065
        %8067 = vadd.xlane.f32.xlu0 %v8038
        %v8068 = vpop.xlane.xlu0 %8067
        %8069 = vadd.xlane.f32.xlu0 %v8039
        %v8070 = vpop.xlane.xlu0 %8069
        %8071 = vadd.xlane.f32.xlu0 %v8040
        %v8072 = vpop.xlane.xlu0 %8071
        %v8073 = vmul.f32 %v8042, %v1353
        %v8074 = vmul.f32 %v8044, %v1353
        %v8075 = vmul.f32 %v8046, %v1353
        %v8076 = vmul.f32 %v8048, %v1353
        %v8077 = vmul.f32 %v8050, %v1353
        %v8078 = vmul.f32 %v8052, %v1353
        %v8079 = vmul.f32 %v8054, %v1353
        %v8080 = vmul.f32 %v8056, %v1353
        %v8081 = vmul.f32 %v8058, %v1353
        %v8082 = vmul.f32 %v8060, %v1353
        %v8083 = vmul.f32 %v8062, %v1353
        %v8084 = vmul.f32 %v8064, %v1353
        %v8085 = vmul.f32 %v8066, %v1353
        %v8086 = vmul.f32 %v8068, %v1353
        %v8087 = vmul.f32 %v8070, %v1353
        %v8088 = vmul.f32 %v8072, %v1353
        %v8089 = vadd.f32 %v8073, 1e-05
        %v8090 = vadd.f32 %v8074, 1e-05
        %v8091 = vadd.f32 %v8075, 1e-05
        %v8092 = vadd.f32 %v8076, 1e-05
        %v8093 = vadd.f32 %v8077, 1e-05
        %v8094 = vadd.f32 %v8078, 1e-05
        %v8095 = vadd.f32 %v8079, 1e-05
        %v8096 = vadd.f32 %v8080, 1e-05
        %v8097 = vadd.f32 %v8081, 1e-05
        %v8098 = vadd.f32 %v8082, 1e-05
        %v8099 = vadd.f32 %v8083, 1e-05
        %v8100 = vadd.f32 %v8084, 1e-05
        %v8101 = vadd.f32 %v8085, 1e-05
        %v8102 = vadd.f32 %v8086, 1e-05
        %v8103 = vadd.f32 %v8087, 1e-05
        %v8104 = vadd.f32 %v8088, 1e-05
        %v8105 = vrsqrt.pop %v8089
        %v8106 = vrsqrt.pop %v8090
        %v8107 = vrsqrt.pop %v8091
        %v8108 = vrsqrt.pop %v8092
        %v8109 = vrsqrt.pop %v8093
        %v8110 = vrsqrt.pop %v8094
        %v8111 = vrsqrt.pop %v8095
        %v8112 = vrsqrt.pop %v8096
        %v8113 = vrsqrt.pop %v8097
        %v8114 = vrsqrt.pop %v8098
        %v8115 = vrsqrt.pop %v8099
        %v8116 = vrsqrt.pop %v8100
        %v8117 = vrsqrt.pop %v8101
        %v8118 = vrsqrt.pop %v8102
        %v8119 = vrsqrt.pop %v8103
        %v8120 = vrsqrt.pop %v8104
        %v8121 = vmul.f32 %v8009, %v8105
        %v8122 = vmul.f32 %v8010, %v8106
        %v8123 = vmul.f32 %v8011, %v8107
        %v8124 = vmul.f32 %v8012, %v8108
        %v8125 = vmul.f32 %v8013, %v8109
        %v8126 = vmul.f32 %v8014, %v8110
        %v8127 = vmul.f32 %v8015, %v8111
        %v8128 = vmul.f32 %v8016, %v8112
        %v8129 = vmul.f32 %v8017, %v8113
        %v8130 = vmul.f32 %v8018, %v8114
        %v8131 = vmul.f32 %v8019, %v8115
        %v8132 = vmul.f32 %v8020, %v8116
        %v8133 = vmul.f32 %v8021, %v8117
        %v8134 = vmul.f32 %v8022, %v8118
        %v8135 = vmul.f32 %v8023, %v8119
        %v8136 = vmul.f32 %v8024, %v8120
        %v8137 = vlaneseq
        %v8138 = vshrl.u32 %v8137, 7
        %v8139 = vsub.s32 4, %v8138
        %v8140 = vrot.slane %v1249, %v8139
        %v8141 = vmul.f32 %v8121, %v8140
        %v8142 = vmul.f32 %v8122, %v8140
        %v8143 = vmul.f32 %v8123, %v8140
        %v8144 = vmul.f32 %v8124, %v8140
        %v8145 = vmul.f32 %v8125, %v8140
        %v8146 = vmul.f32 %v8126, %v8140
        %v8147 = vmul.f32 %v8127, %v8140
        %v8148 = vmul.f32 %v8128, %v8140
        %v8149 = vmul.f32 %v8129, %v8140
        %v8150 = vmul.f32 %v8130, %v8140
        %v8151 = vmul.f32 %v8131, %v8140
        %v8152 = vmul.f32 %v8132, %v8140
        %v8153 = vmul.f32 %v8133, %v8140
        %v8154 = vmul.f32 %v8134, %v8140
        %v8155 = vmul.f32 %v8135, %v8140
        %v8156 = vmul.f32 %v8136, %v8140
        %v8157 = vlaneseq
        %v8158 = vshrl.u32 %v8157, 7
        %v8159 = vsub.s32 5, %v8158
        %v8160 = vrot.slane %v1249, %v8159
        %v8161 = vadd.f32 %v8141, %v8160
        %v8162 = vadd.f32 %v8142, %v8160
        %v8163 = vadd.f32 %v8143, %v8160
        %v8164 = vadd.f32 %v8144, %v8160
        %v8165 = vadd.f32 %v8145, %v8160
        %v8166 = vadd.f32 %v8146, %v8160
        %v8167 = vadd.f32 %v8147, %v8160
        %v8168 = vadd.f32 %v8148, %v8160
        %v8169 = vadd.f32 %v8149, %v8160
        %v8170 = vadd.f32 %v8150, %v8160
        %v8171 = vadd.f32 %v8151, %v8160
        %v8172 = vadd.f32 %v8152, %v8160
        %v8173 = vadd.f32 %v8153, %v8160
        %v8174 = vadd.f32 %v8154, %v8160
        %v8175 = vadd.f32 %v8155, %v8160
        %v8176 = vadd.f32 %v8156, %v8160
        %v8177 = vld [vmem:[#allocation26] sm:$0xff]
        %v8178 = vld [vmem:[#allocation26 + $0x8] sm:$0xff]
        %v8179 = vld [vmem:[#allocation26 + $0x10] sm:$0xff]
        %v8180 = vld [vmem:[#allocation26 + $0x18] sm:$0xff]
        %v8181 = vld [vmem:[#allocation26 + $0x20] sm:$0xff]
        %v8182 = vld [vmem:[#allocation26 + $0x28] sm:$0xff]
        %v8183 = vld [vmem:[#allocation26 + $0x30] sm:$0xff]
        %v8184 = vld [vmem:[#allocation26 + $0x38] sm:$0xff]
        %v8185 = vld [vmem:[#allocation26 + $0x40] sm:$0xff]
        %v8186 = vld [vmem:[#allocation26 + $0x48] sm:$0xff]
        %v8187 = vld [vmem:[#allocation26 + $0x50] sm:$0xff]
        %v8188 = vld [vmem:[#allocation26 + $0x58] sm:$0xff]
        %v8189 = vld [vmem:[#allocation26 + $0x60] sm:$0xff]
        %v8190 = vld [vmem:[#allocation26 + $0x68] sm:$0xff]
        %v8191 = vld [vmem:[#allocation26 + $0x70] sm:$0xff]
        %v8192 = vld [vmem:[#allocation26 + $0x78] sm:$0xff]
        %v8193 = vld [vmem:[#allocation26 + $0x80] sm:$0xff]
        %v8194 = vld [vmem:[#allocation26 + $0x88] sm:$0xff]
        %v8195 = vld [vmem:[#allocation26 + $0x90] sm:$0xff]
        %v8196 = vld [vmem:[#allocation26 + $0x98] sm:$0xff]
        %v8197 = vld [vmem:[#allocation26 + $0xa0] sm:$0xff]
        %v8198 = vld [vmem:[#allocation26 + $0xa8] sm:$0xff]
        %v8199 = vld [vmem:[#allocation26 + $0xb0] sm:$0xff]
        %v8200 = vld [vmem:[#allocation26 + $0xb8] sm:$0xff]
        %v8201 = vld [vmem:[#allocation26 + $0xc0] sm:$0xff]
        %v8202 = vld [vmem:[#allocation26 + $0xc8] sm:$0xff]
        %v8203 = vld [vmem:[#allocation26 + $0xd0] sm:$0xff]
        %v8204 = vld [vmem:[#allocation26 + $0xd8] sm:$0xff]
        %v8205 = vld [vmem:[#allocation26 + $0xe0] sm:$0xff]
        %v8206 = vld [vmem:[#allocation26 + $0xe8] sm:$0xff]
        %v8207 = vld [vmem:[#allocation26 + $0xf0] sm:$0xff]
        %v8208 = vld [vmem:[#allocation26 + $0xf8] sm:$0xff]
        %v8209 = vld [vmem:[#allocation27] sm:$0x3]
        %v8211 = vlaneseq
        %v8212 = vshrl.u32 %v8211, 7
        %v8213 = vsub.s32 0, %v8212
        %v8214 = vrot.slane %v8209, %v8213
        %v8215 = vlaneseq
        %v8216 = vshrl.u32 %v8215, 7
        %v8217 = vsub.s32 1, %v8216
        %v8218 = vrot.slane %v8209, %v8217
        %8221 = vmatprep.subr.mxu0 %v8178
        %8222 = vmatpush1.msra.mxu0 %v8177
        %8223 = vmatprep.subr.mxu0 %v8180
        %8224 = vmatpush1.msra.mxu0 %v8179
        %8225 = vmatprep.subr.mxu0 %v8182
        %8226 = vmatpush1.msra.mxu0 %v8181
        %8227 = vmatprep.subr.mxu0 %v8184
        %8228 = vmatpush1.msra.mxu0 %v8183
        %8229 = vmatprep.subr.mxu0 %v8186
        %8230 = vmatpush1.msra.mxu0 %v8185
        %8231 = vmatprep.subr.mxu0 %v8188
        %8232 = vmatpush1.msra.mxu0 %v8187
        %8233 = vmatprep.subr.mxu0 %v8190
        %8234 = vmatpush1.msra.mxu0 %v8189
        %8235 = vmatprep.subr.mxu0 %v8192
        %8236 = vmatpush1.msra.mxu0 %v8191
        %8237 = vmatprep.subr.mxu0 %v8194
        %8238 = vmatpush1.msra.mxu0 %v8193
        %8239 = vmatprep.subr.mxu0 %v8196
        %8240 = vmatpush1.msra.mxu0 %v8195
        %8241 = vmatprep.subr.mxu0 %v8198
        %8242 = vmatpush1.msra.mxu0 %v8197
        %8243 = vmatprep.subr.mxu0 %v8200
        %8244 = vmatpush1.msra.mxu0 %v8199
        %8245 = vmatprep.subr.mxu0 %v8202
        %8246 = vmatpush1.msra.mxu0 %v8201
        %8247 = vmatprep.subr.mxu0 %v8204
        %8248 = vmatpush1.msra.mxu0 %v8203
        %8249 = vmatprep.subr.mxu0 %v8206
        %8250 = vmatpush1.msra.mxu0 %v8205
        %8251 = vmatprep.subr.mxu0 %v8208
        %8252 = vmatpush1.msra.mxu0 %v8207
        %8253 = vmatprep.subr.mxu0 0.0
        %8254 = vmatpush1.msra.mxu0 0.0
        %8255 = vmatprep.subr.mxu0 0.0
        %8256 = vmatpush1.msra.mxu0 0.0
        %8257 = vmatprep.subr.mxu0 0.0
        %8258 = vmatpush1.msra.mxu0 0.0
        %8259 = vmatprep.subr.mxu0 0.0
        %8260 = vmatpush1.msra.mxu0 0.0
        %8261 = vmatprep.subr.mxu0 0.0
        %8262 = vmatpush1.msra.mxu0 0.0
        %8263 = vmatprep.subr.mxu0 0.0
        %8264 = vmatpush1.msra.mxu0 0.0
        %8265 = vmatprep.subr.mxu0 0.0
        %8266 = vmatpush1.msra.mxu0 0.0
        %8267 = vmatprep.subr.mxu0 0.0
        %8268 = vmatpush1.msra.mxu0 0.0
        %8269 = vmatprep.subr.mxu0 0.0
        %8270 = vmatpush1.msra.mxu0 0.0
        %8271 = vmatprep.subr.mxu0 0.0
        %8272 = vmatpush1.msra.mxu0 0.0
        %8273 = vmatprep.subr.mxu0 0.0
        %8274 = vmatpush1.msra.mxu0 0.0
        %8275 = vmatprep.subr.mxu0 0.0
        %8276 = vmatpush1.msra.mxu0 0.0
        %8277 = vmatprep.subr.mxu0 0.0
        %8278 = vmatpush1.msra.mxu0 0.0
        %8279 = vmatprep.subr.mxu0 0.0
        %8280 = vmatpush1.msra.mxu0 0.0
        %8281 = vmatprep.subr.mxu0 0.0
        %8282 = vmatpush1.msra.mxu0 0.0
        %8283 = vmatprep.subr.mxu0 0.0
        %8284 = vmatpush1.msra.mxu0 0.0
        %8285 = vmatprep.mubr.f32.mxu0 0.0
        %8286 = vmatmul.mubr.f32.gmra.mrb[0].mxu0 %v8161
        %v8287 = vpop.f32.mrb[0].mxu0
        %v8288 = vadd.f32 %v8214, %v8287
        %v8289 = vpop.f32.mrb[0].mxu0
        %v8290 = vadd.f32 %v8218, %v8289
        %8291 = vmatprep.mubr.f32.mxu0 0.0
        %8292 = vmatmul.mubr.f32.gmra.mrb[0].mxu0 %v8162
        %v8293 = vpop.f32.mrb[0].mxu0
        %v8294 = vadd.f32 %v8214, %v8293
        %v8295 = vpop.f32.mrb[0].mxu0
        %v8296 = vadd.f32 %v8218, %v8295
        %8297 = vmatprep.mubr.f32.mxu0 0.0
        %8298 = vmatmul.mubr.f32.gmra.mrb[0].mxu0 %v8163
        %v8299 = vpop.f32.mrb[0].mxu0
        %v8300 = vadd.f32 %v8214, %v8299
        %v8301 = vpop.f32.mrb[0].mxu0
        %v8302 = vadd.f32 %v8218, %v8301
        %8303 = vmatprep.mubr.f32.mxu0 0.0
        %8304 = vmatmul.mubr.f32.gmra.mrb[0].mxu0 %v8164
        %v8305 = vpop.f32.mrb[0].mxu0
        %v8306 = vadd.f32 %v8214, %v8305
        %v8307 = vpop.f32.mrb[0].mxu0
        %v8308 = vadd.f32 %v8218, %v8307
        %8309 = vmatprep.mubr.f32.mxu0 0.0
        %8310 = vmatmul.mubr.f32.gmra.mrb[0].mxu0 %v8165
        %v8311 = vpop.f32.mrb[0].mxu0
        %v8312 = vadd.f32 %v8214, %v8311
        %v8313 = vpop.f32.mrb[0].mxu0
        %v8314 = vadd.f32 %v8218, %v8313
        %8315 = vmatprep.mubr.f32.mxu0 0.0
        %8316 = vmatmul.mubr.f32.gmra.mrb[0].mxu0 %v8166
        %v8317 = vpop.f32.mrb[0].mxu0
        %v8318 = vadd.f32 %v8214, %v8317
        %v8319 = vpop.f32.mrb[0].mxu0
        %v8320 = vadd.f32 %v8218, %v8319
        %8321 = vmatprep.mubr.f32.mxu0 0.0
        %8322 = vmatmul.mubr.f32.gmra.mrb[0].mxu0 %v8167
        %v8323 = vpop.f32.mrb[0].mxu0
        %v8324 = vadd.f32 %v8214, %v8323
        %v8325 = vpop.f32.mrb[0].mxu0
        %v8326 = vadd.f32 %v8218, %v8325
        %8327 = vmatprep.mubr.f32.mxu0 0.0
        %8328 = vmatmul.mubr.f32.gmra.mrb[0].mxu0 %v8168
        %v8329 = vpop.f32.mrb[0].mxu0
        %v8330 = vadd.f32 %v8214, %v8329
        %v8331 = vpop.f32.mrb[0].mxu0
        %v8332 = vadd.f32 %v8218, %v8331
        %8333 = vmatprep.mubr.f32.mxu0 0.0
        %8334 = vmatmul.mubr.f32.gmra.mrb[0].mxu0 %v8169
        %v8335 = vpop.f32.mrb[0].mxu0
        %v8336 = vadd.f32 %v8214, %v8335
        %v8337 = vpop.f32.mrb[0].mxu0
        %v8338 = vadd.f32 %v8218, %v8337
        %8339 = vmatprep.mubr.f32.mxu0 0.0
        %8340 = vmatmul.mubr.f32.gmra.mrb[0].mxu0 %v8170
        %v8341 = vpop.f32.mrb[0].mxu0
        %v8342 = vadd.f32 %v8214, %v8341
        %v8343 = vpop.f32.mrb[0].mxu0
        %v8344 = vadd.f32 %v8218, %v8343
        %8345 = vmatprep.mubr.f32.mxu0 0.0
        %8346 = vmatmul.mubr.f32.gmra.mrb[0].mxu0 %v8171
        %v8347 = vpop.f32.mrb[0].mxu0
        %v8348 = vadd.f32 %v8214, %v8347
        %v8349 = vpop.f32.mrb[0].mxu0
        %v8350 = vadd.f32 %v8218, %v8349
        %8351 = vmatprep.mubr.f32.mxu0 0.0
        %8352 = vmatmul.mubr.f32.gmra.mrb[0].mxu0 %v8172
        %v8353 = vpop.f32.mrb[0].mxu0
        %v8354 = vadd.f32 %v8214, %v8353
        %v8355 = vpop.f32.mrb[0].mxu0
        %v8356 = vadd.f32 %v8218, %v8355
        %8357 = vmatprep.mubr.f32.mxu0 0.0
        %8358 = vmatmul.mubr.f32.gmra.mrb[0].mxu0 %v8173
        %v8359 = vpop.f32.mrb[0].mxu0
        %v8360 = vadd.f32 %v8214, %v8359
        %v8361 = vpop.f32.mrb[0].mxu0
        %v8362 = vadd.f32 %v8218, %v8361
        %8363 = vmatprep.mubr.f32.mxu0 0.0
        %8364 = vmatmul.mubr.f32.gmra.mrb[0].mxu0 %v8174
        %v8365 = vpop.f32.mrb[0].mxu0
        %v8366 = vadd.f32 %v8214, %v8365
        %v8367 = vpop.f32.mrb[0].mxu0
        %v8368 = vadd.f32 %v8218, %v8367
        %8369 = vmatprep.mubr.f32.mxu0 0.0
        %8370 = vmatmul.mubr.f32.gmra.mrb[0].mxu0 %v8175
        %v8371 = vpop.f32.mrb[0].mxu0
        %v8372 = vadd.f32 %v8214, %v8371
        %v8373 = vpop.f32.mrb[0].mxu0
        %v8374 = vadd.f32 %v8218, %v8373
        %8375 = vmatprep.mubr.f32.mxu0 0.0
        %8376 = vmatmul.mubr.f32.gmra.mrb[0].mxu0 %v8176
        %v8377 = vpop.f32.mrb[0].mxu0
        %v8378 = vadd.f32 %v8214, %v8377
        %v8379 = vpop.f32.mrb[0].mxu0
        %v8380 = vadd.f32 %v8218, %v8379
        %8381 = vdwg.mxu0
        %v8382 = vmax.f32 %v8288, 0.0
        %v8383 = vmax.f32 %v8290, 0.0
        %v8384 = vmax.f32 %v8294, 0.0
        %v8385 = vmax.f32 %v8296, 0.0
        %v8386 = vmax.f32 %v8300, 0.0
        %v8387 = vmax.f32 %v8302, 0.0
        %v8388 = vmax.f32 %v8306, 0.0
        %v8389 = vmax.f32 %v8308, 0.0
        %v8390 = vmax.f32 %v8312, 0.0
        %v8391 = vmax.f32 %v8314, 0.0
        %v8392 = vmax.f32 %v8318, 0.0
        %v8393 = vmax.f32 %v8320, 0.0
        %v8394 = vmax.f32 %v8324, 0.0
        %v8395 = vmax.f32 %v8326, 0.0
        %v8396 = vmax.f32 %v8330, 0.0
        %v8397 = vmax.f32 %v8332, 0.0
        %v8398 = vmax.f32 %v8336, 0.0
        %v8399 = vmax.f32 %v8338, 0.0
        %v8400 = vmax.f32 %v8342, 0.0
        %v8401 = vmax.f32 %v8344, 0.0
        %v8402 = vmax.f32 %v8348, 0.0
        %v8403 = vmax.f32 %v8350, 0.0
        %v8404 = vmax.f32 %v8354, 0.0
        %v8405 = vmax.f32 %v8356, 0.0
        %v8406 = vmax.f32 %v8360, 0.0
        %v8407 = vmax.f32 %v8362, 0.0
        %v8408 = vmax.f32 %v8366, 0.0
        %v8409 = vmax.f32 %v8368, 0.0
        %v8410 = vmax.f32 %v8372, 0.0
        %v8411 = vmax.f32 %v8374, 0.0
        %v8412 = vmax.f32 %v8378, 0.0
        %v8413 = vmax.f32 %v8380, 0.0
        %v8414 = vld [vmem:[#allocation29] sm:$0xff]
        %v8415 = vld [vmem:[#allocation29 + $0x8] sm:$0xff]
        %v8416 = vld [vmem:[#allocation29 + $0x10] sm:$0xff]
        %v8417 = vld [vmem:[#allocation29 + $0x18] sm:$0xff]
        %v8418 = vld [vmem:[#allocation29 + $0x20] sm:$0xff]
        %v8419 = vld [vmem:[#allocation29 + $0x28] sm:$0xff]
        %v8420 = vld [vmem:[#allocation29 + $0x30] sm:$0xff]
        %v8421 = vld [vmem:[#allocation29 + $0x38] sm:$0xff]
        %v8422 = vld [vmem:[#allocation29 + $0x40] sm:$0xff]
        %v8423 = vld [vmem:[#allocation29 + $0x48] sm:$0xff]
        %v8424 = vld [vmem:[#allocation29 + $0x50] sm:$0xff]
        %v8425 = vld [vmem:[#allocation29 + $0x58] sm:$0xff]
        %v8426 = vld [vmem:[#allocation29 + $0x60] sm:$0xff]
        %v8427 = vld [vmem:[#allocation29 + $0x68] sm:$0xff]
        %v8428 = vld [vmem:[#allocation29 + $0x70] sm:$0xff]
        %v8429 = vld [vmem:[#allocation29 + $0x78] sm:$0xff]
        %v8430 = vld [vmem:[#allocation29 + $0x80] sm:$0xff]
        %v8431 = vld [vmem:[#allocation29 + $0x88] sm:$0xff]
        %v8432 = vld [vmem:[#allocation29 + $0x90] sm:$0xff]
        %v8433 = vld [vmem:[#allocation29 + $0x98] sm:$0xff]
        %v8434 = vld [vmem:[#allocation29 + $0xa0] sm:$0xff]
        %v8435 = vld [vmem:[#allocation29 + $0xa8] sm:$0xff]
        %v8436 = vld [vmem:[#allocation29 + $0xb0] sm:$0xff]
        %v8437 = vld [vmem:[#allocation29 + $0xb8] sm:$0xff]
        %v8438 = vld [vmem:[#allocation29 + $0xc0] sm:$0xff]
        %v8439 = vld [vmem:[#allocation29 + $0xc8] sm:$0xff]
        %v8440 = vld [vmem:[#allocation29 + $0xd0] sm:$0xff]
        %v8441 = vld [vmem:[#allocation29 + $0xd8] sm:$0xff]
        %v8442 = vld [vmem:[#allocation29 + $0xe0] sm:$0xff]
        %v8443 = vld [vmem:[#allocation29 + $0xe8] sm:$0xff]
        %v8444 = vld [vmem:[#allocation29 + $0xf0] sm:$0xff]
        %v8445 = vld [vmem:[#allocation29 + $0xf8] sm:$0xff]
        %8446 = vmatprep.subr.mxu0 0.0
        %8447 = vmatpush1.msra.mxu0 %v8414
        %8448 = vmatprep.subr.mxu0 0.0
        %8449 = vmatpush1.msra.mxu0 %v8415
        %8450 = vmatprep.subr.mxu0 0.0
        %8451 = vmatpush1.msra.mxu0 %v8416
        %8452 = vmatprep.subr.mxu0 0.0
        %8453 = vmatpush1.msra.mxu0 %v8417
        %8454 = vmatprep.subr.mxu0 0.0
        %8455 = vmatpush1.msra.mxu0 %v8418
        %8456 = vmatprep.subr.mxu0 0.0
        %8457 = vmatpush1.msra.mxu0 %v8419
        %8458 = vmatprep.subr.mxu0 0.0
        %8459 = vmatpush1.msra.mxu0 %v8420
        %8460 = vmatprep.subr.mxu0 0.0
        %8461 = vmatpush1.msra.mxu0 %v8421
        %8462 = vmatprep.subr.mxu0 0.0
        %8463 = vmatpush1.msra.mxu0 %v8422
        %8464 = vmatprep.subr.mxu0 0.0
        %8465 = vmatpush1.msra.mxu0 %v8423
        %8466 = vmatprep.subr.mxu0 0.0
        %8467 = vmatpush1.msra.mxu0 %v8424
        %8468 = vmatprep.subr.mxu0 0.0
        %8469 = vmatpush1.msra.mxu0 %v8425
        %8470 = vmatprep.subr.mxu0 0.0
        %8471 = vmatpush1.msra.mxu0 %v8426
        %8472 = vmatprep.subr.mxu0 0.0
        %8473 = vmatpush1.msra.mxu0 %v8427
        %8474 = vmatprep.subr.mxu0 0.0
        %8475 = vmatpush1.msra.mxu0 %v8428
        %8476 = vmatprep.subr.mxu0 0.0
        %8477 = vmatpush1.msra.mxu0 %v8429
        %8478 = vmatprep.subr.mxu0 0.0
        %8479 = vmatpush1.msra.mxu0 %v8430
        %8480 = vmatprep.subr.mxu0 0.0
        %8481 = vmatpush1.msra.mxu0 %v8431
        %8482 = vmatprep.subr.mxu0 0.0
        %8483 = vmatpush1.msra.mxu0 %v8432
        %8484 = vmatprep.subr.mxu0 0.0
        %8485 = vmatpush1.msra.mxu0 %v8433
        %8486 = vmatprep.subr.mxu0 0.0
        %8487 = vmatpush1.msra.mxu0 %v8434
        %8488 = vmatprep.subr.mxu0 0.0
        %8489 = vmatpush1.msra.mxu0 %v8435
        %8490 = vmatprep.subr.mxu0 0.0
        %8491 = vmatpush1.msra.mxu0 %v8436
        %8492 = vmatprep.subr.mxu0 0.0
        %8493 = vmatpush1.msra.mxu0 %v8437
        %8494 = vmatprep.subr.mxu0 0.0
        %8495 = vmatpush1.msra.mxu0 %v8438
        %8496 = vmatprep.subr.mxu0 0.0
        %8497 = vmatpush1.msra.mxu0 %v8439
        %8498 = vmatprep.subr.mxu0 0.0
        %8499 = vmatpush1.msra.mxu0 %v8440
        %8500 = vmatprep.subr.mxu0 0.0
        %8501 = vmatpush1.msra.mxu0 %v8441
        %8502 = vmatprep.subr.mxu0 0.0
        %8503 = vmatpush1.msra.mxu0 %v8442
        %8504 = vmatprep.subr.mxu0 0.0
        %8505 = vmatpush1.msra.mxu0 %v8443
        %8506 = vmatprep.subr.mxu0 0.0
        %8507 = vmatpush1.msra.mxu0 %v8444
        %8508 = vmatprep.subr.mxu0 0.0
        %8509 = vmatpush1.msra.mxu0 %v8445
        %8510 = vmatprep.mubr.f32.mxu0 %v8383
        %8511 = vmatmul.mubr.f32.gmra.mrb[0].mxu0 %v8382
        %v8512 = vpop.f32.mrb[0].mxu0
        %v8513 = vadd.f32 0.0, %v8512
        %v8514 = vpop.f32.mrb[0].mxu0
        %8515 = vmatprep.mubr.f32.mxu0 %v8385
        %8516 = vmatmul.mubr.f32.gmra.mrb[0].mxu0 %v8384
        %v8517 = vpop.f32.mrb[0].mxu0
        %v8518 = vadd.f32 0.0, %v8517
        %v8519 = vpop.f32.mrb[0].mxu0
        %8520 = vmatprep.mubr.f32.mxu0 %v8387
        %8521 = vmatmul.mubr.f32.gmra.mrb[0].mxu0 %v8386
        %v8522 = vpop.f32.mrb[0].mxu0
        %v8523 = vadd.f32 0.0, %v8522
        %v8524 = vpop.f32.mrb[0].mxu0
        %8525 = vmatprep.mubr.f32.mxu0 %v8389
        %8526 = vmatmul.mubr.f32.gmra.mrb[0].mxu0 %v8388
        %v8527 = vpop.f32.mrb[0].mxu0
        %v8528 = vadd.f32 0.0, %v8527
        %v8529 = vpop.f32.mrb[0].mxu0
        %8530 = vmatprep.mubr.f32.mxu0 %v8391
        %8531 = vmatmul.mubr.f32.gmra.mrb[0].mxu0 %v8390
        %v8532 = vpop.f32.mrb[0].mxu0
        %v8533 = vadd.f32 0.0, %v8532
        %v8534 = vpop.f32.mrb[0].mxu0
        %8535 = vmatprep.mubr.f32.mxu0 %v8393
        %8536 = vmatmul.mubr.f32.gmra.mrb[0].mxu0 %v8392
        %v8537 = vpop.f32.mrb[0].mxu0
        %v8538 = vadd.f32 0.0, %v8537
        %v8539 = vpop.f32.mrb[0].mxu0
        %8540 = vmatprep.mubr.f32.mxu0 %v8395
        %8541 = vmatmul.mubr.f32.gmra.mrb[0].mxu0 %v8394
        %v8542 = vpop.f32.mrb[0].mxu0
        %v8543 = vadd.f32 0.0, %v8542
        %v8544 = vpop.f32.mrb[0].mxu0
        %8545 = vmatprep.mubr.f32.mxu0 %v8397
        %8546 = vmatmul.mubr.f32.gmra.mrb[0].mxu0 %v8396
        %v8547 = vpop.f32.mrb[0].mxu0
        %v8548 = vadd.f32 0.0, %v8547
        %v8549 = vpop.f32.mrb[0].mxu0
        %8550 = vmatprep.mubr.f32.mxu0 %v8399
        %8551 = vmatmul.mubr.f32.gmra.mrb[0].mxu0 %v8398
        %v8552 = vpop.f32.mrb[0].mxu0
        %v8553 = vadd.f32 0.0, %v8552
        %v8554 = vpop.f32.mrb[0].mxu0
        %8555 = vmatprep.mubr.f32.mxu0 %v8401
        %8556 = vmatmul.mubr.f32.gmra.mrb[0].mxu0 %v8400
        %v8557 = vpop.f32.mrb[0].mxu0
        %v8558 = vadd.f32 0.0, %v8557
        %v8559 = vpop.f32.mrb[0].mxu0
        %8560 = vmatprep.mubr.f32.mxu0 %v8403
        %8561 = vmatmul.mubr.f32.gmra.mrb[0].mxu0 %v8402
        %v8562 = vpop.f32.mrb[0].mxu0
        %v8563 = vadd.f32 0.0, %v8562
        %v8564 = vpop.f32.mrb[0].mxu0
        %8565 = vmatprep.mubr.f32.mxu0 %v8405
        %8566 = vmatmul.mubr.f32.gmra.mrb[0].mxu0 %v8404
        %v8567 = vpop.f32.mrb[0].mxu0
        %v8568 = vadd.f32 0.0, %v8567
        %v8569 = vpop.f32.mrb[0].mxu0
        %8570 = vmatprep.mubr.f32.mxu0 %v8407
        %8571 = vmatmul.mubr.f32.gmra.mrb[0].mxu0 %v8406
        %v8572 = vpop.f32.mrb[0].mxu0
        %v8573 = vadd.f32 0.0, %v8572
        %v8574 = vpop.f32.mrb[0].mxu0
        %8575 = vmatprep.mubr.f32.mxu0 %v8409
        %8576 = vmatmul.mubr.f32.gmra.mrb[0].mxu0 %v8408
        %v8577 = vpop.f32.mrb[0].mxu0
        %v8578 = vadd.f32 0.0, %v8577
        %v8579 = vpop.f32.mrb[0].mxu0
        %8580 = vmatprep.mubr.f32.mxu0 %v8411
        %8581 = vmatmul.mubr.f32.gmra.mrb[0].mxu0 %v8410
        %v8582 = vpop.f32.mrb[0].mxu0
        %v8583 = vadd.f32 0.0, %v8582
        %v8584 = vpop.f32.mrb[0].mxu0
        %8585 = vmatprep.mubr.f32.mxu0 %v8413
        %8586 = vmatmul.mubr.f32.gmra.mrb[0].mxu0 %v8412
        %v8587 = vpop.f32.mrb[0].mxu0
        %v8588 = vadd.f32 0.0, %v8587
        %v8589 = vpop.f32.mrb[0].mxu0
        %8590 = vdwg.mxu0
        %v8591 = vadd.f32 %v7945, %v8513
        %v8592 = vadd.f32 %v7946, %v8518
        %v8593 = vadd.f32 %v7947, %v8523
        %v8594 = vadd.f32 %v7948, %v8528
        %v8595 = vadd.f32 %v7949, %v8533
        %v8596 = vadd.f32 %v7950, %v8538
        %v8597 = vadd.f32 %v7951, %v8543
        %v8598 = vadd.f32 %v7952, %v8548
        %v8599 = vadd.f32 %v7953, %v8553
        %v8600 = vadd.f32 %v7954, %v8558
        %v8601 = vadd.f32 %v7955, %v8563
        %v8602 = vadd.f32 %v7956, %v8568
        %v8603 = vadd.f32 %v7957, %v8573
        %v8604 = vadd.f32 %v7958, %v8578
        %v8605 = vadd.f32 %v7959, %v8583
        %v8606 = vadd.f32 %v7960, %v8588
        %v8607 = vld [vmem:[#allocation30] sm:$0x1]
        %v8609 = vlaneseq
        %v8610 = vshrl.u32 %v8609, 7
        %v8611 = vsub.s32 0, %v8610
        %v8612 = vrot.slane %v8607, %v8611
        %v8614 = vadd.f32 %v8591, %v8612
        %v8615 = vadd.f32 %v8592, %v8612
        %v8616 = vadd.f32 %v8593, %v8612
        %v8617 = vadd.f32 %v8594, %v8612
        %v8618 = vadd.f32 %v8595, %v8612
        %v8619 = vadd.f32 %v8596, %v8612
        %v8620 = vadd.f32 %v8597, %v8612
        %v8621 = vadd.f32 %v8598, %v8612
        %v8622 = vadd.f32 %v8599, %v8612
        %v8623 = vadd.f32 %v8600, %v8612
        %v8624 = vadd.f32 %v8601, %v8612
        %v8625 = vadd.f32 %v8602, %v8612
        %v8626 = vadd.f32 %v8603, %v8612
        %v8627 = vadd.f32 %v8604, %v8612
        %v8628 = vadd.f32 %v8605, %v8612
        %v8629 = vadd.f32 %v8606, %v8612
        %8630 = vst [vmem:[#allocation2] sm:$0xff] %v8614
        %8631 = vst [vmem:[#allocation2 + $0x8] sm:$0xff] %v8615
        %8632 = vst [vmem:[#allocation2 + $0x10] sm:$0xff] %v8616
        %8633 = vst [vmem:[#allocation2 + $0x18] sm:$0xff] %v8617
        %8634 = vst [vmem:[#allocation2 + $0x20] sm:$0xff] %v8618
        %8635 = vst [vmem:[#allocation2 + $0x28] sm:$0xff] %v8619
        %8636 = vst [vmem:[#allocation2 + $0x30] sm:$0xff] %v8620
        %8637 = vst [vmem:[#allocation2 + $0x38] sm:$0xff] %v8621
        %8638 = vst [vmem:[#allocation2 + $0x40] sm:$0xff] %v8622
        %8639 = vst [vmem:[#allocation2 + $0x48] sm:$0xff] %v8623
        %8640 = vst [vmem:[#allocation2 + $0x50] sm:$0xff] %v8624
        %8641 = vst [vmem:[#allocation2 + $0x58] sm:$0xff] %v8625
        %8642 = vst [vmem:[#allocation2 + $0x60] sm:$0xff] %v8626
        %8643 = vst [vmem:[#allocation2 + $0x68] sm:$0xff] %v8627
        %8644 = vst [vmem:[#allocation2 + $0x70] sm:$0xff] %v8628
        %8645 = vst [vmem:[#allocation2 + $0x78] sm:$0xff] %v8629
        %p8646 = scmp.eq.s32.totalorder %s57, 2
        // Predicated region
        $region153: #{universal_transformer_decoder_forward.1} parent=83 // pred_check
          %p8647 = pneg %p8646
        $region154: #{universal_transformer_decoder_forward.1} parent=83 // pred_check_branch
          %8649 = sbr.rel (%p8647) target = $region156
        $region155: #{universal_transformer_decoder_forward.1} parent=83 // pred_region
          %8650 = vadd.xlane.f32.xlu0 %v8614
          %v8651 = vpop.xlane.xlu0 %8650
          %8652 = vadd.xlane.f32.xlu0 %v8615
          %v8653 = vpop.xlane.xlu0 %8652
          %8654 = vadd.xlane.f32.xlu0 %v8616
          %v8655 = vpop.xlane.xlu0 %8654
          %8656 = vadd.xlane.f32.xlu0 %v8617
          %v8657 = vpop.xlane.xlu0 %8656
          %8658 = vadd.xlane.f32.xlu0 %v8618
          %v8659 = vpop.xlane.xlu0 %8658
          %8660 = vadd.xlane.f32.xlu0 %v8619
          %v8661 = vpop.xlane.xlu0 %8660
          %8662 = vadd.xlane.f32.xlu0 %v8620
          %v8663 = vpop.xlane.xlu0 %8662
          %8664 = vadd.xlane.f32.xlu0 %v8621
          %v8665 = vpop.xlane.xlu0 %8664
          %8666 = vadd.xlane.f32.xlu0 %v8622
          %v8667 = vpop.xlane.xlu0 %8666
          %8668 = vadd.xlane.f32.xlu0 %v8623
          %v8669 = vpop.xlane.xlu0 %8668
          %8670 = vadd.xlane.f32.xlu0 %v8624
          %v8671 = vpop.xlane.xlu0 %8670
          %8672 = vadd.xlane.f32.xlu0 %v8625
          %v8673 = vpop.xlane.xlu0 %8672
          %8674 = vadd.xlane.f32.xlu0 %v8626
          %v8675 = vpop.xlane.xlu0 %8674
          %8676 = vadd.xlane.f32.xlu0 %v8627
          %v8677 = vpop.xlane.xlu0 %8676
          %8678 = vadd.xlane.f32.xlu0 %v8628
          %v8679 = vpop.xlane.xlu0 %8678
          %8680 = vadd.xlane.f32.xlu0 %v8629
          %v8681 = vpop.xlane.xlu0 %8680
          %v8682 = vmul.f32 %v8651, %v1353
          %v8683 = vmul.f32 %v8653, %v1353
          %v8684 = vmul.f32 %v8655, %v1353
          %v8685 = vmul.f32 %v8657, %v1353
          %v8686 = vmul.f32 %v8659, %v1353
          %v8687 = vmul.f32 %v8661, %v1353
          %v8688 = vmul.f32 %v8663, %v1353
          %v8689 = vmul.f32 %v8665, %v1353
          %v8690 = vmul.f32 %v8667, %v1353
          %v8691 = vmul.f32 %v8669, %v1353
          %v8692 = vmul.f32 %v8671, %v1353
          %v8693 = vmul.f32 %v8673, %v1353
          %v8694 = vmul.f32 %v8675, %v1353
          %v8695 = vmul.f32 %v8677, %v1353
          %v8696 = vmul.f32 %v8679, %v1353
          %v8697 = vmul.f32 %v8681, %v1353
          %v8698 = vsub.f32 %v8614, %v8682
          %v8699 = vsub.f32 %v8615, %v8683
          %v8700 = vsub.f32 %v8616, %v8684
          %v8701 = vsub.f32 %v8617, %v8685
          %v8702 = vsub.f32 %v8618, %v8686
          %v8703 = vsub.f32 %v8619, %v8687
          %v8704 = vsub.f32 %v8620, %v8688
          %v8705 = vsub.f32 %v8621, %v8689
          %v8706 = vsub.f32 %v8622, %v8690
          %v8707 = vsub.f32 %v8623, %v8691
          %v8708 = vsub.f32 %v8624, %v8692
          %v8709 = vsub.f32 %v8625, %v8693
          %v8710 = vsub.f32 %v8626, %v8694
          %v8711 = vsub.f32 %v8627, %v8695
          %v8712 = vsub.f32 %v8628, %v8696
          %v8713 = vsub.f32 %v8629, %v8697
          %v8714 = vmul.f32 %v8698, %v8698
          %v8715 = vmul.f32 %v8699, %v8699
          %v8716 = vmul.f32 %v8700, %v8700
          %v8717 = vmul.f32 %v8701, %v8701
          %v8718 = vmul.f32 %v8702, %v8702
          %v8719 = vmul.f32 %v8703, %v8703
          %v8720 = vmul.f32 %v8704, %v8704
          %v8721 = vmul.f32 %v8705, %v8705
          %v8722 = vmul.f32 %v8706, %v8706
          %v8723 = vmul.f32 %v8707, %v8707
          %v8724 = vmul.f32 %v8708, %v8708
          %v8725 = vmul.f32 %v8709, %v8709
          %v8726 = vmul.f32 %v8710, %v8710
          %v8727 = vmul.f32 %v8711, %v8711
          %v8728 = vmul.f32 %v8712, %v8712
          %v8729 = vmul.f32 %v8713, %v8713
          %8730 = vadd.xlane.f32.xlu0 %v8714
          %v8731 = vpop.xlane.xlu0 %8730
          %8732 = vadd.xlane.f32.xlu0 %v8715
          %v8733 = vpop.xlane.xlu0 %8732
          %8734 = vadd.xlane.f32.xlu0 %v8716
          %v8735 = vpop.xlane.xlu0 %8734
          %8736 = vadd.xlane.f32.xlu0 %v8717
          %v8737 = vpop.xlane.xlu0 %8736
          %8738 = vadd.xlane.f32.xlu0 %v8718
          %v8739 = vpop.xlane.xlu0 %8738
          %8740 = vadd.xlane.f32.xlu0 %v8719
          %v8741 = vpop.xlane.xlu0 %8740
          %8742 = vadd.xlane.f32.xlu0 %v8720
          %v8743 = vpop.xlane.xlu0 %8742
          %8744 = vadd.xlane.f32.xlu0 %v8721
          %v8745 = vpop.xlane.xlu0 %8744
          %8746 = vadd.xlane.f32.xlu0 %v8722
          %v8747 = vpop.xlane.xlu0 %8746
          %8748 = vadd.xlane.f32.xlu0 %v8723
          %v8749 = vpop.xlane.xlu0 %8748
          %8750 = vadd.xlane.f32.xlu0 %v8724
          %v8751 = vpop.xlane.xlu0 %8750
          %8752 = vadd.xlane.f32.xlu0 %v8725
          %v8753 = vpop.xlane.xlu0 %8752
          %8754 = vadd.xlane.f32.xlu0 %v8726
          %v8755 = vpop.xlane.xlu0 %8754
          %8756 = vadd.xlane.f32.xlu0 %v8727
          %v8757 = vpop.xlane.xlu0 %8756
          %8758 = vadd.xlane.f32.xlu0 %v8728
          %v8759 = vpop.xlane.xlu0 %8758
          %8760 = vadd.xlane.f32.xlu0 %v8729
          %v8761 = vpop.xlane.xlu0 %8760
          %v8762 = vmul.f32 %v8731, %v1353
          %v8763 = vmul.f32 %v8733, %v1353
          %v8764 = vmul.f32 %v8735, %v1353
          %v8765 = vmul.f32 %v8737, %v1353
          %v8766 = vmul.f32 %v8739, %v1353
          %v8767 = vmul.f32 %v8741, %v1353
          %v8768 = vmul.f32 %v8743, %v1353
          %v8769 = vmul.f32 %v8745, %v1353
          %v8770 = vmul.f32 %v8747, %v1353
          %v8771 = vmul.f32 %v8749, %v1353
          %v8772 = vmul.f32 %v8751, %v1353
          %v8773 = vmul.f32 %v8753, %v1353
          %v8774 = vmul.f32 %v8755, %v1353
          %v8775 = vmul.f32 %v8757, %v1353
          %v8776 = vmul.f32 %v8759, %v1353
          %v8777 = vmul.f32 %v8761, %v1353
          %v8778 = vadd.f32 %v8762, 1e-05
          %v8779 = vadd.f32 %v8763, 1e-05
          %v8780 = vadd.f32 %v8764, 1e-05
          %v8781 = vadd.f32 %v8765, 1e-05
          %v8782 = vadd.f32 %v8766, 1e-05
          %v8783 = vadd.f32 %v8767, 1e-05
          %v8784 = vadd.f32 %v8768, 1e-05
          %v8785 = vadd.f32 %v8769, 1e-05
          %v8786 = vadd.f32 %v8770, 1e-05
          %v8787 = vadd.f32 %v8771, 1e-05
          %v8788 = vadd.f32 %v8772, 1e-05
          %v8789 = vadd.f32 %v8773, 1e-05
          %v8790 = vadd.f32 %v8774, 1e-05
          %v8791 = vadd.f32 %v8775, 1e-05
          %v8792 = vadd.f32 %v8776, 1e-05
          %v8793 = vadd.f32 %v8777, 1e-05
          %v8794 = vrsqrt.pop %v8778
          %v8795 = vrsqrt.pop %v8779
          %v8796 = vrsqrt.pop %v8780
          %v8797 = vrsqrt.pop %v8781
          %v8798 = vrsqrt.pop %v8782
          %v8799 = vrsqrt.pop %v8783
          %v8800 = vrsqrt.pop %v8784
          %v8801 = vrsqrt.pop %v8785
          %v8802 = vrsqrt.pop %v8786
          %v8803 = vrsqrt.pop %v8787
          %v8804 = vrsqrt.pop %v8788
          %v8805 = vrsqrt.pop %v8789
          %v8806 = vrsqrt.pop %v8790
          %v8807 = vrsqrt.pop %v8791
          %v8808 = vrsqrt.pop %v8792
          %v8809 = vrsqrt.pop %v8793
          %v8810 = vmul.f32 %v8698, %v8794
          %v8811 = vmul.f32 %v8699, %v8795
          %v8812 = vmul.f32 %v8700, %v8796
          %v8813 = vmul.f32 %v8701, %v8797
          %v8814 = vmul.f32 %v8702, %v8798
          %v8815 = vmul.f32 %v8703, %v8799
          %v8816 = vmul.f32 %v8704, %v8800
          %v8817 = vmul.f32 %v8705, %v8801
          %v8818 = vmul.f32 %v8706, %v8802
          %v8819 = vmul.f32 %v8707, %v8803
          %v8820 = vmul.f32 %v8708, %v8804
          %v8821 = vmul.f32 %v8709, %v8805
          %v8822 = vmul.f32 %v8710, %v8806
          %v8823 = vmul.f32 %v8711, %v8807
          %v8824 = vmul.f32 %v8712, %v8808
          %v8825 = vmul.f32 %v8713, %v8809
          %v8826 = vlaneseq
          %v8827 = vshrl.u32 %v8826, 7
          %v8828 = vsub.s32 6, %v8827
          %v8829 = vrot.slane %v1249, %v8828
          %v8830 = vmul.f32 %v8810, %v8829
          %v8831 = vmul.f32 %v8811, %v8829
          %v8832 = vmul.f32 %v8812, %v8829
          %v8833 = vmul.f32 %v8813, %v8829
          %v8834 = vmul.f32 %v8814, %v8829
          %v8835 = vmul.f32 %v8815, %v8829
          %v8836 = vmul.f32 %v8816, %v8829
          %v8837 = vmul.f32 %v8817, %v8829
          %v8838 = vmul.f32 %v8818, %v8829
          %v8839 = vmul.f32 %v8819, %v8829
          %v8840 = vmul.f32 %v8820, %v8829
          %v8841 = vmul.f32 %v8821, %v8829
          %v8842 = vmul.f32 %v8822, %v8829
          %v8843 = vmul.f32 %v8823, %v8829
          %v8844 = vmul.f32 %v8824, %v8829
          %v8845 = vmul.f32 %v8825, %v8829
          %v8846 = vlaneseq
          %v8847 = vshrl.u32 %v8846, 7
          %v8848 = vsub.s32 7, %v8847
          %v8849 = vrot.slane %v1249, %v8848
          %v8850 = vadd.f32 %v8830, %v8849
          %v8851 = vadd.f32 %v8831, %v8849
          %v8852 = vadd.f32 %v8832, %v8849
          %v8853 = vadd.f32 %v8833, %v8849
          %v8854 = vadd.f32 %v8834, %v8849
          %v8855 = vadd.f32 %v8835, %v8849
          %v8856 = vadd.f32 %v8836, %v8849
          %v8857 = vadd.f32 %v8837, %v8849
          %v8858 = vadd.f32 %v8838, %v8849
          %v8859 = vadd.f32 %v8839, %v8849
          %v8860 = vadd.f32 %v8840, %v8849
          %v8861 = vadd.f32 %v8841, %v8849
          %v8862 = vadd.f32 %v8842, %v8849
          %v8863 = vadd.f32 %v8843, %v8849
          %v8864 = vadd.f32 %v8844, %v8849
          %v8865 = vadd.f32 %v8845, %v8849
          %8866 = vst [vmem:[%s874] sm:$0xff] %v8850
          %8867 = vst [vmem:[%s874 + $0x8] sm:$0xff] %v8851
          %8868 = vst [vmem:[%s874 + $0x10] sm:$0xff] %v8852
          %8869 = vst [vmem:[%s874 + $0x18] sm:$0xff] %v8853
          %8870 = vst [vmem:[%s874 + $0x20] sm:$0xff] %v8854
          %8871 = vst [vmem:[%s874 + $0x28] sm:$0xff] %v8855
          %8872 = vst [vmem:[%s874 + $0x30] sm:$0xff] %v8856
          %8873 = vst [vmem:[%s874 + $0x38] sm:$0xff] %v8857
          %8874 = vst [vmem:[%s874 + $0x40] sm:$0xff] %v8858
          %8875 = vst [vmem:[%s874 + $0x48] sm:$0xff] %v8859
          %8876 = vst [vmem:[%s874 + $0x50] sm:$0xff] %v8860
          %8877 = vst [vmem:[%s874 + $0x58] sm:$0xff] %v8861
          %8878 = vst [vmem:[%s874 + $0x60] sm:$0xff] %v8862
          %8879 = vst [vmem:[%s874 + $0x68] sm:$0xff] %v8863
          %8880 = vst [vmem:[%s874 + $0x70] sm:$0xff] %v8864
          %8881 = vst [vmem:[%s874 + $0x78] sm:$0xff] %v8865
          %v8882 = vmul.f32 %v7335, 0.25
          %v8883 = vmul.f32 %v7336, 0.25
          %v8884 = vmul.f32 %v7337, 0.25
          %v8885 = vmul.f32 %v7338, 0.25
          %v8886 = vmul.f32 %v7339, 0.25
          %v8887 = vmul.f32 %v7340, 0.25
          %v8888 = vmul.f32 %v7341, 0.25
          %v8889 = vmul.f32 %v7342, 0.25
          %v8890 = vmul.f32 %v7343, 0.25
          %v8891 = vmul.f32 %v7344, 0.25
          %v8892 = vmul.f32 %v7345, 0.25
          %v8893 = vmul.f32 %v7346, 0.25
          %v8894 = vmul.f32 %v7347, 0.25
          %v8895 = vmul.f32 %v7348, 0.25
          %v8896 = vmul.f32 %v7349, 0.25
          %v8897 = vmul.f32 %v7350, 0.25
          %8898 = vst [vmem:[%s881] sm:$0xff] %v8882
          %8899 = vst [vmem:[%s881 + $0x8] sm:$0xff] %v8883
          %8900 = vst [vmem:[%s881 + $0x10] sm:$0xff] %v8884
          %8901 = vst [vmem:[%s881 + $0x18] sm:$0xff] %v8885
          %8902 = vst [vmem:[%s881 + $0x20] sm:$0xff] %v8886
          %8903 = vst [vmem:[%s881 + $0x28] sm:$0xff] %v8887
          %8904 = vst [vmem:[%s881 + $0x30] sm:$0xff] %v8888
          %8905 = vst [vmem:[%s881 + $0x38] sm:$0xff] %v8889
          %8906 = vst [vmem:[%s881 + $0x40] sm:$0xff] %v8890
          %8907 = vst [vmem:[%s881 + $0x48] sm:$0xff] %v8891
          %8908 = vst [vmem:[%s881 + $0x50] sm:$0xff] %v8892
          %8909 = vst [vmem:[%s881 + $0x58] sm:$0xff] %v8893
          %8910 = vst [vmem:[%s881 + $0x60] sm:$0xff] %v8894
          %8911 = vst [vmem:[%s881 + $0x68] sm:$0xff] %v8895
          %8912 = vst [vmem:[%s881 + $0x70] sm:$0xff] %v8896
          %8913 = vst [vmem:[%s881 + $0x78] sm:$0xff] %v8897
        $region156: #{universal_transformer_decoder_forward.1} parent=83 // pred_fallthru
          _
        %s8914 = sand.u32 %s433, 1
        %s8915 = scalar_lea.sflag [#allocation8], %s8914
        %s8916 = sand.u32 %s433, 1
        %s8917 = smul.addr %s8916, 128
        %s8918 = scalar_lea.vmem [#allocation32], %s8917
        %s8919 = sand.u32 %s459, 1
        %s8920 = scalar_lea.sflag [#allocation34], %s8919
        %s8921 = sand.u32 %s459, 1
        %s8922 = smul.addr %s8921, 128
        %s8923 = scalar_lea.vmem [#allocation33], %s8922
        // Predicated region
        $region157: #{universal_transformer_decoder_forward.1} parent=83 // pred_check
          %p8924 = pneg %p443
        $region158: #{universal_transformer_decoder_forward.1} parent=83 // pred_check_branch
          %8926 = sbr.rel (%p8924) target = $region160
        $region159: #{universal_transformer_decoder_forward.1} parent=83 // pred_region
          %s8928 = ssub.s32 2048, 2048
          %8929 = vsyncadd %s8915, %s8928
          %s8930 = smul.addr %s56, 16
          %s8931 = smul.addr %s8930, 128
          %s8932 = scalar_lea.hbm %s16, %s8931
          %s8933 = sshll.u32 %s8918, 4
          %s8934 = int_to_ptr.vmem [resolvable:$true] %s8933
          %8939 = dma.vmem_to_hbm [thread:$0]  %s8934, 2048, %s8932, %s8915, 128, 128, 8
        $region160: #{universal_transformer_decoder_forward.1} parent=83 // pred_fallthru
          _
        // Predicated region
        $region161: #{universal_transformer_decoder_forward.1} parent=83 // pred_check
          %p8940 = pneg %p469
        $region162: #{universal_transformer_decoder_forward.1} parent=83 // pred_check_branch
          %8942 = sbr.rel (%p8940) target = $region164
        $region163: #{universal_transformer_decoder_forward.1} parent=83 // pred_region
          %s8944 = ssub.s32 2048, 2048
          %8945 = vsyncadd %s8920, %s8944
          %s8946 = smul.addr %s56, 16
          %s8947 = smul.addr %s8946, 128
          %s8948 = scalar_lea.hbm %s17, %s8947
          %s8949 = sshll.u32 %s8923, 4
          %s8950 = int_to_ptr.vmem [resolvable:$true] %s8949
          %8955 = dma.vmem_to_hbm [thread:$0]  %s8950, 2048, %s8948, %s8920, 128, 128, 8
        $region164: #{universal_transformer_decoder_forward.1} parent=83 // pred_fallthru
          _
      $region84: #{universal_transformer_decoder_forward.1} parent=5 // pred_fallthru
        _
      %p8956 = scmp.le.s32.totalorder 2, %s47
      // Predicated region
      $region165: #{universal_transformer_decoder_forward.1} parent=5 // pred_check
        %p8957 = pneg %p8956
      $region166: #{universal_transformer_decoder_forward.1} parent=5 // pred_check_branch
        %8959 = sbr.rel (%p8957) target = $region168
      $region167: #{universal_transformer_decoder_forward.1} parent=5 // pred_region
        %s8960 = ssub.s32 %s47, 2
        // Predicated region
        $region169: #{universal_transformer_decoder_forward.1} parent=167 // pred_check
          %p8961 = pneg %p449
        $region170: #{universal_transformer_decoder_forward.1} parent=167 // pred_check_branch
          %8963 = sbr.rel (%p8961) target = $region172
        $region171: #{universal_transformer_decoder_forward.1} parent=167 // pred_region
          %s8964 = sand.u32 %s434, 1
          %s8965 = scalar_lea.sflag [#allocation8], %s8964
          %s8966 = sand.u32 %s434, 1
          %s8967 = smul.addr %s8966, 128
          %s8968 = scalar_lea.vmem [#allocation32], %s8967
          %8969 = dma.done %s8965, 2048
        $region172: #{universal_transformer_decoder_forward.1} parent=167 // pred_fallthru
          _
        // Predicated region
        $region173: #{universal_transformer_decoder_forward.1} parent=167 // pred_check
          %p8970 = pneg %p475
        $region174: #{universal_transformer_decoder_forward.1} parent=167 // pred_check_branch
          %8972 = sbr.rel (%p8970) target = $region176
        $region175: #{universal_transformer_decoder_forward.1} parent=167 // pred_region
          %s8973 = sand.u32 %s460, 1
          %s8974 = scalar_lea.sflag [#allocation34], %s8973
          %s8975 = sand.u32 %s460, 1
          %s8976 = smul.addr %s8975, 128
          %s8977 = scalar_lea.vmem [#allocation33], %s8976
          %8978 = dma.done %s8974, 2048
        $region176: #{universal_transformer_decoder_forward.1} parent=167 // pred_fallthru
          _
      $region168: #{universal_transformer_decoder_forward.1} parent=5 // pred_fallthru
        _
    $region6: #{universal_transformer_decoder_forward.1} parent=1 // loop_footer
      %s51 = sadd.s32 1, %s47
    $region7: #{universal_transformer_decoder_forward.1} parent=1 // loop_footer_branch
      %46 = sbr.rel target = $region3
    $region8: #{universal_transformer_decoder_forward.1} parent=1 // loop_exit
      _
    %8979 = vsyncpa [#allocation7], 1
    %s8980 = scalar_lea.sflag [#allocation7], 1
    %8981 = vsyncpa %s8980, 1
    %8982 = vsyncpa [#allocation10], 1
    %s8983 = scalar_lea.sflag [#allocation10], 1
    %8984 = vsyncpa %s8983, 1
    %8985 = vsyncpa [#allocation13], 1
    %s8986 = scalar_lea.sflag [#allocation13], 1
    %8987 = vsyncpa %s8986, 1
    %8988 = vsyncpa [#allocation16], 1
    %s8989 = scalar_lea.sflag [#allocation16], 1
    %8990 = vsyncpa %s8989, 1
    %8991 = vsyncpa [#allocation19], 1
    %8992 = vsyncpa [#allocation22], 1
    %8993 = vsyncpa [#allocation25], 1
    %8994 = vsyncpa [#allocation28], 1
    %8995 = vsyncpa [#allocation31], 1
    %8996 = vsyncpa [#allocation8], 1
    %s8997 = scalar_lea.sflag [#allocation8], 1
    %8998 = vsyncpa %s8997, 1
    %8999 = vsyncpa [#allocation34], 1
    %s9000 = scalar_lea.sflag [#allocation34], 1
    %9001 = vsyncpa %s9000, 1

</llo_original>
